<compile_context>
chip_gen: v6e
topology: v6e:2x2x1
jax: 0.10.0
libtpu: 0.0.40
codegen_flags: <defaults>
</compile_context>

<pallas_src>
import math

import jax
import jax.numpy as jnp
from jax.experimental import pallas as pl
from jax.experimental.pallas import tpu as pltpu

LN_EPS = 1e-5      # torch.nn.LayerNorm default
ADJ_CLAMP = 1e-12  # clamp(min=1e-12) in normalize_adj
LANE = 128


def make_gcn_kernel(k_hops, f_real, matmul_dtype):
    """Kernel body. Processes `bt` graphs per grid step."""
    f32 = jnp.float32

    def kernel(x_ref, adj_ref, wall_ref, ball_ref, wff_ref, wfb_ref, bfu_ref,
               attn_ref, gamma_ref, beta_ref, out_ref):
        bt, n, fin = x_ref.shape
        fp = out_ref.shape[-1]

        x2 = x_ref[...].reshape(bt * n, fin)     # merge (batch, node) sublane dims
        adj = adj_ref[...]                       # [bt, n, n] f32

        # Self-loop diagonal mask (no materialized f32 identity).
        row = jax.lax.broadcasted_iota(jnp.int32, (n, n), 0)
        col = jax.lax.broadcasted_iota(jnp.int32, (n, n), 1)
        diag = (row == col)[None]                # [1, n, n] bool

        def normalize(a):                        # a: [bt, n, n] f32
            a = jnp.where(diag, a + 1.0, a)
            rowsum = jnp.maximum(jnp.sum(a, axis=2, keepdims=True), ADJ_CLAMP)
            colsum = jnp.maximum(jnp.sum(a, axis=1, keepdims=True), ADJ_CLAMP)
            return a * (jax.lax.rsqrt(rowsum) * jax.lax.rsqrt(colsum))

        # Hoisted, lane-dense projection of ALL hops (fwd + bwd) in one matmul.
        lin_all = jnp.dot(x2.astype(matmul_dtype), wall_ref[...],
                          preferred_element_type=f32) + ball_ref[...]  # [bt*n, 2K*fp]

        m = d = acc = None
        adj_pow = adj
        for k in range(k_hops):
            if k > 0:
                # Serial A^k chain kept in f32 (rounding compounds along the chain).
                adj_pow = jnp.einsum('bij,bjk->bik', adj_pow, adj,
                                     preferred_element_type=f32)
            nf = normalize(adj_pow)                       # norm_adj_fwd
            # norm_adj_bwd == nf^T exactly (normalize commutes with transpose).
            nft = jnp.swapaxes(nf, -1, -2)

            off = 2 * k * fp                              # 128-aligned lane offsets
            fwd_lin = lin_all[:, off:off + fp].reshape(bt, n, fp)
            bwd_lin = lin_all[:, off + fp:off + 2 * fp].reshape(bt, n, fp)

            fwd = jnp.einsum('bij,bjf->bif', nf.astype(matmul_dtype),
                             fwd_lin.astype(matmul_dtype),
                             preferred_element_type=f32).reshape(bt * n, fp)
            bwd = jnp.einsum('bij,bjf->bif', nft.astype(matmul_dtype),
                             bwd_lin.astype(matmul_dtype),
                             preferred_element_type=f32).reshape(bt * n, fp)

            # Fusion Linear over concat([fwd, bwd]) split into two matmuls.
            fused = (jnp.dot(fwd.astype(matmul_dtype), wff_ref[k],
                             preferred_element_type=f32)
                     + jnp.dot(bwd.astype(matmul_dtype), wfb_ref[k],
                               preferred_element_type=f32)
                     + bfu_ref[k])
            h = jnp.maximum(fused, 0.0)                   # ReLU   [bt*n, fp]

            # Online softmax over hops (running max / denom / accumulator).
            s = jnp.sum(h * attn_ref[k], axis=-1, keepdims=True)   # [bt*n, 1]
            if k == 0:
                m, d, acc = s, jnp.ones_like(s), h
            else:
                m_new = jnp.maximum(m, s)
                a_old = jnp.exp(m - m_new)
                p = jnp.exp(s - m_new)
                d = d * a_old + p
                acc = acc * a_old + p * h
                m = m_new

        out = acc * pl.reciprocal(d, approx=True)         # [bt*n, fp]

        # LayerNorm over the REAL feature width (padded columns are exactly 0);
        # two-pass masked variance, affine, ReLU.
        inv_f = 1.0 / float(f_real)
        mu = jnp.sum(out, axis=-1, keepdims=True) * inv_f
        feat_mask = jax.lax.broadcasted_iota(jnp.int32, (1, fp), 1) < f_real
        centered = out - mu
        cm = jnp.where(feat_mask, centered, 0.0)
        var = jnp.sum(cm * cm, axis=-1, keepdims=True) * inv_f
        y = centered * jax.lax.rsqrt(var + LN_EPS)
        y = y * gamma_ref[...] + beta_ref[...]            # padded cols -> 0
        y = jnp.maximum(y, 0.0)
        out_ref[...] = y.reshape(bt, n, fp).astype(out_ref.dtype)

    return kernel


def _round_up(v, m):
    return ((v + m - 1) // m) * m


def _pack_params(params, f_pad, matmul_dtype):
    """Pack/pad per-hop parameters into lane-dense, hoisted layouts."""
    w_fwd, b_fwd = params["w_fwd"], params["b_fwd"]       # [K,Fin,F], [K,F]
    w_bwd, b_bwd = params["w_bwd"], params["b_bwd"]
    w_fuse, b_fuse = params["w_fuse"], params["b_fuse"]   # [K,2F,F], [K,F]
    hop_attn = params["hop_attn"]                         # [K,F]
    gamma, beta = params["gamma"], params["beta"]         # [F]

    K, Fin, F = w_fwd.shape
    pad_f = f_pad - F

    def padf(a):  # zero-pad last dim to f_pad
        return jnp.pad(a, [(0, 0)] * (a.ndim - 1) + [(0, pad_f)])

    # Column layout: [hop0_fwd | hop0_bwd | hop1_fwd | ...] -> each hop slices a
    # contiguous, 128-aligned 2*f_pad window.
    w_all = jnp.stack([padf(w_fwd), padf(w_bwd)], axis=1)            # [K,2,Fin,Fp]
    w_all = jnp.transpose(w_all, (2, 0, 1, 3)).reshape(Fin, 2 * K * f_pad)
    b_all = jnp.stack([padf(b_fwd), padf(b_bwd)], axis=1).reshape(1, 2 * K * f_pad)

    wff = jnp.pad(w_fuse[:, :F, :], [(0, 0), (0, pad_f), (0, pad_f)])  # [K,Fp,Fp]
    wfb = jnp.pad(w_fuse[:, F:, :], [(0, 0), (0, pad_f), (0, pad_f)])
    b_fu = padf(b_fuse)[:, None, :]                                    # [K,1,Fp]
    attn = padf(hop_attn)[:, None, :]                                  # [K,1,Fp]
    gamma_p = padf(gamma)[None, :]                                     # [1,Fp]
    beta_p = padf(beta)[None, :]

    # MXU operands stored in HBM at matmul precision; VPU-side params stay f32.
    w_all = w_all.astype(matmul_dtype)
    wff = wff.astype(matmul_dtype)
    wfb = wfb.astype(matmul_dtype)
    return w_all, b_all, wff, wfb, b_fu, attn, gamma_p, beta_p


def gcn_forward(x, adj, params, *, batch_tile=8, matmul_dtype=jnp.bfloat16):
    B, N, Fin = x.shape
    K, _, Fout = params["w_fwd"].shape
    assert N % 8 == 0, "kernel merges (batch, node) sublane dims; needs N % 8 == 0"
    # TODO(synk): support N % 8 != 0 via per-graph projection instead of the merge.

    f_pad = _round_up(Fout, LANE)                 # lane-dense output / weight tiles
    (w_all, b_all, wff, wfb, b_fu, attn,
     gamma_p, beta_p) = _pack_params(params, f_pad, matmul_dtype)

    # Largest divisor of B that is <= batch_tile: several graphs per grid step.
    bt = min(batch_tile, B)
    while B % bt:
        bt -= 1
    grid = (B // bt,)

    kernel = make_gcn_kernel(K, Fout, matmul_dtype)

    def resident(shape, single_buffer):
        nd = len(shape)
        idx = lambda b, _nd=nd: (0,) * _nd        # constant map -> stays resident
        if single_buffer:
            return pl.BlockSpec(shape, idx, pipeline_mode=pl.Buffered(1))
        return pl.BlockSpec(shape, idx)

    def build_and_run(single_buffer):
        in_specs = [
            pl.BlockSpec((bt, N, Fin), lambda b: (b, 0, 0)),   # x   (streamed)
            pl.BlockSpec((bt, N, N), lambda b: (b, 0, 0)),     # adj (streamed)
            resident(w_all.shape, single_buffer),              # packed projections
            resident(b_all.shape, single_buffer),
            resident(wff.shape, single_buffer),                # fusion (fwd half)
            resident(wfb.shape, single_buffer),                # fusion (bwd half)
            resident(b_fu.shape, single_buffer),
            resident(attn.shape, single_buffer),
            resident(gamma_p.shape, single_buffer),
            resident(beta_p.shape, single_buffer),
        ]
        out_spec = pl.BlockSpec((bt, N, f_pad), lambda b: (b, 0, 0))
        return pl.pallas_call(
            kernel,
            out_shape=jax.ShapeDtypeStruct((B, N, f_pad), x.dtype),
            grid=grid,
            in_specs=in_specs,
            out_specs=out_spec,
            compiler_params=pltpu.CompilerParams(
                dimension_semantics=("parallel",),    # shard batch across TCs
                vmem_limit_bytes=64 * 1024 * 1024,
            ),
        )(x, adj, w_all, b_all, wff, wfb, b_fu, attn, gamma_p, beta_p)

    try:
        out = build_and_run(True)
    except Exception:
        # pipeline_mode=pl.Buffered(1) unsupported on this jax version: fall back
        # to default double-buffered resident weights (correctness unchanged).
        out = build_and_run(False)
    return out[..., :Fout]


def init_gcn_params(key, in_features, out_features, k_hops, dtype=jnp.float32):
    """Matches reset_parameters(): xavier_uniform weights, zero biases,
    hop_attn ~ N(0, 0.1), default LayerNorm affine."""

    def xavier(k, fan_in, fan_out, shape):
        bound = math.sqrt(6.0 / (fan_in + fan_out))
        return jax.random.uniform(k, shape, dtype, -bound, bound)

    keys = jax.random.split(key, 3 * k_hops + 1)
    w_fwd = jnp.stack([xavier(keys[k], in_features, out_features,
                              (in_features, out_features)) for k in range(k_hops)])
    w_bwd = jnp.stack([xavier(keys[k_hops + k], in_features, out_features,
                              (in_features, out_features)) for k in range(k_hops)])
    w_fuse = jnp.stack([xavier(keys[2 * k_hops + k], 2 * out_features, out_features,
                               (2 * out_features, out_features)) for k in range(k_hops)])
    hop_attn = 0.1 * jax.random.normal(keys[-1], (k_hops, out_features), dtype)
    return dict(
        w_fwd=w_fwd, b_fwd=jnp.zeros((k_hops, out_features), dtype),
        w_bwd=w_bwd, b_bwd=jnp.zeros((k_hops, out_features), dtype),
        w_fuse=w_fuse, b_fuse=jnp.zeros((k_hops, out_features), dtype),
        hop_attn=hop_attn,
        gamma=jnp.ones((out_features,), dtype),
        beta=jnp.zeros((out_features,), dtype),
    )


def gcn_reference(x, adj, params):
    """Pure-JAX f32 mirror of the PyTorch forward pass (separate fwd/bwd chains)."""
    B, N, _ = x.shape
    K = params["w_fwd"].shape[0]
    eye = jnp.eye(N, dtype=x.dtype)[None]

    def normalize(a):
        a = a + eye
        rowsum = jnp.maximum(jnp.sum(a, axis=2, keepdims=True), ADJ_CLAMP)
        colsum = jnp.maximum(jnp.sum(a, axis=1, keepdims=True), ADJ_CLAMP)
        return a / (jnp.sqrt(rowsum) * jnp.sqrt(colsum))

    adj_t = jnp.swapaxes(adj, 1, 2)
    apf, apb = adj, adj_t
    hops = []
    for k in range(K):
        if k > 0:
            apf = apf @ adj
            apb = apb @ adj_t
        nf, nb = normalize(apf), normalize(apb)
        fwd = nf @ (x @ params["w_fwd"][k] + params["b_fwd"][k])
        bwd = nb @ (x @ params["w_bwd"][k] + params["b_bwd"][k])
        cat = jnp.concatenate([fwd, bwd], axis=-1)
        fused = jax.nn.relu(cat @ params["w_fuse"][k] + params["b_fuse"][k])
        hops.append(fused)
    stack = jnp.stack(hops, axis=1)                                    # [B,K,N,F]
    scores = jnp.sum(stack * params["hop_attn"][None, :, None, :], axis=-1)
    w = jax.nn.softmax(scores, axis=1)[..., None]
    out = jnp.sum(stack * w, axis=1)                                   # [B,N,F]
    mu = jnp.mean(out, axis=-1, keepdims=True)
    var = jnp.mean((out - mu) ** 2, axis=-1, keepdims=True)
    y = (out - mu) / jnp.sqrt(var + LN_EPS)
    y = y * params["gamma"] + params["beta"]
    return jax.nn.relu(y)


if __name__ == "__main__":
    B, N, Fin, Fout, K = 2, 16, 32, 32, 5

    key = jax.random.PRNGKey(0)
    kx, ka, kp = jax.random.split(key, 3)
    x = jax.random.normal(kx, (B, N, Fin), jnp.float32)
    adj = (jax.random.uniform(ka, (B, N, N), jnp.float32) > 0.7).astype(jnp.float32)
    params = init_gcn_params(kp, Fin, Fout, K)

    ref = gcn_reference(x, adj, params)

    # Exact-precision path (f32 MXU operands): tight tolerance vs f32 reference.
    out_f32 = jax.block_until_ready(
        gcn_forward(x, adj, params, matmul_dtype=jnp.float32))
    assert out_f32.shape == (B, N, Fout), out_f32.shape
    err32 = float(jnp.max(jnp.abs(out_f32 - ref)))
    assert jnp.allclose(out_f32, ref, atol=2e-3, rtol=2e-3), f"f32 max abs diff {err32}"

    # Fast path (bf16 MXU operands, f32 accumulation): loose bound sized for the
    # bf16 operand-rounding envelope; exact semantics are proven by the f32 run.
    out_bf16 = jax.block_until_ready(gcn_forward(x, adj, params))
    assert out_bf16.shape == (B, N, Fout), out_bf16.shape
    errbf = float(jnp.max(jnp.abs(out_bf16 - ref)))
    assert errbf < 1e-1, f"bf16 max abs diff {errbf}"

    print("KERNEL_OK")
</pallas_src>

<mosaic_0001>
module attributes {stable_mosaic.version = 11 : i64} {
  func.func @kernel(%arg0: i32, %arg1: memref<2x16x32xf32, #tpu.memory_space<vmem>>, %arg2: memref<2x16x16xf32, #tpu.memory_space<vmem>>, %arg3: memref<32x1280xf32, #tpu.memory_space<vmem>>, %arg4: memref<1x1280xf32, #tpu.memory_space<vmem>>, %arg5: memref<5x128x128xf32, #tpu.memory_space<vmem>>, %arg6: memref<5x128x128xf32, #tpu.memory_space<vmem>>, %arg7: memref<5x1x128xf32, #tpu.memory_space<vmem>>, %arg8: memref<5x1x128xf32, #tpu.memory_space<vmem>>, %arg9: memref<1x128xf32, #tpu.memory_space<vmem>>, %arg10: memref<1x128xf32, #tpu.memory_space<vmem>>, %arg11: memref<2x16x128xf32, #tpu.memory_space<vmem>>) attributes {dimension_semantics = [#tpu.dimension_semantics<parallel>], iteration_bounds = array<i64: 1>, scalar_prefetch = 0 : i64, scratch_operands = 0 : i64, tpu.core_type = #tpu.core_type<tc>, window_params = [{transform_indices = @transform_0, window_bounds = array<i64: 2, 16, 32>}, {transform_indices = @transform_1, window_bounds = array<i64: 2, 16, 16>}, {pipeline_mode = #tpu.pipeline_mode<synchronous>, transform_indices = @transform_2, window_bounds = array<i64: 32, 1280>}, {pipeline_mode = #tpu.pipeline_mode<synchronous>, transform_indices = @transform_3, window_bounds = array<i64: 1, 1280>}, {pipeline_mode = #tpu.pipeline_mode<synchronous>, transform_indices = @transform_4, window_bounds = array<i64: 5, 128, 128>}, {pipeline_mode = #tpu.pipeline_mode<synchronous>, transform_indices = @transform_5, window_bounds = array<i64: 5, 128, 128>}, {pipeline_mode = #tpu.pipeline_mode<synchronous>, transform_indices = @transform_6, window_bounds = array<i64: 5, 1, 128>}, {pipeline_mode = #tpu.pipeline_mode<synchronous>, transform_indices = @transform_7, window_bounds = array<i64: 5, 1, 128>}, {pipeline_mode = #tpu.pipeline_mode<synchronous>, transform_indices = @transform_8, window_bounds = array<i64: 1, 128>}, {pipeline_mode = #tpu.pipeline_mode<synchronous>, transform_indices = @transform_9, window_bounds = array<i64: 1, 128>}, {transform_indices = @transform_10, window_bounds = array<i64: 2, 16, 128>}]} {
    %c0 = arith.constant 0 : index
    %c0_0 = arith.constant 0 : index
    %c0_1 = arith.constant 0 : index
    %0 = vector.load %arg1[%c0, %c0_0, %c0_1] : memref<2x16x32xf32, #tpu.memory_space<vmem>>, vector<2x16x32xf32>
    %1 = vector.shape_cast %0 : vector<2x16x32xf32> to vector<32x32xf32>
    %c0_2 = arith.constant 0 : index
    %c0_3 = arith.constant 0 : index
    %c0_4 = arith.constant 0 : index
    %2 = vector.load %arg2[%c0_2, %c0_3, %c0_4] : memref<2x16x16xf32, #tpu.memory_space<vmem>>, vector<2x16x16xf32>
    %3 = tpu.iota {dimensions = array<i32: 0>} : vector<16x16xi32>
    %4 = tpu.iota {dimensions = array<i32: 1>} : vector<16x16xi32>
    %5 = arith.cmpi eq, %3, %4 : vector<16x16xi32>
    %6 = vector.shape_cast %5 : vector<16x16xi1> to vector<1x16x16xi1>
    %c0_5 = arith.constant 0 : index
    %c0_6 = arith.constant 0 : index
    %7 = vector.load %arg3[%c0_5, %c0_6] : memref<32x1280xf32, #tpu.memory_space<vmem>>, vector<32x1280xf32>
    %cst = arith.constant dense<0.000000e+00> : vector<32x1280xf32>
    %8 = tpu.matmul %1, %7, %cst {dimension_numbers = #tpu.dot_dimension_numbers<[1], [0], [0], [1], [0, 0, 1, 1], [], []>} : vector<32x32xf32>, vector<32x1280xf32>, vector<32x1280xf32> -> vector<32x1280xf32>
    %c0_7 = arith.constant 0 : index
    %c0_8 = arith.constant 0 : index
    %9 = vector.load %arg4[%c0_7, %c0_8] : memref<1x1280xf32, #tpu.memory_space<vmem>>, vector<1x1280xf32>
    %10 = vector.broadcast %9 : vector<1x1280xf32> to vector<32x1280xf32>
    %11 = arith.addf %8, %10 : vector<32x1280xf32>
    %cst_9 = arith.constant 1.000000e+00 : f32
    %12 = vector.broadcast %cst_9 : f32 to vector<2x16x16xf32>
    %13 = arith.addf %2, %12 : vector<2x16x16xf32>
    %14 = vector.shape_cast %6 : vector<1x16x16xi1> to vector<1x16x16xi1>
    %15 = vector.broadcast %14 : vector<1x16x16xi1> to vector<2x16x16xi1>
    %16 = arith.select %15, %13, %2 : vector<2x16x16xi1>, vector<2x16x16xf32>
    %cst_10 = arith.constant dense<0.000000e+00> : vector<2x16xf32>
    %17 = vector.multi_reduction <add>, %16, %cst_10 [2] : vector<2x16x16xf32> to vector<2x16xf32>
    %18 = vector.shape_cast %17 : vector<2x16xf32> to vector<2x16x1xf32>
    %cst_11 = arith.constant 9.99999996E-13 : f32
    %19 = vector.broadcast %cst_11 : f32 to vector<2x16x1xf32>
    %20 = arith.maximumf %18, %19 : vector<2x16x1xf32>
    %cst_12 = arith.constant dense<0.000000e+00> : vector<2x16xf32>
    %21 = vector.multi_reduction <add>, %16, %cst_12 [1] : vector<2x16x16xf32> to vector<2x16xf32>
    %22 = vector.shape_cast %21 : vector<2x16xf32> to vector<2x1x16xf32>
    %cst_13 = arith.constant 9.99999996E-13 : f32
    %23 = vector.broadcast %cst_13 : f32 to vector<2x1x16xf32>
    %24 = arith.maximumf %22, %23 : vector<2x1x16xf32>
    %25 = math.rsqrt %20 : vector<2x16x1xf32>
    %26 = math.rsqrt %24 : vector<2x1x16xf32>
    %27 = vector.broadcast %25 : vector<2x16x1xf32> to vector<2x16x16xf32>
    %28 = vector.broadcast %26 : vector<2x1x16xf32> to vector<2x16x16xf32>
    %29 = arith.mulf %27, %28 : vector<2x16x16xf32>
    %30 = arith.mulf %16, %29 : vector<2x16x16xf32>
    %31 = tpu.transpose %30, [0, 2, 1] : vector<2x16x16xf32> -> vector<2x16x16xf32>
    %32 = vector.extract_strided_slice %11 {offsets = [0, 0], sizes = [32, 128], strides = [1, 1]} : vector<32x1280xf32> to vector<32x128xf32>
    %33 = vector.shape_cast %32 : vector<32x128xf32> to vector<2x16x128xf32>
    %34 = vector.extract_strided_slice %11 {offsets = [0, 128], sizes = [32, 128], strides = [1, 1]} : vector<32x1280xf32> to vector<32x128xf32>
    %35 = vector.shape_cast %34 : vector<32x128xf32> to vector<2x16x128xf32>
    "tpu.trace_start"() <{level = 10 : i32, message = "bij,bjf->bif"}> : () -> ()
    %cst_14 = arith.constant dense<0.000000e+00> : vector<2x16x128xf32>
    %36 = tpu.matmul %30, %33, %cst_14 {dimension_numbers = #tpu.dot_dimension_numbers<[2], [1], [1], [2], [0, 0, 0, 1, 1, 2], [0], [0]>} : vector<2x16x16xf32>, vector<2x16x128xf32>, vector<2x16x128xf32> -> vector<2x16x128xf32>
    "tpu.trace_stop"() : () -> ()
    %37 = vector.shape_cast %36 : vector<2x16x128xf32> to vector<32x128xf32>
    "tpu.trace_start"() <{level = 10 : i32, message = "bij,bjf->bif"}> : () -> ()
    %cst_15 = arith.constant dense<0.000000e+00> : vector<2x16x128xf32>
    %38 = tpu.matmul %31, %35, %cst_15 {dimension_numbers = #tpu.dot_dimension_numbers<[2], [1], [1], [2], [0, 0, 0, 1, 1, 2], [0], [0]>} : vector<2x16x16xf32>, vector<2x16x128xf32>, vector<2x16x128xf32> -> vector<2x16x128xf32>
    "tpu.trace_stop"() : () -> ()
    %39 = vector.shape_cast %38 : vector<2x16x128xf32> to vector<32x128xf32>
    %c0_16 = arith.constant 0 : index
    %c0_17 = arith.constant 0 : index
    %c0_18 = arith.constant 0 : index
    %40 = vector.load %arg5[%c0_16, %c0_17, %c0_18] : memref<5x128x128xf32, #tpu.memory_space<vmem>>, vector<1x128x128xf32>
    %41 = vector.shape_cast %40 : vector<1x128x128xf32> to vector<128x128xf32>
    %cst_19 = arith.constant dense<0.000000e+00> : vector<32x128xf32>
    %42 = tpu.matmul %37, %41, %cst_19 {dimension_numbers = #tpu.dot_dimension_numbers<[1], [0], [0], [1], [0, 0, 1, 1], [], []>} : vector<32x128xf32>, vector<128x128xf32>, vector<32x128xf32> -> vector<32x128xf32>
    %c0_20 = arith.constant 0 : index
    %c0_21 = arith.constant 0 : index
    %c0_22 = arith.constant 0 : index
    %43 = vector.load %arg6[%c0_20, %c0_21, %c0_22] : memref<5x128x128xf32, #tpu.memory_space<vmem>>, vector<1x128x128xf32>
    %44 = vector.shape_cast %43 : vector<1x128x128xf32> to vector<128x128xf32>
    %cst_23 = arith.constant dense<0.000000e+00> : vector<32x128xf32>
    %45 = tpu.matmul %39, %44, %cst_23 {dimension_numbers = #tpu.dot_dimension_numbers<[1], [0], [0], [1], [0, 0, 1, 1], [], []>} : vector<32x128xf32>, vector<128x128xf32>, vector<32x128xf32> -> vector<32x128xf32>
    %46 = arith.addf %42, %45 : vector<32x128xf32>
    %c0_24 = arith.constant 0 : index
    %c0_25 = arith.constant 0 : index
    %c0_26 = arith.constant 0 : index
    %47 = vector.load %arg7[%c0_24, %c0_25, %c0_26] : memref<5x1x128xf32, #tpu.memory_space<vmem>>, vector<1x1x128xf32>
    %48 = vector.shape_cast %47 : vector<1x1x128xf32> to vector<1x128xf32>
    %49 = vector.broadcast %48 : vector<1x128xf32> to vector<32x128xf32>
    %50 = arith.addf %46, %49 : vector<32x128xf32>
    %cst_27 = arith.constant 0.000000e+00 : f32
    %51 = vector.broadcast %cst_27 : f32 to vector<32x128xf32>
    %52 = arith.maximumf %50, %51 : vector<32x128xf32>
    %c0_28 = arith.constant 0 : index
    %c0_29 = arith.constant 0 : index
    %c0_30 = arith.constant 0 : index
    %53 = vector.load %arg8[%c0_28, %c0_29, %c0_30] : memref<5x1x128xf32, #tpu.memory_space<vmem>>, vector<1x1x128xf32>
    %54 = vector.shape_cast %53 : vector<1x1x128xf32> to vector<1x128xf32>
    %55 = vector.broadcast %54 : vector<1x128xf32> to vector<32x128xf32>
    %56 = arith.mulf %52, %55 : vector<32x128xf32>
    %cst_31 = arith.constant dense<0.000000e+00> : vector<32xf32>
    %57 = vector.multi_reduction <add>, %56, %cst_31 [1] : vector<32x128xf32> to vector<32xf32>
    %58 = vector.shape_cast %57 : vector<32xf32> to vector<32x1xf32>
    %cst_32 = arith.constant 1.000000e+00 : f32
    %59 = vector.broadcast %cst_32 : f32 to vector<32x1xf32>
    "tpu.trace_start"() <{level = 10 : i32, message = "bij,bjk->bik"}> : () -> ()
    %cst_33 = arith.constant dense<0.000000e+00> : vector<2x16x16xf32>
    %60 = tpu.matmul %2, %2, %cst_33 {dimension_numbers = #tpu.dot_dimension_numbers<[2], [1], [1], [2], [0, 0, 0, 1, 1, 2], [0], [0]>} : vector<2x16x16xf32>, vector<2x16x16xf32>, vector<2x16x16xf32> -> vector<2x16x16xf32>
    "tpu.trace_stop"() : () -> ()
    %cst_34 = arith.constant 1.000000e+00 : f32
    %61 = vector.broadcast %cst_34 : f32 to vector<2x16x16xf32>
    %62 = arith.addf %60, %61 : vector<2x16x16xf32>
    %63 = vector.shape_cast %6 : vector<1x16x16xi1> to vector<1x16x16xi1>
    %64 = vector.broadcast %63 : vector<1x16x16xi1> to vector<2x16x16xi1>
    %65 = arith.select %64, %62, %60 : vector<2x16x16xi1>, vector<2x16x16xf32>
    %cst_35 = arith.constant dense<0.000000e+00> : vector<2x16xf32>
    %66 = vector.multi_reduction <add>, %65, %cst_35 [2] : vector<2x16x16xf32> to vector<2x16xf32>
    %67 = vector.shape_cast %66 : vector<2x16xf32> to vector<2x16x1xf32>
    %cst_36 = arith.constant 9.99999996E-13 : f32
    %68 = vector.broadcast %cst_36 : f32 to vector<2x16x1xf32>
    %69 = arith.maximumf %67, %68 : vector<2x16x1xf32>
    %cst_37 = arith.constant dense<0.000000e+00> : vector<2x16xf32>
    %70 = vector.multi_reduction <add>, %65, %cst_37 [1] : vector<2x16x16xf32> to vector<2x16xf32>
    %71 = vector.shape_cast %70 : vector<2x16xf32> to vector<2x1x16xf32>
    %cst_38 = arith.constant 9.99999996E-13 : f32
    %72 = vector.broadcast %cst_38 : f32 to vector<2x1x16xf32>
    %73 = arith.maximumf %71, %72 : vector<2x1x16xf32>
    %74 = math.rsqrt %69 : vector<2x16x1xf32>
    %75 = math.rsqrt %73 : vector<2x1x16xf32>
    %76 = vector.broadcast %74 : vector<2x16x1xf32> to vector<2x16x16xf32>
    %77 = vector.broadcast %75 : vector<2x1x16xf32> to vector<2x16x16xf32>
    %78 = arith.mulf %76, %77 : vector<2x16x16xf32>
    %79 = arith.mulf %65, %78 : vector<2x16x16xf32>
    %80 = tpu.transpose %79, [0, 2, 1] : vector<2x16x16xf32> -> vector<2x16x16xf32>
    %81 = vector.extract_strided_slice %11 {offsets = [0, 256], sizes = [32, 128], strides = [1, 1]} : vector<32x1280xf32> to vector<32x128xf32>
    %82 = vector.shape_cast %81 : vector<32x128xf32> to vector<2x16x128xf32>
    %83 = vector.extract_strided_slice %11 {offsets = [0, 384], sizes = [32, 128], strides = [1, 1]} : vector<32x1280xf32> to vector<32x128xf32>
    %84 = vector.shape_cast %83 : vector<32x128xf32> to vector<2x16x128xf32>
    "tpu.trace_start"() <{level = 10 : i32, message = "bij,bjf->bif"}> : () -> ()
    %cst_39 = arith.constant dense<0.000000e+00> : vector<2x16x128xf32>
    %85 = tpu.matmul %79, %82, %cst_39 {dimension_numbers = #tpu.dot_dimension_numbers<[2], [1], [1], [2], [0, 0, 0, 1, 1, 2], [0], [0]>} : vector<2x16x16xf32>, vector<2x16x128xf32>, vector<2x16x128xf32> -> vector<2x16x128xf32>
    "tpu.trace_stop"() : () -> ()
    %86 = vector.shape_cast %85 : vector<2x16x128xf32> to vector<32x128xf32>
    "tpu.trace_start"() <{level = 10 : i32, message = "bij,bjf->bif"}> : () -> ()
    %cst_40 = arith.constant dense<0.000000e+00> : vector<2x16x128xf32>
    %87 = tpu.matmul %80, %84, %cst_40 {dimension_numbers = #tpu.dot_dimension_numbers<[2], [1], [1], [2], [0, 0, 0, 1, 1, 2], [0], [0]>} : vector<2x16x16xf32>, vector<2x16x128xf32>, vector<2x16x128xf32> -> vector<2x16x128xf32>
    "tpu.trace_stop"() : () -> ()
    %88 = vector.shape_cast %87 : vector<2x16x128xf32> to vector<32x128xf32>
    %c1 = arith.constant 1 : index
    %c0_41 = arith.constant 0 : index
    %c0_42 = arith.constant 0 : index
    %89 = vector.load %arg5[%c1, %c0_41, %c0_42] : memref<5x128x128xf32, #tpu.memory_space<vmem>>, vector<1x128x128xf32>
    %90 = vector.shape_cast %89 : vector<1x128x128xf32> to vector<128x128xf32>
    %cst_43 = arith.constant dense<0.000000e+00> : vector<32x128xf32>
    %91 = tpu.matmul %86, %90, %cst_43 {dimension_numbers = #tpu.dot_dimension_numbers<[1], [0], [0], [1], [0, 0, 1, 1], [], []>} : vector<32x128xf32>, vector<128x128xf32>, vector<32x128xf32> -> vector<32x128xf32>
    %c1_44 = arith.constant 1 : index
    %c0_45 = arith.constant 0 : index
    %c0_46 = arith.constant 0 : index
    %92 = vector.load %arg6[%c1_44, %c0_45, %c0_46] : memref<5x128x128xf32, #tpu.memory_space<vmem>>, vector<1x128x128xf32>
    %93 = vector.shape_cast %92 : vector<1x128x128xf32> to vector<128x128xf32>
    %cst_47 = arith.constant dense<0.000000e+00> : vector<32x128xf32>
    %94 = tpu.matmul %88, %93, %cst_47 {dimension_numbers = #tpu.dot_dimension_numbers<[1], [0], [0], [1], [0, 0, 1, 1], [], []>} : vector<32x128xf32>, vector<128x128xf32>, vector<32x128xf32> -> vector<32x128xf32>
    %95 = arith.addf %91, %94 : vector<32x128xf32>
    %c1_48 = arith.constant 1 : index
    %c0_49 = arith.constant 0 : index
    %c0_50 = arith.constant 0 : index
    %96 = vector.load %arg7[%c1_48, %c0_49, %c0_50] : memref<5x1x128xf32, #tpu.memory_space<vmem>>, vector<1x1x128xf32>
    %97 = vector.shape_cast %96 : vector<1x1x128xf32> to vector<1x128xf32>
    %98 = vector.broadcast %97 : vector<1x128xf32> to vector<32x128xf32>
    %99 = arith.addf %95, %98 : vector<32x128xf32>
    %cst_51 = arith.constant 0.000000e+00 : f32
    %100 = vector.broadcast %cst_51 : f32 to vector<32x128xf32>
    %101 = arith.maximumf %99, %100 : vector<32x128xf32>
    %c1_52 = arith.constant 1 : index
    %c0_53 = arith.constant 0 : index
    %c0_54 = arith.constant 0 : index
    %102 = vector.load %arg8[%c1_52, %c0_53, %c0_54] : memref<5x1x128xf32, #tpu.memory_space<vmem>>, vector<1x1x128xf32>
    %103 = vector.shape_cast %102 : vector<1x1x128xf32> to vector<1x128xf32>
    %104 = vector.broadcast %103 : vector<1x128xf32> to vector<32x128xf32>
    %105 = arith.mulf %101, %104 : vector<32x128xf32>
    %cst_55 = arith.constant dense<0.000000e+00> : vector<32xf32>
    %106 = vector.multi_reduction <add>, %105, %cst_55 [1] : vector<32x128xf32> to vector<32xf32>
    %107 = vector.shape_cast %106 : vector<32xf32> to vector<32x1xf32>
    %108 = arith.maximumf %58, %107 : vector<32x1xf32>
    %109 = arith.subf %58, %108 : vector<32x1xf32>
    %110 = math.exp %109 : vector<32x1xf32>
    %111 = arith.subf %107, %108 : vector<32x1xf32>
    %112 = math.exp %111 : vector<32x1xf32>
    %113 = arith.mulf %59, %110 : vector<32x1xf32>
    %114 = arith.addf %113, %112 : vector<32x1xf32>
    %115 = vector.broadcast %110 : vector<32x1xf32> to vector<32x128xf32>
    %116 = arith.mulf %52, %115 : vector<32x128xf32>
    %117 = vector.broadcast %112 : vector<32x1xf32> to vector<32x128xf32>
    %118 = arith.mulf %117, %101 : vector<32x128xf32>
    %119 = arith.addf %116, %118 : vector<32x128xf32>
    "tpu.trace_start"() <{level = 10 : i32, message = "bij,bjk->bik"}> : () -> ()
    %cst_56 = arith.constant dense<0.000000e+00> : vector<2x16x16xf32>
    %120 = tpu.matmul %60, %2, %cst_56 {dimension_numbers = #tpu.dot_dimension_numbers<[2], [1], [1], [2], [0, 0, 0, 1, 1, 2], [0], [0]>} : vector<2x16x16xf32>, vector<2x16x16xf32>, vector<2x16x16xf32> -> vector<2x16x16xf32>
    "tpu.trace_stop"() : () -> ()
    %cst_57 = arith.constant 1.000000e+00 : f32
    %121 = vector.broadcast %cst_57 : f32 to vector<2x16x16xf32>
    %122 = arith.addf %120, %121 : vector<2x16x16xf32>
    %123 = vector.shape_cast %6 : vector<1x16x16xi1> to vector<1x16x16xi1>
    %124 = vector.broadcast %123 : vector<1x16x16xi1> to vector<2x16x16xi1>
    %125 = arith.select %124, %122, %120 : vector<2x16x16xi1>, vector<2x16x16xf32>
    %cst_58 = arith.constant dense<0.000000e+00> : vector<2x16xf32>
    %126 = vector.multi_reduction <add>, %125, %cst_58 [2] : vector<2x16x16xf32> to vector<2x16xf32>
    %127 = vector.shape_cast %126 : vector<2x16xf32> to vector<2x16x1xf32>
    %cst_59 = arith.constant 9.99999996E-13 : f32
    %128 = vector.broadcast %cst_59 : f32 to vector<2x16x1xf32>
    %129 = arith.maximumf %127, %128 : vector<2x16x1xf32>
    %cst_60 = arith.constant dense<0.000000e+00> : vector<2x16xf32>
    %130 = vector.multi_reduction <add>, %125, %cst_60 [1] : vector<2x16x16xf32> to vector<2x16xf32>
    %131 = vector.shape_cast %130 : vector<2x16xf32> to vector<2x1x16xf32>
    %cst_61 = arith.constant 9.99999996E-13 : f32
    %132 = vector.broadcast %cst_61 : f32 to vector<2x1x16xf32>
    %133 = arith.maximumf %131, %132 : vector<2x1x16xf32>
    %134 = math.rsqrt %129 : vector<2x16x1xf32>
    %135 = math.rsqrt %133 : vector<2x1x16xf32>
    %136 = vector.broadcast %134 : vector<2x16x1xf32> to vector<2x16x16xf32>
    %137 = vector.broadcast %135 : vector<2x1x16xf32> to vector<2x16x16xf32>
    %138 = arith.mulf %136, %137 : vector<2x16x16xf32>
    %139 = arith.mulf %125, %138 : vector<2x16x16xf32>
    %140 = tpu.transpose %139, [0, 2, 1] : vector<2x16x16xf32> -> vector<2x16x16xf32>
    %141 = vector.extract_strided_slice %11 {offsets = [0, 512], sizes = [32, 128], strides = [1, 1]} : vector<32x1280xf32> to vector<32x128xf32>
    %142 = vector.shape_cast %141 : vector<32x128xf32> to vector<2x16x128xf32>
    %143 = vector.extract_strided_slice %11 {offsets = [0, 640], sizes = [32, 128], strides = [1, 1]} : vector<32x1280xf32> to vector<32x128xf32>
    %144 = vector.shape_cast %143 : vector<32x128xf32> to vector<2x16x128xf32>
    "tpu.trace_start"() <{level = 10 : i32, message = "bij,bjf->bif"}> : () -> ()
    %cst_62 = arith.constant dense<0.000000e+00> : vector<2x16x128xf32>
    %145 = tpu.matmul %139, %142, %cst_62 {dimension_numbers = #tpu.dot_dimension_numbers<[2], [1], [1], [2], [0, 0, 0, 1, 1, 2], [0], [0]>} : vector<2x16x16xf32>, vector<2x16x128xf32>, vector<2x16x128xf32> -> vector<2x16x128xf32>
    "tpu.trace_stop"() : () -> ()
    %146 = vector.shape_cast %145 : vector<2x16x128xf32> to vector<32x128xf32>
    "tpu.trace_start"() <{level = 10 : i32, message = "bij,bjf->bif"}> : () -> ()
    %cst_63 = arith.constant dense<0.000000e+00> : vector<2x16x128xf32>
    %147 = tpu.matmul %140, %144, %cst_63 {dimension_numbers = #tpu.dot_dimension_numbers<[2], [1], [1], [2], [0, 0, 0, 1, 1, 2], [0], [0]>} : vector<2x16x16xf32>, vector<2x16x128xf32>, vector<2x16x128xf32> -> vector<2x16x128xf32>
    "tpu.trace_stop"() : () -> ()
    %148 = vector.shape_cast %147 : vector<2x16x128xf32> to vector<32x128xf32>
    %c2 = arith.constant 2 : index
    %c0_64 = arith.constant 0 : index
    %c0_65 = arith.constant 0 : index
    %149 = vector.load %arg5[%c2, %c0_64, %c0_65] : memref<5x128x128xf32, #tpu.memory_space<vmem>>, vector<1x128x128xf32>
    %150 = vector.shape_cast %149 : vector<1x128x128xf32> to vector<128x128xf32>
    %cst_66 = arith.constant dense<0.000000e+00> : vector<32x128xf32>
    %151 = tpu.matmul %146, %150, %cst_66 {dimension_numbers = #tpu.dot_dimension_numbers<[1], [0], [0], [1], [0, 0, 1, 1], [], []>} : vector<32x128xf32>, vector<128x128xf32>, vector<32x128xf32> -> vector<32x128xf32>
    %c2_67 = arith.constant 2 : index
    %c0_68 = arith.constant 0 : index
    %c0_69 = arith.constant 0 : index
    %152 = vector.load %arg6[%c2_67, %c0_68, %c0_69] : memref<5x128x128xf32, #tpu.memory_space<vmem>>, vector<1x128x128xf32>
    %153 = vector.shape_cast %152 : vector<1x128x128xf32> to vector<128x128xf32>
    %cst_70 = arith.constant dense<0.000000e+00> : vector<32x128xf32>
    %154 = tpu.matmul %148, %153, %cst_70 {dimension_numbers = #tpu.dot_dimension_numbers<[1], [0], [0], [1], [0, 0, 1, 1], [], []>} : vector<32x128xf32>, vector<128x128xf32>, vector<32x128xf32> -> vector<32x128xf32>
    %155 = arith.addf %151, %154 : vector<32x128xf32>
    %c2_71 = arith.constant 2 : index
    %c0_72 = arith.constant 0 : index
    %c0_73 = arith.constant 0 : index
    %156 = vector.load %arg7[%c2_71, %c0_72, %c0_73] : memref<5x1x128xf32, #tpu.memory_space<vmem>>, vector<1x1x128xf32>
    %157 = vector.shape_cast %156 : vector<1x1x128xf32> to vector<1x128xf32>
    %158 = vector.broadcast %157 : vector<1x128xf32> to vector<32x128xf32>
    %159 = arith.addf %155, %158 : vector<32x128xf32>
    %cst_74 = arith.constant 0.000000e+00 : f32
    %160 = vector.broadcast %cst_74 : f32 to vector<32x128xf32>
    %161 = arith.maximumf %159, %160 : vector<32x128xf32>
    %c2_75 = arith.constant 2 : index
    %c0_76 = arith.constant 0 : index
    %c0_77 = arith.constant 0 : index
    %162 = vector.load %arg8[%c2_75, %c0_76, %c0_77] : memref<5x1x128xf32, #tpu.memory_space<vmem>>, vector<1x1x128xf32>
    %163 = vector.shape_cast %162 : vector<1x1x128xf32> to vector<1x128xf32>
    %164 = vector.broadcast %163 : vector<1x128xf32> to vector<32x128xf32>
    %165 = arith.mulf %161, %164 : vector<32x128xf32>
    %cst_78 = arith.constant dense<0.000000e+00> : vector<32xf32>
    %166 = vector.multi_reduction <add>, %165, %cst_78 [1] : vector<32x128xf32> to vector<32xf32>
    %167 = vector.shape_cast %166 : vector<32xf32> to vector<32x1xf32>
    %168 = arith.maximumf %108, %167 : vector<32x1xf32>
    %169 = arith.subf %108, %168 : vector<32x1xf32>
    %170 = math.exp %169 : vector<32x1xf32>
    %171 = arith.subf %167, %168 : vector<32x1xf32>
    %172 = math.exp %171 : vector<32x1xf32>
    %173 = arith.mulf %114, %170 : vector<32x1xf32>
    %174 = arith.addf %173, %172 : vector<32x1xf32>
    %175 = vector.broadcast %170 : vector<32x1xf32> to vector<32x128xf32>
    %176 = arith.mulf %119, %175 : vector<32x128xf32>
    %177 = vector.broadcast %172 : vector<32x1xf32> to vector<32x128xf32>
    %178 = arith.mulf %177, %161 : vector<32x128xf32>
    %179 = arith.addf %176, %178 : vector<32x128xf32>
    "tpu.trace_start"() <{level = 10 : i32, message = "bij,bjk->bik"}> : () -> ()
    %cst_79 = arith.constant dense<0.000000e+00> : vector<2x16x16xf32>
    %180 = tpu.matmul %120, %2, %cst_79 {dimension_numbers = #tpu.dot_dimension_numbers<[2], [1], [1], [2], [0, 0, 0, 1, 1, 2], [0], [0]>} : vector<2x16x16xf32>, vector<2x16x16xf32>, vector<2x16x16xf32> -> vector<2x16x16xf32>
    "tpu.trace_stop"() : () -> ()
    %cst_80 = arith.constant 1.000000e+00 : f32
    %181 = vector.broadcast %cst_80 : f32 to vector<2x16x16xf32>
    %182 = arith.addf %180, %181 : vector<2x16x16xf32>
    %183 = vector.shape_cast %6 : vector<1x16x16xi1> to vector<1x16x16xi1>
    %184 = vector.broadcast %183 : vector<1x16x16xi1> to vector<2x16x16xi1>
    %185 = arith.select %184, %182, %180 : vector<2x16x16xi1>, vector<2x16x16xf32>
    %cst_81 = arith.constant dense<0.000000e+00> : vector<2x16xf32>
    %186 = vector.multi_reduction <add>, %185, %cst_81 [2] : vector<2x16x16xf32> to vector<2x16xf32>
    %187 = vector.shape_cast %186 : vector<2x16xf32> to vector<2x16x1xf32>
    %cst_82 = arith.constant 9.99999996E-13 : f32
    %188 = vector.broadcast %cst_82 : f32 to vector<2x16x1xf32>
    %189 = arith.maximumf %187, %188 : vector<2x16x1xf32>
    %cst_83 = arith.constant dense<0.000000e+00> : vector<2x16xf32>
    %190 = vector.multi_reduction <add>, %185, %cst_83 [1] : vector<2x16x16xf32> to vector<2x16xf32>
    %191 = vector.shape_cast %190 : vector<2x16xf32> to vector<2x1x16xf32>
    %cst_84 = arith.constant 9.99999996E-13 : f32
    %192 = vector.broadcast %cst_84 : f32 to vector<2x1x16xf32>
    %193 = arith.maximumf %191, %192 : vector<2x1x16xf32>
    %194 = math.rsqrt %189 : vector<2x16x1xf32>
    %195 = math.rsqrt %193 : vector<2x1x16xf32>
    %196 = vector.broadcast %194 : vector<2x16x1xf32> to vector<2x16x16xf32>
    %197 = vector.broadcast %195 : vector<2x1x16xf32> to vector<2x16x16xf32>
    %198 = arith.mulf %196, %197 : vector<2x16x16xf32>
    %199 = arith.mulf %185, %198 : vector<2x16x16xf32>
    %200 = tpu.transpose %199, [0, 2, 1] : vector<2x16x16xf32> -> vector<2x16x16xf32>
    %201 = vector.extract_strided_slice %11 {offsets = [0, 768], sizes = [32, 128], strides = [1, 1]} : vector<32x1280xf32> to vector<32x128xf32>
    %202 = vector.shape_cast %201 : vector<32x128xf32> to vector<2x16x128xf32>
    %203 = vector.extract_strided_slice %11 {offsets = [0, 896], sizes = [32, 128], strides = [1, 1]} : vector<32x1280xf32> to vector<32x128xf32>
    %204 = vector.shape_cast %203 : vector<32x128xf32> to vector<2x16x128xf32>
    "tpu.trace_start"() <{level = 10 : i32, message = "bij,bjf->bif"}> : () -> ()
    %cst_85 = arith.constant dense<0.000000e+00> : vector<2x16x128xf32>
    %205 = tpu.matmul %199, %202, %cst_85 {dimension_numbers = #tpu.dot_dimension_numbers<[2], [1], [1], [2], [0, 0, 0, 1, 1, 2], [0], [0]>} : vector<2x16x16xf32>, vector<2x16x128xf32>, vector<2x16x128xf32> -> vector<2x16x128xf32>
    "tpu.trace_stop"() : () -> ()
    %206 = vector.shape_cast %205 : vector<2x16x128xf32> to vector<32x128xf32>
    "tpu.trace_start"() <{level = 10 : i32, message = "bij,bjf->bif"}> : () -> ()
    %cst_86 = arith.constant dense<0.000000e+00> : vector<2x16x128xf32>
    %207 = tpu.matmul %200, %204, %cst_86 {dimension_numbers = #tpu.dot_dimension_numbers<[2], [1], [1], [2], [0, 0, 0, 1, 1, 2], [0], [0]>} : vector<2x16x16xf32>, vector<2x16x128xf32>, vector<2x16x128xf32> -> vector<2x16x128xf32>
    "tpu.trace_stop"() : () -> ()
    %208 = vector.shape_cast %207 : vector<2x16x128xf32> to vector<32x128xf32>
    %c3 = arith.constant 3 : index
    %c0_87 = arith.constant 0 : index
    %c0_88 = arith.constant 0 : index
    %209 = vector.load %arg5[%c3, %c0_87, %c0_88] : memref<5x128x128xf32, #tpu.memory_space<vmem>>, vector<1x128x128xf32>
    %210 = vector.shape_cast %209 : vector<1x128x128xf32> to vector<128x128xf32>
    %cst_89 = arith.constant dense<0.000000e+00> : vector<32x128xf32>
    %211 = tpu.matmul %206, %210, %cst_89 {dimension_numbers = #tpu.dot_dimension_numbers<[1], [0], [0], [1], [0, 0, 1, 1], [], []>} : vector<32x128xf32>, vector<128x128xf32>, vector<32x128xf32> -> vector<32x128xf32>
    %c3_90 = arith.constant 3 : index
    %c0_91 = arith.constant 0 : index
    %c0_92 = arith.constant 0 : index
    %212 = vector.load %arg6[%c3_90, %c0_91, %c0_92] : memref<5x128x128xf32, #tpu.memory_space<vmem>>, vector<1x128x128xf32>
    %213 = vector.shape_cast %212 : vector<1x128x128xf32> to vector<128x128xf32>
    %cst_93 = arith.constant dense<0.000000e+00> : vector<32x128xf32>
    %214 = tpu.matmul %208, %213, %cst_93 {dimension_numbers = #tpu.dot_dimension_numbers<[1], [0], [0], [1], [0, 0, 1, 1], [], []>} : vector<32x128xf32>, vector<128x128xf32>, vector<32x128xf32> -> vector<32x128xf32>
    %215 = arith.addf %211, %214 : vector<32x128xf32>
    %c3_94 = arith.constant 3 : index
    %c0_95 = arith.constant 0 : index
    %c0_96 = arith.constant 0 : index
    %216 = vector.load %arg7[%c3_94, %c0_95, %c0_96] : memref<5x1x128xf32, #tpu.memory_space<vmem>>, vector<1x1x128xf32>
    %217 = vector.shape_cast %216 : vector<1x1x128xf32> to vector<1x128xf32>
    %218 = vector.broadcast %217 : vector<1x128xf32> to vector<32x128xf32>
    %219 = arith.addf %215, %218 : vector<32x128xf32>
    %cst_97 = arith.constant 0.000000e+00 : f32
    %220 = vector.broadcast %cst_97 : f32 to vector<32x128xf32>
    %221 = arith.maximumf %219, %220 : vector<32x128xf32>
    %c3_98 = arith.constant 3 : index
    %c0_99 = arith.constant 0 : index
    %c0_100 = arith.constant 0 : index
    %222 = vector.load %arg8[%c3_98, %c0_99, %c0_100] : memref<5x1x128xf32, #tpu.memory_space<vmem>>, vector<1x1x128xf32>
    %223 = vector.shape_cast %222 : vector<1x1x128xf32> to vector<1x128xf32>
    %224 = vector.broadcast %223 : vector<1x128xf32> to vector<32x128xf32>
    %225 = arith.mulf %221, %224 : vector<32x128xf32>
    %cst_101 = arith.constant dense<0.000000e+00> : vector<32xf32>
    %226 = vector.multi_reduction <add>, %225, %cst_101 [1] : vector<32x128xf32> to vector<32xf32>
    %227 = vector.shape_cast %226 : vector<32xf32> to vector<32x1xf32>
    %228 = arith.maximumf %168, %227 : vector<32x1xf32>
    %229 = arith.subf %168, %228 : vector<32x1xf32>
    %230 = math.exp %229 : vector<32x1xf32>
    %231 = arith.subf %227, %228 : vector<32x1xf32>
    %232 = math.exp %231 : vector<32x1xf32>
    %233 = arith.mulf %174, %230 : vector<32x1xf32>
    %234 = arith.addf %233, %232 : vector<32x1xf32>
    %235 = vector.broadcast %230 : vector<32x1xf32> to vector<32x128xf32>
    %236 = arith.mulf %179, %235 : vector<32x128xf32>
    %237 = vector.broadcast %232 : vector<32x1xf32> to vector<32x128xf32>
    %238 = arith.mulf %237, %221 : vector<32x128xf32>
    %239 = arith.addf %236, %238 : vector<32x128xf32>
    "tpu.trace_start"() <{level = 10 : i32, message = "bij,bjk->bik"}> : () -> ()
    %cst_102 = arith.constant dense<0.000000e+00> : vector<2x16x16xf32>
    %240 = tpu.matmul %180, %2, %cst_102 {dimension_numbers = #tpu.dot_dimension_numbers<[2], [1], [1], [2], [0, 0, 0, 1, 1, 2], [0], [0]>} : vector<2x16x16xf32>, vector<2x16x16xf32>, vector<2x16x16xf32> -> vector<2x16x16xf32>
    "tpu.trace_stop"() : () -> ()
    %cst_103 = arith.constant 1.000000e+00 : f32
    %241 = vector.broadcast %cst_103 : f32 to vector<2x16x16xf32>
    %242 = arith.addf %240, %241 : vector<2x16x16xf32>
    %243 = vector.shape_cast %6 : vector<1x16x16xi1> to vector<1x16x16xi1>
    %244 = vector.broadcast %243 : vector<1x16x16xi1> to vector<2x16x16xi1>
    %245 = arith.select %244, %242, %240 : vector<2x16x16xi1>, vector<2x16x16xf32>
    %cst_104 = arith.constant dense<0.000000e+00> : vector<2x16xf32>
    %246 = vector.multi_reduction <add>, %245, %cst_104 [2] : vector<2x16x16xf32> to vector<2x16xf32>
    %247 = vector.shape_cast %246 : vector<2x16xf32> to vector<2x16x1xf32>
    %cst_105 = arith.constant 9.99999996E-13 : f32
    %248 = vector.broadcast %cst_105 : f32 to vector<2x16x1xf32>
    %249 = arith.maximumf %247, %248 : vector<2x16x1xf32>
    %cst_106 = arith.constant dense<0.000000e+00> : vector<2x16xf32>
    %250 = vector.multi_reduction <add>, %245, %cst_106 [1] : vector<2x16x16xf32> to vector<2x16xf32>
    %251 = vector.shape_cast %250 : vector<2x16xf32> to vector<2x1x16xf32>
    %cst_107 = arith.constant 9.99999996E-13 : f32
    %252 = vector.broadcast %cst_107 : f32 to vector<2x1x16xf32>
    %253 = arith.maximumf %251, %252 : vector<2x1x16xf32>
    %254 = math.rsqrt %249 : vector<2x16x1xf32>
    %255 = math.rsqrt %253 : vector<2x1x16xf32>
    %256 = vector.broadcast %254 : vector<2x16x1xf32> to vector<2x16x16xf32>
    %257 = vector.broadcast %255 : vector<2x1x16xf32> to vector<2x16x16xf32>
    %258 = arith.mulf %256, %257 : vector<2x16x16xf32>
    %259 = arith.mulf %245, %258 : vector<2x16x16xf32>
    %260 = tpu.transpose %259, [0, 2, 1] : vector<2x16x16xf32> -> vector<2x16x16xf32>
    %261 = vector.extract_strided_slice %11 {offsets = [0, 1024], sizes = [32, 128], strides = [1, 1]} : vector<32x1280xf32> to vector<32x128xf32>
    %262 = vector.shape_cast %261 : vector<32x128xf32> to vector<2x16x128xf32>
    %263 = vector.extract_strided_slice %11 {offsets = [0, 1152], sizes = [32, 128], strides = [1, 1]} : vector<32x1280xf32> to vector<32x128xf32>
    %264 = vector.shape_cast %263 : vector<32x128xf32> to vector<2x16x128xf32>
    "tpu.trace_start"() <{level = 10 : i32, message = "bij,bjf->bif"}> : () -> ()
    %cst_108 = arith.constant dense<0.000000e+00> : vector<2x16x128xf32>
    %265 = tpu.matmul %259, %262, %cst_108 {dimension_numbers = #tpu.dot_dimension_numbers<[2], [1], [1], [2], [0, 0, 0, 1, 1, 2], [0], [0]>} : vector<2x16x16xf32>, vector<2x16x128xf32>, vector<2x16x128xf32> -> vector<2x16x128xf32>
    "tpu.trace_stop"() : () -> ()
    %266 = vector.shape_cast %265 : vector<2x16x128xf32> to vector<32x128xf32>
    "tpu.trace_start"() <{level = 10 : i32, message = "bij,bjf->bif"}> : () -> ()
    %cst_109 = arith.constant dense<0.000000e+00> : vector<2x16x128xf32>
    %267 = tpu.matmul %260, %264, %cst_109 {dimension_numbers = #tpu.dot_dimension_numbers<[2], [1], [1], [2], [0, 0, 0, 1, 1, 2], [0], [0]>} : vector<2x16x16xf32>, vector<2x16x128xf32>, vector<2x16x128xf32> -> vector<2x16x128xf32>
    "tpu.trace_stop"() : () -> ()
    %268 = vector.shape_cast %267 : vector<2x16x128xf32> to vector<32x128xf32>
    %c4 = arith.constant 4 : index
    %c0_110 = arith.constant 0 : index
    %c0_111 = arith.constant 0 : index
    %269 = vector.load %arg5[%c4, %c0_110, %c0_111] : memref<5x128x128xf32, #tpu.memory_space<vmem>>, vector<1x128x128xf32>
    %270 = vector.shape_cast %269 : vector<1x128x128xf32> to vector<128x128xf32>
    %cst_112 = arith.constant dense<0.000000e+00> : vector<32x128xf32>
    %271 = tpu.matmul %266, %270, %cst_112 {dimension_numbers = #tpu.dot_dimension_numbers<[1], [0], [0], [1], [0, 0, 1, 1], [], []>} : vector<32x128xf32>, vector<128x128xf32>, vector<32x128xf32> -> vector<32x128xf32>
    %c4_113 = arith.constant 4 : index
    %c0_114 = arith.constant 0 : index
    %c0_115 = arith.constant 0 : index
    %272 = vector.load %arg6[%c4_113, %c0_114, %c0_115] : memref<5x128x128xf32, #tpu.memory_space<vmem>>, vector<1x128x128xf32>
    %273 = vector.shape_cast %272 : vector<1x128x128xf32> to vector<128x128xf32>
    %cst_116 = arith.constant dense<0.000000e+00> : vector<32x128xf32>
    %274 = tpu.matmul %268, %273, %cst_116 {dimension_numbers = #tpu.dot_dimension_numbers<[1], [0], [0], [1], [0, 0, 1, 1], [], []>} : vector<32x128xf32>, vector<128x128xf32>, vector<32x128xf32> -> vector<32x128xf32>
    %275 = arith.addf %271, %274 : vector<32x128xf32>
    %c4_117 = arith.constant 4 : index
    %c0_118 = arith.constant 0 : index
    %c0_119 = arith.constant 0 : index
    %276 = vector.load %arg7[%c4_117, %c0_118, %c0_119] : memref<5x1x128xf32, #tpu.memory_space<vmem>>, vector<1x1x128xf32>
    %277 = vector.shape_cast %276 : vector<1x1x128xf32> to vector<1x128xf32>
    %278 = vector.broadcast %277 : vector<1x128xf32> to vector<32x128xf32>
    %279 = arith.addf %275, %278 : vector<32x128xf32>
    %cst_120 = arith.constant 0.000000e+00 : f32
    %280 = vector.broadcast %cst_120 : f32 to vector<32x128xf32>
    %281 = arith.maximumf %279, %280 : vector<32x128xf32>
    %c4_121 = arith.constant 4 : index
    %c0_122 = arith.constant 0 : index
    %c0_123 = arith.constant 0 : index
    %282 = vector.load %arg8[%c4_121, %c0_122, %c0_123] : memref<5x1x128xf32, #tpu.memory_space<vmem>>, vector<1x1x128xf32>
    %283 = vector.shape_cast %282 : vector<1x1x128xf32> to vector<1x128xf32>
    %284 = vector.broadcast %283 : vector<1x128xf32> to vector<32x128xf32>
    %285 = arith.mulf %281, %284 : vector<32x128xf32>
    %cst_124 = arith.constant dense<0.000000e+00> : vector<32xf32>
    %286 = vector.multi_reduction <add>, %285, %cst_124 [1] : vector<32x128xf32> to vector<32xf32>
    %287 = vector.shape_cast %286 : vector<32xf32> to vector<32x1xf32>
    %288 = arith.maximumf %228, %287 : vector<32x1xf32>
    %289 = arith.subf %228, %288 : vector<32x1xf32>
    %290 = math.exp %289 : vector<32x1xf32>
    %291 = arith.subf %287, %288 : vector<32x1xf32>
    %292 = math.exp %291 : vector<32x1xf32>
    %293 = arith.mulf %234, %290 : vector<32x1xf32>
    %294 = arith.addf %293, %292 : vector<32x1xf32>
    %295 = vector.broadcast %290 : vector<32x1xf32> to vector<32x128xf32>
    %296 = arith.mulf %239, %295 : vector<32x128xf32>
    %297 = vector.broadcast %292 : vector<32x1xf32> to vector<32x128xf32>
    %298 = arith.mulf %297, %281 : vector<32x128xf32>
    %299 = arith.addf %296, %298 : vector<32x128xf32>
    %300 = tpu.reciprocal %294 {approx = true} : vector<32x1xf32> -> vector<32x1xf32>
    %301 = vector.broadcast %300 : vector<32x1xf32> to vector<32x128xf32>
    %302 = arith.mulf %299, %301 : vector<32x128xf32>
    %cst_125 = arith.constant dense<0.000000e+00> : vector<32xf32>
    %303 = vector.multi_reduction <add>, %302, %cst_125 [1] : vector<32x128xf32> to vector<32xf32>
    %304 = vector.shape_cast %303 : vector<32xf32> to vector<32x1xf32>
    %cst_126 = arith.constant 3.125000e-02 : f32
    %305 = vector.broadcast %cst_126 : f32 to vector<32x1xf32>
    %306 = arith.mulf %304, %305 : vector<32x1xf32>
    %307 = tpu.iota {dimensions = array<i32: 1>} : vector<1x128xi32>
    %c32_i32 = arith.constant 32 : i32
    %308 = vector.broadcast %c32_i32 : i32 to vector<1x128xi32>
    %309 = arith.cmpi slt, %307, %308 : vector<1x128xi32>
    %310 = vector.broadcast %306 : vector<32x1xf32> to vector<32x128xf32>
    %311 = arith.subf %302, %310 : vector<32x128xf32>
    %cst_127 = arith.constant 0.000000e+00 : f32
    %312 = vector.shape_cast %309 : vector<1x128xi1> to vector<1x128xi1>
    %313 = vector.broadcast %312 : vector<1x128xi1> to vector<32x128xi1>
    %314 = vector.broadcast %cst_127 : f32 to vector<32x128xf32>
    %315 = arith.select %313, %311, %314 : vector<32x128xi1>, vector<32x128xf32>
    %316 = arith.mulf %315, %315 : vector<32x128xf32>
    %cst_128 = arith.constant dense<0.000000e+00> : vector<32xf32>
    %317 = vector.multi_reduction <add>, %316, %cst_128 [1] : vector<32x128xf32> to vector<32xf32>
    %318 = vector.shape_cast %317 : vector<32xf32> to vector<32x1xf32>
    %cst_129 = arith.constant 3.125000e-02 : f32
    %319 = vector.broadcast %cst_129 : f32 to vector<32x1xf32>
    %320 = arith.mulf %318, %319 : vector<32x1xf32>
    %cst_130 = arith.constant 9.99999974E-6 : f32
    %321 = vector.broadcast %cst_130 : f32 to vector<32x1xf32>
    %322 = arith.addf %320, %321 : vector<32x1xf32>
    %323 = math.rsqrt %322 : vector<32x1xf32>
    %324 = vector.broadcast %323 : vector<32x1xf32> to vector<32x128xf32>
    %325 = arith.mulf %311, %324 : vector<32x128xf32>
    %c0_131 = arith.constant 0 : index
    %c0_132 = arith.constant 0 : index
    %326 = vector.load %arg9[%c0_131, %c0_132] : memref<1x128xf32, #tpu.memory_space<vmem>>, vector<1x128xf32>
    %327 = vector.broadcast %326 : vector<1x128xf32> to vector<32x128xf32>
    %328 = arith.mulf %325, %327 : vector<32x128xf32>
    %c0_133 = arith.constant 0 : index
    %c0_134 = arith.constant 0 : index
    %329 = vector.load %arg10[%c0_133, %c0_134] : memref<1x128xf32, #tpu.memory_space<vmem>>, vector<1x128xf32>
    %330 = vector.broadcast %329 : vector<1x128xf32> to vector<32x128xf32>
    %331 = arith.addf %328, %330 : vector<32x128xf32>
    %cst_135 = arith.constant 0.000000e+00 : f32
    %332 = vector.broadcast %cst_135 : f32 to vector<32x128xf32>
    %333 = arith.maximumf %331, %332 : vector<32x128xf32>
    %334 = vector.shape_cast %333 : vector<32x128xf32> to vector<2x16x128xf32>
    %c0_136 = arith.constant 0 : index
    %c0_137 = arith.constant 0 : index
    %c0_138 = arith.constant 0 : index
    %335 = vector.load %arg11[%c0_136, %c0_137, %c0_138] : memref<2x16x128xf32, #tpu.memory_space<vmem>>, vector<2x16x128xf32>
    tpu.vector_store %arg11[%c0_136, %c0_137, %c0_138], %334 {strides = array<i32>} : memref<2x16x128xf32, #tpu.memory_space<vmem>>, vector<2x16x128xf32>,
    return
  }
  func.func @transform_0(%arg0: i32) -> (i32, i32, i32) {
    %c0_i32 = arith.constant 0 : i32
    %c0_i32_0 = arith.constant 0 : i32
    %c0_i32_1 = arith.constant 0 : i32
    return %arg0, %c0_i32, %c0_i32_0 : i32, i32, i32
  }
  func.func @transform_1(%arg0: i32) -> (i32, i32, i32) {
    %c0_i32 = arith.constant 0 : i32
    %c0_i32_0 = arith.constant 0 : i32
    %c0_i32_1 = arith.constant 0 : i32
    return %arg0, %c0_i32, %c0_i32_0 : i32, i32, i32
  }
  func.func @transform_2(%arg0: i32) -> (i32, i32) {
    %c0_i32 = arith.constant 0 : i32
    %c0_i32_0 = arith.constant 0 : i32
    %c0_i32_1 = arith.constant 0 : i32
    return %c0_i32, %c0_i32_0 : i32, i32
  }
  func.func @transform_3(%arg0: i32) -> (i32, i32) {
    %c0_i32 = arith.constant 0 : i32
    %c0_i32_0 = arith.constant 0 : i32
    %c0_i32_1 = arith.constant 0 : i32
    return %c0_i32, %c0_i32_0 : i32, i32
  }
  func.func @transform_4(%arg0: i32) -> (i32, i32, i32) {
    %c0_i32 = arith.constant 0 : i32
    %c0_i32_0 = arith.constant 0 : i32
    %c0_i32_1 = arith.constant 0 : i32
    %c0_i32_2 = arith.constant 0 : i32
    return %c0_i32, %c0_i32_0, %c0_i32_1 : i32, i32, i32
  }
  func.func @transform_5(%arg0: i32) -> (i32, i32, i32) {
    %c0_i32 = arith.constant 0 : i32
    %c0_i32_0 = arith.constant 0 : i32
    %c0_i32_1 = arith.constant 0 : i32
    %c0_i32_2 = arith.constant 0 : i32
    return %c0_i32, %c0_i32_0, %c0_i32_1 : i32, i32, i32
  }
  func.func @transform_6(%arg0: i32) -> (i32, i32, i32) {
    %c0_i32 = arith.constant 0 : i32
    %c0_i32_0 = arith.constant 0 : i32
    %c0_i32_1 = arith.constant 0 : i32
    %c0_i32_2 = arith.constant 0 : i32
    return %c0_i32, %c0_i32_0, %c0_i32_1 : i32, i32, i32
  }
  func.func @transform_7(%arg0: i32) -> (i32, i32, i32) {
    %c0_i32 = arith.constant 0 : i32
    %c0_i32_0 = arith.constant 0 : i32
    %c0_i32_1 = arith.constant 0 : i32
    %c0_i32_2 = arith.constant 0 : i32
    return %c0_i32, %c0_i32_0, %c0_i32_1 : i32, i32, i32
  }
  func.func @transform_8(%arg0: i32) -> (i32, i32) {
    %c0_i32 = arith.constant 0 : i32
    %c0_i32_0 = arith.constant 0 : i32
    %c0_i32_1 = arith.constant 0 : i32
    return %c0_i32, %c0_i32_0 : i32, i32
  }
  func.func @transform_9(%arg0: i32) -> (i32, i32) {
    %c0_i32 = arith.constant 0 : i32
    %c0_i32_0 = arith.constant 0 : i32
    %c0_i32_1 = arith.constant 0 : i32
    return %c0_i32, %c0_i32_0 : i32, i32
  }
  func.func @transform_10(%arg0: i32) -> (i32, i32, i32) {
    %c0_i32 = arith.constant 0 : i32
    %c0_i32_0 = arith.constant 0 : i32
    %c0_i32_1 = arith.constant 0 : i32
    return %arg0, %c0_i32, %c0_i32_0 : i32, i32, i32
  }
}

module attributes {stable_mosaic.version = 11 : i64} {
  func.func @kernel(%arg0: i32, %arg1: memref<2x16x32xf32, #tpu.memory_space<vmem>>, %arg2: memref<2x16x16xf32, #tpu.memory_space<vmem>>, %arg3: memref<32x1280xf32, #tpu.memory_space<vmem>>, %arg4: memref<1x1280xf32, #tpu.memory_space<vmem>>, %arg5: memref<5x128x128xf32, #tpu.memory_space<vmem>>, %arg6: memref<5x128x128xf32, #tpu.memory_space<vmem>>, %arg7: memref<5x1x128xf32, #tpu.memory_space<vmem>>, %arg8: memref<5x1x128xf32, #tpu.memory_space<vmem>>, %arg9: memref<1x128xf32, #tpu.memory_space<vmem>>, %arg10: memref<1x128xf32, #tpu.memory_space<vmem>>, %arg11: memref<2x16x128xf32, #tpu.memory_space<vmem>>) attributes {dimension_semantics = [#tpu.dimension_semantics<parallel>], iteration_bounds = array<i64: 1>, scalar_prefetch = 0 : i64, scratch_operands = 0 : i64, tpu.core_type = #tpu.core_type<tc>, window_params = [{transform_indices = @transform_0, window_bounds = array<i64: 2, 16, 32>}, {transform_indices = @transform_1, window_bounds = array<i64: 2, 16, 16>}, {pipeline_mode = #tpu.pipeline_mode<synchronous>, transform_indices = @transform_2, window_bounds = array<i64: 32, 1280>}, {pipeline_mode = #tpu.pipeline_mode<synchronous>, transform_indices = @transform_3, window_bounds = array<i64: 1, 1280>}, {pipeline_mode = #tpu.pipeline_mode<synchronous>, transform_indices = @transform_4, window_bounds = array<i64: 5, 128, 128>}, {pipeline_mode = #tpu.pipeline_mode<synchronous>, transform_indices = @transform_5, window_bounds = array<i64: 5, 128, 128>}, {pipeline_mode = #tpu.pipeline_mode<synchronous>, transform_indices = @transform_6, window_bounds = array<i64: 5, 1, 128>}, {pipeline_mode = #tpu.pipeline_mode<synchronous>, transform_indices = @transform_7, window_bounds = array<i64: 5, 1, 128>}, {pipeline_mode = #tpu.pipeline_mode<synchronous>, transform_indices = @transform_8, window_bounds = array<i64: 1, 128>}, {pipeline_mode = #tpu.pipeline_mode<synchronous>, transform_indices = @transform_9, window_bounds = array<i64: 1, 128>}, {transform_indices = @transform_10, window_bounds = array<i64: 2, 16, 128>}]} {
    %c0 = arith.constant 0 : index
    %c0_0 = arith.constant 0 : index
    %c0_1 = arith.constant 0 : index
    %0 = vector.load %arg1[%c0, %c0_0, %c0_1] : memref<2x16x32xf32, #tpu.memory_space<vmem>>, vector<2x16x32xf32>
    %1 = vector.shape_cast %0 : vector<2x16x32xf32> to vector<32x32xf32>
    %c0_2 = arith.constant 0 : index
    %c0_3 = arith.constant 0 : index
    %c0_4 = arith.constant 0 : index
    %2 = vector.load %arg2[%c0_2, %c0_3, %c0_4] : memref<2x16x16xf32, #tpu.memory_space<vmem>>, vector<2x16x16xf32>
    %3 = tpu.iota {dimensions = array<i32: 0>} : vector<16x16xi32>
    %4 = tpu.iota {dimensions = array<i32: 1>} : vector<16x16xi32>
    %5 = arith.cmpi eq, %3, %4 : vector<16x16xi32>
    %6 = vector.shape_cast %5 : vector<16x16xi1> to vector<1x16x16xi1>
    %c0_5 = arith.constant 0 : index
    %c0_6 = arith.constant 0 : index
    %7 = vector.load %arg3[%c0_5, %c0_6] : memref<32x1280xf32, #tpu.memory_space<vmem>>, vector<32x1280xf32>
    %cst = arith.constant dense<0.000000e+00> : vector<32x1280xf32>
    %8 = tpu.matmul %1, %7, %cst {dimension_numbers = #tpu.dot_dimension_numbers<[1], [0], [0], [1], [0, 0, 1, 1], [], []>} : vector<32x32xf32>, vector<32x1280xf32>, vector<32x1280xf32> -> vector<32x1280xf32>
    %c0_7 = arith.constant 0 : index
    %c0_8 = arith.constant 0 : index
    %9 = vector.load %arg4[%c0_7, %c0_8] : memref<1x1280xf32, #tpu.memory_space<vmem>>, vector<1x1280xf32>
    %10 = vector.broadcast %9 : vector<1x1280xf32> to vector<32x1280xf32>
    %11 = arith.addf %8, %10 : vector<32x1280xf32>
    %cst_9 = arith.constant 1.000000e+00 : f32
    %12 = vector.broadcast %cst_9 : f32 to vector<2x16x16xf32>
    %13 = arith.addf %2, %12 : vector<2x16x16xf32>
    %14 = vector.shape_cast %6 : vector<1x16x16xi1> to vector<1x16x16xi1>
    %15 = vector.broadcast %14 : vector<1x16x16xi1> to vector<2x16x16xi1>
    %16 = arith.select %15, %13, %2 : vector<2x16x16xi1>, vector<2x16x16xf32>
    %cst_10 = arith.constant dense<0.000000e+00> : vector<2x16xf32>
    %17 = vector.multi_reduction <add>, %16, %cst_10 [2] : vector<2x16x16xf32> to vector<2x16xf32>
    %18 = vector.shape_cast %17 : vector<2x16xf32> to vector<2x16x1xf32>
    %cst_11 = arith.constant 9.99999996E-13 : f32
    %19 = vector.broadcast %cst_11 : f32 to vector<2x16x1xf32>
    %20 = arith.maximumf %18, %19 : vector<2x16x1xf32>
    %cst_12 = arith.constant dense<0.000000e+00> : vector<2x16xf32>
    %21 = vector.multi_reduction <add>, %16, %cst_12 [1] : vector<2x16x16xf32> to vector<2x16xf32>
    %22 = vector.shape_cast %21 : vector<2x16xf32> to vector<2x1x16xf32>
    %cst_13 = arith.constant 9.99999996E-13 : f32
    %23 = vector.broadcast %cst_13 : f32 to vector<2x1x16xf32>
    %24 = arith.maximumf %22, %23 : vector<2x1x16xf32>
    %25 = math.rsqrt %20 : vector<2x16x1xf32>
    %26 = math.rsqrt %24 : vector<2x1x16xf32>
    %27 = vector.broadcast %25 : vector<2x16x1xf32> to vector<2x16x16xf32>
    %28 = vector.broadcast %26 : vector<2x1x16xf32> to vector<2x16x16xf32>
    %29 = arith.mulf %27, %28 : vector<2x16x16xf32>
    %30 = arith.mulf %16, %29 : vector<2x16x16xf32>
    %31 = tpu.transpose %30, [0, 2, 1] : vector<2x16x16xf32> -> vector<2x16x16xf32>
    %32 = vector.extract_strided_slice %11 {offsets = [0, 0], sizes = [32, 128], strides = [1, 1]} : vector<32x1280xf32> to vector<32x128xf32>
    %33 = vector.shape_cast %32 : vector<32x128xf32> to vector<2x16x128xf32>
    %34 = vector.extract_strided_slice %11 {offsets = [0, 128], sizes = [32, 128], strides = [1, 1]} : vector<32x1280xf32> to vector<32x128xf32>
    %35 = vector.shape_cast %34 : vector<32x128xf32> to vector<2x16x128xf32>
    "tpu.trace_start"() <{level = 10 : i32, message = "bij,bjf->bif"}> : () -> ()
    %cst_14 = arith.constant dense<0.000000e+00> : vector<2x16x128xf32>
    %36 = tpu.matmul %30, %33, %cst_14 {dimension_numbers = #tpu.dot_dimension_numbers<[2], [1], [1], [2], [0, 0, 0, 1, 1, 2], [0], [0]>} : vector<2x16x16xf32>, vector<2x16x128xf32>, vector<2x16x128xf32> -> vector<2x16x128xf32>
    "tpu.trace_stop"() : () -> ()
    %37 = vector.shape_cast %36 : vector<2x16x128xf32> to vector<32x128xf32>
    "tpu.trace_start"() <{level = 10 : i32, message = "bij,bjf->bif"}> : () -> ()
    %cst_15 = arith.constant dense<0.000000e+00> : vector<2x16x128xf32>
    %38 = tpu.matmul %31, %35, %cst_15 {dimension_numbers = #tpu.dot_dimension_numbers<[2], [1], [1], [2], [0, 0, 0, 1, 1, 2], [0], [0]>} : vector<2x16x16xf32>, vector<2x16x128xf32>, vector<2x16x128xf32> -> vector<2x16x128xf32>
    "tpu.trace_stop"() : () -> ()
    %39 = vector.shape_cast %38 : vector<2x16x128xf32> to vector<32x128xf32>
    %c0_16 = arith.constant 0 : index
    %c0_17 = arith.constant 0 : index
    %c0_18 = arith.constant 0 : index
    %40 = vector.load %arg5[%c0_16, %c0_17, %c0_18] : memref<5x128x128xf32, #tpu.memory_space<vmem>>, vector<1x128x128xf32>
    %41 = vector.shape_cast %40 : vector<1x128x128xf32> to vector<128x128xf32>
    %cst_19 = arith.constant dense<0.000000e+00> : vector<32x128xf32>
    %42 = tpu.matmul %37, %41, %cst_19 {dimension_numbers = #tpu.dot_dimension_numbers<[1], [0], [0], [1], [0, 0, 1, 1], [], []>} : vector<32x128xf32>, vector<128x128xf32>, vector<32x128xf32> -> vector<32x128xf32>
    %c0_20 = arith.constant 0 : index
    %c0_21 = arith.constant 0 : index
    %c0_22 = arith.constant 0 : index
    %43 = vector.load %arg6[%c0_20, %c0_21, %c0_22] : memref<5x128x128xf32, #tpu.memory_space<vmem>>, vector<1x128x128xf32>
    %44 = vector.shape_cast %43 : vector<1x128x128xf32> to vector<128x128xf32>
    %cst_23 = arith.constant dense<0.000000e+00> : vector<32x128xf32>
    %45 = tpu.matmul %39, %44, %cst_23 {dimension_numbers = #tpu.dot_dimension_numbers<[1], [0], [0], [1], [0, 0, 1, 1], [], []>} : vector<32x128xf32>, vector<128x128xf32>, vector<32x128xf32> -> vector<32x128xf32>
    %46 = arith.addf %42, %45 : vector<32x128xf32>
    %c0_24 = arith.constant 0 : index
    %c0_25 = arith.constant 0 : index
    %c0_26 = arith.constant 0 : index
    %47 = vector.load %arg7[%c0_24, %c0_25, %c0_26] : memref<5x1x128xf32, #tpu.memory_space<vmem>>, vector<1x1x128xf32>
    %48 = vector.shape_cast %47 : vector<1x1x128xf32> to vector<1x128xf32>
    %49 = vector.broadcast %48 : vector<1x128xf32> to vector<32x128xf32>
    %50 = arith.addf %46, %49 : vector<32x128xf32>
    %cst_27 = arith.constant 0.000000e+00 : f32
    %51 = vector.broadcast %cst_27 : f32 to vector<32x128xf32>
    %52 = arith.maximumf %50, %51 : vector<32x128xf32>
    %c0_28 = arith.constant 0 : index
    %c0_29 = arith.constant 0 : index
    %c0_30 = arith.constant 0 : index
    %53 = vector.load %arg8[%c0_28, %c0_29, %c0_30] : memref<5x1x128xf32, #tpu.memory_space<vmem>>, vector<1x1x128xf32>
    %54 = vector.shape_cast %53 : vector<1x1x128xf32> to vector<1x128xf32>
    %55 = vector.broadcast %54 : vector<1x128xf32> to vector<32x128xf32>
    %56 = arith.mulf %52, %55 : vector<32x128xf32>
    %cst_31 = arith.constant dense<0.000000e+00> : vector<32xf32>
    %57 = vector.multi_reduction <add>, %56, %cst_31 [1] : vector<32x128xf32> to vector<32xf32>
    %58 = vector.shape_cast %57 : vector<32xf32> to vector<32x1xf32>
    %cst_32 = arith.constant 1.000000e+00 : f32
    %59 = vector.broadcast %cst_32 : f32 to vector<32x1xf32>
    "tpu.trace_start"() <{level = 10 : i32, message = "bij,bjk->bik"}> : () -> ()
    %cst_33 = arith.constant dense<0.000000e+00> : vector<2x16x16xf32>
    %60 = tpu.matmul %2, %2, %cst_33 {dimension_numbers = #tpu.dot_dimension_numbers<[2], [1], [1], [2], [0, 0, 0, 1, 1, 2], [0], [0]>} : vector<2x16x16xf32>, vector<2x16x16xf32>, vector<2x16x16xf32> -> vector<2x16x16xf32>
    "tpu.trace_stop"() : () -> ()
    %cst_34 = arith.constant 1.000000e+00 : f32
    %61 = vector.broadcast %cst_34 : f32 to vector<2x16x16xf32>
    %62 = arith.addf %60, %61 : vector<2x16x16xf32>
    %63 = vector.shape_cast %6 : vector<1x16x16xi1> to vector<1x16x16xi1>
    %64 = vector.broadcast %63 : vector<1x16x16xi1> to vector<2x16x16xi1>
    %65 = arith.select %64, %62, %60 : vector<2x16x16xi1>, vector<2x16x16xf32>
    %cst_35 = arith.constant dense<0.000000e+00> : vector<2x16xf32>
    %66 = vector.multi_reduction <add>, %65, %cst_35 [2] : vector<2x16x16xf32> to vector<2x16xf32>
    %67 = vector.shape_cast %66 : vector<2x16xf32> to vector<2x16x1xf32>
    %cst_36 = arith.constant 9.99999996E-13 : f32
    %68 = vector.broadcast %cst_36 : f32 to vector<2x16x1xf32>
    %69 = arith.maximumf %67, %68 : vector<2x16x1xf32>
    %cst_37 = arith.constant dense<0.000000e+00> : vector<2x16xf32>
    %70 = vector.multi_reduction <add>, %65, %cst_37 [1] : vector<2x16x16xf32> to vector<2x16xf32>
    %71 = vector.shape_cast %70 : vector<2x16xf32> to vector<2x1x16xf32>
    %cst_38 = arith.constant 9.99999996E-13 : f32
    %72 = vector.broadcast %cst_38 : f32 to vector<2x1x16xf32>
    %73 = arith.maximumf %71, %72 : vector<2x1x16xf32>
    %74 = math.rsqrt %69 : vector<2x16x1xf32>
    %75 = math.rsqrt %73 : vector<2x1x16xf32>
    %76 = vector.broadcast %74 : vector<2x16x1xf32> to vector<2x16x16xf32>
    %77 = vector.broadcast %75 : vector<2x1x16xf32> to vector<2x16x16xf32>
    %78 = arith.mulf %76, %77 : vector<2x16x16xf32>
    %79 = arith.mulf %65, %78 : vector<2x16x16xf32>
    %80 = tpu.transpose %79, [0, 2, 1] : vector<2x16x16xf32> -> vector<2x16x16xf32>
    %81 = vector.extract_strided_slice %11 {offsets = [0, 256], sizes = [32, 128], strides = [1, 1]} : vector<32x1280xf32> to vector<32x128xf32>
    %82 = vector.shape_cast %81 : vector<32x128xf32> to vector<2x16x128xf32>
    %83 = vector.extract_strided_slice %11 {offsets = [0, 384], sizes = [32, 128], strides = [1, 1]} : vector<32x1280xf32> to vector<32x128xf32>
    %84 = vector.shape_cast %83 : vector<32x128xf32> to vector<2x16x128xf32>
    "tpu.trace_start"() <{level = 10 : i32, message = "bij,bjf->bif"}> : () -> ()
    %cst_39 = arith.constant dense<0.000000e+00> : vector<2x16x128xf32>
    %85 = tpu.matmul %79, %82, %cst_39 {dimension_numbers = #tpu.dot_dimension_numbers<[2], [1], [1], [2], [0, 0, 0, 1, 1, 2], [0], [0]>} : vector<2x16x16xf32>, vector<2x16x128xf32>, vector<2x16x128xf32> -> vector<2x16x128xf32>
    "tpu.trace_stop"() : () -> ()
    %86 = vector.shape_cast %85 : vector<2x16x128xf32> to vector<32x128xf32>
    "tpu.trace_start"() <{level = 10 : i32, message = "bij,bjf->bif"}> : () -> ()
    %cst_40 = arith.constant dense<0.000000e+00> : vector<2x16x128xf32>
    %87 = tpu.matmul %80, %84, %cst_40 {dimension_numbers = #tpu.dot_dimension_numbers<[2], [1], [1], [2], [0, 0, 0, 1, 1, 2], [0], [0]>} : vector<2x16x16xf32>, vector<2x16x128xf32>, vector<2x16x128xf32> -> vector<2x16x128xf32>
    "tpu.trace_stop"() : () -> ()
    %88 = vector.shape_cast %87 : vector<2x16x128xf32> to vector<32x128xf32>
    %c1 = arith.constant 1 : index
    %c0_41 = arith.constant 0 : index
    %c0_42 = arith.constant 0 : index
    %89 = vector.load %arg5[%c1, %c0_41, %c0_42] : memref<5x128x128xf32, #tpu.memory_space<vmem>>, vector<1x128x128xf32>
    %90 = vector.shape_cast %89 : vector<1x128x128xf32> to vector<128x128xf32>
    %cst_43 = arith.constant dense<0.000000e+00> : vector<32x128xf32>
    %91 = tpu.matmul %86, %90, %cst_43 {dimension_numbers = #tpu.dot_dimension_numbers<[1], [0], [0], [1], [0, 0, 1, 1], [], []>} : vector<32x128xf32>, vector<128x128xf32>, vector<32x128xf32> -> vector<32x128xf32>
    %c1_44 = arith.constant 1 : index
    %c0_45 = arith.constant 0 : index
    %c0_46 = arith.constant 0 : index
    %92 = vector.load %arg6[%c1_44, %c0_45, %c0_46] : memref<5x128x128xf32, #tpu.memory_space<vmem>>, vector<1x128x128xf32>
    %93 = vector.shape_cast %92 : vector<1x128x128xf32> to vector<128x128xf32>
    %cst_47 = arith.constant dense<0.000000e+00> : vector<32x128xf32>
    %94 = tpu.matmul %88, %93, %cst_47 {dimension_numbers = #tpu.dot_dimension_numbers<[1], [0], [0], [1], [0, 0, 1, 1], [], []>} : vector<32x128xf32>, vector<128x128xf32>, vector<32x128xf32> -> vector<32x128xf32>
    %95 = arith.addf %91, %94 : vector<32x128xf32>
    %c1_48 = arith.constant 1 : index
    %c0_49 = arith.constant 0 : index
    %c0_50 = arith.constant 0 : index
    %96 = vector.load %arg7[%c1_48, %c0_49, %c0_50] : memref<5x1x128xf32, #tpu.memory_space<vmem>>, vector<1x1x128xf32>
    %97 = vector.shape_cast %96 : vector<1x1x128xf32> to vector<1x128xf32>
    %98 = vector.broadcast %97 : vector<1x128xf32> to vector<32x128xf32>
    %99 = arith.addf %95, %98 : vector<32x128xf32>
    %cst_51 = arith.constant 0.000000e+00 : f32
    %100 = vector.broadcast %cst_51 : f32 to vector<32x128xf32>
    %101 = arith.maximumf %99, %100 : vector<32x128xf32>
    %c1_52 = arith.constant 1 : index
    %c0_53 = arith.constant 0 : index
    %c0_54 = arith.constant 0 : index
    %102 = vector.load %arg8[%c1_52, %c0_53, %c0_54] : memref<5x1x128xf32, #tpu.memory_space<vmem>>, vector<1x1x128xf32>
    %103 = vector.shape_cast %102 : vector<1x1x128xf32> to vector<1x128xf32>
    %104 = vector.broadcast %103 : vector<1x128xf32> to vector<32x128xf32>
    %105 = arith.mulf %101, %104 : vector<32x128xf32>
    %cst_55 = arith.constant dense<0.000000e+00> : vector<32xf32>
    %106 = vector.multi_reduction <add>, %105, %cst_55 [1] : vector<32x128xf32> to vector<32xf32>
    %107 = vector.shape_cast %106 : vector<32xf32> to vector<32x1xf32>
    %108 = arith.maximumf %58, %107 : vector<32x1xf32>
    %109 = arith.subf %58, %108 : vector<32x1xf32>
    %110 = math.exp %109 : vector<32x1xf32>
    %111 = arith.subf %107, %108 : vector<32x1xf32>
    %112 = math.exp %111 : vector<32x1xf32>
    %113 = arith.mulf %59, %110 : vector<32x1xf32>
    %114 = arith.addf %113, %112 : vector<32x1xf32>
    %115 = vector.broadcast %110 : vector<32x1xf32> to vector<32x128xf32>
    %116 = arith.mulf %52, %115 : vector<32x128xf32>
    %117 = vector.broadcast %112 : vector<32x1xf32> to vector<32x128xf32>
    %118 = arith.mulf %117, %101 : vector<32x128xf32>
    %119 = arith.addf %116, %118 : vector<32x128xf32>
    "tpu.trace_start"() <{level = 10 : i32, message = "bij,bjk->bik"}> : () -> ()
    %cst_56 = arith.constant dense<0.000000e+00> : vector<2x16x16xf32>
    %120 = tpu.matmul %60, %2, %cst_56 {dimension_numbers = #tpu.dot_dimension_numbers<[2], [1], [1], [2], [0, 0, 0, 1, 1, 2], [0], [0]>} : vector<2x16x16xf32>, vector<2x16x16xf32>, vector<2x16x16xf32> -> vector<2x16x16xf32>
    "tpu.trace_stop"() : () -> ()
    %cst_57 = arith.constant 1.000000e+00 : f32
    %121 = vector.broadcast %cst_57 : f32 to vector<2x16x16xf32>
    %122 = arith.addf %120, %121 : vector<2x16x16xf32>
    %123 = vector.shape_cast %6 : vector<1x16x16xi1> to vector<1x16x16xi1>
    %124 = vector.broadcast %123 : vector<1x16x16xi1> to vector<2x16x16xi1>
    %125 = arith.select %124, %122, %120 : vector<2x16x16xi1>, vector<2x16x16xf32>
    %cst_58 = arith.constant dense<0.000000e+00> : vector<2x16xf32>
    %126 = vector.multi_reduction <add>, %125, %cst_58 [2] : vector<2x16x16xf32> to vector<2x16xf32>
    %127 = vector.shape_cast %126 : vector<2x16xf32> to vector<2x16x1xf32>
    %cst_59 = arith.constant 9.99999996E-13 : f32
    %128 = vector.broadcast %cst_59 : f32 to vector<2x16x1xf32>
    %129 = arith.maximumf %127, %128 : vector<2x16x1xf32>
    %cst_60 = arith.constant dense<0.000000e+00> : vector<2x16xf32>
    %130 = vector.multi_reduction <add>, %125, %cst_60 [1] : vector<2x16x16xf32> to vector<2x16xf32>
    %131 = vector.shape_cast %130 : vector<2x16xf32> to vector<2x1x16xf32>
    %cst_61 = arith.constant 9.99999996E-13 : f32
    %132 = vector.broadcast %cst_61 : f32 to vector<2x1x16xf32>
    %133 = arith.maximumf %131, %132 : vector<2x1x16xf32>
    %134 = math.rsqrt %129 : vector<2x16x1xf32>
    %135 = math.rsqrt %133 : vector<2x1x16xf32>
    %136 = vector.broadcast %134 : vector<2x16x1xf32> to vector<2x16x16xf32>
    %137 = vector.broadcast %135 : vector<2x1x16xf32> to vector<2x16x16xf32>
    %138 = arith.mulf %136, %137 : vector<2x16x16xf32>
    %139 = arith.mulf %125, %138 : vector<2x16x16xf32>
    %140 = tpu.transpose %139, [0, 2, 1] : vector<2x16x16xf32> -> vector<2x16x16xf32>
    %141 = vector.extract_strided_slice %11 {offsets = [0, 512], sizes = [32, 128], strides = [1, 1]} : vector<32x1280xf32> to vector<32x128xf32>
    %142 = vector.shape_cast %141 : vector<32x128xf32> to vector<2x16x128xf32>
    %143 = vector.extract_strided_slice %11 {offsets = [0, 640], sizes = [32, 128], strides = [1, 1]} : vector<32x1280xf32> to vector<32x128xf32>
    %144 = vector.shape_cast %143 : vector<32x128xf32> to vector<2x16x128xf32>
    "tpu.trace_start"() <{level = 10 : i32, message = "bij,bjf->bif"}> : () -> ()
    %cst_62 = arith.constant dense<0.000000e+00> : vector<2x16x128xf32>
    %145 = tpu.matmul %139, %142, %cst_62 {dimension_numbers = #tpu.dot_dimension_numbers<[2], [1], [1], [2], [0, 0, 0, 1, 1, 2], [0], [0]>} : vector<2x16x16xf32>, vector<2x16x128xf32>, vector<2x16x128xf32> -> vector<2x16x128xf32>
    "tpu.trace_stop"() : () -> ()
    %146 = vector.shape_cast %145 : vector<2x16x128xf32> to vector<32x128xf32>
    "tpu.trace_start"() <{level = 10 : i32, message = "bij,bjf->bif"}> : () -> ()
    %cst_63 = arith.constant dense<0.000000e+00> : vector<2x16x128xf32>
    %147 = tpu.matmul %140, %144, %cst_63 {dimension_numbers = #tpu.dot_dimension_numbers<[2], [1], [1], [2], [0, 0, 0, 1, 1, 2], [0], [0]>} : vector<2x16x16xf32>, vector<2x16x128xf32>, vector<2x16x128xf32> -> vector<2x16x128xf32>
    "tpu.trace_stop"() : () -> ()
    %148 = vector.shape_cast %147 : vector<2x16x128xf32> to vector<32x128xf32>
    %c2 = arith.constant 2 : index
    %c0_64 = arith.constant 0 : index
    %c0_65 = arith.constant 0 : index
    %149 = vector.load %arg5[%c2, %c0_64, %c0_65] : memref<5x128x128xf32, #tpu.memory_space<vmem>>, vector<1x128x128xf32>
    %150 = vector.shape_cast %149 : vector<1x128x128xf32> to vector<128x128xf32>
    %cst_66 = arith.constant dense<0.000000e+00> : vector<32x128xf32>
    %151 = tpu.matmul %146, %150, %cst_66 {dimension_numbers = #tpu.dot_dimension_numbers<[1], [0], [0], [1], [0, 0, 1, 1], [], []>} : vector<32x128xf32>, vector<128x128xf32>, vector<32x128xf32> -> vector<32x128xf32>
    %c2_67 = arith.constant 2 : index
    %c0_68 = arith.constant 0 : index
    %c0_69 = arith.constant 0 : index
    %152 = vector.load %arg6[%c2_67, %c0_68, %c0_69] : memref<5x128x128xf32, #tpu.memory_space<vmem>>, vector<1x128x128xf32>
    %153 = vector.shape_cast %152 : vector<1x128x128xf32> to vector<128x128xf32>
    %cst_70 = arith.constant dense<0.000000e+00> : vector<32x128xf32>
    %154 = tpu.matmul %148, %153, %cst_70 {dimension_numbers = #tpu.dot_dimension_numbers<[1], [0], [0], [1], [0, 0, 1, 1], [], []>} : vector<32x128xf32>, vector<128x128xf32>, vector<32x128xf32> -> vector<32x128xf32>
    %155 = arith.addf %151, %154 : vector<32x128xf32>
    %c2_71 = arith.constant 2 : index
    %c0_72 = arith.constant 0 : index
    %c0_73 = arith.constant 0 : index
    %156 = vector.load %arg7[%c2_71, %c0_72, %c0_73] : memref<5x1x128xf32, #tpu.memory_space<vmem>>, vector<1x1x128xf32>
    %157 = vector.shape_cast %156 : vector<1x1x128xf32> to vector<1x128xf32>
    %158 = vector.broadcast %157 : vector<1x128xf32> to vector<32x128xf32>
    %159 = arith.addf %155, %158 : vector<32x128xf32>
    %cst_74 = arith.constant 0.000000e+00 : f32
    %160 = vector.broadcast %cst_74 : f32 to vector<32x128xf32>
    %161 = arith.maximumf %159, %160 : vector<32x128xf32>
    %c2_75 = arith.constant 2 : index
    %c0_76 = arith.constant 0 : index
    %c0_77 = arith.constant 0 : index
    %162 = vector.load %arg8[%c2_75, %c0_76, %c0_77] : memref<5x1x128xf32, #tpu.memory_space<vmem>>, vector<1x1x128xf32>
    %163 = vector.shape_cast %162 : vector<1x1x128xf32> to vector<1x128xf32>
    %164 = vector.broadcast %163 : vector<1x128xf32> to vector<32x128xf32>
    %165 = arith.mulf %161, %164 : vector<32x128xf32>
    %cst_78 = arith.constant dense<0.000000e+00> : vector<32xf32>
    %166 = vector.multi_reduction <add>, %165, %cst_78 [1] : vector<32x128xf32> to vector<32xf32>
    %167 = vector.shape_cast %166 : vector<32xf32> to vector<32x1xf32>
    %168 = arith.maximumf %108, %167 : vector<32x1xf32>
    %169 = arith.subf %108, %168 : vector<32x1xf32>
    %170 = math.exp %169 : vector<32x1xf32>
    %171 = arith.subf %167, %168 : vector<32x1xf32>
    %172 = math.exp %171 : vector<32x1xf32>
    %173 = arith.mulf %114, %170 : vector<32x1xf32>
    %174 = arith.addf %173, %172 : vector<32x1xf32>
    %175 = vector.broadcast %170 : vector<32x1xf32> to vector<32x128xf32>
    %176 = arith.mulf %119, %175 : vector<32x128xf32>
    %177 = vector.broadcast %172 : vector<32x1xf32> to vector<32x128xf32>
    %178 = arith.mulf %177, %161 : vector<32x128xf32>
    %179 = arith.addf %176, %178 : vector<32x128xf32>
    "tpu.trace_start"() <{level = 10 : i32, message = "bij,bjk->bik"}> : () -> ()
    %cst_79 = arith.constant dense<0.000000e+00> : vector<2x16x16xf32>
    %180 = tpu.matmul %120, %2, %cst_79 {dimension_numbers = #tpu.dot_dimension_numbers<[2], [1], [1], [2], [0, 0, 0, 1, 1, 2], [0], [0]>} : vector<2x16x16xf32>, vector<2x16x16xf32>, vector<2x16x16xf32> -> vector<2x16x16xf32>
    "tpu.trace_stop"() : () -> ()
    %cst_80 = arith.constant 1.000000e+00 : f32
    %181 = vector.broadcast %cst_80 : f32 to vector<2x16x16xf32>
    %182 = arith.addf %180, %181 : vector<2x16x16xf32>
    %183 = vector.shape_cast %6 : vector<1x16x16xi1> to vector<1x16x16xi1>
    %184 = vector.broadcast %183 : vector<1x16x16xi1> to vector<2x16x16xi1>
    %185 = arith.select %184, %182, %180 : vector<2x16x16xi1>, vector<2x16x16xf32>
    %cst_81 = arith.constant dense<0.000000e+00> : vector<2x16xf32>
    %186 = vector.multi_reduction <add>, %185, %cst_81 [2] : vector<2x16x16xf32> to vector<2x16xf32>
    %187 = vector.shape_cast %186 : vector<2x16xf32> to vector<2x16x1xf32>
    %cst_82 = arith.constant 9.99999996E-13 : f32
    %188 = vector.broadcast %cst_82 : f32 to vector<2x16x1xf32>
    %189 = arith.maximumf %187, %188 : vector<2x16x1xf32>
    %cst_83 = arith.constant dense<0.000000e+00> : vector<2x16xf32>
    %190 = vector.multi_reduction <add>, %185, %cst_83 [1] : vector<2x16x16xf32> to vector<2x16xf32>
    %191 = vector.shape_cast %190 : vector<2x16xf32> to vector<2x1x16xf32>
    %cst_84 = arith.constant 9.99999996E-13 : f32
    %192 = vector.broadcast %cst_84 : f32 to vector<2x1x16xf32>
    %193 = arith.maximumf %191, %192 : vector<2x1x16xf32>
    %194 = math.rsqrt %189 : vector<2x16x1xf32>
    %195 = math.rsqrt %193 : vector<2x1x16xf32>
    %196 = vector.broadcast %194 : vector<2x16x1xf32> to vector<2x16x16xf32>
    %197 = vector.broadcast %195 : vector<2x1x16xf32> to vector<2x16x16xf32>
    %198 = arith.mulf %196, %197 : vector<2x16x16xf32>
    %199 = arith.mulf %185, %198 : vector<2x16x16xf32>
    %200 = tpu.transpose %199, [0, 2, 1] : vector<2x16x16xf32> -> vector<2x16x16xf32>
    %201 = vector.extract_strided_slice %11 {offsets = [0, 768], sizes = [32, 128], strides = [1, 1]} : vector<32x1280xf32> to vector<32x128xf32>
    %202 = vector.shape_cast %201 : vector<32x128xf32> to vector<2x16x128xf32>
    %203 = vector.extract_strided_slice %11 {offsets = [0, 896], sizes = [32, 128], strides = [1, 1]} : vector<32x1280xf32> to vector<32x128xf32>
    %204 = vector.shape_cast %203 : vector<32x128xf32> to vector<2x16x128xf32>
    "tpu.trace_start"() <{level = 10 : i32, message = "bij,bjf->bif"}> : () -> ()
    %cst_85 = arith.constant dense<0.000000e+00> : vector<2x16x128xf32>
    %205 = tpu.matmul %199, %202, %cst_85 {dimension_numbers = #tpu.dot_dimension_numbers<[2], [1], [1], [2], [0, 0, 0, 1, 1, 2], [0], [0]>} : vector<2x16x16xf32>, vector<2x16x128xf32>, vector<2x16x128xf32> -> vector<2x16x128xf32>
    "tpu.trace_stop"() : () -> ()
    %206 = vector.shape_cast %205 : vector<2x16x128xf32> to vector<32x128xf32>
    "tpu.trace_start"() <{level = 10 : i32, message = "bij,bjf->bif"}> : () -> ()
    %cst_86 = arith.constant dense<0.000000e+00> : vector<2x16x128xf32>
    %207 = tpu.matmul %200, %204, %cst_86 {dimension_numbers = #tpu.dot_dimension_numbers<[2], [1], [1], [2], [0, 0, 0, 1, 1, 2], [0], [0]>} : vector<2x16x16xf32>, vector<2x16x128xf32>, vector<2x16x128xf32> -> vector<2x16x128xf32>
    "tpu.trace_stop"() : () -> ()
    %208 = vector.shape_cast %207 : vector<2x16x128xf32> to vector<32x128xf32>
    %c3 = arith.constant 3 : index
    %c0_87 = arith.constant 0 : index
    %c0_88 = arith.constant 0 : index
    %209 = vector.load %arg5[%c3, %c0_87, %c0_88] : memref<5x128x128xf32, #tpu.memory_space<vmem>>, vector<1x128x128xf32>
    %210 = vector.shape_cast %209 : vector<1x128x128xf32> to vector<128x128xf32>
    %cst_89 = arith.constant dense<0.000000e+00> : vector<32x128xf32>
    %211 = tpu.matmul %206, %210, %cst_89 {dimension_numbers = #tpu.dot_dimension_numbers<[1], [0], [0], [1], [0, 0, 1, 1], [], []>} : vector<32x128xf32>, vector<128x128xf32>, vector<32x128xf32> -> vector<32x128xf32>
    %c3_90 = arith.constant 3 : index
    %c0_91 = arith.constant 0 : index
    %c0_92 = arith.constant 0 : index
    %212 = vector.load %arg6[%c3_90, %c0_91, %c0_92] : memref<5x128x128xf32, #tpu.memory_space<vmem>>, vector<1x128x128xf32>
    %213 = vector.shape_cast %212 : vector<1x128x128xf32> to vector<128x128xf32>
    %cst_93 = arith.constant dense<0.000000e+00> : vector<32x128xf32>
    %214 = tpu.matmul %208, %213, %cst_93 {dimension_numbers = #tpu.dot_dimension_numbers<[1], [0], [0], [1], [0, 0, 1, 1], [], []>} : vector<32x128xf32>, vector<128x128xf32>, vector<32x128xf32> -> vector<32x128xf32>
    %215 = arith.addf %211, %214 : vector<32x128xf32>
    %c3_94 = arith.constant 3 : index
    %c0_95 = arith.constant 0 : index
    %c0_96 = arith.constant 0 : index
    %216 = vector.load %arg7[%c3_94, %c0_95, %c0_96] : memref<5x1x128xf32, #tpu.memory_space<vmem>>, vector<1x1x128xf32>
    %217 = vector.shape_cast %216 : vector<1x1x128xf32> to vector<1x128xf32>
    %218 = vector.broadcast %217 : vector<1x128xf32> to vector<32x128xf32>
    %219 = arith.addf %215, %218 : vector<32x128xf32>
    %cst_97 = arith.constant 0.000000e+00 : f32
    %220 = vector.broadcast %cst_97 : f32 to vector<32x128xf32>
    %221 = arith.maximumf %219, %220 : vector<32x128xf32>
    %c3_98 = arith.constant 3 : index
    %c0_99 = arith.constant 0 : index
    %c0_100 = arith.constant 0 : index
    %222 = vector.load %arg8[%c3_98, %c0_99, %c0_100] : memref<5x1x128xf32, #tpu.memory_space<vmem>>, vector<1x1x128xf32>
    %223 = vector.shape_cast %222 : vector<1x1x128xf32> to vector<1x128xf32>
    %224 = vector.broadcast %223 : vector<1x128xf32> to vector<32x128xf32>
    %225 = arith.mulf %221, %224 : vector<32x128xf32>
    %cst_101 = arith.constant dense<0.000000e+00> : vector<32xf32>
    %226 = vector.multi_reduction <add>, %225, %cst_101 [1] : vector<32x128xf32> to vector<32xf32>
    %227 = vector.shape_cast %226 : vector<32xf32> to vector<32x1xf32>
    %228 = arith.maximumf %168, %227 : vector<32x1xf32>
    %229 = arith.subf %168, %228 : vector<32x1xf32>
    %230 = math.exp %229 : vector<32x1xf32>
    %231 = arith.subf %227, %228 : vector<32x1xf32>
    %232 = math.exp %231 : vector<32x1xf32>
    %233 = arith.mulf %174, %230 : vector<32x1xf32>
    %234 = arith.addf %233, %232 : vector<32x1xf32>
    %235 = vector.broadcast %230 : vector<32x1xf32> to vector<32x128xf32>
    %236 = arith.mulf %179, %235 : vector<32x128xf32>
    %237 = vector.broadcast %232 : vector<32x1xf32> to vector<32x128xf32>
    %238 = arith.mulf %237, %221 : vector<32x128xf32>
    %239 = arith.addf %236, %238 : vector<32x128xf32>
    "tpu.trace_start"() <{level = 10 : i32, message = "bij,bjk->bik"}> : () -> ()
    %cst_102 = arith.constant dense<0.000000e+00> : vector<2x16x16xf32>
    %240 = tpu.matmul %180, %2, %cst_102 {dimension_numbers = #tpu.dot_dimension_numbers<[2], [1], [1], [2], [0, 0, 0, 1, 1, 2], [0], [0]>} : vector<2x16x16xf32>, vector<2x16x16xf32>, vector<2x16x16xf32> -> vector<2x16x16xf32>
    "tpu.trace_stop"() : () -> ()
    %cst_103 = arith.constant 1.000000e+00 : f32
    %241 = vector.broadcast %cst_103 : f32 to vector<2x16x16xf32>
    %242 = arith.addf %240, %241 : vector<2x16x16xf32>
    %243 = vector.shape_cast %6 : vector<1x16x16xi1> to vector<1x16x16xi1>
    %244 = vector.broadcast %243 : vector<1x16x16xi1> to vector<2x16x16xi1>
    %245 = arith.select %244, %242, %240 : vector<2x16x16xi1>, vector<2x16x16xf32>
    %cst_104 = arith.constant dense<0.000000e+00> : vector<2x16xf32>
    %246 = vector.multi_reduction <add>, %245, %cst_104 [2] : vector<2x16x16xf32> to vector<2x16xf32>
    %247 = vector.shape_cast %246 : vector<2x16xf32> to vector<2x16x1xf32>
    %cst_105 = arith.constant 9.99999996E-13 : f32
    %248 = vector.broadcast %cst_105 : f32 to vector<2x16x1xf32>
    %249 = arith.maximumf %247, %248 : vector<2x16x1xf32>
    %cst_106 = arith.constant dense<0.000000e+00> : vector<2x16xf32>
    %250 = vector.multi_reduction <add>, %245, %cst_106 [1] : vector<2x16x16xf32> to vector<2x16xf32>
    %251 = vector.shape_cast %250 : vector<2x16xf32> to vector<2x1x16xf32>
    %cst_107 = arith.constant 9.99999996E-13 : f32
    %252 = vector.broadcast %cst_107 : f32 to vector<2x1x16xf32>
    %253 = arith.maximumf %251, %252 : vector<2x1x16xf32>
    %254 = math.rsqrt %249 : vector<2x16x1xf32>
    %255 = math.rsqrt %253 : vector<2x1x16xf32>
    %256 = vector.broadcast %254 : vector<2x16x1xf32> to vector<2x16x16xf32>
    %257 = vector.broadcast %255 : vector<2x1x16xf32> to vector<2x16x16xf32>
    %258 = arith.mulf %256, %257 : vector<2x16x16xf32>
    %259 = arith.mulf %245, %258 : vector<2x16x16xf32>
    %260 = tpu.transpose %259, [0, 2, 1] : vector<2x16x16xf32> -> vector<2x16x16xf32>
    %261 = vector.extract_strided_slice %11 {offsets = [0, 1024], sizes = [32, 128], strides = [1, 1]} : vector<32x1280xf32> to vector<32x128xf32>
    %262 = vector.shape_cast %261 : vector<32x128xf32> to vector<2x16x128xf32>
    %263 = vector.extract_strided_slice %11 {offsets = [0, 1152], sizes = [32, 128], strides = [1, 1]} : vector<32x1280xf32> to vector<32x128xf32>
    %264 = vector.shape_cast %263 : vector<32x128xf32> to vector<2x16x128xf32>
    "tpu.trace_start"() <{level = 10 : i32, message = "bij,bjf->bif"}> : () -> ()
    %cst_108 = arith.constant dense<0.000000e+00> : vector<2x16x128xf32>
    %265 = tpu.matmul %259, %262, %cst_108 {dimension_numbers = #tpu.dot_dimension_numbers<[2], [1], [1], [2], [0, 0, 0, 1, 1, 2], [0], [0]>} : vector<2x16x16xf32>, vector<2x16x128xf32>, vector<2x16x128xf32> -> vector<2x16x128xf32>
    "tpu.trace_stop"() : () -> ()
    %266 = vector.shape_cast %265 : vector<2x16x128xf32> to vector<32x128xf32>
    "tpu.trace_start"() <{level = 10 : i32, message = "bij,bjf->bif"}> : () -> ()
    %cst_109 = arith.constant dense<0.000000e+00> : vector<2x16x128xf32>
    %267 = tpu.matmul %260, %264, %cst_109 {dimension_numbers = #tpu.dot_dimension_numbers<[2], [1], [1], [2], [0, 0, 0, 1, 1, 2], [0], [0]>} : vector<2x16x16xf32>, vector<2x16x128xf32>, vector<2x16x128xf32> -> vector<2x16x128xf32>
    "tpu.trace_stop"() : () -> ()
    %268 = vector.shape_cast %267 : vector<2x16x128xf32> to vector<32x128xf32>
    %c4 = arith.constant 4 : index
    %c0_110 = arith.constant 0 : index
    %c0_111 = arith.constant 0 : index
    %269 = vector.load %arg5[%c4, %c0_110, %c0_111] : memref<5x128x128xf32, #tpu.memory_space<vmem>>, vector<1x128x128xf32>
    %270 = vector.shape_cast %269 : vector<1x128x128xf32> to vector<128x128xf32>
    %cst_112 = arith.constant dense<0.000000e+00> : vector<32x128xf32>
    %271 = tpu.matmul %266, %270, %cst_112 {dimension_numbers = #tpu.dot_dimension_numbers<[1], [0], [0], [1], [0, 0, 1, 1], [], []>} : vector<32x128xf32>, vector<128x128xf32>, vector<32x128xf32> -> vector<32x128xf32>
    %c4_113 = arith.constant 4 : index
    %c0_114 = arith.constant 0 : index
    %c0_115 = arith.constant 0 : index
    %272 = vector.load %arg6[%c4_113, %c0_114, %c0_115] : memref<5x128x128xf32, #tpu.memory_space<vmem>>, vector<1x128x128xf32>
    %273 = vector.shape_cast %272 : vector<1x128x128xf32> to vector<128x128xf32>
    %cst_116 = arith.constant dense<0.000000e+00> : vector<32x128xf32>
    %274 = tpu.matmul %268, %273, %cst_116 {dimension_numbers = #tpu.dot_dimension_numbers<[1], [0], [0], [1], [0, 0, 1, 1], [], []>} : vector<32x128xf32>, vector<128x128xf32>, vector<32x128xf32> -> vector<32x128xf32>
    %275 = arith.addf %271, %274 : vector<32x128xf32>
    %c4_117 = arith.constant 4 : index
    %c0_118 = arith.constant 0 : index
    %c0_119 = arith.constant 0 : index
    %276 = vector.load %arg7[%c4_117, %c0_118, %c0_119] : memref<5x1x128xf32, #tpu.memory_space<vmem>>, vector<1x1x128xf32>
    %277 = vector.shape_cast %276 : vector<1x1x128xf32> to vector<1x128xf32>
    %278 = vector.broadcast %277 : vector<1x128xf32> to vector<32x128xf32>
    %279 = arith.addf %275, %278 : vector<32x128xf32>
    %cst_120 = arith.constant 0.000000e+00 : f32
    %280 = vector.broadcast %cst_120 : f32 to vector<32x128xf32>
    %281 = arith.maximumf %279, %280 : vector<32x128xf32>
    %c4_121 = arith.constant 4 : index
    %c0_122 = arith.constant 0 : index
    %c0_123 = arith.constant 0 : index
    %282 = vector.load %arg8[%c4_121, %c0_122, %c0_123] : memref<5x1x128xf32, #tpu.memory_space<vmem>>, vector<1x1x128xf32>
    %283 = vector.shape_cast %282 : vector<1x1x128xf32> to vector<1x128xf32>
    %284 = vector.broadcast %283 : vector<1x128xf32> to vector<32x128xf32>
    %285 = arith.mulf %281, %284 : vector<32x128xf32>
    %cst_124 = arith.constant dense<0.000000e+00> : vector<32xf32>
    %286 = vector.multi_reduction <add>, %285, %cst_124 [1] : vector<32x128xf32> to vector<32xf32>
    %287 = vector.shape_cast %286 : vector<32xf32> to vector<32x1xf32>
    %288 = arith.maximumf %228, %287 : vector<32x1xf32>
    %289 = arith.subf %228, %288 : vector<32x1xf32>
    %290 = math.exp %289 : vector<32x1xf32>
    %291 = arith.subf %287, %288 : vector<32x1xf32>
    %292 = math.exp %291 : vector<32x1xf32>
    %293 = arith.mulf %234, %290 : vector<32x1xf32>
    %294 = arith.addf %293, %292 : vector<32x1xf32>
    %295 = vector.broadcast %290 : vector<32x1xf32> to vector<32x128xf32>
    %296 = arith.mulf %239, %295 : vector<32x128xf32>
    %297 = vector.broadcast %292 : vector<32x1xf32> to vector<32x128xf32>
    %298 = arith.mulf %297, %281 : vector<32x128xf32>
    %299 = arith.addf %296, %298 : vector<32x128xf32>
    %300 = tpu.reciprocal %294 {approx = true} : vector<32x1xf32> -> vector<32x1xf32>
    %301 = vector.broadcast %300 : vector<32x1xf32> to vector<32x128xf32>
    %302 = arith.mulf %299, %301 : vector<32x128xf32>
    %cst_125 = arith.constant dense<0.000000e+00> : vector<32xf32>
    %303 = vector.multi_reduction <add>, %302, %cst_125 [1] : vector<32x128xf32> to vector<32xf32>
    %304 = vector.shape_cast %303 : vector<32xf32> to vector<32x1xf32>
    %cst_126 = arith.constant 3.125000e-02 : f32
    %305 = vector.broadcast %cst_126 : f32 to vector<32x1xf32>
    %306 = arith.mulf %304, %305 : vector<32x1xf32>
    %307 = tpu.iota {dimensions = array<i32: 1>} : vector<1x128xi32>
    %c32_i32 = arith.constant 32 : i32
    %308 = vector.broadcast %c32_i32 : i32 to vector<1x128xi32>
    %309 = arith.cmpi slt, %307, %308 : vector<1x128xi32>
    %310 = vector.broadcast %306 : vector<32x1xf32> to vector<32x128xf32>
    %311 = arith.subf %302, %310 : vector<32x128xf32>
    %cst_127 = arith.constant 0.000000e+00 : f32
    %312 = vector.shape_cast %309 : vector<1x128xi1> to vector<1x128xi1>
    %313 = vector.broadcast %312 : vector<1x128xi1> to vector<32x128xi1>
    %314 = vector.broadcast %cst_127 : f32 to vector<32x128xf32>
    %315 = arith.select %313, %311, %314 : vector<32x128xi1>, vector<32x128xf32>
    %316 = arith.mulf %315, %315 : vector<32x128xf32>
    %cst_128 = arith.constant dense<0.000000e+00> : vector<32xf32>
    %317 = vector.multi_reduction <add>, %316, %cst_128 [1] : vector<32x128xf32> to vector<32xf32>
    %318 = vector.shape_cast %317 : vector<32xf32> to vector<32x1xf32>
    %cst_129 = arith.constant 3.125000e-02 : f32
    %319 = vector.broadcast %cst_129 : f32 to vector<32x1xf32>
    %320 = arith.mulf %318, %319 : vector<32x1xf32>
    %cst_130 = arith.constant 9.99999974E-6 : f32
    %321 = vector.broadcast %cst_130 : f32 to vector<32x1xf32>
    %322 = arith.addf %320, %321 : vector<32x1xf32>
    %323 = math.rsqrt %322 : vector<32x1xf32>
    %324 = vector.broadcast %323 : vector<32x1xf32> to vector<32x128xf32>
    %325 = arith.mulf %311, %324 : vector<32x128xf32>
    %c0_131 = arith.constant 0 : index
    %c0_132 = arith.constant 0 : index
    %326 = vector.load %arg9[%c0_131, %c0_132] : memref<1x128xf32, #tpu.memory_space<vmem>>, vector<1x128xf32>
    %327 = vector.broadcast %326 : vector<1x128xf32> to vector<32x128xf32>
    %328 = arith.mulf %325, %327 : vector<32x128xf32>
    %c0_133 = arith.constant 0 : index
    %c0_134 = arith.constant 0 : index
    %329 = vector.load %arg10[%c0_133, %c0_134] : memref<1x128xf32, #tpu.memory_space<vmem>>, vector<1x128xf32>
    %330 = vector.broadcast %329 : vector<1x128xf32> to vector<32x128xf32>
    %331 = arith.addf %328, %330 : vector<32x128xf32>
    %cst_135 = arith.constant 0.000000e+00 : f32
    %332 = vector.broadcast %cst_135 : f32 to vector<32x128xf32>
    %333 = arith.maximumf %331, %332 : vector<32x128xf32>
    %334 = vector.shape_cast %333 : vector<32x128xf32> to vector<2x16x128xf32>
    %c0_136 = arith.constant 0 : index
    %c0_137 = arith.constant 0 : index
    %c0_138 = arith.constant 0 : index
    %335 = vector.load %arg11[%c0_136, %c0_137, %c0_138] : memref<2x16x128xf32, #tpu.memory_space<vmem>>, vector<2x16x128xf32>
    tpu.vector_store %arg11[%c0_136, %c0_137, %c0_138], %334 {strides = array<i32>} : memref<2x16x128xf32, #tpu.memory_space<vmem>>, vector<2x16x128xf32>,
    return
  }
  func.func @transform_0(%arg0: i32) -> (i32, i32, i32) {
    %c0_i32 = arith.constant 0 : i32
    %c0_i32_0 = arith.constant 0 : i32
    %c0_i32_1 = arith.constant 0 : i32
    return %arg0, %c0_i32, %c0_i32_0 : i32, i32, i32
  }
  func.func @transform_1(%arg0: i32) -> (i32, i32, i32) {
    %c0_i32 = arith.constant 0 : i32
    %c0_i32_0 = arith.constant 0 : i32
    %c0_i32_1 = arith.constant 0 : i32
    return %arg0, %c0_i32, %c0_i32_0 : i32, i32, i32
  }
  func.func @transform_2(%arg0: i32) -> (i32, i32) {
    %c0_i32 = arith.constant 0 : i32
    %c0_i32_0 = arith.constant 0 : i32
    %c0_i32_1 = arith.constant 0 : i32
    return %c0_i32, %c0_i32_0 : i32, i32
  }
  func.func @transform_3(%arg0: i32) -> (i32, i32) {
    %c0_i32 = arith.constant 0 : i32
    %c0_i32_0 = arith.constant 0 : i32
    %c0_i32_1 = arith.constant 0 : i32
    return %c0_i32, %c0_i32_0 : i32, i32
  }
  func.func @transform_4(%arg0: i32) -> (i32, i32, i32) {
    %c0_i32 = arith.constant 0 : i32
    %c0_i32_0 = arith.constant 0 : i32
    %c0_i32_1 = arith.constant 0 : i32
    %c0_i32_2 = arith.constant 0 : i32
    return %c0_i32, %c0_i32_0, %c0_i32_1 : i32, i32, i32
  }
  func.func @transform_5(%arg0: i32) -> (i32, i32, i32) {
    %c0_i32 = arith.constant 0 : i32
    %c0_i32_0 = arith.constant 0 : i32
    %c0_i32_1 = arith.constant 0 : i32
    %c0_i32_2 = arith.constant 0 : i32
    return %c0_i32, %c0_i32_0, %c0_i32_1 : i32, i32, i32
  }
  func.func @transform_6(%arg0: i32) -> (i32, i32, i32) {
    %c0_i32 = arith.constant 0 : i32
    %c0_i32_0 = arith.constant 0 : i32
    %c0_i32_1 = arith.constant 0 : i32
    %c0_i32_2 = arith.constant 0 : i32
    return %c0_i32, %c0_i32_0, %c0_i32_1 : i32, i32, i32
  }
  func.func @transform_7(%arg0: i32) -> (i32, i32, i32) {
    %c0_i32 = arith.constant 0 : i32
    %c0_i32_0 = arith.constant 0 : i32
    %c0_i32_1 = arith.constant 0 : i32
    %c0_i32_2 = arith.constant 0 : i32
    return %c0_i32, %c0_i32_0, %c0_i32_1 : i32, i32, i32
  }
  func.func @transform_8(%arg0: i32) -> (i32, i32) {
    %c0_i32 = arith.constant 0 : i32
    %c0_i32_0 = arith.constant 0 : i32
    %c0_i32_1 = arith.constant 0 : i32
    return %c0_i32, %c0_i32_0 : i32, i32
  }
  func.func @transform_9(%arg0: i32) -> (i32, i32) {
    %c0_i32 = arith.constant 0 : i32
    %c0_i32_0 = arith.constant 0 : i32
    %c0_i32_1 = arith.constant 0 : i32
    return %c0_i32, %c0_i32_0 : i32, i32
  }
  func.func @transform_10(%arg0: i32) -> (i32, i32, i32) {
    %c0_i32 = arith.constant 0 : i32
    %c0_i32_0 = arith.constant 0 : i32
    %c0_i32_1 = arith.constant 0 : i32
    return %arg0, %c0_i32, %c0_i32_0 : i32, i32, i32
  }
}

</mosaic_0001>

<llo_original>
// kernel: tpu_custom_call.1
$region0: #{tpu_custom_call.1}
  #allocation0 [shape = 'u32[]', space=smem, size = 0x4, offset = 0x4, fixed_abs, tag = 'smem constant byte address 0x4 - core index']
  #allocation1 [shape = 'u32[144,128]{1,0:T(1,128)}', space=vmem, size = 0x12000, scoped, tag = 'internal scratch']
  %s0 = inlined_call_operand.hbm [shape: f32[2,16,32], index: 0, kind: input, shape index: {}]
  %s1 = inlined_call_operand.hbm [shape: f32[2,16,16], index: 1, kind: input, shape index: {}]
  %s2 = inlined_call_operand.hbm [shape: f32[32,1280], index: 2, kind: input, shape index: {}]
  %s3 = inlined_call_operand.hbm [shape: f32[1,1280], index: 3, kind: input, shape index: {}]
  %s4 = inlined_call_operand.hbm [shape: f32[5,128,128], index: 4, kind: input, shape index: {}]
  %s5 = inlined_call_operand.hbm [shape: f32[5,128,128], index: 5, kind: input, shape index: {}]
  %s6 = inlined_call_operand.vmem [shape: f32[5,1,128], index: 6, kind: input, shape index: {}]
  %s7 = inlined_call_operand.vmem [shape: f32[5,1,128], index: 7, kind: input, shape index: {}]
  %s8 = inlined_call_operand.vmem [shape: f32[1,128], index: 8, kind: input, shape index: {}]
  %s9 = inlined_call_operand.vmem [shape: f32[1,128], index: 9, kind: input, shape index: {}]
  %s10 = inlined_call_operand.hbm [shape: f32[2,16,128], index: 10, kind: output, shape index: {}]
  %s11 = sld [smem:[#allocation0]]
  $region74: #{tpu_custom_call.1} parent=0
    _
  %s13 = ssub.s32 1, %s11
  %s14 = scalar_select 0, %s13, %s11
  $region1: #{tpu_custom_call.1} parent=0
    #allocation2 [shape = 'u8[16384]{0}', space=vmem, size = 0x4000, scoped, tag = 'input window, operand 0, single buffered']
    #allocation3 [shape = 's32[1]{0}', space=sflag, size = 0x4, scoped, tag = 'scoped memory for tpu_custom_call.1']
    #allocation4 [shape = 's32[1]{0}', space=sflag, size = 0x4, scoped, tag = 'scoped memory for tpu_custom_call.1']
    #allocation5 [shape = 'u8[16384]{0}', space=vmem, size = 0x4000, scoped, tag = 'input window, operand 1, single buffered']
    #allocation6 [shape = 's32[1]{0}', space=sflag, size = 0x4, scoped, tag = 'scoped memory for tpu_custom_call.1']
    #allocation7 [shape = 'u8[163840]{0}', space=vmem, size = 0x28000, scoped, tag = 'input window, operand 2, single buffered']
    #allocation8 [shape = 'u8[5120]{0}', space=vmem, size = 0x1400, scoped, tag = 'input window, operand 3, single buffered']
    #allocation9 [shape = 's32[1]{0}', space=sflag, size = 0x4, scoped, tag = 'scoped memory for tpu_custom_call.1']
    #allocation10 [shape = 'u8[327680]{0}', space=vmem, size = 0x50000, scoped, tag = 'input window, operand 4, single buffered']
    #allocation11 [shape = 'u8[327680]{0}', space=vmem, size = 0x50000, scoped, tag = 'input window, operand 5, single buffered']
    #allocation12 [shape = 's32[1]{0}', space=sflag, size = 0x4, scoped, tag = 'scoped memory for tpu_custom_call.1']
    #allocation13 [shape = 'u8[16384]{0}', space=vmem, size = 0x4000, scoped, tag = 'output window, operand 0, single buffered']
    %15 = vsyncpa [#allocation3], 0
    %16 = vsyncpa [#allocation6], 0
    %17 = vsyncpa [#allocation9], 0
    %18 = vsyncpa [#allocation12], 0
    %19 = vsyncpa [#allocation4], 0
    // Predicated region
    $region2: #{tpu_custom_call.1} parent=1 // pred_check
      _
    $region3: #{tpu_custom_call.1} parent=1 // pred_check_branch
      %21 = sbr.rel (0) target = $region5
    $region4: #{tpu_custom_call.1} parent=1 // pred_region
      %s23 = ssub.s32 512, 512
      %24 = vsyncadd [#allocation3], %s23
      %s25 = sshll.u32 [#allocation2], 4
      %s26 = int_to_ptr.vmem [resolvable:$true] %s25
      %31 = dma.hbm_to_vmem [thread:$0]  %s0, 512, %s26, [#allocation3], 128, 128, 8
    $region5: #{tpu_custom_call.1} parent=1 // pred_fallthru
      _
    // Predicated region
    $region6: #{tpu_custom_call.1} parent=1 // pred_check
      _
    $region7: #{tpu_custom_call.1} parent=1 // pred_check_branch
      %33 = sbr.rel (0) target = $region9
    $region8: #{tpu_custom_call.1} parent=1 // pred_region
      %s35 = ssub.s32 512, 512
      %36 = vsyncadd [#allocation6], %s35
      %s37 = sshll.u32 [#allocation5], 4
      %s38 = int_to_ptr.vmem [resolvable:$true] %s37
      %43 = dma.hbm_to_vmem [thread:$0]  %s1, 512, %s38, [#allocation6], 128, 128, 8
    $region9: #{tpu_custom_call.1} parent=1 // pred_fallthru
      _
    // Predicated region
    $region10: #{tpu_custom_call.1} parent=1 // pred_check
      _
    $region11: #{tpu_custom_call.1} parent=1 // pred_check_branch
      %45 = sbr.rel (0) target = $region13
    $region12: #{tpu_custom_call.1} parent=1 // pred_region
      %s47 = ssub.s32 5120, 5120
      %48 = vsyncadd [#allocation6], %s47
      %s49 = sshll.u32 [#allocation7], 4
      %s50 = int_to_ptr.vmem [resolvable:$true] %s49
      %55 = dma.hbm_to_vmem [thread:$0]  %s2, 5120, %s50, [#allocation6], 1280, 1280, 80
    $region13: #{tpu_custom_call.1} parent=1 // pred_fallthru
      _
    // Predicated region
    $region14: #{tpu_custom_call.1} parent=1 // pred_check
      _
    $region15: #{tpu_custom_call.1} parent=1 // pred_check_branch
      %57 = sbr.rel (0) target = $region17
    $region16: #{tpu_custom_call.1} parent=1 // pred_region
      %s59 = ssub.s32 160, 160
      %60 = vsyncadd [#allocation9], %s59
      %s62 = sshll.u32 [#allocation8], 4
      %s63 = int_to_ptr.vmem [resolvable:$true] %s62
      %65 = dma.hbm_to_vmem [thread:$0]  %s3, 160, %s63, [#allocation9]
    $region17: #{tpu_custom_call.1} parent=1 // pred_fallthru
      _
    // Predicated region
    $region18: #{tpu_custom_call.1} parent=1 // pred_check
      _
    $region19: #{tpu_custom_call.1} parent=1 // pred_check_branch
      %67 = sbr.rel (0) target = $region21
    $region20: #{tpu_custom_call.1} parent=1 // pred_region
      %s69 = ssub.s32 10240, 10240
      %70 = vsyncadd [#allocation9], %s69
      %s71 = sshll.u32 [#allocation10], 4
      %s72 = int_to_ptr.vmem [resolvable:$true] %s71
      %77 = dma.hbm_to_vmem [thread:$0]  %s4, 10240, %s72, [#allocation9], 128, 128, 8
    $region21: #{tpu_custom_call.1} parent=1 // pred_fallthru
      _
    // Predicated region
    $region22: #{tpu_custom_call.1} parent=1 // pred_check
      _
    $region23: #{tpu_custom_call.1} parent=1 // pred_check_branch
      %79 = sbr.rel (0) target = $region25
    $region24: #{tpu_custom_call.1} parent=1 // pred_region
      %s81 = ssub.s32 10240, 10240
      %82 = vsyncadd [#allocation12], %s81
      %s83 = sshll.u32 [#allocation11], 4
      %s84 = int_to_ptr.vmem [resolvable:$true] %s83
      %89 = dma.hbm_to_vmem [thread:$0]  %s5, 10240, %s84, [#allocation12], 128, 128, 8
    $region25: #{tpu_custom_call.1} parent=1 // pred_fallthru
      _
    // Predicated region
    $region26: #{tpu_custom_call.1} parent=1 // pred_check
      _
    $region27: #{tpu_custom_call.1} parent=1 // pred_check_branch
      %91 = sbr.rel (0) target = $region29
    $region28: #{tpu_custom_call.1} parent=1 // pred_region
      _
    $region29: #{tpu_custom_call.1} parent=1 // pred_fallthru
      _
    // Predicated region
    $region30: #{tpu_custom_call.1} parent=1 // pred_check
      _
    $region31: #{tpu_custom_call.1} parent=1 // pred_check_branch
      %93 = sbr.rel (0) target = $region33
    $region32: #{tpu_custom_call.1} parent=1 // pred_region
      _
    $region33: #{tpu_custom_call.1} parent=1 // pred_fallthru
      _
    // Predicated region
    $region34: #{tpu_custom_call.1} parent=1 // pred_check
      _
    $region35: #{tpu_custom_call.1} parent=1 // pred_check_branch
      %95 = sbr.rel (0) target = $region37
    $region36: #{tpu_custom_call.1} parent=1 // pred_region
      _
    $region37: #{tpu_custom_call.1} parent=1 // pred_fallthru
      _
    // Predicated region
    $region38: #{tpu_custom_call.1} parent=1 // pred_check
      _
    $region39: #{tpu_custom_call.1} parent=1 // pred_check_branch
      %97 = sbr.rel (0) target = $region41
    $region40: #{tpu_custom_call.1} parent=1 // pred_region
      _
    $region41: #{tpu_custom_call.1} parent=1 // pred_fallthru
      _
    // Predicated region
    $region42: #{tpu_custom_call.1} parent=1 // pred_check
      _
    $region43: #{tpu_custom_call.1} parent=1 // pred_check_branch
      %99 = sbr.rel (0) target = $region45
    $region44: #{tpu_custom_call.1} parent=1 // pred_region
      %100 = dma.done [#allocation3], 512
    $region45: #{tpu_custom_call.1} parent=1 // pred_fallthru
      _
    // Predicated region
    $region46: #{tpu_custom_call.1} parent=1 // pred_check
      _
    $region47: #{tpu_custom_call.1} parent=1 // pred_check_branch
      %102 = sbr.rel (0) target = $region49
    $region48: #{tpu_custom_call.1} parent=1 // pred_region
      %103 = dma.done [#allocation6], 512
    $region49: #{tpu_custom_call.1} parent=1 // pred_fallthru
      _
    // Predicated region
    $region50: #{tpu_custom_call.1} parent=1 // pred_check
      _
    $region51: #{tpu_custom_call.1} parent=1 // pred_check_branch
      %105 = sbr.rel (0) target = $region53
    $region52: #{tpu_custom_call.1} parent=1 // pred_region
      %106 = dma.done [#allocation6], 5120
    $region53: #{tpu_custom_call.1} parent=1 // pred_fallthru
      _
    // Predicated region
    $region54: #{tpu_custom_call.1} parent=1 // pred_check
      _
    $region55: #{tpu_custom_call.1} parent=1 // pred_check_branch
      %108 = sbr.rel (0) target = $region57
    $region56: #{tpu_custom_call.1} parent=1 // pred_region
      %109 = dma.done [#allocation9], 160
    $region57: #{tpu_custom_call.1} parent=1 // pred_fallthru
      _
    // Predicated region
    $region58: #{tpu_custom_call.1} parent=1 // pred_check
      _
    $region59: #{tpu_custom_call.1} parent=1 // pred_check_branch
      %111 = sbr.rel (0) target = $region61
    $region60: #{tpu_custom_call.1} parent=1 // pred_region
      %112 = dma.done [#allocation9], 10240
    $region61: #{tpu_custom_call.1} parent=1 // pred_fallthru
      _
    // Predicated region
    $region62: #{tpu_custom_call.1} parent=1 // pred_check
      _
    $region63: #{tpu_custom_call.1} parent=1 // pred_check_branch
      %114 = sbr.rel (0) target = $region65
    $region64: #{tpu_custom_call.1} parent=1 // pred_region
      %115 = dma.done [#allocation12], 10240
    $region65: #{tpu_custom_call.1} parent=1 // pred_fallthru
      _
    %v116 = vld [vmem:[#allocation2] sm:$0xff]
    %v117 = vld [vmem:[#allocation2 + $0x8] sm:$0xff]
    %v118 = vld [vmem:[#allocation2 + $0x10] sm:$0xff]
    %v119 = vld [vmem:[#allocation2 + $0x18] sm:$0xff]
    %v120 = vld [vmem:[#allocation5] sm:$0xff]
    %v121 = vld [vmem:[#allocation5 + $0x8] sm:$0xff]
    %v122 = vld [vmem:[#allocation5 + $0x10] sm:$0xff]
    %v123 = vld [vmem:[#allocation5 + $0x18] sm:$0xff]
    %v124 = vlaneseq
    %v125 = vshrl.u32 %v124, 7
    %v126 = vadd.s32 %v125, 8
    %v127 = vlaneseq
    %v128 = vand.u32 %v127, 127
    %vm129 = vcmp.eq.s32.totalorder %v125, %v128
    %vm130 = vcmp.eq.s32.totalorder %v126, %v128
    %v131 = vld [vmem:[#allocation7] sm:$0xff]
    %v132 = vld [vmem:[#allocation7 + $0x8] sm:$0xff]
    %v133 = vld [vmem:[#allocation7 + $0x10] sm:$0xff]
    %v134 = vld [vmem:[#allocation7 + $0x18] sm:$0xff]
    %v135 = vld [vmem:[#allocation7 + $0x20] sm:$0xff]
    %v136 = vld [vmem:[#allocation7 + $0x28] sm:$0xff]
    %v137 = vld [vmem:[#allocation7 + $0x30] sm:$0xff]
    %v138 = vld [vmem:[#allocation7 + $0x38] sm:$0xff]
    %v139 = vld [vmem:[#allocation7 + $0x40] sm:$0xff]
    %v140 = vld [vmem:[#allocation7 + $0x48] sm:$0xff]
    %v141 = vld [vmem:[#allocation7 + $0x50] sm:$0xff]
    %v142 = vld [vmem:[#allocation7 + $0x58] sm:$0xff]
    %v143 = vld [vmem:[#allocation7 + $0x60] sm:$0xff]
    %v144 = vld [vmem:[#allocation7 + $0x68] sm:$0xff]
    %v145 = vld [vmem:[#allocation7 + $0x70] sm:$0xff]
    %v146 = vld [vmem:[#allocation7 + $0x78] sm:$0xff]
    %v147 = vld [vmem:[#allocation7 + $0x80] sm:$0xff]
    %v148 = vld [vmem:[#allocation7 + $0x88] sm:$0xff]
    %v149 = vld [vmem:[#allocation7 + $0x90] sm:$0xff]
    %v150 = vld [vmem:[#allocation7 + $0x98] sm:$0xff]
    %v151 = vld [vmem:[#allocation7 + $0xa0] sm:$0xff]
    %v152 = vld [vmem:[#allocation7 + $0xa8] sm:$0xff]
    %v153 = vld [vmem:[#allocation7 + $0xb0] sm:$0xff]
    %v154 = vld [vmem:[#allocation7 + $0xb8] sm:$0xff]
    %v155 = vld [vmem:[#allocation7 + $0xc0] sm:$0xff]
    %v156 = vld [vmem:[#allocation7 + $0xc8] sm:$0xff]
    %v157 = vld [vmem:[#allocation7 + $0xd0] sm:$0xff]
    %v158 = vld [vmem:[#allocation7 + $0xd8] sm:$0xff]
    %v159 = vld [vmem:[#allocation7 + $0xe0] sm:$0xff]
    %v160 = vld [vmem:[#allocation7 + $0xe8] sm:$0xff]
    %v161 = vld [vmem:[#allocation7 + $0xf0] sm:$0xff]
    %v162 = vld [vmem:[#allocation7 + $0xf8] sm:$0xff]
    %v163 = vld [vmem:[#allocation7 + $0x100] sm:$0xff]
    %v164 = vld [vmem:[#allocation7 + $0x108] sm:$0xff]
    %v165 = vld [vmem:[#allocation7 + $0x110] sm:$0xff]
    %v166 = vld [vmem:[#allocation7 + $0x118] sm:$0xff]
    %v167 = vld [vmem:[#allocation7 + $0x120] sm:$0xff]
    %v168 = vld [vmem:[#allocation7 + $0x128] sm:$0xff]
    %v169 = vld [vmem:[#allocation7 + $0x130] sm:$0xff]
    %v170 = vld [vmem:[#allocation7 + $0x138] sm:$0xff]
    %v171 = vld [vmem:[#allocation8] sm:$0xff]
    %v172 = vld [vmem:[#allocation8 + $0x8] sm:$0x3]
    %v175 = vlaneseq
    %v176 = vshrl.u32 %v175, 7
    %v177 = vsub.s32 0, %v176
    %v178 = vrot.slane %v171, %v177
    %v179 = vlaneseq
    %v180 = vshrl.u32 %v179, 7
    %v181 = vsub.s32 1, %v180
    %v182 = vrot.slane %v171, %v181
    %v183 = vlaneseq
    %v184 = vshrl.u32 %v183, 7
    %v185 = vsub.s32 2, %v184
    %v186 = vrot.slane %v171, %v185
    %v187 = vlaneseq
    %v188 = vshrl.u32 %v187, 7
    %v189 = vsub.s32 3, %v188
    %v190 = vrot.slane %v171, %v189
    %v191 = vlaneseq
    %v192 = vshrl.u32 %v191, 7
    %v193 = vsub.s32 4, %v192
    %v194 = vrot.slane %v171, %v193
    %v195 = vlaneseq
    %v196 = vshrl.u32 %v195, 7
    %v197 = vsub.s32 5, %v196
    %v198 = vrot.slane %v171, %v197
    %v199 = vlaneseq
    %v200 = vshrl.u32 %v199, 7
    %v201 = vsub.s32 6, %v200
    %v202 = vrot.slane %v171, %v201
    %v203 = vlaneseq
    %v204 = vshrl.u32 %v203, 7
    %v205 = vsub.s32 7, %v204
    %v206 = vrot.slane %v171, %v205
    %v207 = vlaneseq
    %v208 = vshrl.u32 %v207, 7
    %v209 = vsub.s32 0, %v208
    %v210 = vrot.slane %v172, %v209
    %v211 = vlaneseq
    %v212 = vshrl.u32 %v211, 7
    %v213 = vsub.s32 1, %v212
    %v214 = vrot.slane %v172, %v213
    %vm225 = vcmask 261120
    %v227 = vsel %vm225, %v116, 0
    %v230 = vsel %vm225, %v117, 0
    %v233 = vsel %vm225, %v118, 0
    %v236 = vsel %vm225, %v119, 0
    %238 = vmatprep.subr.mxu0 0.0
    %239 = vmatpush1.msra.mxu0 0.0
    %240 = vmatprep.subr.mxu0 0.0
    %241 = vmatpush1.msra.mxu0 0.0
    %242 = vmatprep.subr.mxu0 0.0
    %243 = vmatpush1.msra.mxu0 0.0
    %244 = vmatprep.subr.mxu0 0.0
    %245 = vmatpush1.msra.mxu0 0.0
    %246 = vmatprep.subr.mxu0 0.0
    %247 = vmatpush1.msra.mxu0 0.0
    %248 = vmatprep.subr.mxu0 0.0
    %249 = vmatpush1.msra.mxu0 0.0
    %250 = vmatprep.subr.mxu0 0.0
    %251 = vmatpush1.msra.mxu0 0.0
    %252 = vmatprep.subr.mxu0 0.0
    %253 = vmatpush1.msra.mxu0 0.0
    %254 = vmatprep.subr.mxu0 0.0
    %255 = vmatpush1.msra.mxu0 0.0
    %256 = vmatprep.subr.mxu0 0.0
    %257 = vmatpush1.msra.mxu0 0.0
    %258 = vmatprep.subr.mxu0 0.0
    %259 = vmatpush1.msra.mxu0 0.0
    %260 = vmatprep.subr.mxu0 0.0
    %261 = vmatpush1.msra.mxu0 0.0
    %262 = vmatprep.subr.mxu0 %v162
    %263 = vmatpush1.msra.mxu0 %v161
    %264 = vmatprep.subr.mxu0 %v152
    %265 = vmatpush1.msra.mxu0 %v151
    %266 = vmatprep.subr.mxu0 %v142
    %267 = vmatpush1.msra.mxu0 %v141
    %268 = vmatprep.subr.mxu0 %v132
    %269 = vmatpush1.msra.mxu0 %v131
    %270 = vmatprep.subr.mxu0 0.0
    %271 = vmatpush2.msra.mxu0 0.0
    %272 = vmatprep.subr.mxu0 0.0
    %273 = vmatpush2.msra.mxu0 0.0
    %274 = vmatprep.subr.mxu0 0.0
    %275 = vmatpush2.msra.mxu0 0.0
    %276 = vmatprep.subr.mxu0 0.0
    %277 = vmatpush2.msra.mxu0 0.0
    %278 = vmatprep.subr.mxu0 0.0
    %279 = vmatpush2.msra.mxu0 0.0
    %280 = vmatprep.subr.mxu0 0.0
    %281 = vmatpush2.msra.mxu0 0.0
    %282 = vmatprep.subr.mxu0 0.0
    %283 = vmatpush2.msra.mxu0 0.0
    %284 = vmatprep.subr.mxu0 0.0
    %285 = vmatpush2.msra.mxu0 0.0
    %286 = vmatprep.subr.mxu0 0.0
    %287 = vmatpush2.msra.mxu0 0.0
    %288 = vmatprep.subr.mxu0 0.0
    %289 = vmatpush2.msra.mxu0 0.0
    %290 = vmatprep.subr.mxu0 0.0
    %291 = vmatpush2.msra.mxu0 0.0
    %292 = vmatprep.subr.mxu0 0.0
    %293 = vmatpush2.msra.mxu0 0.0
    %294 = vmatprep.subr.mxu0 0.0
    %295 = vmatpush2.msra.mxu0 0.0
    %296 = vmatprep.subr.mxu0 0.0
    %297 = vmatpush2.msra.mxu0 0.0
    %298 = vmatprep.subr.mxu0 0.0
    %299 = vmatpush2.msra.mxu0 0.0
    %300 = vmatprep.subr.mxu0 0.0
    %301 = vmatpush2.msra.mxu0 0.0
    %302 = vmatprep.mubr.f32.mxu0 0.0
    %303 = vmatmul.mubr.f32.gmra.mxu0 %v227
    %v304 = vpop.f32.mrf.mxu0
    %v305 = vadd.f32 %v178, %v304
    %v306 = vpop.f32.mrf.mxu0
    %v307 = vadd.f32 %v182, %v306
    %308 = vmatprep.mubr.f32.mxu0 0.0
    %309 = vmatmul.mubr.f32.gmra.mxu0 %v230
    %v310 = vpop.f32.mrf.mxu0
    %v311 = vadd.f32 %v178, %v310
    %v312 = vpop.f32.mrf.mxu0
    %v313 = vadd.f32 %v182, %v312
    %314 = vmatprep.mubr.f32.mxu0 0.0
    %315 = vmatmul.mubr.f32.gmra.mxu0 %v233
    %v316 = vpop.f32.mrf.mxu0
    %v317 = vadd.f32 %v178, %v316
    %v318 = vpop.f32.mrf.mxu0
    %v319 = vadd.f32 %v182, %v318
    %320 = vmatprep.mubr.f32.mxu0 0.0
    %321 = vmatmul.mubr.f32.gmra.mxu0 %v236
    %v322 = vpop.f32.mrf.mxu0
    %v323 = vadd.f32 %v178, %v322
    %v324 = vpop.f32.mrf.mxu0
    %v325 = vadd.f32 %v182, %v324
    %326 = vdwg.mxu0
    %327 = vmatprep.subr.mxu0 0.0
    %328 = vmatpush1.msra.mxu0 0.0
    %329 = vmatprep.subr.mxu0 0.0
    %330 = vmatpush1.msra.mxu0 0.0
    %331 = vmatprep.subr.mxu0 0.0
    %332 = vmatpush1.msra.mxu0 0.0
    %333 = vmatprep.subr.mxu0 0.0
    %334 = vmatpush1.msra.mxu0 0.0
    %335 = vmatprep.subr.mxu0 0.0
    %336 = vmatpush1.msra.mxu0 0.0
    %337 = vmatprep.subr.mxu0 0.0
    %338 = vmatpush1.msra.mxu0 0.0
    %339 = vmatprep.subr.mxu0 0.0
    %340 = vmatpush1.msra.mxu0 0.0
    %341 = vmatprep.subr.mxu0 0.0
    %342 = vmatpush1.msra.mxu0 0.0
    %343 = vmatprep.subr.mxu0 0.0
    %344 = vmatpush1.msra.mxu0 0.0
    %345 = vmatprep.subr.mxu0 0.0
    %346 = vmatpush1.msra.mxu0 0.0
    %347 = vmatprep.subr.mxu0 0.0
    %348 = vmatpush1.msra.mxu0 0.0
    %349 = vmatprep.subr.mxu0 0.0
    %350 = vmatpush1.msra.mxu0 0.0
    %351 = vmatprep.subr.mxu0 %v164
    %352 = vmatpush1.msra.mxu0 %v163
    %353 = vmatprep.subr.mxu0 %v154
    %354 = vmatpush1.msra.mxu0 %v153
    %355 = vmatprep.subr.mxu0 %v144
    %356 = vmatpush1.msra.mxu0 %v143
    %357 = vmatprep.subr.mxu0 %v134
    %358 = vmatpush1.msra.mxu0 %v133
    %359 = vmatprep.subr.mxu0 0.0
    %360 = vmatpush2.msra.mxu0 0.0
    %361 = vmatprep.subr.mxu0 0.0
    %362 = vmatpush2.msra.mxu0 0.0
    %363 = vmatprep.subr.mxu0 0.0
    %364 = vmatpush2.msra.mxu0 0.0
    %365 = vmatprep.subr.mxu0 0.0
    %366 = vmatpush2.msra.mxu0 0.0
    %367 = vmatprep.subr.mxu0 0.0
    %368 = vmatpush2.msra.mxu0 0.0
    %369 = vmatprep.subr.mxu0 0.0
    %370 = vmatpush2.msra.mxu0 0.0
    %371 = vmatprep.subr.mxu0 0.0
    %372 = vmatpush2.msra.mxu0 0.0
    %373 = vmatprep.subr.mxu0 0.0
    %374 = vmatpush2.msra.mxu0 0.0
    %375 = vmatprep.subr.mxu0 0.0
    %376 = vmatpush2.msra.mxu0 0.0
    %377 = vmatprep.subr.mxu0 0.0
    %378 = vmatpush2.msra.mxu0 0.0
    %379 = vmatprep.subr.mxu0 0.0
    %380 = vmatpush2.msra.mxu0 0.0
    %381 = vmatprep.subr.mxu0 0.0
    %382 = vmatpush2.msra.mxu0 0.0
    %383 = vmatprep.subr.mxu0 0.0
    %384 = vmatpush2.msra.mxu0 0.0
    %385 = vmatprep.subr.mxu0 0.0
    %386 = vmatpush2.msra.mxu0 0.0
    %387 = vmatprep.subr.mxu0 0.0
    %388 = vmatpush2.msra.mxu0 0.0
    %389 = vmatprep.subr.mxu0 0.0
    %390 = vmatpush2.msra.mxu0 0.0
    %391 = vmatprep.mubr.f32.mxu0 0.0
    %392 = vmatmul.mubr.f32.gmra.mxu0 %v227
    %v393 = vpop.f32.mrf.mxu0
    %v394 = vadd.f32 %v186, %v393
    %v395 = vpop.f32.mrf.mxu0
    %v396 = vadd.f32 %v190, %v395
    %397 = vmatprep.mubr.f32.mxu0 0.0
    %398 = vmatmul.mubr.f32.gmra.mxu0 %v230
    %v399 = vpop.f32.mrf.mxu0
    %v400 = vadd.f32 %v186, %v399
    %v401 = vpop.f32.mrf.mxu0
    %v402 = vadd.f32 %v190, %v401
    %403 = vmatprep.mubr.f32.mxu0 0.0
    %404 = vmatmul.mubr.f32.gmra.mxu0 %v233
    %v405 = vpop.f32.mrf.mxu0
    %v406 = vadd.f32 %v186, %v405
    %v407 = vpop.f32.mrf.mxu0
    %v408 = vadd.f32 %v190, %v407
    %409 = vmatprep.mubr.f32.mxu0 0.0
    %410 = vmatmul.mubr.f32.gmra.mxu0 %v236
    %v411 = vpop.f32.mrf.mxu0
    %v412 = vadd.f32 %v186, %v411
    %v413 = vpop.f32.mrf.mxu0
    %v414 = vadd.f32 %v190, %v413
    %415 = vdwg.mxu0
    %416 = vmatprep.subr.mxu0 0.0
    %417 = vmatpush1.msra.mxu0 0.0
    %418 = vmatprep.subr.mxu0 0.0
    %419 = vmatpush1.msra.mxu0 0.0
    %420 = vmatprep.subr.mxu0 0.0
    %421 = vmatpush1.msra.mxu0 0.0
    %422 = vmatprep.subr.mxu0 0.0
    %423 = vmatpush1.msra.mxu0 0.0
    %424 = vmatprep.subr.mxu0 0.0
    %425 = vmatpush1.msra.mxu0 0.0
    %426 = vmatprep.subr.mxu0 0.0
    %427 = vmatpush1.msra.mxu0 0.0
    %428 = vmatprep.subr.mxu0 0.0
    %429 = vmatpush1.msra.mxu0 0.0
    %430 = vmatprep.subr.mxu0 0.0
    %431 = vmatpush1.msra.mxu0 0.0
    %432 = vmatprep.subr.mxu0 0.0
    %433 = vmatpush1.msra.mxu0 0.0
    %434 = vmatprep.subr.mxu0 0.0
    %435 = vmatpush1.msra.mxu0 0.0
    %436 = vmatprep.subr.mxu0 0.0
    %437 = vmatpush1.msra.mxu0 0.0
    %438 = vmatprep.subr.mxu0 0.0
    %439 = vmatpush1.msra.mxu0 0.0
    %440 = vmatprep.subr.mxu0 %v166
    %441 = vmatpush1.msra.mxu0 %v165
    %442 = vmatprep.subr.mxu0 %v156
    %443 = vmatpush1.msra.mxu0 %v155
    %444 = vmatprep.subr.mxu0 %v146
    %445 = vmatpush1.msra.mxu0 %v145
    %446 = vmatprep.subr.mxu0 %v136
    %447 = vmatpush1.msra.mxu0 %v135
    %448 = vmatprep.subr.mxu0 0.0
    %449 = vmatpush2.msra.mxu0 0.0
    %450 = vmatprep.subr.mxu0 0.0
    %451 = vmatpush2.msra.mxu0 0.0
    %452 = vmatprep.subr.mxu0 0.0
    %453 = vmatpush2.msra.mxu0 0.0
    %454 = vmatprep.subr.mxu0 0.0
    %455 = vmatpush2.msra.mxu0 0.0
    %456 = vmatprep.subr.mxu0 0.0
    %457 = vmatpush2.msra.mxu0 0.0
    %458 = vmatprep.subr.mxu0 0.0
    %459 = vmatpush2.msra.mxu0 0.0
    %460 = vmatprep.subr.mxu0 0.0
    %461 = vmatpush2.msra.mxu0 0.0
    %462 = vmatprep.subr.mxu0 0.0
    %463 = vmatpush2.msra.mxu0 0.0
    %464 = vmatprep.subr.mxu0 0.0
    %465 = vmatpush2.msra.mxu0 0.0
    %466 = vmatprep.subr.mxu0 0.0
    %467 = vmatpush2.msra.mxu0 0.0
    %468 = vmatprep.subr.mxu0 0.0
    %469 = vmatpush2.msra.mxu0 0.0
    %470 = vmatprep.subr.mxu0 0.0
    %471 = vmatpush2.msra.mxu0 0.0
    %472 = vmatprep.subr.mxu0 0.0
    %473 = vmatpush2.msra.mxu0 0.0
    %474 = vmatprep.subr.mxu0 0.0
    %475 = vmatpush2.msra.mxu0 0.0
    %476 = vmatprep.subr.mxu0 0.0
    %477 = vmatpush2.msra.mxu0 0.0
    %478 = vmatprep.subr.mxu0 0.0
    %479 = vmatpush2.msra.mxu0 0.0
    %480 = vmatprep.mubr.f32.mxu0 0.0
    %481 = vmatmul.mubr.f32.gmra.mxu0 %v227
    %v482 = vpop.f32.mrf.mxu0
    %v483 = vadd.f32 %v194, %v482
    %v484 = vpop.f32.mrf.mxu0
    %v485 = vadd.f32 %v198, %v484
    %486 = vmatprep.mubr.f32.mxu0 0.0
    %487 = vmatmul.mubr.f32.gmra.mxu0 %v230
    %v488 = vpop.f32.mrf.mxu0
    %v489 = vadd.f32 %v194, %v488
    %v490 = vpop.f32.mrf.mxu0
    %v491 = vadd.f32 %v198, %v490
    %492 = vmatprep.mubr.f32.mxu0 0.0
    %493 = vmatmul.mubr.f32.gmra.mxu0 %v233
    %v494 = vpop.f32.mrf.mxu0
    %v495 = vadd.f32 %v194, %v494
    %v496 = vpop.f32.mrf.mxu0
    %v497 = vadd.f32 %v198, %v496
    %498 = vmatprep.mubr.f32.mxu0 0.0
    %499 = vmatmul.mubr.f32.gmra.mxu0 %v236
    %v500 = vpop.f32.mrf.mxu0
    %v501 = vadd.f32 %v194, %v500
    %v502 = vpop.f32.mrf.mxu0
    %v503 = vadd.f32 %v198, %v502
    %504 = vdwg.mxu0
    %505 = vmatprep.subr.mxu0 0.0
    %506 = vmatpush1.msra.mxu0 0.0
    %507 = vmatprep.subr.mxu0 0.0
    %508 = vmatpush1.msra.mxu0 0.0
    %509 = vmatprep.subr.mxu0 0.0
    %510 = vmatpush1.msra.mxu0 0.0
    %511 = vmatprep.subr.mxu0 0.0
    %512 = vmatpush1.msra.mxu0 0.0
    %513 = vmatprep.subr.mxu0 0.0
    %514 = vmatpush1.msra.mxu0 0.0
    %515 = vmatprep.subr.mxu0 0.0
    %516 = vmatpush1.msra.mxu0 0.0
    %517 = vmatprep.subr.mxu0 0.0
    %518 = vmatpush1.msra.mxu0 0.0
    %519 = vmatprep.subr.mxu0 0.0
    %520 = vmatpush1.msra.mxu0 0.0
    %521 = vmatprep.subr.mxu0 0.0
    %522 = vmatpush1.msra.mxu0 0.0
    %523 = vmatprep.subr.mxu0 0.0
    %524 = vmatpush1.msra.mxu0 0.0
    %525 = vmatprep.subr.mxu0 0.0
    %526 = vmatpush1.msra.mxu0 0.0
    %527 = vmatprep.subr.mxu0 0.0
    %528 = vmatpush1.msra.mxu0 0.0
    %529 = vmatprep.subr.mxu0 %v168
    %530 = vmatpush1.msra.mxu0 %v167
    %531 = vmatprep.subr.mxu0 %v158
    %532 = vmatpush1.msra.mxu0 %v157
    %533 = vmatprep.subr.mxu0 %v148
    %534 = vmatpush1.msra.mxu0 %v147
    %535 = vmatprep.subr.mxu0 %v138
    %536 = vmatpush1.msra.mxu0 %v137
    %537 = vmatprep.subr.mxu0 0.0
    %538 = vmatpush2.msra.mxu0 0.0
    %539 = vmatprep.subr.mxu0 0.0
    %540 = vmatpush2.msra.mxu0 0.0
    %541 = vmatprep.subr.mxu0 0.0
    %542 = vmatpush2.msra.mxu0 0.0
    %543 = vmatprep.subr.mxu0 0.0
    %544 = vmatpush2.msra.mxu0 0.0
    %545 = vmatprep.subr.mxu0 0.0
    %546 = vmatpush2.msra.mxu0 0.0
    %547 = vmatprep.subr.mxu0 0.0
    %548 = vmatpush2.msra.mxu0 0.0
    %549 = vmatprep.subr.mxu0 0.0
    %550 = vmatpush2.msra.mxu0 0.0
    %551 = vmatprep.subr.mxu0 0.0
    %552 = vmatpush2.msra.mxu0 0.0
    %553 = vmatprep.subr.mxu0 0.0
    %554 = vmatpush2.msra.mxu0 0.0
    %555 = vmatprep.subr.mxu0 0.0
    %556 = vmatpush2.msra.mxu0 0.0
    %557 = vmatprep.subr.mxu0 0.0
    %558 = vmatpush2.msra.mxu0 0.0
    %559 = vmatprep.subr.mxu0 0.0
    %560 = vmatpush2.msra.mxu0 0.0
    %561 = vmatprep.subr.mxu0 0.0
    %562 = vmatpush2.msra.mxu0 0.0
    %563 = vmatprep.subr.mxu0 0.0
    %564 = vmatpush2.msra.mxu0 0.0
    %565 = vmatprep.subr.mxu0 0.0
    %566 = vmatpush2.msra.mxu0 0.0
    %567 = vmatprep.subr.mxu0 0.0
    %568 = vmatpush2.msra.mxu0 0.0
    %569 = vmatprep.mubr.f32.mxu0 0.0
    %570 = vmatmul.mubr.f32.gmra.mxu0 %v227
    %v571 = vpop.f32.mrf.mxu0
    %v572 = vadd.f32 %v202, %v571
    %v573 = vpop.f32.mrf.mxu0
    %v574 = vadd.f32 %v206, %v573
    %575 = vmatprep.mubr.f32.mxu0 0.0
    %576 = vmatmul.mubr.f32.gmra.mxu0 %v230
    %v577 = vpop.f32.mrf.mxu0
    %v578 = vadd.f32 %v202, %v577
    %v579 = vpop.f32.mrf.mxu0
    %v580 = vadd.f32 %v206, %v579
    %581 = vmatprep.mubr.f32.mxu0 0.0
    %582 = vmatmul.mubr.f32.gmra.mxu0 %v233
    %v583 = vpop.f32.mrf.mxu0
    %v584 = vadd.f32 %v202, %v583
    %v585 = vpop.f32.mrf.mxu0
    %v586 = vadd.f32 %v206, %v585
    %587 = vmatprep.mubr.f32.mxu0 0.0
    %588 = vmatmul.mubr.f32.gmra.mxu0 %v236
    %v589 = vpop.f32.mrf.mxu0
    %v590 = vadd.f32 %v202, %v589
    %v591 = vpop.f32.mrf.mxu0
    %v592 = vadd.f32 %v206, %v591
    %593 = vdwg.mxu0
    %594 = vmatprep.subr.mxu0 0.0
    %595 = vmatpush1.msra.mxu0 0.0
    %596 = vmatprep.subr.mxu0 0.0
    %597 = vmatpush1.msra.mxu0 0.0
    %598 = vmatprep.subr.mxu0 0.0
    %599 = vmatpush1.msra.mxu0 0.0
    %600 = vmatprep.subr.mxu0 0.0
    %601 = vmatpush1.msra.mxu0 0.0
    %602 = vmatprep.subr.mxu0 0.0
    %603 = vmatpush1.msra.mxu0 0.0
    %604 = vmatprep.subr.mxu0 0.0
    %605 = vmatpush1.msra.mxu0 0.0
    %606 = vmatprep.subr.mxu0 0.0
    %607 = vmatpush1.msra.mxu0 0.0
    %608 = vmatprep.subr.mxu0 0.0
    %609 = vmatpush1.msra.mxu0 0.0
    %610 = vmatprep.subr.mxu0 0.0
    %611 = vmatpush1.msra.mxu0 0.0
    %612 = vmatprep.subr.mxu0 0.0
    %613 = vmatpush1.msra.mxu0 0.0
    %614 = vmatprep.subr.mxu0 0.0
    %615 = vmatpush1.msra.mxu0 0.0
    %616 = vmatprep.subr.mxu0 0.0
    %617 = vmatpush1.msra.mxu0 0.0
    %618 = vmatprep.subr.mxu0 %v170
    %619 = vmatpush1.msra.mxu0 %v169
    %620 = vmatprep.subr.mxu0 %v160
    %621 = vmatpush1.msra.mxu0 %v159
    %622 = vmatprep.subr.mxu0 %v150
    %623 = vmatpush1.msra.mxu0 %v149
    %624 = vmatprep.subr.mxu0 %v140
    %625 = vmatpush1.msra.mxu0 %v139
    %626 = vmatprep.subr.mxu0 0.0
    %627 = vmatpush2.msra.mxu0 0.0
    %628 = vmatprep.subr.mxu0 0.0
    %629 = vmatpush2.msra.mxu0 0.0
    %630 = vmatprep.subr.mxu0 0.0
    %631 = vmatpush2.msra.mxu0 0.0
    %632 = vmatprep.subr.mxu0 0.0
    %633 = vmatpush2.msra.mxu0 0.0
    %634 = vmatprep.subr.mxu0 0.0
    %635 = vmatpush2.msra.mxu0 0.0
    %636 = vmatprep.subr.mxu0 0.0
    %637 = vmatpush2.msra.mxu0 0.0
    %638 = vmatprep.subr.mxu0 0.0
    %639 = vmatpush2.msra.mxu0 0.0
    %640 = vmatprep.subr.mxu0 0.0
    %641 = vmatpush2.msra.mxu0 0.0
    %642 = vmatprep.subr.mxu0 0.0
    %643 = vmatpush2.msra.mxu0 0.0
    %644 = vmatprep.subr.mxu0 0.0
    %645 = vmatpush2.msra.mxu0 0.0
    %646 = vmatprep.subr.mxu0 0.0
    %647 = vmatpush2.msra.mxu0 0.0
    %648 = vmatprep.subr.mxu0 0.0
    %649 = vmatpush2.msra.mxu0 0.0
    %650 = vmatprep.subr.mxu0 0.0
    %651 = vmatpush2.msra.mxu0 0.0
    %652 = vmatprep.subr.mxu0 0.0
    %653 = vmatpush2.msra.mxu0 0.0
    %654 = vmatprep.subr.mxu0 0.0
    %655 = vmatpush2.msra.mxu0 0.0
    %656 = vmatprep.subr.mxu0 0.0
    %657 = vmatpush2.msra.mxu0 0.0
    %658 = vmatprep.mubr.f32.mxu0 0.0
    %659 = vmatmul.mubr.f32.gmra.mxu0 %v227
    %v660 = vpop.f32.mrf.mxu0
    %v661 = vadd.f32 %v210, %v660
    %v662 = vpop.f32.mrf.mxu0
    %v663 = vadd.f32 %v214, %v662
    %664 = vmatprep.mubr.f32.mxu0 0.0
    %665 = vmatmul.mubr.f32.gmra.mxu0 %v230
    %v666 = vpop.f32.mrf.mxu0
    %v667 = vadd.f32 %v210, %v666
    %v668 = vpop.f32.mrf.mxu0
    %v669 = vadd.f32 %v214, %v668
    %670 = vmatprep.mubr.f32.mxu0 0.0
    %671 = vmatmul.mubr.f32.gmra.mxu0 %v233
    %v672 = vpop.f32.mrf.mxu0
    %v673 = vadd.f32 %v210, %v672
    %v674 = vpop.f32.mrf.mxu0
    %v675 = vadd.f32 %v214, %v674
    %676 = vmatprep.mubr.f32.mxu0 0.0
    %677 = vmatmul.mubr.f32.gmra.mxu0 %v236
    %v678 = vpop.f32.mrf.mxu0
    %v679 = vadd.f32 %v210, %v678
    %v680 = vpop.f32.mrf.mxu0
    %v681 = vadd.f32 %v214, %v680
    %682 = vdwg.mxu0
    %v683 = vadd.f32 %v120, 1.0
    %v684 = vadd.f32 %v121, 1.0
    %v685 = vadd.f32 %v122, 1.0
    %v686 = vadd.f32 %v123, 1.0
    %v687 = vsel %vm129, 1, 0
    %v688 = vsel %vm130, 1, 0
    %vm689 = vcmp.eq.s32.totalorder %v687, 1
    %vm690 = vcmp.eq.s32.totalorder %v688, 1
    %v691 = vsel %vm689, %v683, %v120
    %v692 = vsel %vm690, %v684, %v121
    %v693 = vsel %vm689, %v685, %v122
    %v694 = vsel %vm690, %v686, %v123
    %vm695 = vcmask 130048
    %v696 = vsel %vm695, %v691, 0.0
    %697 = vadd.xlane.f32.xlu0 %v696
    %v698 = vpop.xlane.xlu0 %697
    %v699 = vsel %vm695, %v692, 0.0
    %700 = vadd.xlane.f32.xlu0 %v699
    %v701 = vpop.xlane.xlu0 %700
    %v702 = vsel %vm695, %v693, 0.0
    %703 = vadd.xlane.f32.xlu0 %v702
    %v704 = vpop.xlane.xlu0 %703
    %v705 = vsel %vm695, %v694, 0.0
    %706 = vadd.xlane.f32.xlu0 %v705
    %v707 = vpop.xlane.xlu0 %706
    %v708 = vmax.f32 %v698, 1e-12
    %v709 = vmax.f32 %v701, 1e-12
    %v710 = vmax.f32 %v704, 1e-12
    %v711 = vmax.f32 %v707, 1e-12
    %v712 = vadd.f32 %v696, %v699
    %v713 = vrot.slane %v712, 4
    %v714 = vadd.f32 %v712, %v713
    %v715 = vrot.slane %v714, 2
    %v716 = vadd.f32 %v714, %v715
    %v717 = vrot.slane %v716, 1
    %v718 = vadd.f32 %v716, %v717
    %v719 = vadd.f32 %v702, %v705
    %v720 = vrot.slane %v719, 4
    %v721 = vadd.f32 %v719, %v720
    %v722 = vrot.slane %v721, 2
    %v723 = vadd.f32 %v721, %v722
    %v724 = vrot.slane %v723, 1
    %v725 = vadd.f32 %v723, %v724
    %v726 = vmax.f32 %v718, 1e-12
    %v727 = vmax.f32 %v725, 1e-12
    %v728 = vrsqrt.pop %v708
    %v729 = vrsqrt.pop %v709
    %v730 = vrsqrt.pop %v710
    %v731 = vrsqrt.pop %v711
    %v732 = vrsqrt.pop %v726
    %v733 = vrsqrt.pop %v727
    %v734 = vmul.f32 %v728, %v732
    %v735 = vmul.f32 %v729, %v732
    %v736 = vmul.f32 %v730, %v733
    %v737 = vmul.f32 %v731, %v733
    %v738 = vmul.f32 %v691, %v734
    %v739 = vmul.f32 %v692, %v735
    %v740 = vmul.f32 %v693, %v736
    %v741 = vmul.f32 %v694, %v737
    %742 = vxpose.xlu0.b32.start [1/16] %v738, 128
    %743 = vxpose.xlu0.b32.cont [2/16] %v739, 128
    %744 = vxpose.xlu0.b32.cont [3/16] 0.0, 128
    %745 = vxpose.xlu0.b32.cont [4/16] 0.0, 128
    %746 = vxpose.xlu0.b32.cont [5/16] 0.0, 128
    %747 = vxpose.xlu0.b32.cont [6/16] 0.0, 128
    %748 = vxpose.xlu0.b32.cont [7/16] 0.0, 128
    %749 = vxpose.xlu0.b32.cont [8/16] 0.0, 128
    %750 = vxpose.xlu0.b32.cont [9/16] 0.0, 128
    %751 = vxpose.xlu0.b32.cont [10/16] 0.0, 128
    %752 = vxpose.xlu0.b32.cont [11/16] 0.0, 128
    %753 = vxpose.xlu0.b32.cont [12/16] 0.0, 128
    %754 = vxpose.xlu0.b32.cont [13/16] 0.0, 128
    %755 = vxpose.xlu0.b32.cont [14/16] 0.0, 128
    %756 = vxpose.xlu0.b32.cont [15/16] 0.0, 128
    %757 = vxpose.xlu0.b32.end [16/16] 0.0, 128
    %v758 = vpop.trf.xlu0
    %v759 = vpop.trf.xlu0
    %v760 = vpop.trf.xlu0
    %v761 = vpop.trf.xlu0
    %v762 = vpop.trf.xlu0
    %v763 = vpop.trf.xlu0
    %v764 = vpop.trf.xlu0
    %v765 = vpop.trf.xlu0
    %v766 = vpop.trf.xlu0
    %v767 = vpop.trf.xlu0
    %v768 = vpop.trf.xlu0
    %v769 = vpop.trf.xlu0
    %v770 = vpop.trf.xlu0
    %v771 = vpop.trf.xlu0
    %v772 = vpop.trf.xlu0
    %v773 = vpop.trf.xlu0
    %774 = vxpose.xlu0.b32.start [1/16] %v740, 128
    %775 = vxpose.xlu0.b32.cont [2/16] %v741, 128
    %776 = vxpose.xlu0.b32.cont [3/16] 0.0, 128
    %777 = vxpose.xlu0.b32.cont [4/16] 0.0, 128
    %778 = vxpose.xlu0.b32.cont [5/16] 0.0, 128
    %779 = vxpose.xlu0.b32.cont [6/16] 0.0, 128
    %780 = vxpose.xlu0.b32.cont [7/16] 0.0, 128
    %781 = vxpose.xlu0.b32.cont [8/16] 0.0, 128
    %782 = vxpose.xlu0.b32.cont [9/16] 0.0, 128
    %783 = vxpose.xlu0.b32.cont [10/16] 0.0, 128
    %784 = vxpose.xlu0.b32.cont [11/16] 0.0, 128
    %785 = vxpose.xlu0.b32.cont [12/16] 0.0, 128
    %786 = vxpose.xlu0.b32.cont [13/16] 0.0, 128
    %787 = vxpose.xlu0.b32.cont [14/16] 0.0, 128
    %788 = vxpose.xlu0.b32.cont [15/16] 0.0, 128
    %789 = vxpose.xlu0.b32.end [16/16] 0.0, 128
    %v790 = vpop.trf.xlu0
    %v791 = vpop.trf.xlu0
    %v792 = vpop.trf.xlu0
    %v793 = vpop.trf.xlu0
    %v794 = vpop.trf.xlu0
    %v795 = vpop.trf.xlu0
    %v796 = vpop.trf.xlu0
    %v797 = vpop.trf.xlu0
    %v798 = vpop.trf.xlu0
    %v799 = vpop.trf.xlu0
    %v800 = vpop.trf.xlu0
    %v801 = vpop.trf.xlu0
    %v802 = vpop.trf.xlu0
    %v803 = vpop.trf.xlu0
    %v804 = vpop.trf.xlu0
    %v805 = vpop.trf.xlu0
    %v807 = vsel %vm695, %v738, 0
    %v810 = vsel %vm695, %v739, 0
    %812 = vmatprep.subr.mxu0 0.0
    %813 = vmatpush1.msra.mxu0 0.0
    %814 = vmatprep.subr.mxu0 0.0
    %815 = vmatpush1.msra.mxu0 0.0
    %816 = vmatprep.subr.mxu0 0.0
    %817 = vmatpush1.msra.mxu0 0.0
    %818 = vmatprep.subr.mxu0 0.0
    %819 = vmatpush1.msra.mxu0 0.0
    %820 = vmatprep.subr.mxu0 0.0
    %821 = vmatpush1.msra.mxu0 0.0
    %822 = vmatprep.subr.mxu0 0.0
    %823 = vmatpush1.msra.mxu0 0.0
    %824 = vmatprep.subr.mxu0 0.0
    %825 = vmatpush1.msra.mxu0 0.0
    %826 = vmatprep.subr.mxu0 0.0
    %827 = vmatpush1.msra.mxu0 0.0
    %828 = vmatprep.subr.mxu0 0.0
    %829 = vmatpush1.msra.mxu0 0.0
    %830 = vmatprep.subr.mxu0 0.0
    %831 = vmatpush1.msra.mxu0 0.0
    %832 = vmatprep.subr.mxu0 0.0
    %833 = vmatpush1.msra.mxu0 0.0
    %834 = vmatprep.subr.mxu0 0.0
    %835 = vmatpush1.msra.mxu0 0.0
    %836 = vmatprep.subr.mxu0 0.0
    %837 = vmatpush1.msra.mxu0 0.0
    %838 = vmatprep.subr.mxu0 0.0
    %839 = vmatpush1.msra.mxu0 0.0
    %840 = vmatprep.subr.mxu0 0.0
    %841 = vmatpush1.msra.mxu0 %v311
    %842 = vmatprep.subr.mxu0 0.0
    %843 = vmatpush1.msra.mxu0 %v305
    %844 = vmatprep.subr.mxu0 0.0
    %845 = vmatpush2.msra.mxu0 0.0
    %846 = vmatprep.subr.mxu0 0.0
    %847 = vmatpush2.msra.mxu0 0.0
    %848 = vmatprep.subr.mxu0 0.0
    %849 = vmatpush2.msra.mxu0 0.0
    %850 = vmatprep.subr.mxu0 0.0
    %851 = vmatpush2.msra.mxu0 0.0
    %852 = vmatprep.subr.mxu0 0.0
    %853 = vmatpush2.msra.mxu0 0.0
    %854 = vmatprep.subr.mxu0 0.0
    %855 = vmatpush2.msra.mxu0 0.0
    %856 = vmatprep.subr.mxu0 0.0
    %857 = vmatpush2.msra.mxu0 0.0
    %858 = vmatprep.subr.mxu0 0.0
    %859 = vmatpush2.msra.mxu0 0.0
    %860 = vmatprep.subr.mxu0 0.0
    %861 = vmatpush2.msra.mxu0 0.0
    %862 = vmatprep.subr.mxu0 0.0
    %863 = vmatpush2.msra.mxu0 0.0
    %864 = vmatprep.subr.mxu0 0.0
    %865 = vmatpush2.msra.mxu0 0.0
    %866 = vmatprep.subr.mxu0 0.0
    %867 = vmatpush2.msra.mxu0 0.0
    %868 = vmatprep.subr.mxu0 0.0
    %869 = vmatpush2.msra.mxu0 0.0
    %870 = vmatprep.subr.mxu0 0.0
    %871 = vmatpush2.msra.mxu0 0.0
    %872 = vmatprep.subr.mxu0 0.0
    %873 = vmatpush2.msra.mxu0 0.0
    %874 = vmatprep.subr.mxu0 0.0
    %875 = vmatpush2.msra.mxu0 0.0
    %876 = vmatprep.mubr.f32.mxu0 0.0
    %877 = vmatmul.mubr.f32.gmra.mxu0 %v807
    %v878 = vpop.f32.mrf.mxu0
    %v879 = vadd.f32 0.0, %v878
    %v880 = vpop.f32.mrf.mxu0
    %881 = vmatprep.mubr.f32.mxu0 0.0
    %882 = vmatmul.mubr.f32.gmra.mxu0 %v810
    %v883 = vpop.f32.mrf.mxu0
    %v884 = vadd.f32 0.0, %v883
    %v885 = vpop.f32.mrf.mxu0
    %886 = vdwg.mxu0
    %v888 = vsel %vm695, %v740, 0
    %v891 = vsel %vm695, %v741, 0
    %893 = vmatprep.subr.mxu0 0.0
    %894 = vmatpush1.msra.mxu0 0.0
    %895 = vmatprep.subr.mxu0 0.0
    %896 = vmatpush1.msra.mxu0 0.0
    %897 = vmatprep.subr.mxu0 0.0
    %898 = vmatpush1.msra.mxu0 0.0
    %899 = vmatprep.subr.mxu0 0.0
    %900 = vmatpush1.msra.mxu0 0.0
    %901 = vmatprep.subr.mxu0 0.0
    %902 = vmatpush1.msra.mxu0 0.0
    %903 = vmatprep.subr.mxu0 0.0
    %904 = vmatpush1.msra.mxu0 0.0
    %905 = vmatprep.subr.mxu0 0.0
    %906 = vmatpush1.msra.mxu0 0.0
    %907 = vmatprep.subr.mxu0 0.0
    %908 = vmatpush1.msra.mxu0 0.0
    %909 = vmatprep.subr.mxu0 0.0
    %910 = vmatpush1.msra.mxu0 0.0
    %911 = vmatprep.subr.mxu0 0.0
    %912 = vmatpush1.msra.mxu0 0.0
    %913 = vmatprep.subr.mxu0 0.0
    %914 = vmatpush1.msra.mxu0 0.0
    %915 = vmatprep.subr.mxu0 0.0
    %916 = vmatpush1.msra.mxu0 0.0
    %917 = vmatprep.subr.mxu0 0.0
    %918 = vmatpush1.msra.mxu0 0.0
    %919 = vmatprep.subr.mxu0 0.0
    %920 = vmatpush1.msra.mxu0 0.0
    %921 = vmatprep.subr.mxu0 0.0
    %922 = vmatpush1.msra.mxu0 %v323
    %923 = vmatprep.subr.mxu0 0.0
    %924 = vmatpush1.msra.mxu0 %v317
    %925 = vmatprep.subr.mxu0 0.0
    %926 = vmatpush2.msra.mxu0 0.0
    %927 = vmatprep.subr.mxu0 0.0
    %928 = vmatpush2.msra.mxu0 0.0
    %929 = vmatprep.subr.mxu0 0.0
    %930 = vmatpush2.msra.mxu0 0.0
    %931 = vmatprep.subr.mxu0 0.0
    %932 = vmatpush2.msra.mxu0 0.0
    %933 = vmatprep.subr.mxu0 0.0
    %934 = vmatpush2.msra.mxu0 0.0
    %935 = vmatprep.subr.mxu0 0.0
    %936 = vmatpush2.msra.mxu0 0.0
    %937 = vmatprep.subr.mxu0 0.0
    %938 = vmatpush2.msra.mxu0 0.0
    %939 = vmatprep.subr.mxu0 0.0
    %940 = vmatpush2.msra.mxu0 0.0
    %941 = vmatprep.subr.mxu0 0.0
    %942 = vmatpush2.msra.mxu0 0.0
    %943 = vmatprep.subr.mxu0 0.0
    %944 = vmatpush2.msra.mxu0 0.0
    %945 = vmatprep.subr.mxu0 0.0
    %946 = vmatpush2.msra.mxu0 0.0
    %947 = vmatprep.subr.mxu0 0.0
    %948 = vmatpush2.msra.mxu0 0.0
    %949 = vmatprep.subr.mxu0 0.0
    %950 = vmatpush2.msra.mxu0 0.0
    %951 = vmatprep.subr.mxu0 0.0
    %952 = vmatpush2.msra.mxu0 0.0
    %953 = vmatprep.subr.mxu0 0.0
    %954 = vmatpush2.msra.mxu0 0.0
    %955 = vmatprep.subr.mxu0 0.0
    %956 = vmatpush2.msra.mxu0 0.0
    %957 = vmatprep.mubr.f32.mxu0 0.0
    %958 = vmatmul.mubr.f32.gmra.mxu0 %v888
    %v959 = vpop.f32.mrf.mxu0
    %v960 = vadd.f32 0.0, %v959
    %v961 = vpop.f32.mrf.mxu0
    %962 = vmatprep.mubr.f32.mxu0 0.0
    %963 = vmatmul.mubr.f32.gmra.mxu0 %v891
    %v964 = vpop.f32.mrf.mxu0
    %v965 = vadd.f32 0.0, %v964
    %v966 = vpop.f32.mrf.mxu0
    %967 = vdwg.mxu0
    %v969 = vsel %vm695, %v758, 0
    %v972 = vsel %vm695, %v759, 0
    %974 = vmatprep.subr.mxu0 0.0
    %975 = vmatpush1.msra.mxu0 0.0
    %976 = vmatprep.subr.mxu0 0.0
    %977 = vmatpush1.msra.mxu0 0.0
    %978 = vmatprep.subr.mxu0 0.0
    %979 = vmatpush1.msra.mxu0 0.0
    %980 = vmatprep.subr.mxu0 0.0
    %981 = vmatpush1.msra.mxu0 0.0
    %982 = vmatprep.subr.mxu0 0.0
    %983 = vmatpush1.msra.mxu0 0.0
    %984 = vmatprep.subr.mxu0 0.0
    %985 = vmatpush1.msra.mxu0 0.0
    %986 = vmatprep.subr.mxu0 0.0
    %987 = vmatpush1.msra.mxu0 0.0
    %988 = vmatprep.subr.mxu0 0.0
    %989 = vmatpush1.msra.mxu0 0.0
    %990 = vmatprep.subr.mxu0 0.0
    %991 = vmatpush1.msra.mxu0 0.0
    %992 = vmatprep.subr.mxu0 0.0
    %993 = vmatpush1.msra.mxu0 0.0
    %994 = vmatprep.subr.mxu0 0.0
    %995 = vmatpush1.msra.mxu0 0.0
    %996 = vmatprep.subr.mxu0 0.0
    %997 = vmatpush1.msra.mxu0 0.0
    %998 = vmatprep.subr.mxu0 0.0
    %999 = vmatpush1.msra.mxu0 0.0
    %1000 = vmatprep.subr.mxu0 0.0
    %1001 = vmatpush1.msra.mxu0 0.0
    %1002 = vmatprep.subr.mxu0 0.0
    %1003 = vmatpush1.msra.mxu0 %v313
    %1004 = vmatprep.subr.mxu0 0.0
    %1005 = vmatpush1.msra.mxu0 %v307
    %1006 = vmatprep.subr.mxu0 0.0
    %1007 = vmatpush2.msra.mxu0 0.0
    %1008 = vmatprep.subr.mxu0 0.0
    %1009 = vmatpush2.msra.mxu0 0.0
    %1010 = vmatprep.subr.mxu0 0.0
    %1011 = vmatpush2.msra.mxu0 0.0
    %1012 = vmatprep.subr.mxu0 0.0
    %1013 = vmatpush2.msra.mxu0 0.0
    %1014 = vmatprep.subr.mxu0 0.0
    %1015 = vmatpush2.msra.mxu0 0.0
    %1016 = vmatprep.subr.mxu0 0.0
    %1017 = vmatpush2.msra.mxu0 0.0
    %1018 = vmatprep.subr.mxu0 0.0
    %1019 = vmatpush2.msra.mxu0 0.0
    %1020 = vmatprep.subr.mxu0 0.0
    %1021 = vmatpush2.msra.mxu0 0.0
    %1022 = vmatprep.subr.mxu0 0.0
    %1023 = vmatpush2.msra.mxu0 0.0
    %1024 = vmatprep.subr.mxu0 0.0
    %1025 = vmatpush2.msra.mxu0 0.0
    %1026 = vmatprep.subr.mxu0 0.0
    %1027 = vmatpush2.msra.mxu0 0.0
    %1028 = vmatprep.subr.mxu0 0.0
    %1029 = vmatpush2.msra.mxu0 0.0
    %1030 = vmatprep.subr.mxu0 0.0
    %1031 = vmatpush2.msra.mxu0 0.0
    %1032 = vmatprep.subr.mxu0 0.0
    %1033 = vmatpush2.msra.mxu0 0.0
    %1034 = vmatprep.subr.mxu0 0.0
    %1035 = vmatpush2.msra.mxu0 0.0
    %1036 = vmatprep.subr.mxu0 0.0
    %1037 = vmatpush2.msra.mxu0 0.0
    %1038 = vmatprep.mubr.f32.mxu0 0.0
    %1039 = vmatmul.mubr.f32.gmra.mxu0 %v969
    %v1040 = vpop.f32.mrf.mxu0
    %v1041 = vadd.f32 0.0, %v1040
    %v1042 = vpop.f32.mrf.mxu0
    %1043 = vmatprep.mubr.f32.mxu0 0.0
    %1044 = vmatmul.mubr.f32.gmra.mxu0 %v972
    %v1045 = vpop.f32.mrf.mxu0
    %v1046 = vadd.f32 0.0, %v1045
    %v1047 = vpop.f32.mrf.mxu0
    %1048 = vdwg.mxu0
    %v1050 = vsel %vm695, %v790, 0
    %v1053 = vsel %vm695, %v791, 0
    %1055 = vmatprep.subr.mxu0 0.0
    %1056 = vmatpush1.msra.mxu0 0.0
    %1057 = vmatprep.subr.mxu0 0.0
    %1058 = vmatpush1.msra.mxu0 0.0
    %1059 = vmatprep.subr.mxu0 0.0
    %1060 = vmatpush1.msra.mxu0 0.0
    %1061 = vmatprep.subr.mxu0 0.0
    %1062 = vmatpush1.msra.mxu0 0.0
    %1063 = vmatprep.subr.mxu0 0.0
    %1064 = vmatpush1.msra.mxu0 0.0
    %1065 = vmatprep.subr.mxu0 0.0
    %1066 = vmatpush1.msra.mxu0 0.0
    %1067 = vmatprep.subr.mxu0 0.0
    %1068 = vmatpush1.msra.mxu0 0.0
    %1069 = vmatprep.subr.mxu0 0.0
    %1070 = vmatpush1.msra.mxu0 0.0
    %1071 = vmatprep.subr.mxu0 0.0
    %1072 = vmatpush1.msra.mxu0 0.0
    %1073 = vmatprep.subr.mxu0 0.0
    %1074 = vmatpush1.msra.mxu0 0.0
    %1075 = vmatprep.subr.mxu0 0.0
    %1076 = vmatpush1.msra.mxu0 0.0
    %1077 = vmatprep.subr.mxu0 0.0
    %1078 = vmatpush1.msra.mxu0 0.0
    %1079 = vmatprep.subr.mxu0 0.0
    %1080 = vmatpush1.msra.mxu0 0.0
    %1081 = vmatprep.subr.mxu0 0.0
    %1082 = vmatpush1.msra.mxu0 0.0
    %1083 = vmatprep.subr.mxu0 0.0
    %1084 = vmatpush1.msra.mxu0 %v325
    %1085 = vmatprep.subr.mxu0 0.0
    %1086 = vmatpush1.msra.mxu0 %v319
    %1087 = vmatprep.subr.mxu0 0.0
    %1088 = vmatpush2.msra.mxu0 0.0
    %1089 = vmatprep.subr.mxu0 0.0
    %1090 = vmatpush2.msra.mxu0 0.0
    %1091 = vmatprep.subr.mxu0 0.0
    %1092 = vmatpush2.msra.mxu0 0.0
    %1093 = vmatprep.subr.mxu0 0.0
    %1094 = vmatpush2.msra.mxu0 0.0
    %1095 = vmatprep.subr.mxu0 0.0
    %1096 = vmatpush2.msra.mxu0 0.0
    %1097 = vmatprep.subr.mxu0 0.0
    %1098 = vmatpush2.msra.mxu0 0.0
    %1099 = vmatprep.subr.mxu0 0.0
    %1100 = vmatpush2.msra.mxu0 0.0
    %1101 = vmatprep.subr.mxu0 0.0
    %1102 = vmatpush2.msra.mxu0 0.0
    %1103 = vmatprep.subr.mxu0 0.0
    %1104 = vmatpush2.msra.mxu0 0.0
    %1105 = vmatprep.subr.mxu0 0.0
    %1106 = vmatpush2.msra.mxu0 0.0
    %1107 = vmatprep.subr.mxu0 0.0
    %1108 = vmatpush2.msra.mxu0 0.0
    %1109 = vmatprep.subr.mxu0 0.0
    %1110 = vmatpush2.msra.mxu0 0.0
    %1111 = vmatprep.subr.mxu0 0.0
    %1112 = vmatpush2.msra.mxu0 0.0
    %1113 = vmatprep.subr.mxu0 0.0
    %1114 = vmatpush2.msra.mxu0 0.0
    %1115 = vmatprep.subr.mxu0 0.0
    %1116 = vmatpush2.msra.mxu0 0.0
    %1117 = vmatprep.subr.mxu0 0.0
    %1118 = vmatpush2.msra.mxu0 0.0
    %1119 = vmatprep.mubr.f32.mxu0 0.0
    %1120 = vmatmul.mubr.f32.gmra.mxu0 %v1050
    %v1121 = vpop.f32.mrf.mxu0
    %v1122 = vadd.f32 0.0, %v1121
    %v1123 = vpop.f32.mrf.mxu0
    %1124 = vmatprep.mubr.f32.mxu0 0.0
    %1125 = vmatmul.mubr.f32.gmra.mxu0 %v1053
    %v1126 = vpop.f32.mrf.mxu0
    %v1127 = vadd.f32 0.0, %v1126
    %v1128 = vpop.f32.mrf.mxu0
    %1129 = vdwg.mxu0
    %v1130 = vld [vmem:[#allocation10] sm:$0xff]
    %v1131 = vld [vmem:[#allocation10 + $0x8] sm:$0xff]
    %v1132 = vld [vmem:[#allocation10 + $0x10] sm:$0xff]
    %v1133 = vld [vmem:[#allocation10 + $0x18] sm:$0xff]
    %v1134 = vld [vmem:[#allocation10 + $0x20] sm:$0xff]
    %v1135 = vld [vmem:[#allocation10 + $0x28] sm:$0xff]
    %v1136 = vld [vmem:[#allocation10 + $0x30] sm:$0xff]
    %v1137 = vld [vmem:[#allocation10 + $0x38] sm:$0xff]
    %v1138 = vld [vmem:[#allocation10 + $0x40] sm:$0xff]
    %v1139 = vld [vmem:[#allocation10 + $0x48] sm:$0xff]
    %v1140 = vld [vmem:[#allocation10 + $0x50] sm:$0xff]
    %v1141 = vld [vmem:[#allocation10 + $0x58] sm:$0xff]
    %v1142 = vld [vmem:[#allocation10 + $0x60] sm:$0xff]
    %v1143 = vld [vmem:[#allocation10 + $0x68] sm:$0xff]
    %v1144 = vld [vmem:[#allocation10 + $0x70] sm:$0xff]
    %v1145 = vld [vmem:[#allocation10 + $0x78] sm:$0xff]
    %v1146 = vld [vmem:[#allocation11] sm:$0xff]
    %v1147 = vld [vmem:[#allocation11 + $0x8] sm:$0xff]
    %v1148 = vld [vmem:[#allocation11 + $0x10] sm:$0xff]
    %v1149 = vld [vmem:[#allocation11 + $0x18] sm:$0xff]
    %v1150 = vld [vmem:[#allocation11 + $0x20] sm:$0xff]
    %v1151 = vld [vmem:[#allocation11 + $0x28] sm:$0xff]
    %v1152 = vld [vmem:[#allocation11 + $0x30] sm:$0xff]
    %v1153 = vld [vmem:[#allocation11 + $0x38] sm:$0xff]
    %v1154 = vld [vmem:[#allocation11 + $0x40] sm:$0xff]
    %v1155 = vld [vmem:[#allocation11 + $0x48] sm:$0xff]
    %v1156 = vld [vmem:[#allocation11 + $0x50] sm:$0xff]
    %v1157 = vld [vmem:[#allocation11 + $0x58] sm:$0xff]
    %v1158 = vld [vmem:[#allocation11 + $0x60] sm:$0xff]
    %v1159 = vld [vmem:[#allocation11 + $0x68] sm:$0xff]
    %v1160 = vld [vmem:[#allocation11 + $0x70] sm:$0xff]
    %v1161 = vld [vmem:[#allocation11 + $0x78] sm:$0xff]
    %1162 = vmatprep.subr.mxu0 0.0
    %1163 = vmatpush1.msra.mxu0 %v1161
    %1164 = vmatprep.subr.mxu0 0.0
    %1165 = vmatpush1.msra.mxu0 %v1160
    %1166 = vmatprep.subr.mxu0 0.0
    %1167 = vmatpush1.msra.mxu0 %v1159
    %1168 = vmatprep.subr.mxu0 0.0
    %1169 = vmatpush1.msra.mxu0 %v1158
    %1170 = vmatprep.subr.mxu0 0.0
    %1171 = vmatpush1.msra.mxu0 %v1157
    %1172 = vmatprep.subr.mxu0 0.0
    %1173 = vmatpush1.msra.mxu0 %v1156
    %1174 = vmatprep.subr.mxu0 0.0
    %1175 = vmatpush1.msra.mxu0 %v1155
    %1176 = vmatprep.subr.mxu0 0.0
    %1177 = vmatpush1.msra.mxu0 %v1154
    %1178 = vmatprep.subr.mxu0 0.0
    %1179 = vmatpush1.msra.mxu0 %v1153
    %1180 = vmatprep.subr.mxu0 0.0
    %1181 = vmatpush1.msra.mxu0 %v1152
    %1182 = vmatprep.subr.mxu0 0.0
    %1183 = vmatpush1.msra.mxu0 %v1151
    %1184 = vmatprep.subr.mxu0 0.0
    %1185 = vmatpush1.msra.mxu0 %v1150
    %1186 = vmatprep.subr.mxu0 0.0
    %1187 = vmatpush1.msra.mxu0 %v1149
    %1188 = vmatprep.subr.mxu0 0.0
    %1189 = vmatpush1.msra.mxu0 %v1148
    %1190 = vmatprep.subr.mxu0 0.0
    %1191 = vmatpush1.msra.mxu0 %v1147
    %1192 = vmatprep.subr.mxu0 0.0
    %1193 = vmatpush1.msra.mxu0 %v1146
    %1194 = vmatprep.subr.mxu0 0.0
    %1195 = vmatpush2.msra.mxu0 0.0
    %1196 = vmatprep.subr.mxu0 0.0
    %1197 = vmatpush2.msra.mxu0 0.0
    %1198 = vmatprep.subr.mxu0 0.0
    %1199 = vmatpush2.msra.mxu0 0.0
    %1200 = vmatprep.subr.mxu0 0.0
    %1201 = vmatpush2.msra.mxu0 0.0
    %1202 = vmatprep.subr.mxu0 0.0
    %1203 = vmatpush2.msra.mxu0 0.0
    %1204 = vmatprep.subr.mxu0 0.0
    %1205 = vmatpush2.msra.mxu0 0.0
    %1206 = vmatprep.subr.mxu0 0.0
    %1207 = vmatpush2.msra.mxu0 0.0
    %1208 = vmatprep.subr.mxu0 0.0
    %1209 = vmatpush2.msra.mxu0 0.0
    %1210 = vmatprep.subr.mxu0 0.0
    %1211 = vmatpush2.msra.mxu0 0.0
    %1212 = vmatprep.subr.mxu0 0.0
    %1213 = vmatpush2.msra.mxu0 0.0
    %1214 = vmatprep.subr.mxu0 0.0
    %1215 = vmatpush2.msra.mxu0 0.0
    %1216 = vmatprep.subr.mxu0 0.0
    %1217 = vmatpush2.msra.mxu0 0.0
    %1218 = vmatprep.subr.mxu0 0.0
    %1219 = vmatpush2.msra.mxu0 0.0
    %1220 = vmatprep.subr.mxu0 0.0
    %1221 = vmatpush2.msra.mxu0 0.0
    %1222 = vmatprep.subr.mxu0 0.0
    %1223 = vmatpush2.msra.mxu0 0.0
    %1224 = vmatprep.subr.mxu0 0.0
    %1225 = vmatpush2.msra.mxu0 0.0
    %1226 = vmatprep.mubr.f32.mxu0 0.0
    %1227 = vmatmul.mubr.f32.gmra.mxu0 %v1041
    %v1228 = vpop.f32.mrf.mxu0
    %v1229 = vadd.f32 0.0, %v1228
    %v1230 = vpop.f32.mrf.mxu0
    %1231 = vmatprep.mubr.f32.mxu0 0.0
    %1232 = vmatmul.mubr.f32.gmra.mxu0 %v1046
    %v1233 = vpop.f32.mrf.mxu0
    %v1234 = vadd.f32 0.0, %v1233
    %v1235 = vpop.f32.mrf.mxu0
    %1236 = vmatprep.mubr.f32.mxu0 0.0
    %1237 = vmatmul.mubr.f32.gmra.mxu0 %v1122
    %v1238 = vpop.f32.mrf.mxu0
    %v1239 = vadd.f32 0.0, %v1238
    %v1240 = vpop.f32.mrf.mxu0
    %1241 = vmatprep.mubr.f32.mxu0 0.0
    %1242 = vmatmul.mubr.f32.gmra.mxu0 %v1127
    %v1243 = vpop.f32.mrf.mxu0
    %v1244 = vadd.f32 0.0, %v1243
    %v1245 = vpop.f32.mrf.mxu0
    %1246 = vdwg.mxu0
    %1247 = vmatprep.subr.mxu0 0.0
    %1248 = vmatpush1.msra.mxu0 %v1145
    %1249 = vmatprep.subr.mxu0 0.0
    %1250 = vmatpush1.msra.mxu0 %v1144
    %1251 = vmatprep.subr.mxu0 0.0
    %1252 = vmatpush1.msra.mxu0 %v1143
    %1253 = vmatprep.subr.mxu0 0.0
    %1254 = vmatpush1.msra.mxu0 %v1142
    %1255 = vmatprep.subr.mxu0 0.0
    %1256 = vmatpush1.msra.mxu0 %v1141
    %1257 = vmatprep.subr.mxu0 0.0
    %1258 = vmatpush1.msra.mxu0 %v1140
    %1259 = vmatprep.subr.mxu0 0.0
    %1260 = vmatpush1.msra.mxu0 %v1139
    %1261 = vmatprep.subr.mxu0 0.0
    %1262 = vmatpush1.msra.mxu0 %v1138
    %1263 = vmatprep.subr.mxu0 0.0
    %1264 = vmatpush1.msra.mxu0 %v1137
    %1265 = vmatprep.subr.mxu0 0.0
    %1266 = vmatpush1.msra.mxu0 %v1136
    %1267 = vmatprep.subr.mxu0 0.0
    %1268 = vmatpush1.msra.mxu0 %v1135
    %1269 = vmatprep.subr.mxu0 0.0
    %1270 = vmatpush1.msra.mxu0 %v1134
    %1271 = vmatprep.subr.mxu0 0.0
    %1272 = vmatpush1.msra.mxu0 %v1133
    %1273 = vmatprep.subr.mxu0 0.0
    %1274 = vmatpush1.msra.mxu0 %v1132
    %1275 = vmatprep.subr.mxu0 0.0
    %1276 = vmatpush1.msra.mxu0 %v1131
    %1277 = vmatprep.subr.mxu0 0.0
    %1278 = vmatpush1.msra.mxu0 %v1130
    %1279 = vmatprep.subr.mxu0 0.0
    %1280 = vmatpush2.msra.mxu0 0.0
    %1281 = vmatprep.subr.mxu0 0.0
    %1282 = vmatpush2.msra.mxu0 0.0
    %1283 = vmatprep.subr.mxu0 0.0
    %1284 = vmatpush2.msra.mxu0 0.0
    %1285 = vmatprep.subr.mxu0 0.0
    %1286 = vmatpush2.msra.mxu0 0.0
    %1287 = vmatprep.subr.mxu0 0.0
    %1288 = vmatpush2.msra.mxu0 0.0
    %1289 = vmatprep.subr.mxu0 0.0
    %1290 = vmatpush2.msra.mxu0 0.0
    %1291 = vmatprep.subr.mxu0 0.0
    %1292 = vmatpush2.msra.mxu0 0.0
    %1293 = vmatprep.subr.mxu0 0.0
    %1294 = vmatpush2.msra.mxu0 0.0
    %1295 = vmatprep.subr.mxu0 0.0
    %1296 = vmatpush2.msra.mxu0 0.0
    %1297 = vmatprep.subr.mxu0 0.0
    %1298 = vmatpush2.msra.mxu0 0.0
    %1299 = vmatprep.subr.mxu0 0.0
    %1300 = vmatpush2.msra.mxu0 0.0
    %1301 = vmatprep.subr.mxu0 0.0
    %1302 = vmatpush2.msra.mxu0 0.0
    %1303 = vmatprep.subr.mxu0 0.0
    %1304 = vmatpush2.msra.mxu0 0.0
    %1305 = vmatprep.subr.mxu0 0.0
    %1306 = vmatpush2.msra.mxu0 0.0
    %1307 = vmatprep.subr.mxu0 0.0
    %1308 = vmatpush2.msra.mxu0 0.0
    %1309 = vmatprep.subr.mxu0 0.0
    %1310 = vmatpush2.msra.mxu0 0.0
    %1311 = vmatprep.mubr.f32.mxu0 0.0
    %1312 = vmatmul.mubr.f32.gmra.mxu0 %v879
    %v1313 = vpop.f32.mrf.mxu0
    %v1314 = vadd.f32 %v1229, %v1313
    %v1315 = vpop.f32.mrf.mxu0
    %1316 = vmatprep.mubr.f32.mxu0 0.0
    %1317 = vmatmul.mubr.f32.gmra.mxu0 %v884
    %v1318 = vpop.f32.mrf.mxu0
    %v1319 = vadd.f32 %v1234, %v1318
    %v1320 = vpop.f32.mrf.mxu0
    %1321 = vmatprep.mubr.f32.mxu0 0.0
    %1322 = vmatmul.mubr.f32.gmra.mxu0 %v960
    %v1323 = vpop.f32.mrf.mxu0
    %v1324 = vadd.f32 %v1239, %v1323
    %v1325 = vpop.f32.mrf.mxu0
    %1326 = vmatprep.mubr.f32.mxu0 0.0
    %1327 = vmatmul.mubr.f32.gmra.mxu0 %v965
    %v1328 = vpop.f32.mrf.mxu0
    %v1329 = vadd.f32 %v1244, %v1328
    %v1330 = vpop.f32.mrf.mxu0
    %1331 = vdwg.mxu0
    %v1332 = vld [vmem:[%s6] sm:$0x1]
    %v1334 = vlaneseq
    %v1335 = vshrl.u32 %v1334, 7
    %v1336 = vsub.s32 0, %v1335
    %v1337 = vrot.slane %v1332, %v1336
    %v1339 = vadd.f32 %v1314, %v1337
    %v1340 = vadd.f32 %v1319, %v1337
    %v1341 = vadd.f32 %v1324, %v1337
    %v1342 = vadd.f32 %v1329, %v1337
    %v1343 = vmax.f32 %v1339, 0.0
    %v1344 = vmax.f32 %v1340, 0.0
    %v1345 = vmax.f32 %v1341, 0.0
    %v1346 = vmax.f32 %v1342, 0.0
    %v1347 = vld [vmem:[%s7] sm:$0x1]
    %v1349 = vlaneseq
    %v1350 = vshrl.u32 %v1349, 7
    %v1351 = vsub.s32 0, %v1350
    %v1352 = vrot.slane %v1347, %v1351
    %v1354 = vmul.f32 %v1343, %v1352
    %v1355 = vmul.f32 %v1344, %v1352
    %v1356 = vmul.f32 %v1345, %v1352
    %v1357 = vmul.f32 %v1346, %v1352
    %1358 = vadd.xlane.f32.xlu0 %v1354
    %v1359 = vpop.xlane.xlu0 %1358
    %1360 = vadd.xlane.f32.xlu0 %v1355
    %v1361 = vpop.xlane.xlu0 %1360
    %1362 = vadd.xlane.f32.xlu0 %v1356
    %v1363 = vpop.xlane.xlu0 %1362
    %1364 = vadd.xlane.f32.xlu0 %v1357
    %v1365 = vpop.xlane.xlu0 %1364
    %v1367 = vsel %vm695, %v120, 0
    %v1370 = vsel %vm695, %v121, 0
    %1372 = vmatprep.subr.mxu0 0.0
    %1373 = vmatpush1.msra.mxu0 0.0
    %1374 = vmatprep.subr.mxu0 0.0
    %1375 = vmatpush1.msra.mxu0 0.0
    %1376 = vmatprep.subr.mxu0 0.0
    %1377 = vmatpush1.msra.mxu0 0.0
    %1378 = vmatprep.subr.mxu0 0.0
    %1379 = vmatpush1.msra.mxu0 0.0
    %1380 = vmatprep.subr.mxu0 0.0
    %1381 = vmatpush1.msra.mxu0 0.0
    %1382 = vmatprep.subr.mxu0 0.0
    %1383 = vmatpush1.msra.mxu0 0.0
    %1384 = vmatprep.subr.mxu0 0.0
    %1385 = vmatpush1.msra.mxu0 0.0
    %1386 = vmatprep.subr.mxu0 0.0
    %1387 = vmatpush1.msra.mxu0 0.0
    %1388 = vmatprep.subr.mxu0 0.0
    %1389 = vmatpush1.msra.mxu0 0.0
    %1390 = vmatprep.subr.mxu0 0.0
    %1391 = vmatpush1.msra.mxu0 0.0
    %1392 = vmatprep.subr.mxu0 0.0
    %1393 = vmatpush1.msra.mxu0 0.0
    %1394 = vmatprep.subr.mxu0 0.0
    %1395 = vmatpush1.msra.mxu0 0.0
    %1396 = vmatprep.subr.mxu0 0.0
    %1397 = vmatpush1.msra.mxu0 0.0
    %1398 = vmatprep.subr.mxu0 0.0
    %1399 = vmatpush1.msra.mxu0 0.0
    %1400 = vmatprep.subr.mxu0 0.0
    %1401 = vmatpush1.msra.mxu0 %v121
    %1402 = vmatprep.subr.mxu0 0.0
    %1403 = vmatpush1.msra.mxu0 %v120
    %1404 = vmatprep.subr.mxu0 0.0
    %1405 = vmatpush2.msra.mxu0 0.0
    %1406 = vmatprep.subr.mxu0 0.0
    %1407 = vmatpush2.msra.mxu0 0.0
    %1408 = vmatprep.subr.mxu0 0.0
    %1409 = vmatpush2.msra.mxu0 0.0
    %1410 = vmatprep.subr.mxu0 0.0
    %1411 = vmatpush2.msra.mxu0 0.0
    %1412 = vmatprep.subr.mxu0 0.0
    %1413 = vmatpush2.msra.mxu0 0.0
    %1414 = vmatprep.subr.mxu0 0.0
    %1415 = vmatpush2.msra.mxu0 0.0
    %1416 = vmatprep.subr.mxu0 0.0
    %1417 = vmatpush2.msra.mxu0 0.0
    %1418 = vmatprep.subr.mxu0 0.0
    %1419 = vmatpush2.msra.mxu0 0.0
    %1420 = vmatprep.subr.mxu0 0.0
    %1421 = vmatpush2.msra.mxu0 0.0
    %1422 = vmatprep.subr.mxu0 0.0
    %1423 = vmatpush2.msra.mxu0 0.0
    %1424 = vmatprep.subr.mxu0 0.0
    %1425 = vmatpush2.msra.mxu0 0.0
    %1426 = vmatprep.subr.mxu0 0.0
    %1427 = vmatpush2.msra.mxu0 0.0
    %1428 = vmatprep.subr.mxu0 0.0
    %1429 = vmatpush2.msra.mxu0 0.0
    %1430 = vmatprep.subr.mxu0 0.0
    %1431 = vmatpush2.msra.mxu0 0.0
    %1432 = vmatprep.subr.mxu0 0.0
    %1433 = vmatpush2.msra.mxu0 0.0
    %1434 = vmatprep.subr.mxu0 0.0
    %1435 = vmatpush2.msra.mxu0 0.0
    %1436 = vmatprep.mubr.f32.mxu0 0.0
    %1437 = vmatmul.mubr.f32.gmra.mxu0 %v1367
    %v1438 = vpop.f32.mrf.mxu0
    %v1439 = vadd.f32 0.0, %v1438
    %v1440 = vpop.f32.mrf.mxu0
    %1441 = vmatprep.mubr.f32.mxu0 0.0
    %1442 = vmatmul.mubr.f32.gmra.mxu0 %v1370
    %v1443 = vpop.f32.mrf.mxu0
    %v1444 = vadd.f32 0.0, %v1443
    %v1445 = vpop.f32.mrf.mxu0
    %1446 = vdwg.mxu0
    %v1448 = vsel %vm695, %v122, 0
    %v1451 = vsel %vm695, %v123, 0
    %1453 = vmatprep.subr.mxu0 0.0
    %1454 = vmatpush1.msra.mxu0 0.0
    %1455 = vmatprep.subr.mxu0 0.0
    %1456 = vmatpush1.msra.mxu0 0.0
    %1457 = vmatprep.subr.mxu0 0.0
    %1458 = vmatpush1.msra.mxu0 0.0
    %1459 = vmatprep.subr.mxu0 0.0
    %1460 = vmatpush1.msra.mxu0 0.0
    %1461 = vmatprep.subr.mxu0 0.0
    %1462 = vmatpush1.msra.mxu0 0.0
    %1463 = vmatprep.subr.mxu0 0.0
    %1464 = vmatpush1.msra.mxu0 0.0
    %1465 = vmatprep.subr.mxu0 0.0
    %1466 = vmatpush1.msra.mxu0 0.0
    %1467 = vmatprep.subr.mxu0 0.0
    %1468 = vmatpush1.msra.mxu0 0.0
    %1469 = vmatprep.subr.mxu0 0.0
    %1470 = vmatpush1.msra.mxu0 0.0
    %1471 = vmatprep.subr.mxu0 0.0
    %1472 = vmatpush1.msra.mxu0 0.0
    %1473 = vmatprep.subr.mxu0 0.0
    %1474 = vmatpush1.msra.mxu0 0.0
    %1475 = vmatprep.subr.mxu0 0.0
    %1476 = vmatpush1.msra.mxu0 0.0
    %1477 = vmatprep.subr.mxu0 0.0
    %1478 = vmatpush1.msra.mxu0 0.0
    %1479 = vmatprep.subr.mxu0 0.0
    %1480 = vmatpush1.msra.mxu0 0.0
    %1481 = vmatprep.subr.mxu0 0.0
    %1482 = vmatpush1.msra.mxu0 %v123
    %1483 = vmatprep.subr.mxu0 0.0
    %1484 = vmatpush1.msra.mxu0 %v122
    %1485 = vmatprep.subr.mxu0 0.0
    %1486 = vmatpush2.msra.mxu0 0.0
    %1487 = vmatprep.subr.mxu0 0.0
    %1488 = vmatpush2.msra.mxu0 0.0
    %1489 = vmatprep.subr.mxu0 0.0
    %1490 = vmatpush2.msra.mxu0 0.0
    %1491 = vmatprep.subr.mxu0 0.0
    %1492 = vmatpush2.msra.mxu0 0.0
    %1493 = vmatprep.subr.mxu0 0.0
    %1494 = vmatpush2.msra.mxu0 0.0
    %1495 = vmatprep.subr.mxu0 0.0
    %1496 = vmatpush2.msra.mxu0 0.0
    %1497 = vmatprep.subr.mxu0 0.0
    %1498 = vmatpush2.msra.mxu0 0.0
    %1499 = vmatprep.subr.mxu0 0.0
    %1500 = vmatpush2.msra.mxu0 0.0
    %1501 = vmatprep.subr.mxu0 0.0
    %1502 = vmatpush2.msra.mxu0 0.0
    %1503 = vmatprep.subr.mxu0 0.0
    %1504 = vmatpush2.msra.mxu0 0.0
    %1505 = vmatprep.subr.mxu0 0.0
    %1506 = vmatpush2.msra.mxu0 0.0
    %1507 = vmatprep.subr.mxu0 0.0
    %1508 = vmatpush2.msra.mxu0 0.0
    %1509 = vmatprep.subr.mxu0 0.0
    %1510 = vmatpush2.msra.mxu0 0.0
    %1511 = vmatprep.subr.mxu0 0.0
    %1512 = vmatpush2.msra.mxu0 0.0
    %1513 = vmatprep.subr.mxu0 0.0
    %1514 = vmatpush2.msra.mxu0 0.0
    %1515 = vmatprep.subr.mxu0 0.0
    %1516 = vmatpush2.msra.mxu0 0.0
    %1517 = vmatprep.mubr.f32.mxu0 0.0
    %1518 = vmatmul.mubr.f32.gmra.mxu0 %v1448
    %v1519 = vpop.f32.mrf.mxu0
    %v1520 = vadd.f32 0.0, %v1519
    %v1521 = vpop.f32.mrf.mxu0
    %1522 = vmatprep.mubr.f32.mxu0 0.0
    %1523 = vmatmul.mubr.f32.gmra.mxu0 %v1451
    %v1524 = vpop.f32.mrf.mxu0
    %v1525 = vadd.f32 0.0, %v1524
    %v1526 = vpop.f32.mrf.mxu0
    %1527 = vdwg.mxu0
    %v1528 = vadd.f32 %v1439, 1.0
    %v1529 = vadd.f32 %v1444, 1.0
    %v1530 = vadd.f32 %v1520, 1.0
    %v1531 = vadd.f32 %v1525, 1.0
    %v1532 = vsel %vm689, %v1528, %v1439
    %v1533 = vsel %vm690, %v1529, %v1444
    %v1534 = vsel %vm689, %v1530, %v1520
    %v1535 = vsel %vm690, %v1531, %v1525
    %v1536 = vsel %vm695, %v1532, 0.0
    %1537 = vadd.xlane.f32.xlu0 %v1536
    %v1538 = vpop.xlane.xlu0 %1537
    %v1539 = vsel %vm695, %v1533, 0.0
    %1540 = vadd.xlane.f32.xlu0 %v1539
    %v1541 = vpop.xlane.xlu0 %1540
    %v1542 = vsel %vm695, %v1534, 0.0
    %1543 = vadd.xlane.f32.xlu0 %v1542
    %v1544 = vpop.xlane.xlu0 %1543
    %v1545 = vsel %vm695, %v1535, 0.0
    %1546 = vadd.xlane.f32.xlu0 %v1545
    %v1547 = vpop.xlane.xlu0 %1546
    %v1548 = vmax.f32 %v1538, 1e-12
    %v1549 = vmax.f32 %v1541, 1e-12
    %v1550 = vmax.f32 %v1544, 1e-12
    %v1551 = vmax.f32 %v1547, 1e-12
    %v1552 = vadd.f32 %v1536, %v1539
    %v1553 = vrot.slane %v1552, 4
    %v1554 = vadd.f32 %v1552, %v1553
    %v1555 = vrot.slane %v1554, 2
    %v1556 = vadd.f32 %v1554, %v1555
    %v1557 = vrot.slane %v1556, 1
    %v1558 = vadd.f32 %v1556, %v1557
    %v1559 = vadd.f32 %v1542, %v1545
    %v1560 = vrot.slane %v1559, 4
    %v1561 = vadd.f32 %v1559, %v1560
    %v1562 = vrot.slane %v1561, 2
    %v1563 = vadd.f32 %v1561, %v1562
    %v1564 = vrot.slane %v1563, 1
    %v1565 = vadd.f32 %v1563, %v1564
    %v1566 = vmax.f32 %v1558, 1e-12
    %v1567 = vmax.f32 %v1565, 1e-12
    %v1568 = vrsqrt.pop %v1548
    %v1569 = vrsqrt.pop %v1549
    %v1570 = vrsqrt.pop %v1550
    %v1571 = vrsqrt.pop %v1551
    %v1572 = vrsqrt.pop %v1566
    %v1573 = vrsqrt.pop %v1567
    %v1574 = vmul.f32 %v1568, %v1572
    %v1575 = vmul.f32 %v1569, %v1572
    %v1576 = vmul.f32 %v1570, %v1573
    %v1577 = vmul.f32 %v1571, %v1573
    %v1578 = vmul.f32 %v1532, %v1574
    %v1579 = vmul.f32 %v1533, %v1575
    %v1580 = vmul.f32 %v1534, %v1576
    %v1581 = vmul.f32 %v1535, %v1577
    %1582 = vxpose.xlu0.b32.start [1/16] %v1578, 128
    %1583 = vxpose.xlu0.b32.cont [2/16] %v1579, 128
    %1584 = vxpose.xlu0.b32.cont [3/16] 0.0, 128
    %1585 = vxpose.xlu0.b32.cont [4/16] 0.0, 128
    %1586 = vxpose.xlu0.b32.cont [5/16] 0.0, 128
    %1587 = vxpose.xlu0.b32.cont [6/16] 0.0, 128
    %1588 = vxpose.xlu0.b32.cont [7/16] 0.0, 128
    %1589 = vxpose.xlu0.b32.cont [8/16] 0.0, 128
    %1590 = vxpose.xlu0.b32.cont [9/16] 0.0, 128
    %1591 = vxpose.xlu0.b32.cont [10/16] 0.0, 128
    %1592 = vxpose.xlu0.b32.cont [11/16] 0.0, 128
    %1593 = vxpose.xlu0.b32.cont [12/16] 0.0, 128
    %1594 = vxpose.xlu0.b32.cont [13/16] 0.0, 128
    %1595 = vxpose.xlu0.b32.cont [14/16] 0.0, 128
    %1596 = vxpose.xlu0.b32.cont [15/16] 0.0, 128
    %1597 = vxpose.xlu0.b32.end [16/16] 0.0, 128
    %v1598 = vpop.trf.xlu0
    %v1599 = vpop.trf.xlu0
    %v1600 = vpop.trf.xlu0
    %v1601 = vpop.trf.xlu0
    %v1602 = vpop.trf.xlu0
    %v1603 = vpop.trf.xlu0
    %v1604 = vpop.trf.xlu0
    %v1605 = vpop.trf.xlu0
    %v1606 = vpop.trf.xlu0
    %v1607 = vpop.trf.xlu0
    %v1608 = vpop.trf.xlu0
    %v1609 = vpop.trf.xlu0
    %v1610 = vpop.trf.xlu0
    %v1611 = vpop.trf.xlu0
    %v1612 = vpop.trf.xlu0
    %v1613 = vpop.trf.xlu0
    %1614 = vxpose.xlu0.b32.start [1/16] %v1580, 128
    %1615 = vxpose.xlu0.b32.cont [2/16] %v1581, 128
    %1616 = vxpose.xlu0.b32.cont [3/16] 0.0, 128
    %1617 = vxpose.xlu0.b32.cont [4/16] 0.0, 128
    %1618 = vxpose.xlu0.b32.cont [5/16] 0.0, 128
    %1619 = vxpose.xlu0.b32.cont [6/16] 0.0, 128
    %1620 = vxpose.xlu0.b32.cont [7/16] 0.0, 128
    %1621 = vxpose.xlu0.b32.cont [8/16] 0.0, 128
    %1622 = vxpose.xlu0.b32.cont [9/16] 0.0, 128
    %1623 = vxpose.xlu0.b32.cont [10/16] 0.0, 128
    %1624 = vxpose.xlu0.b32.cont [11/16] 0.0, 128
    %1625 = vxpose.xlu0.b32.cont [12/16] 0.0, 128
    %1626 = vxpose.xlu0.b32.cont [13/16] 0.0, 128
    %1627 = vxpose.xlu0.b32.cont [14/16] 0.0, 128
    %1628 = vxpose.xlu0.b32.cont [15/16] 0.0, 128
    %1629 = vxpose.xlu0.b32.end [16/16] 0.0, 128
    %v1630 = vpop.trf.xlu0
    %v1631 = vpop.trf.xlu0
    %v1632 = vpop.trf.xlu0
    %v1633 = vpop.trf.xlu0
    %v1634 = vpop.trf.xlu0
    %v1635 = vpop.trf.xlu0
    %v1636 = vpop.trf.xlu0
    %v1637 = vpop.trf.xlu0
    %v1638 = vpop.trf.xlu0
    %v1639 = vpop.trf.xlu0
    %v1640 = vpop.trf.xlu0
    %v1641 = vpop.trf.xlu0
    %v1642 = vpop.trf.xlu0
    %v1643 = vpop.trf.xlu0
    %v1644 = vpop.trf.xlu0
    %v1645 = vpop.trf.xlu0
    %v1647 = vsel %vm695, %v1578, 0
    %v1650 = vsel %vm695, %v1579, 0
    %1652 = vmatprep.subr.mxu0 0.0
    %1653 = vmatpush1.msra.mxu0 0.0
    %1654 = vmatprep.subr.mxu0 0.0
    %1655 = vmatpush1.msra.mxu0 0.0
    %1656 = vmatprep.subr.mxu0 0.0
    %1657 = vmatpush1.msra.mxu0 0.0
    %1658 = vmatprep.subr.mxu0 0.0
    %1659 = vmatpush1.msra.mxu0 0.0
    %1660 = vmatprep.subr.mxu0 0.0
    %1661 = vmatpush1.msra.mxu0 0.0
    %1662 = vmatprep.subr.mxu0 0.0
    %1663 = vmatpush1.msra.mxu0 0.0
    %1664 = vmatprep.subr.mxu0 0.0
    %1665 = vmatpush1.msra.mxu0 0.0
    %1666 = vmatprep.subr.mxu0 0.0
    %1667 = vmatpush1.msra.mxu0 0.0
    %1668 = vmatprep.subr.mxu0 0.0
    %1669 = vmatpush1.msra.mxu0 0.0
    %1670 = vmatprep.subr.mxu0 0.0
    %1671 = vmatpush1.msra.mxu0 0.0
    %1672 = vmatprep.subr.mxu0 0.0
    %1673 = vmatpush1.msra.mxu0 0.0
    %1674 = vmatprep.subr.mxu0 0.0
    %1675 = vmatpush1.msra.mxu0 0.0
    %1676 = vmatprep.subr.mxu0 0.0
    %1677 = vmatpush1.msra.mxu0 0.0
    %1678 = vmatprep.subr.mxu0 0.0
    %1679 = vmatpush1.msra.mxu0 0.0
    %1680 = vmatprep.subr.mxu0 0.0
    %1681 = vmatpush1.msra.mxu0 %v400
    %1682 = vmatprep.subr.mxu0 0.0
    %1683 = vmatpush1.msra.mxu0 %v394
    %1684 = vmatprep.subr.mxu0 0.0
    %1685 = vmatpush2.msra.mxu0 0.0
    %1686 = vmatprep.subr.mxu0 0.0
    %1687 = vmatpush2.msra.mxu0 0.0
    %1688 = vmatprep.subr.mxu0 0.0
    %1689 = vmatpush2.msra.mxu0 0.0
    %1690 = vmatprep.subr.mxu0 0.0
    %1691 = vmatpush2.msra.mxu0 0.0
    %1692 = vmatprep.subr.mxu0 0.0
    %1693 = vmatpush2.msra.mxu0 0.0
    %1694 = vmatprep.subr.mxu0 0.0
    %1695 = vmatpush2.msra.mxu0 0.0
    %1696 = vmatprep.subr.mxu0 0.0
    %1697 = vmatpush2.msra.mxu0 0.0
    %1698 = vmatprep.subr.mxu0 0.0
    %1699 = vmatpush2.msra.mxu0 0.0
    %1700 = vmatprep.subr.mxu0 0.0
    %1701 = vmatpush2.msra.mxu0 0.0
    %1702 = vmatprep.subr.mxu0 0.0
    %1703 = vmatpush2.msra.mxu0 0.0
    %1704 = vmatprep.subr.mxu0 0.0
    %1705 = vmatpush2.msra.mxu0 0.0
    %1706 = vmatprep.subr.mxu0 0.0
    %1707 = vmatpush2.msra.mxu0 0.0
    %1708 = vmatprep.subr.mxu0 0.0
    %1709 = vmatpush2.msra.mxu0 0.0
    %1710 = vmatprep.subr.mxu0 0.0
    %1711 = vmatpush2.msra.mxu0 0.0
    %1712 = vmatprep.subr.mxu0 0.0
    %1713 = vmatpush2.msra.mxu0 0.0
    %1714 = vmatprep.subr.mxu0 0.0
    %1715 = vmatpush2.msra.mxu0 0.0
    %1716 = vmatprep.mubr.f32.mxu0 0.0
    %1717 = vmatmul.mubr.f32.gmra.mxu0 %v1647
    %v1718 = vpop.f32.mrf.mxu0
    %v1719 = vadd.f32 0.0, %v1718
    %v1720 = vpop.f32.mrf.mxu0
    %1721 = vmatprep.mubr.f32.mxu0 0.0
    %1722 = vmatmul.mubr.f32.gmra.mxu0 %v1650
    %v1723 = vpop.f32.mrf.mxu0
    %v1724 = vadd.f32 0.0, %v1723
    %v1725 = vpop.f32.mrf.mxu0
    %1726 = vdwg.mxu0
    %v1728 = vsel %vm695, %v1580, 0
    %v1731 = vsel %vm695, %v1581, 0
    %1733 = vmatprep.subr.mxu0 0.0
    %1734 = vmatpush1.msra.mxu0 0.0
    %1735 = vmatprep.subr.mxu0 0.0
    %1736 = vmatpush1.msra.mxu0 0.0
    %1737 = vmatprep.subr.mxu0 0.0
    %1738 = vmatpush1.msra.mxu0 0.0
    %1739 = vmatprep.subr.mxu0 0.0
    %1740 = vmatpush1.msra.mxu0 0.0
    %1741 = vmatprep.subr.mxu0 0.0
    %1742 = vmatpush1.msra.mxu0 0.0
    %1743 = vmatprep.subr.mxu0 0.0
    %1744 = vmatpush1.msra.mxu0 0.0
    %1745 = vmatprep.subr.mxu0 0.0
    %1746 = vmatpush1.msra.mxu0 0.0
    %1747 = vmatprep.subr.mxu0 0.0
    %1748 = vmatpush1.msra.mxu0 0.0
    %1749 = vmatprep.subr.mxu0 0.0
    %1750 = vmatpush1.msra.mxu0 0.0
    %1751 = vmatprep.subr.mxu0 0.0
    %1752 = vmatpush1.msra.mxu0 0.0
    %1753 = vmatprep.subr.mxu0 0.0
    %1754 = vmatpush1.msra.mxu0 0.0
    %1755 = vmatprep.subr.mxu0 0.0
    %1756 = vmatpush1.msra.mxu0 0.0
    %1757 = vmatprep.subr.mxu0 0.0
    %1758 = vmatpush1.msra.mxu0 0.0
    %1759 = vmatprep.subr.mxu0 0.0
    %1760 = vmatpush1.msra.mxu0 0.0
    %1761 = vmatprep.subr.mxu0 0.0
    %1762 = vmatpush1.msra.mxu0 %v412
    %1763 = vmatprep.subr.mxu0 0.0
    %1764 = vmatpush1.msra.mxu0 %v406
    %1765 = vmatprep.subr.mxu0 0.0
    %1766 = vmatpush2.msra.mxu0 0.0
    %1767 = vmatprep.subr.mxu0 0.0
    %1768 = vmatpush2.msra.mxu0 0.0
    %1769 = vmatprep.subr.mxu0 0.0
    %1770 = vmatpush2.msra.mxu0 0.0
    %1771 = vmatprep.subr.mxu0 0.0
    %1772 = vmatpush2.msra.mxu0 0.0
    %1773 = vmatprep.subr.mxu0 0.0
    %1774 = vmatpush2.msra.mxu0 0.0
    %1775 = vmatprep.subr.mxu0 0.0
    %1776 = vmatpush2.msra.mxu0 0.0
    %1777 = vmatprep.subr.mxu0 0.0
    %1778 = vmatpush2.msra.mxu0 0.0
    %1779 = vmatprep.subr.mxu0 0.0
    %1780 = vmatpush2.msra.mxu0 0.0
    %1781 = vmatprep.subr.mxu0 0.0
    %1782 = vmatpush2.msra.mxu0 0.0
    %1783 = vmatprep.subr.mxu0 0.0
    %1784 = vmatpush2.msra.mxu0 0.0
    %1785 = vmatprep.subr.mxu0 0.0
    %1786 = vmatpush2.msra.mxu0 0.0
    %1787 = vmatprep.subr.mxu0 0.0
    %1788 = vmatpush2.msra.mxu0 0.0
    %1789 = vmatprep.subr.mxu0 0.0
    %1790 = vmatpush2.msra.mxu0 0.0
    %1791 = vmatprep.subr.mxu0 0.0
    %1792 = vmatpush2.msra.mxu0 0.0
    %1793 = vmatprep.subr.mxu0 0.0
    %1794 = vmatpush2.msra.mxu0 0.0
    %1795 = vmatprep.subr.mxu0 0.0
    %1796 = vmatpush2.msra.mxu0 0.0
    %1797 = vmatprep.mubr.f32.mxu0 0.0
    %1798 = vmatmul.mubr.f32.gmra.mxu0 %v1728
    %v1799 = vpop.f32.mrf.mxu0
    %v1800 = vadd.f32 0.0, %v1799
    %v1801 = vpop.f32.mrf.mxu0
    %1802 = vmatprep.mubr.f32.mxu0 0.0
    %1803 = vmatmul.mubr.f32.gmra.mxu0 %v1731
    %v1804 = vpop.f32.mrf.mxu0
    %v1805 = vadd.f32 0.0, %v1804
    %v1806 = vpop.f32.mrf.mxu0
    %1807 = vdwg.mxu0
    %v1809 = vsel %vm695, %v1598, 0
    %v1812 = vsel %vm695, %v1599, 0
    %1814 = vmatprep.subr.mxu0 0.0
    %1815 = vmatpush1.msra.mxu0 0.0
    %1816 = vmatprep.subr.mxu0 0.0
    %1817 = vmatpush1.msra.mxu0 0.0
    %1818 = vmatprep.subr.mxu0 0.0
    %1819 = vmatpush1.msra.mxu0 0.0
    %1820 = vmatprep.subr.mxu0 0.0
    %1821 = vmatpush1.msra.mxu0 0.0
    %1822 = vmatprep.subr.mxu0 0.0
    %1823 = vmatpush1.msra.mxu0 0.0
    %1824 = vmatprep.subr.mxu0 0.0
    %1825 = vmatpush1.msra.mxu0 0.0
    %1826 = vmatprep.subr.mxu0 0.0
    %1827 = vmatpush1.msra.mxu0 0.0
    %1828 = vmatprep.subr.mxu0 0.0
    %1829 = vmatpush1.msra.mxu0 0.0
    %1830 = vmatprep.subr.mxu0 0.0
    %1831 = vmatpush1.msra.mxu0 0.0
    %1832 = vmatprep.subr.mxu0 0.0
    %1833 = vmatpush1.msra.mxu0 0.0
    %1834 = vmatprep.subr.mxu0 0.0
    %1835 = vmatpush1.msra.mxu0 0.0
    %1836 = vmatprep.subr.mxu0 0.0
    %1837 = vmatpush1.msra.mxu0 0.0
    %1838 = vmatprep.subr.mxu0 0.0
    %1839 = vmatpush1.msra.mxu0 0.0
    %1840 = vmatprep.subr.mxu0 0.0
    %1841 = vmatpush1.msra.mxu0 0.0
    %1842 = vmatprep.subr.mxu0 0.0
    %1843 = vmatpush1.msra.mxu0 %v402
    %1844 = vmatprep.subr.mxu0 0.0
    %1845 = vmatpush1.msra.mxu0 %v396
    %1846 = vmatprep.subr.mxu0 0.0
    %1847 = vmatpush2.msra.mxu0 0.0
    %1848 = vmatprep.subr.mxu0 0.0
    %1849 = vmatpush2.msra.mxu0 0.0
    %1850 = vmatprep.subr.mxu0 0.0
    %1851 = vmatpush2.msra.mxu0 0.0
    %1852 = vmatprep.subr.mxu0 0.0
    %1853 = vmatpush2.msra.mxu0 0.0
    %1854 = vmatprep.subr.mxu0 0.0
    %1855 = vmatpush2.msra.mxu0 0.0
    %1856 = vmatprep.subr.mxu0 0.0
    %1857 = vmatpush2.msra.mxu0 0.0
    %1858 = vmatprep.subr.mxu0 0.0
    %1859 = vmatpush2.msra.mxu0 0.0
    %1860 = vmatprep.subr.mxu0 0.0
    %1861 = vmatpush2.msra.mxu0 0.0
    %1862 = vmatprep.subr.mxu0 0.0
    %1863 = vmatpush2.msra.mxu0 0.0
    %1864 = vmatprep.subr.mxu0 0.0
    %1865 = vmatpush2.msra.mxu0 0.0
    %1866 = vmatprep.subr.mxu0 0.0
    %1867 = vmatpush2.msra.mxu0 0.0
    %1868 = vmatprep.subr.mxu0 0.0
    %1869 = vmatpush2.msra.mxu0 0.0
    %1870 = vmatprep.subr.mxu0 0.0
    %1871 = vmatpush2.msra.mxu0 0.0
    %1872 = vmatprep.subr.mxu0 0.0
    %1873 = vmatpush2.msra.mxu0 0.0
    %1874 = vmatprep.subr.mxu0 0.0
    %1875 = vmatpush2.msra.mxu0 0.0
    %1876 = vmatprep.subr.mxu0 0.0
    %1877 = vmatpush2.msra.mxu0 0.0
    %1878 = vmatprep.mubr.f32.mxu0 0.0
    %1879 = vmatmul.mubr.f32.gmra.mxu0 %v1809
    %v1880 = vpop.f32.mrf.mxu0
    %v1881 = vadd.f32 0.0, %v1880
    %v1882 = vpop.f32.mrf.mxu0
    %1883 = vmatprep.mubr.f32.mxu0 0.0
    %1884 = vmatmul.mubr.f32.gmra.mxu0 %v1812
    %v1885 = vpop.f32.mrf.mxu0
    %v1886 = vadd.f32 0.0, %v1885
    %v1887 = vpop.f32.mrf.mxu0
    %1888 = vdwg.mxu0
    %v1890 = vsel %vm695, %v1630, 0
    %v1893 = vsel %vm695, %v1631, 0
    %1895 = vmatprep.subr.mxu0 0.0
    %1896 = vmatpush1.msra.mxu0 0.0
    %1897 = vmatprep.subr.mxu0 0.0
    %1898 = vmatpush1.msra.mxu0 0.0
    %1899 = vmatprep.subr.mxu0 0.0
    %1900 = vmatpush1.msra.mxu0 0.0
    %1901 = vmatprep.subr.mxu0 0.0
    %1902 = vmatpush1.msra.mxu0 0.0
    %1903 = vmatprep.subr.mxu0 0.0
    %1904 = vmatpush1.msra.mxu0 0.0
    %1905 = vmatprep.subr.mxu0 0.0
    %1906 = vmatpush1.msra.mxu0 0.0
    %1907 = vmatprep.subr.mxu0 0.0
    %1908 = vmatpush1.msra.mxu0 0.0
    %1909 = vmatprep.subr.mxu0 0.0
    %1910 = vmatpush1.msra.mxu0 0.0
    %1911 = vmatprep.subr.mxu0 0.0
    %1912 = vmatpush1.msra.mxu0 0.0
    %1913 = vmatprep.subr.mxu0 0.0
    %1914 = vmatpush1.msra.mxu0 0.0
    %1915 = vmatprep.subr.mxu0 0.0
    %1916 = vmatpush1.msra.mxu0 0.0
    %1917 = vmatprep.subr.mxu0 0.0
    %1918 = vmatpush1.msra.mxu0 0.0
    %1919 = vmatprep.subr.mxu0 0.0
    %1920 = vmatpush1.msra.mxu0 0.0
    %1921 = vmatprep.subr.mxu0 0.0
    %1922 = vmatpush1.msra.mxu0 0.0
    %1923 = vmatprep.subr.mxu0 0.0
    %1924 = vmatpush1.msra.mxu0 %v414
    %1925 = vmatprep.subr.mxu0 0.0
    %1926 = vmatpush1.msra.mxu0 %v408
    %1927 = vmatprep.subr.mxu0 0.0
    %1928 = vmatpush2.msra.mxu0 0.0
    %1929 = vmatprep.subr.mxu0 0.0
    %1930 = vmatpush2.msra.mxu0 0.0
    %1931 = vmatprep.subr.mxu0 0.0
    %1932 = vmatpush2.msra.mxu0 0.0
    %1933 = vmatprep.subr.mxu0 0.0
    %1934 = vmatpush2.msra.mxu0 0.0
    %1935 = vmatprep.subr.mxu0 0.0
    %1936 = vmatpush2.msra.mxu0 0.0
    %1937 = vmatprep.subr.mxu0 0.0
    %1938 = vmatpush2.msra.mxu0 0.0
    %1939 = vmatprep.subr.mxu0 0.0
    %1940 = vmatpush2.msra.mxu0 0.0
    %1941 = vmatprep.subr.mxu0 0.0
    %1942 = vmatpush2.msra.mxu0 0.0
    %1943 = vmatprep.subr.mxu0 0.0
    %1944 = vmatpush2.msra.mxu0 0.0
    %1945 = vmatprep.subr.mxu0 0.0
    %1946 = vmatpush2.msra.mxu0 0.0
    %1947 = vmatprep.subr.mxu0 0.0
    %1948 = vmatpush2.msra.mxu0 0.0
    %1949 = vmatprep.subr.mxu0 0.0
    %1950 = vmatpush2.msra.mxu0 0.0
    %1951 = vmatprep.subr.mxu0 0.0
    %1952 = vmatpush2.msra.mxu0 0.0
    %1953 = vmatprep.subr.mxu0 0.0
    %1954 = vmatpush2.msra.mxu0 0.0
    %1955 = vmatprep.subr.mxu0 0.0
    %1956 = vmatpush2.msra.mxu0 0.0
    %1957 = vmatprep.subr.mxu0 0.0
    %1958 = vmatpush2.msra.mxu0 0.0
    %1959 = vmatprep.mubr.f32.mxu0 0.0
    %1960 = vmatmul.mubr.f32.gmra.mxu0 %v1890
    %v1961 = vpop.f32.mrf.mxu0
    %v1962 = vadd.f32 0.0, %v1961
    %v1963 = vpop.f32.mrf.mxu0
    %1964 = vmatprep.mubr.f32.mxu0 0.0
    %1965 = vmatmul.mubr.f32.gmra.mxu0 %v1893
    %v1966 = vpop.f32.mrf.mxu0
    %v1967 = vadd.f32 0.0, %v1966
    %v1968 = vpop.f32.mrf.mxu0
    %1969 = vdwg.mxu0
    %s1970 = scalar_lea.vmem [#allocation10], 128
    %v1971 = vld [vmem:[%s1970] sm:$0xff]
    %v1972 = vld [vmem:[%s1970 + $0x8] sm:$0xff]
    %v1973 = vld [vmem:[%s1970 + $0x10] sm:$0xff]
    %v1974 = vld [vmem:[%s1970 + $0x18] sm:$0xff]
    %v1975 = vld [vmem:[%s1970 + $0x20] sm:$0xff]
    %v1976 = vld [vmem:[%s1970 + $0x28] sm:$0xff]
    %v1977 = vld [vmem:[%s1970 + $0x30] sm:$0xff]
    %v1978 = vld [vmem:[%s1970 + $0x38] sm:$0xff]
    %v1979 = vld [vmem:[%s1970 + $0x40] sm:$0xff]
    %v1980 = vld [vmem:[%s1970 + $0x48] sm:$0xff]
    %v1981 = vld [vmem:[%s1970 + $0x50] sm:$0xff]
    %v1982 = vld [vmem:[%s1970 + $0x58] sm:$0xff]
    %v1983 = vld [vmem:[%s1970 + $0x60] sm:$0xff]
    %v1984 = vld [vmem:[%s1970 + $0x68] sm:$0xff]
    %v1985 = vld [vmem:[%s1970 + $0x70] sm:$0xff]
    %v1986 = vld [vmem:[%s1970 + $0x78] sm:$0xff]
    %s1987 = scalar_lea.vmem [#allocation11], 128
    %v1988 = vld [vmem:[%s1987] sm:$0xff]
    %v1989 = vld [vmem:[%s1987 + $0x8] sm:$0xff]
    %v1990 = vld [vmem:[%s1987 + $0x10] sm:$0xff]
    %v1991 = vld [vmem:[%s1987 + $0x18] sm:$0xff]
    %v1992 = vld [vmem:[%s1987 + $0x20] sm:$0xff]
    %v1993 = vld [vmem:[%s1987 + $0x28] sm:$0xff]
    %v1994 = vld [vmem:[%s1987 + $0x30] sm:$0xff]
    %v1995 = vld [vmem:[%s1987 + $0x38] sm:$0xff]
    %v1996 = vld [vmem:[%s1987 + $0x40] sm:$0xff]
    %v1997 = vld [vmem:[%s1987 + $0x48] sm:$0xff]
    %v1998 = vld [vmem:[%s1987 + $0x50] sm:$0xff]
    %v1999 = vld [vmem:[%s1987 + $0x58] sm:$0xff]
    %v2000 = vld [vmem:[%s1987 + $0x60] sm:$0xff]
    %v2001 = vld [vmem:[%s1987 + $0x68] sm:$0xff]
    %v2002 = vld [vmem:[%s1987 + $0x70] sm:$0xff]
    %v2003 = vld [vmem:[%s1987 + $0x78] sm:$0xff]
    %2004 = vmatprep.subr.mxu0 0.0
    %2005 = vmatpush1.msra.mxu0 %v2003
    %2006 = vmatprep.subr.mxu0 0.0
    %2007 = vmatpush1.msra.mxu0 %v2002
    %2008 = vmatprep.subr.mxu0 0.0
    %2009 = vmatpush1.msra.mxu0 %v2001
    %2010 = vmatprep.subr.mxu0 0.0
    %2011 = vmatpush1.msra.mxu0 %v2000
    %2012 = vmatprep.subr.mxu0 0.0
    %2013 = vmatpush1.msra.mxu0 %v1999
    %2014 = vmatprep.subr.mxu0 0.0
    %2015 = vmatpush1.msra.mxu0 %v1998
    %2016 = vmatprep.subr.mxu0 0.0
    %2017 = vmatpush1.msra.mxu0 %v1997
    %2018 = vmatprep.subr.mxu0 0.0
    %2019 = vmatpush1.msra.mxu0 %v1996
    %2020 = vmatprep.subr.mxu0 0.0
    %2021 = vmatpush1.msra.mxu0 %v1995
    %2022 = vmatprep.subr.mxu0 0.0
    %2023 = vmatpush1.msra.mxu0 %v1994
    %2024 = vmatprep.subr.mxu0 0.0
    %2025 = vmatpush1.msra.mxu0 %v1993
    %2026 = vmatprep.subr.mxu0 0.0
    %2027 = vmatpush1.msra.mxu0 %v1992
    %2028 = vmatprep.subr.mxu0 0.0
    %2029 = vmatpush1.msra.mxu0 %v1991
    %2030 = vmatprep.subr.mxu0 0.0
    %2031 = vmatpush1.msra.mxu0 %v1990
    %2032 = vmatprep.subr.mxu0 0.0
    %2033 = vmatpush1.msra.mxu0 %v1989
    %2034 = vmatprep.subr.mxu0 0.0
    %2035 = vmatpush1.msra.mxu0 %v1988
    %2036 = vmatprep.subr.mxu0 0.0
    %2037 = vmatpush2.msra.mxu0 0.0
    %2038 = vmatprep.subr.mxu0 0.0
    %2039 = vmatpush2.msra.mxu0 0.0
    %2040 = vmatprep.subr.mxu0 0.0
    %2041 = vmatpush2.msra.mxu0 0.0
    %2042 = vmatprep.subr.mxu0 0.0
    %2043 = vmatpush2.msra.mxu0 0.0
    %2044 = vmatprep.subr.mxu0 0.0
    %2045 = vmatpush2.msra.mxu0 0.0
    %2046 = vmatprep.subr.mxu0 0.0
    %2047 = vmatpush2.msra.mxu0 0.0
    %2048 = vmatprep.subr.mxu0 0.0
    %2049 = vmatpush2.msra.mxu0 0.0
    %2050 = vmatprep.subr.mxu0 0.0
    %2051 = vmatpush2.msra.mxu0 0.0
    %2052 = vmatprep.subr.mxu0 0.0
    %2053 = vmatpush2.msra.mxu0 0.0
    %2054 = vmatprep.subr.mxu0 0.0
    %2055 = vmatpush2.msra.mxu0 0.0
    %2056 = vmatprep.subr.mxu0 0.0
    %2057 = vmatpush2.msra.mxu0 0.0
    %2058 = vmatprep.subr.mxu0 0.0
    %2059 = vmatpush2.msra.mxu0 0.0
    %2060 = vmatprep.subr.mxu0 0.0
    %2061 = vmatpush2.msra.mxu0 0.0
    %2062 = vmatprep.subr.mxu0 0.0
    %2063 = vmatpush2.msra.mxu0 0.0
    %2064 = vmatprep.subr.mxu0 0.0
    %2065 = vmatpush2.msra.mxu0 0.0
    %2066 = vmatprep.subr.mxu0 0.0
    %2067 = vmatpush2.msra.mxu0 0.0
    %2068 = vmatprep.mubr.f32.mxu0 0.0
    %2069 = vmatmul.mubr.f32.gmra.mxu0 %v1881
    %v2070 = vpop.f32.mrf.mxu0
    %v2071 = vadd.f32 0.0, %v2070
    %v2072 = vpop.f32.mrf.mxu0
    %2073 = vmatprep.mubr.f32.mxu0 0.0
    %2074 = vmatmul.mubr.f32.gmra.mxu0 %v1886
    %v2075 = vpop.f32.mrf.mxu0
    %v2076 = vadd.f32 0.0, %v2075
    %v2077 = vpop.f32.mrf.mxu0
    %2078 = vmatprep.mubr.f32.mxu0 0.0
    %2079 = vmatmul.mubr.f32.gmra.mxu0 %v1962
    %v2080 = vpop.f32.mrf.mxu0
    %v2081 = vadd.f32 0.0, %v2080
    %v2082 = vpop.f32.mrf.mxu0
    %2083 = vmatprep.mubr.f32.mxu0 0.0
    %2084 = vmatmul.mubr.f32.gmra.mxu0 %v1967
    %v2085 = vpop.f32.mrf.mxu0
    %v2086 = vadd.f32 0.0, %v2085
    %v2087 = vpop.f32.mrf.mxu0
    %2088 = vdwg.mxu0
    %2089 = vmatprep.subr.mxu0 0.0
    %2090 = vmatpush1.msra.mxu0 %v1986
    %2091 = vmatprep.subr.mxu0 0.0
    %2092 = vmatpush1.msra.mxu0 %v1985
    %2093 = vmatprep.subr.mxu0 0.0
    %2094 = vmatpush1.msra.mxu0 %v1984
    %2095 = vmatprep.subr.mxu0 0.0
    %2096 = vmatpush1.msra.mxu0 %v1983
    %2097 = vmatprep.subr.mxu0 0.0
    %2098 = vmatpush1.msra.mxu0 %v1982
    %2099 = vmatprep.subr.mxu0 0.0
    %2100 = vmatpush1.msra.mxu0 %v1981
    %2101 = vmatprep.subr.mxu0 0.0
    %2102 = vmatpush1.msra.mxu0 %v1980
    %2103 = vmatprep.subr.mxu0 0.0
    %2104 = vmatpush1.msra.mxu0 %v1979
    %2105 = vmatprep.subr.mxu0 0.0
    %2106 = vmatpush1.msra.mxu0 %v1978
    %2107 = vmatprep.subr.mxu0 0.0
    %2108 = vmatpush1.msra.mxu0 %v1977
    %2109 = vmatprep.subr.mxu0 0.0
    %2110 = vmatpush1.msra.mxu0 %v1976
    %2111 = vmatprep.subr.mxu0 0.0
    %2112 = vmatpush1.msra.mxu0 %v1975
    %2113 = vmatprep.subr.mxu0 0.0
    %2114 = vmatpush1.msra.mxu0 %v1974
    %2115 = vmatprep.subr.mxu0 0.0
    %2116 = vmatpush1.msra.mxu0 %v1973
    %2117 = vmatprep.subr.mxu0 0.0
    %2118 = vmatpush1.msra.mxu0 %v1972
    %2119 = vmatprep.subr.mxu0 0.0
    %2120 = vmatpush1.msra.mxu0 %v1971
    %2121 = vmatprep.subr.mxu0 0.0
    %2122 = vmatpush2.msra.mxu0 0.0
    %2123 = vmatprep.subr.mxu0 0.0
    %2124 = vmatpush2.msra.mxu0 0.0
    %2125 = vmatprep.subr.mxu0 0.0
    %2126 = vmatpush2.msra.mxu0 0.0
    %2127 = vmatprep.subr.mxu0 0.0
    %2128 = vmatpush2.msra.mxu0 0.0
    %2129 = vmatprep.subr.mxu0 0.0
    %2130 = vmatpush2.msra.mxu0 0.0
    %2131 = vmatprep.subr.mxu0 0.0
    %2132 = vmatpush2.msra.mxu0 0.0
    %2133 = vmatprep.subr.mxu0 0.0
    %2134 = vmatpush2.msra.mxu0 0.0
    %2135 = vmatprep.subr.mxu0 0.0
    %2136 = vmatpush2.msra.mxu0 0.0
    %2137 = vmatprep.subr.mxu0 0.0
    %2138 = vmatpush2.msra.mxu0 0.0
    %2139 = vmatprep.subr.mxu0 0.0
    %2140 = vmatpush2.msra.mxu0 0.0
    %2141 = vmatprep.subr.mxu0 0.0
    %2142 = vmatpush2.msra.mxu0 0.0
    %2143 = vmatprep.subr.mxu0 0.0
    %2144 = vmatpush2.msra.mxu0 0.0
    %2145 = vmatprep.subr.mxu0 0.0
    %2146 = vmatpush2.msra.mxu0 0.0
    %2147 = vmatprep.subr.mxu0 0.0
    %2148 = vmatpush2.msra.mxu0 0.0
    %2149 = vmatprep.subr.mxu0 0.0
    %2150 = vmatpush2.msra.mxu0 0.0
    %2151 = vmatprep.subr.mxu0 0.0
    %2152 = vmatpush2.msra.mxu0 0.0
    %2153 = vmatprep.mubr.f32.mxu0 0.0
    %2154 = vmatmul.mubr.f32.gmra.mxu0 %v1719
    %v2155 = vpop.f32.mrf.mxu0
    %v2156 = vadd.f32 %v2071, %v2155
    %v2157 = vpop.f32.mrf.mxu0
    %2158 = vmatprep.mubr.f32.mxu0 0.0
    %2159 = vmatmul.mubr.f32.gmra.mxu0 %v1724
    %v2160 = vpop.f32.mrf.mxu0
    %v2161 = vadd.f32 %v2076, %v2160
    %v2162 = vpop.f32.mrf.mxu0
    %2163 = vmatprep.mubr.f32.mxu0 0.0
    %2164 = vmatmul.mubr.f32.gmra.mxu0 %v1800
    %v2165 = vpop.f32.mrf.mxu0
    %v2166 = vadd.f32 %v2081, %v2165
    %v2167 = vpop.f32.mrf.mxu0
    %2168 = vmatprep.mubr.f32.mxu0 0.0
    %2169 = vmatmul.mubr.f32.gmra.mxu0 %v1805
    %v2170 = vpop.f32.mrf.mxu0
    %v2171 = vadd.f32 %v2086, %v2170
    %v2172 = vpop.f32.mrf.mxu0
    %2173 = vdwg.mxu0
    %s2174 = scalar_lea.vmem %s6, 1
    %v2175 = vld [vmem:[%s2174] sm:$0x1]
    %v2177 = vlaneseq
    %v2178 = vshrl.u32 %v2177, 7
    %v2179 = vsub.s32 0, %v2178
    %v2180 = vrot.slane %v2175, %v2179
    %v2182 = vadd.f32 %v2156, %v2180
    %v2183 = vadd.f32 %v2161, %v2180
    %v2184 = vadd.f32 %v2166, %v2180
    %v2185 = vadd.f32 %v2171, %v2180
    %v2186 = vmax.f32 %v2182, 0.0
    %v2187 = vmax.f32 %v2183, 0.0
    %v2188 = vmax.f32 %v2184, 0.0
    %v2189 = vmax.f32 %v2185, 0.0
    %s2190 = scalar_lea.vmem %s7, 1
    %v2191 = vld [vmem:[%s2190] sm:$0x1]
    %v2193 = vlaneseq
    %v2194 = vshrl.u32 %v2193, 7
    %v2195 = vsub.s32 0, %v2194
    %v2196 = vrot.slane %v2191, %v2195
    %v2198 = vmul.f32 %v2186, %v2196
    %v2199 = vmul.f32 %v2187, %v2196
    %v2200 = vmul.f32 %v2188, %v2196
    %v2201 = vmul.f32 %v2189, %v2196
    %2202 = vadd.xlane.f32.xlu0 %v2198
    %v2203 = vpop.xlane.xlu0 %2202
    %2204 = vadd.xlane.f32.xlu0 %v2199
    %v2205 = vpop.xlane.xlu0 %2204
    %2206 = vadd.xlane.f32.xlu0 %v2200
    %v2207 = vpop.xlane.xlu0 %2206
    %2208 = vadd.xlane.f32.xlu0 %v2201
    %v2209 = vpop.xlane.xlu0 %2208
    %v2210 = vmax.f32 %v1359, %v2203
    %v2211 = vmax.f32 %v1361, %v2205
    %v2212 = vmax.f32 %v1363, %v2207
    %v2213 = vmax.f32 %v1365, %v2209
    %v2214 = vsub.f32 %v1359, %v2210
    %v2215 = vsub.f32 %v1361, %v2211
    %v2216 = vsub.f32 %v1363, %v2212
    %v2217 = vsub.f32 %v1365, %v2213
    %v2218 = vmul.f32 %v2214, 1.442695
    %v2219 = vpow.pop %v2218
    %v2220 = vmul.f32 %v2215, 1.442695
    %v2221 = vpow.pop %v2220
    %v2222 = vmul.f32 %v2216, 1.442695
    %v2223 = vpow.pop %v2222
    %v2224 = vmul.f32 %v2217, 1.442695
    %v2225 = vpow.pop %v2224
    %v2226 = vsub.f32 %v2203, %v2210
    %v2227 = vsub.f32 %v2205, %v2211
    %v2228 = vsub.f32 %v2207, %v2212
    %v2229 = vsub.f32 %v2209, %v2213
    %v2230 = vmul.f32 %v2226, 1.442695
    %v2231 = vpow.pop %v2230
    %v2232 = vmul.f32 %v2227, 1.442695
    %v2233 = vpow.pop %v2232
    %v2234 = vmul.f32 %v2228, 1.442695
    %v2235 = vpow.pop %v2234
    %v2236 = vmul.f32 %v2229, 1.442695
    %v2237 = vpow.pop %v2236
    %v2238 = vadd.f32 %v2219, %v2231
    %v2239 = vadd.f32 %v2221, %v2233
    %v2240 = vadd.f32 %v2223, %v2235
    %v2241 = vadd.f32 %v2225, %v2237
    %v2242 = vmul.f32 %v1343, %v2219
    %v2243 = vmul.f32 %v1344, %v2221
    %v2244 = vmul.f32 %v1345, %v2223
    %v2245 = vmul.f32 %v1346, %v2225
    %v2246 = vmul.f32 %v2231, %v2186
    %v2247 = vmul.f32 %v2233, %v2187
    %v2248 = vmul.f32 %v2235, %v2188
    %v2249 = vmul.f32 %v2237, %v2189
    %v2250 = vadd.f32 %v2242, %v2246
    %v2251 = vadd.f32 %v2243, %v2247
    %v2252 = vadd.f32 %v2244, %v2248
    %v2253 = vadd.f32 %v2245, %v2249
    %v2255 = vsel %vm695, %v1439, 0
    %v2258 = vsel %vm695, %v1444, 0
    %2260 = vmatprep.subr.mxu0 0.0
    %2261 = vmatpush1.msra.mxu0 0.0
    %2262 = vmatprep.subr.mxu0 0.0
    %2263 = vmatpush1.msra.mxu0 0.0
    %2264 = vmatprep.subr.mxu0 0.0
    %2265 = vmatpush1.msra.mxu0 0.0
    %2266 = vmatprep.subr.mxu0 0.0
    %2267 = vmatpush1.msra.mxu0 0.0
    %2268 = vmatprep.subr.mxu0 0.0
    %2269 = vmatpush1.msra.mxu0 0.0
    %2270 = vmatprep.subr.mxu0 0.0
    %2271 = vmatpush1.msra.mxu0 0.0
    %2272 = vmatprep.subr.mxu0 0.0
    %2273 = vmatpush1.msra.mxu0 0.0
    %2274 = vmatprep.subr.mxu0 0.0
    %2275 = vmatpush1.msra.mxu0 0.0
    %2276 = vmatprep.subr.mxu0 0.0
    %2277 = vmatpush1.msra.mxu0 0.0
    %2278 = vmatprep.subr.mxu0 0.0
    %2279 = vmatpush1.msra.mxu0 0.0
    %2280 = vmatprep.subr.mxu0 0.0
    %2281 = vmatpush1.msra.mxu0 0.0
    %2282 = vmatprep.subr.mxu0 0.0
    %2283 = vmatpush1.msra.mxu0 0.0
    %2284 = vmatprep.subr.mxu0 0.0
    %2285 = vmatpush1.msra.mxu0 0.0
    %2286 = vmatprep.subr.mxu0 0.0
    %2287 = vmatpush1.msra.mxu0 0.0
    %2288 = vmatprep.subr.mxu0 0.0
    %2289 = vmatpush1.msra.mxu0 %v121
    %2290 = vmatprep.subr.mxu0 0.0
    %2291 = vmatpush1.msra.mxu0 %v120
    %2292 = vmatprep.subr.mxu0 0.0
    %2293 = vmatpush2.msra.mxu0 0.0
    %2294 = vmatprep.subr.mxu0 0.0
    %2295 = vmatpush2.msra.mxu0 0.0
    %2296 = vmatprep.subr.mxu0 0.0
    %2297 = vmatpush2.msra.mxu0 0.0
    %2298 = vmatprep.subr.mxu0 0.0
    %2299 = vmatpush2.msra.mxu0 0.0
    %2300 = vmatprep.subr.mxu0 0.0
    %2301 = vmatpush2.msra.mxu0 0.0
    %2302 = vmatprep.subr.mxu0 0.0
    %2303 = vmatpush2.msra.mxu0 0.0
    %2304 = vmatprep.subr.mxu0 0.0
    %2305 = vmatpush2.msra.mxu0 0.0
    %2306 = vmatprep.subr.mxu0 0.0
    %2307 = vmatpush2.msra.mxu0 0.0
    %2308 = vmatprep.subr.mxu0 0.0
    %2309 = vmatpush2.msra.mxu0 0.0
    %2310 = vmatprep.subr.mxu0 0.0
    %2311 = vmatpush2.msra.mxu0 0.0
    %2312 = vmatprep.subr.mxu0 0.0
    %2313 = vmatpush2.msra.mxu0 0.0
    %2314 = vmatprep.subr.mxu0 0.0
    %2315 = vmatpush2.msra.mxu0 0.0
    %2316 = vmatprep.subr.mxu0 0.0
    %2317 = vmatpush2.msra.mxu0 0.0
    %2318 = vmatprep.subr.mxu0 0.0
    %2319 = vmatpush2.msra.mxu0 0.0
    %2320 = vmatprep.subr.mxu0 0.0
    %2321 = vmatpush2.msra.mxu0 0.0
    %2322 = vmatprep.subr.mxu0 0.0
    %2323 = vmatpush2.msra.mxu0 0.0
    %2324 = vmatprep.mubr.f32.mxu0 0.0
    %2325 = vmatmul.mubr.f32.gmra.mxu0 %v2255
    %v2326 = vpop.f32.mrf.mxu0
    %v2327 = vadd.f32 0.0, %v2326
    %v2328 = vpop.f32.mrf.mxu0
    %2329 = vmatprep.mubr.f32.mxu0 0.0
    %2330 = vmatmul.mubr.f32.gmra.mxu0 %v2258
    %v2331 = vpop.f32.mrf.mxu0
    %v2332 = vadd.f32 0.0, %v2331
    %v2333 = vpop.f32.mrf.mxu0
    %2334 = vdwg.mxu0
    %v2336 = vsel %vm695, %v1520, 0
    %v2339 = vsel %vm695, %v1525, 0
    %2341 = vmatprep.subr.mxu0 0.0
    %2342 = vmatpush1.msra.mxu0 0.0
    %2343 = vmatprep.subr.mxu0 0.0
    %2344 = vmatpush1.msra.mxu0 0.0
    %2345 = vmatprep.subr.mxu0 0.0
    %2346 = vmatpush1.msra.mxu0 0.0
    %2347 = vmatprep.subr.mxu0 0.0
    %2348 = vmatpush1.msra.mxu0 0.0
    %2349 = vmatprep.subr.mxu0 0.0
    %2350 = vmatpush1.msra.mxu0 0.0
    %2351 = vmatprep.subr.mxu0 0.0
    %2352 = vmatpush1.msra.mxu0 0.0
    %2353 = vmatprep.subr.mxu0 0.0
    %2354 = vmatpush1.msra.mxu0 0.0
    %2355 = vmatprep.subr.mxu0 0.0
    %2356 = vmatpush1.msra.mxu0 0.0
    %2357 = vmatprep.subr.mxu0 0.0
    %2358 = vmatpush1.msra.mxu0 0.0
    %2359 = vmatprep.subr.mxu0 0.0
    %2360 = vmatpush1.msra.mxu0 0.0
    %2361 = vmatprep.subr.mxu0 0.0
    %2362 = vmatpush1.msra.mxu0 0.0
    %2363 = vmatprep.subr.mxu0 0.0
    %2364 = vmatpush1.msra.mxu0 0.0
    %2365 = vmatprep.subr.mxu0 0.0
    %2366 = vmatpush1.msra.mxu0 0.0
    %2367 = vmatprep.subr.mxu0 0.0
    %2368 = vmatpush1.msra.mxu0 0.0
    %2369 = vmatprep.subr.mxu0 0.0
    %2370 = vmatpush1.msra.mxu0 %v123
    %2371 = vmatprep.subr.mxu0 0.0
    %2372 = vmatpush1.msra.mxu0 %v122
    %2373 = vmatprep.subr.mxu0 0.0
    %2374 = vmatpush2.msra.mxu0 0.0
    %2375 = vmatprep.subr.mxu0 0.0
    %2376 = vmatpush2.msra.mxu0 0.0
    %2377 = vmatprep.subr.mxu0 0.0
    %2378 = vmatpush2.msra.mxu0 0.0
    %2379 = vmatprep.subr.mxu0 0.0
    %2380 = vmatpush2.msra.mxu0 0.0
    %2381 = vmatprep.subr.mxu0 0.0
    %2382 = vmatpush2.msra.mxu0 0.0
    %2383 = vmatprep.subr.mxu0 0.0
    %2384 = vmatpush2.msra.mxu0 0.0
    %2385 = vmatprep.subr.mxu0 0.0
    %2386 = vmatpush2.msra.mxu0 0.0
    %2387 = vmatprep.subr.mxu0 0.0
    %2388 = vmatpush2.msra.mxu0 0.0
    %2389 = vmatprep.subr.mxu0 0.0
    %2390 = vmatpush2.msra.mxu0 0.0
    %2391 = vmatprep.subr.mxu0 0.0
    %2392 = vmatpush2.msra.mxu0 0.0
    %2393 = vmatprep.subr.mxu0 0.0
    %2394 = vmatpush2.msra.mxu0 0.0
    %2395 = vmatprep.subr.mxu0 0.0
    %2396 = vmatpush2.msra.mxu0 0.0
    %2397 = vmatprep.subr.mxu0 0.0
    %2398 = vmatpush2.msra.mxu0 0.0
    %2399 = vmatprep.subr.mxu0 0.0
    %2400 = vmatpush2.msra.mxu0 0.0
    %2401 = vmatprep.subr.mxu0 0.0
    %2402 = vmatpush2.msra.mxu0 0.0
    %2403 = vmatprep.subr.mxu0 0.0
    %2404 = vmatpush2.msra.mxu0 0.0
    %2405 = vmatprep.mubr.f32.mxu0 0.0
    %2406 = vmatmul.mubr.f32.gmra.mxu0 %v2336
    %v2407 = vpop.f32.mrf.mxu0
    %v2408 = vadd.f32 0.0, %v2407
    %v2409 = vpop.f32.mrf.mxu0
    %2410 = vmatprep.mubr.f32.mxu0 0.0
    %2411 = vmatmul.mubr.f32.gmra.mxu0 %v2339
    %v2412 = vpop.f32.mrf.mxu0
    %v2413 = vadd.f32 0.0, %v2412
    %v2414 = vpop.f32.mrf.mxu0
    %2415 = vdwg.mxu0
    %v2416 = vadd.f32 %v2327, 1.0
    %v2417 = vadd.f32 %v2332, 1.0
    %v2418 = vadd.f32 %v2408, 1.0
    %v2419 = vadd.f32 %v2413, 1.0
    %v2420 = vsel %vm689, %v2416, %v2327
    %v2421 = vsel %vm690, %v2417, %v2332
    %v2422 = vsel %vm689, %v2418, %v2408
    %v2423 = vsel %vm690, %v2419, %v2413
    %v2424 = vsel %vm695, %v2420, 0.0
    %2425 = vadd.xlane.f32.xlu0 %v2424
    %v2426 = vpop.xlane.xlu0 %2425
    %v2427 = vsel %vm695, %v2421, 0.0
    %2428 = vadd.xlane.f32.xlu0 %v2427
    %v2429 = vpop.xlane.xlu0 %2428
    %v2430 = vsel %vm695, %v2422, 0.0
    %2431 = vadd.xlane.f32.xlu0 %v2430
    %v2432 = vpop.xlane.xlu0 %2431
    %v2433 = vsel %vm695, %v2423, 0.0
    %2434 = vadd.xlane.f32.xlu0 %v2433
    %v2435 = vpop.xlane.xlu0 %2434
    %v2436 = vmax.f32 %v2426, 1e-12
    %v2437 = vmax.f32 %v2429, 1e-12
    %v2438 = vmax.f32 %v2432, 1e-12
    %v2439 = vmax.f32 %v2435, 1e-12
    %v2440 = vadd.f32 %v2424, %v2427
    %v2441 = vrot.slane %v2440, 4
    %v2442 = vadd.f32 %v2440, %v2441
    %v2443 = vrot.slane %v2442, 2
    %v2444 = vadd.f32 %v2442, %v2443
    %v2445 = vrot.slane %v2444, 1
    %v2446 = vadd.f32 %v2444, %v2445
    %v2447 = vadd.f32 %v2430, %v2433
    %v2448 = vrot.slane %v2447, 4
    %v2449 = vadd.f32 %v2447, %v2448
    %v2450 = vrot.slane %v2449, 2
    %v2451 = vadd.f32 %v2449, %v2450
    %v2452 = vrot.slane %v2451, 1
    %v2453 = vadd.f32 %v2451, %v2452
    %v2454 = vmax.f32 %v2446, 1e-12
    %v2455 = vmax.f32 %v2453, 1e-12
    %v2456 = vrsqrt.pop %v2436
    %v2457 = vrsqrt.pop %v2437
    %v2458 = vrsqrt.pop %v2438
    %v2459 = vrsqrt.pop %v2439
    %v2460 = vrsqrt.pop %v2454
    %v2461 = vrsqrt.pop %v2455
    %v2462 = vmul.f32 %v2456, %v2460
    %v2463 = vmul.f32 %v2457, %v2460
    %v2464 = vmul.f32 %v2458, %v2461
    %v2465 = vmul.f32 %v2459, %v2461
    %v2466 = vmul.f32 %v2420, %v2462
    %v2467 = vmul.f32 %v2421, %v2463
    %v2468 = vmul.f32 %v2422, %v2464
    %v2469 = vmul.f32 %v2423, %v2465
    %2470 = vxpose.xlu0.b32.start [1/16] %v2466, 128
    %2471 = vxpose.xlu0.b32.cont [2/16] %v2467, 128
    %2472 = vxpose.xlu0.b32.cont [3/16] 0.0, 128
    %2473 = vxpose.xlu0.b32.cont [4/16] 0.0, 128
    %2474 = vxpose.xlu0.b32.cont [5/16] 0.0, 128
    %2475 = vxpose.xlu0.b32.cont [6/16] 0.0, 128
    %2476 = vxpose.xlu0.b32.cont [7/16] 0.0, 128
    %2477 = vxpose.xlu0.b32.cont [8/16] 0.0, 128
    %2478 = vxpose.xlu0.b32.cont [9/16] 0.0, 128
    %2479 = vxpose.xlu0.b32.cont [10/16] 0.0, 128
    %2480 = vxpose.xlu0.b32.cont [11/16] 0.0, 128
    %2481 = vxpose.xlu0.b32.cont [12/16] 0.0, 128
    %2482 = vxpose.xlu0.b32.cont [13/16] 0.0, 128
    %2483 = vxpose.xlu0.b32.cont [14/16] 0.0, 128
    %2484 = vxpose.xlu0.b32.cont [15/16] 0.0, 128
    %2485 = vxpose.xlu0.b32.end [16/16] 0.0, 128
    %v2486 = vpop.trf.xlu0
    %v2487 = vpop.trf.xlu0
    %v2488 = vpop.trf.xlu0
    %v2489 = vpop.trf.xlu0
    %v2490 = vpop.trf.xlu0
    %v2491 = vpop.trf.xlu0
    %v2492 = vpop.trf.xlu0
    %v2493 = vpop.trf.xlu0
    %v2494 = vpop.trf.xlu0
    %v2495 = vpop.trf.xlu0
    %v2496 = vpop.trf.xlu0
    %v2497 = vpop.trf.xlu0
    %v2498 = vpop.trf.xlu0
    %v2499 = vpop.trf.xlu0
    %v2500 = vpop.trf.xlu0
    %v2501 = vpop.trf.xlu0
    %2502 = vxpose.xlu0.b32.start [1/16] %v2468, 128
    %2503 = vxpose.xlu0.b32.cont [2/16] %v2469, 128
    %2504 = vxpose.xlu0.b32.cont [3/16] 0.0, 128
    %2505 = vxpose.xlu0.b32.cont [4/16] 0.0, 128
    %2506 = vxpose.xlu0.b32.cont [5/16] 0.0, 128
    %2507 = vxpose.xlu0.b32.cont [6/16] 0.0, 128
    %2508 = vxpose.xlu0.b32.cont [7/16] 0.0, 128
    %2509 = vxpose.xlu0.b32.cont [8/16] 0.0, 128
    %2510 = vxpose.xlu0.b32.cont [9/16] 0.0, 128
    %2511 = vxpose.xlu0.b32.cont [10/16] 0.0, 128
    %2512 = vxpose.xlu0.b32.cont [11/16] 0.0, 128
    %2513 = vxpose.xlu0.b32.cont [12/16] 0.0, 128
    %2514 = vxpose.xlu0.b32.cont [13/16] 0.0, 128
    %2515 = vxpose.xlu0.b32.cont [14/16] 0.0, 128
    %2516 = vxpose.xlu0.b32.cont [15/16] 0.0, 128
    %2517 = vxpose.xlu0.b32.end [16/16] 0.0, 128
    %v2518 = vpop.trf.xlu0
    %v2519 = vpop.trf.xlu0
    %v2520 = vpop.trf.xlu0
    %v2521 = vpop.trf.xlu0
    %v2522 = vpop.trf.xlu0
    %v2523 = vpop.trf.xlu0
    %v2524 = vpop.trf.xlu0
    %v2525 = vpop.trf.xlu0
    %v2526 = vpop.trf.xlu0
    %v2527 = vpop.trf.xlu0
    %v2528 = vpop.trf.xlu0
    %v2529 = vpop.trf.xlu0
    %v2530 = vpop.trf.xlu0
    %v2531 = vpop.trf.xlu0
    %v2532 = vpop.trf.xlu0
    %v2533 = vpop.trf.xlu0
    %v2535 = vsel %vm695, %v2466, 0
    %v2538 = vsel %vm695, %v2467, 0
    %2540 = vmatprep.subr.mxu0 0.0
    %2541 = vmatpush1.msra.mxu0 0.0
    %2542 = vmatprep.subr.mxu0 0.0
    %2543 = vmatpush1.msra.mxu0 0.0
    %2544 = vmatprep.subr.mxu0 0.0
    %2545 = vmatpush1.msra.mxu0 0.0
    %2546 = vmatprep.subr.mxu0 0.0
    %2547 = vmatpush1.msra.mxu0 0.0
    %2548 = vmatprep.subr.mxu0 0.0
    %2549 = vmatpush1.msra.mxu0 0.0
    %2550 = vmatprep.subr.mxu0 0.0
    %2551 = vmatpush1.msra.mxu0 0.0
    %2552 = vmatprep.subr.mxu0 0.0
    %2553 = vmatpush1.msra.mxu0 0.0
    %2554 = vmatprep.subr.mxu0 0.0
    %2555 = vmatpush1.msra.mxu0 0.0
    %2556 = vmatprep.subr.mxu0 0.0
    %2557 = vmatpush1.msra.mxu0 0.0
    %2558 = vmatprep.subr.mxu0 0.0
    %2559 = vmatpush1.msra.mxu0 0.0
    %2560 = vmatprep.subr.mxu0 0.0
    %2561 = vmatpush1.msra.mxu0 0.0
    %2562 = vmatprep.subr.mxu0 0.0
    %2563 = vmatpush1.msra.mxu0 0.0
    %2564 = vmatprep.subr.mxu0 0.0
    %2565 = vmatpush1.msra.mxu0 0.0
    %2566 = vmatprep.subr.mxu0 0.0
    %2567 = vmatpush1.msra.mxu0 0.0
    %2568 = vmatprep.subr.mxu0 0.0
    %2569 = vmatpush1.msra.mxu0 %v489
    %2570 = vmatprep.subr.mxu0 0.0
    %2571 = vmatpush1.msra.mxu0 %v483
    %2572 = vmatprep.subr.mxu0 0.0
    %2573 = vmatpush2.msra.mxu0 0.0
    %2574 = vmatprep.subr.mxu0 0.0
    %2575 = vmatpush2.msra.mxu0 0.0
    %2576 = vmatprep.subr.mxu0 0.0
    %2577 = vmatpush2.msra.mxu0 0.0
    %2578 = vmatprep.subr.mxu0 0.0
    %2579 = vmatpush2.msra.mxu0 0.0
    %2580 = vmatprep.subr.mxu0 0.0
    %2581 = vmatpush2.msra.mxu0 0.0
    %2582 = vmatprep.subr.mxu0 0.0
    %2583 = vmatpush2.msra.mxu0 0.0
    %2584 = vmatprep.subr.mxu0 0.0
    %2585 = vmatpush2.msra.mxu0 0.0
    %2586 = vmatprep.subr.mxu0 0.0
    %2587 = vmatpush2.msra.mxu0 0.0
    %2588 = vmatprep.subr.mxu0 0.0
    %2589 = vmatpush2.msra.mxu0 0.0
    %2590 = vmatprep.subr.mxu0 0.0
    %2591 = vmatpush2.msra.mxu0 0.0
    %2592 = vmatprep.subr.mxu0 0.0
    %2593 = vmatpush2.msra.mxu0 0.0
    %2594 = vmatprep.subr.mxu0 0.0
    %2595 = vmatpush2.msra.mxu0 0.0
    %2596 = vmatprep.subr.mxu0 0.0
    %2597 = vmatpush2.msra.mxu0 0.0
    %2598 = vmatprep.subr.mxu0 0.0
    %2599 = vmatpush2.msra.mxu0 0.0
    %2600 = vmatprep.subr.mxu0 0.0
    %2601 = vmatpush2.msra.mxu0 0.0
    %2602 = vmatprep.subr.mxu0 0.0
    %2603 = vmatpush2.msra.mxu0 0.0
    %2604 = vmatprep.mubr.f32.mxu0 0.0
    %2605 = vmatmul.mubr.f32.gmra.mxu0 %v2535
    %v2606 = vpop.f32.mrf.mxu0
    %v2607 = vadd.f32 0.0, %v2606
    %v2608 = vpop.f32.mrf.mxu0
    %2609 = vmatprep.mubr.f32.mxu0 0.0
    %2610 = vmatmul.mubr.f32.gmra.mxu0 %v2538
    %v2611 = vpop.f32.mrf.mxu0
    %v2612 = vadd.f32 0.0, %v2611
    %v2613 = vpop.f32.mrf.mxu0
    %2614 = vdwg.mxu0
    %v2616 = vsel %vm695, %v2468, 0
    %v2619 = vsel %vm695, %v2469, 0
    %2621 = vmatprep.subr.mxu0 0.0
    %2622 = vmatpush1.msra.mxu0 0.0
    %2623 = vmatprep.subr.mxu0 0.0
    %2624 = vmatpush1.msra.mxu0 0.0
    %2625 = vmatprep.subr.mxu0 0.0
    %2626 = vmatpush1.msra.mxu0 0.0
    %2627 = vmatprep.subr.mxu0 0.0
    %2628 = vmatpush1.msra.mxu0 0.0
    %2629 = vmatprep.subr.mxu0 0.0
    %2630 = vmatpush1.msra.mxu0 0.0
    %2631 = vmatprep.subr.mxu0 0.0
    %2632 = vmatpush1.msra.mxu0 0.0
    %2633 = vmatprep.subr.mxu0 0.0
    %2634 = vmatpush1.msra.mxu0 0.0
    %2635 = vmatprep.subr.mxu0 0.0
    %2636 = vmatpush1.msra.mxu0 0.0
    %2637 = vmatprep.subr.mxu0 0.0
    %2638 = vmatpush1.msra.mxu0 0.0
    %2639 = vmatprep.subr.mxu0 0.0
    %2640 = vmatpush1.msra.mxu0 0.0
    %2641 = vmatprep.subr.mxu0 0.0
    %2642 = vmatpush1.msra.mxu0 0.0
    %2643 = vmatprep.subr.mxu0 0.0
    %2644 = vmatpush1.msra.mxu0 0.0
    %2645 = vmatprep.subr.mxu0 0.0
    %2646 = vmatpush1.msra.mxu0 0.0
    %2647 = vmatprep.subr.mxu0 0.0
    %2648 = vmatpush1.msra.mxu0 0.0
    %2649 = vmatprep.subr.mxu0 0.0
    %2650 = vmatpush1.msra.mxu0 %v501
    %2651 = vmatprep.subr.mxu0 0.0
    %2652 = vmatpush1.msra.mxu0 %v495
    %2653 = vmatprep.subr.mxu0 0.0
    %2654 = vmatpush2.msra.mxu0 0.0
    %2655 = vmatprep.subr.mxu0 0.0
    %2656 = vmatpush2.msra.mxu0 0.0
    %2657 = vmatprep.subr.mxu0 0.0
    %2658 = vmatpush2.msra.mxu0 0.0
    %2659 = vmatprep.subr.mxu0 0.0
    %2660 = vmatpush2.msra.mxu0 0.0
    %2661 = vmatprep.subr.mxu0 0.0
    %2662 = vmatpush2.msra.mxu0 0.0
    %2663 = vmatprep.subr.mxu0 0.0
    %2664 = vmatpush2.msra.mxu0 0.0
    %2665 = vmatprep.subr.mxu0 0.0
    %2666 = vmatpush2.msra.mxu0 0.0
    %2667 = vmatprep.subr.mxu0 0.0
    %2668 = vmatpush2.msra.mxu0 0.0
    %2669 = vmatprep.subr.mxu0 0.0
    %2670 = vmatpush2.msra.mxu0 0.0
    %2671 = vmatprep.subr.mxu0 0.0
    %2672 = vmatpush2.msra.mxu0 0.0
    %2673 = vmatprep.subr.mxu0 0.0
    %2674 = vmatpush2.msra.mxu0 0.0
    %2675 = vmatprep.subr.mxu0 0.0
    %2676 = vmatpush2.msra.mxu0 0.0
    %2677 = vmatprep.subr.mxu0 0.0
    %2678 = vmatpush2.msra.mxu0 0.0
    %2679 = vmatprep.subr.mxu0 0.0
    %2680 = vmatpush2.msra.mxu0 0.0
    %2681 = vmatprep.subr.mxu0 0.0
    %2682 = vmatpush2.msra.mxu0 0.0
    %2683 = vmatprep.subr.mxu0 0.0
    %2684 = vmatpush2.msra.mxu0 0.0
    %2685 = vmatprep.mubr.f32.mxu0 0.0
    %2686 = vmatmul.mubr.f32.gmra.mxu0 %v2616
    %v2687 = vpop.f32.mrf.mxu0
    %v2688 = vadd.f32 0.0, %v2687
    %v2689 = vpop.f32.mrf.mxu0
    %2690 = vmatprep.mubr.f32.mxu0 0.0
    %2691 = vmatmul.mubr.f32.gmra.mxu0 %v2619
    %v2692 = vpop.f32.mrf.mxu0
    %v2693 = vadd.f32 0.0, %v2692
    %v2694 = vpop.f32.mrf.mxu0
    %2695 = vdwg.mxu0
    %v2697 = vsel %vm695, %v2486, 0
    %v2700 = vsel %vm695, %v2487, 0
    %2702 = vmatprep.subr.mxu0 0.0
    %2703 = vmatpush1.msra.mxu0 0.0
    %2704 = vmatprep.subr.mxu0 0.0
    %2705 = vmatpush1.msra.mxu0 0.0
    %2706 = vmatprep.subr.mxu0 0.0
    %2707 = vmatpush1.msra.mxu0 0.0
    %2708 = vmatprep.subr.mxu0 0.0
    %2709 = vmatpush1.msra.mxu0 0.0
    %2710 = vmatprep.subr.mxu0 0.0
    %2711 = vmatpush1.msra.mxu0 0.0
    %2712 = vmatprep.subr.mxu0 0.0
    %2713 = vmatpush1.msra.mxu0 0.0
    %2714 = vmatprep.subr.mxu0 0.0
    %2715 = vmatpush1.msra.mxu0 0.0
    %2716 = vmatprep.subr.mxu0 0.0
    %2717 = vmatpush1.msra.mxu0 0.0
    %2718 = vmatprep.subr.mxu0 0.0
    %2719 = vmatpush1.msra.mxu0 0.0
    %2720 = vmatprep.subr.mxu0 0.0
    %2721 = vmatpush1.msra.mxu0 0.0
    %2722 = vmatprep.subr.mxu0 0.0
    %2723 = vmatpush1.msra.mxu0 0.0
    %2724 = vmatprep.subr.mxu0 0.0
    %2725 = vmatpush1.msra.mxu0 0.0
    %2726 = vmatprep.subr.mxu0 0.0
    %2727 = vmatpush1.msra.mxu0 0.0
    %2728 = vmatprep.subr.mxu0 0.0
    %2729 = vmatpush1.msra.mxu0 0.0
    %2730 = vmatprep.subr.mxu0 0.0
    %2731 = vmatpush1.msra.mxu0 %v491
    %2732 = vmatprep.subr.mxu0 0.0
    %2733 = vmatpush1.msra.mxu0 %v485
    %2734 = vmatprep.subr.mxu0 0.0
    %2735 = vmatpush2.msra.mxu0 0.0
    %2736 = vmatprep.subr.mxu0 0.0
    %2737 = vmatpush2.msra.mxu0 0.0
    %2738 = vmatprep.subr.mxu0 0.0
    %2739 = vmatpush2.msra.mxu0 0.0
    %2740 = vmatprep.subr.mxu0 0.0
    %2741 = vmatpush2.msra.mxu0 0.0
    %2742 = vmatprep.subr.mxu0 0.0
    %2743 = vmatpush2.msra.mxu0 0.0
    %2744 = vmatprep.subr.mxu0 0.0
    %2745 = vmatpush2.msra.mxu0 0.0
    %2746 = vmatprep.subr.mxu0 0.0
    %2747 = vmatpush2.msra.mxu0 0.0
    %2748 = vmatprep.subr.mxu0 0.0
    %2749 = vmatpush2.msra.mxu0 0.0
    %2750 = vmatprep.subr.mxu0 0.0
    %2751 = vmatpush2.msra.mxu0 0.0
    %2752 = vmatprep.subr.mxu0 0.0
    %2753 = vmatpush2.msra.mxu0 0.0
    %2754 = vmatprep.subr.mxu0 0.0
    %2755 = vmatpush2.msra.mxu0 0.0
    %2756 = vmatprep.subr.mxu0 0.0
    %2757 = vmatpush2.msra.mxu0 0.0
    %2758 = vmatprep.subr.mxu0 0.0
    %2759 = vmatpush2.msra.mxu0 0.0
    %2760 = vmatprep.subr.mxu0 0.0
    %2761 = vmatpush2.msra.mxu0 0.0
    %2762 = vmatprep.subr.mxu0 0.0
    %2763 = vmatpush2.msra.mxu0 0.0
    %2764 = vmatprep.subr.mxu0 0.0
    %2765 = vmatpush2.msra.mxu0 0.0
    %2766 = vmatprep.mubr.f32.mxu0 0.0
    %2767 = vmatmul.mubr.f32.gmra.mxu0 %v2697
    %v2768 = vpop.f32.mrf.mxu0
    %v2769 = vadd.f32 0.0, %v2768
    %v2770 = vpop.f32.mrf.mxu0
    %2771 = vmatprep.mubr.f32.mxu0 0.0
    %2772 = vmatmul.mubr.f32.gmra.mxu0 %v2700
    %v2773 = vpop.f32.mrf.mxu0
    %v2774 = vadd.f32 0.0, %v2773
    %v2775 = vpop.f32.mrf.mxu0
    %2776 = vdwg.mxu0
    %v2778 = vsel %vm695, %v2518, 0
    %v2781 = vsel %vm695, %v2519, 0
    %2783 = vmatprep.subr.mxu0 0.0
    %2784 = vmatpush1.msra.mxu0 0.0
    %2785 = vmatprep.subr.mxu0 0.0
    %2786 = vmatpush1.msra.mxu0 0.0
    %2787 = vmatprep.subr.mxu0 0.0
    %2788 = vmatpush1.msra.mxu0 0.0
    %2789 = vmatprep.subr.mxu0 0.0
    %2790 = vmatpush1.msra.mxu0 0.0
    %2791 = vmatprep.subr.mxu0 0.0
    %2792 = vmatpush1.msra.mxu0 0.0
    %2793 = vmatprep.subr.mxu0 0.0
    %2794 = vmatpush1.msra.mxu0 0.0
    %2795 = vmatprep.subr.mxu0 0.0
    %2796 = vmatpush1.msra.mxu0 0.0
    %2797 = vmatprep.subr.mxu0 0.0
    %2798 = vmatpush1.msra.mxu0 0.0
    %2799 = vmatprep.subr.mxu0 0.0
    %2800 = vmatpush1.msra.mxu0 0.0
    %2801 = vmatprep.subr.mxu0 0.0
    %2802 = vmatpush1.msra.mxu0 0.0
    %2803 = vmatprep.subr.mxu0 0.0
    %2804 = vmatpush1.msra.mxu0 0.0
    %2805 = vmatprep.subr.mxu0 0.0
    %2806 = vmatpush1.msra.mxu0 0.0
    %2807 = vmatprep.subr.mxu0 0.0
    %2808 = vmatpush1.msra.mxu0 0.0
    %2809 = vmatprep.subr.mxu0 0.0
    %2810 = vmatpush1.msra.mxu0 0.0
    %2811 = vmatprep.subr.mxu0 0.0
    %2812 = vmatpush1.msra.mxu0 %v503
    %2813 = vmatprep.subr.mxu0 0.0
    %2814 = vmatpush1.msra.mxu0 %v497
    %2815 = vmatprep.subr.mxu0 0.0
    %2816 = vmatpush2.msra.mxu0 0.0
    %2817 = vmatprep.subr.mxu0 0.0
    %2818 = vmatpush2.msra.mxu0 0.0
    %2819 = vmatprep.subr.mxu0 0.0
    %2820 = vmatpush2.msra.mxu0 0.0
    %2821 = vmatprep.subr.mxu0 0.0
    %2822 = vmatpush2.msra.mxu0 0.0
    %2823 = vmatprep.subr.mxu0 0.0
    %2824 = vmatpush2.msra.mxu0 0.0
    %2825 = vmatprep.subr.mxu0 0.0
    %2826 = vmatpush2.msra.mxu0 0.0
    %2827 = vmatprep.subr.mxu0 0.0
    %2828 = vmatpush2.msra.mxu0 0.0
    %2829 = vmatprep.subr.mxu0 0.0
    %2830 = vmatpush2.msra.mxu0 0.0
    %2831 = vmatprep.subr.mxu0 0.0
    %2832 = vmatpush2.msra.mxu0 0.0
    %2833 = vmatprep.subr.mxu0 0.0
    %2834 = vmatpush2.msra.mxu0 0.0
    %2835 = vmatprep.subr.mxu0 0.0
    %2836 = vmatpush2.msra.mxu0 0.0
    %2837 = vmatprep.subr.mxu0 0.0
    %2838 = vmatpush2.msra.mxu0 0.0
    %2839 = vmatprep.subr.mxu0 0.0
    %2840 = vmatpush2.msra.mxu0 0.0
    %2841 = vmatprep.subr.mxu0 0.0
    %2842 = vmatpush2.msra.mxu0 0.0
    %2843 = vmatprep.subr.mxu0 0.0
    %2844 = vmatpush2.msra.mxu0 0.0
    %2845 = vmatprep.subr.mxu0 0.0
    %2846 = vmatpush2.msra.mxu0 0.0
    %2847 = vmatprep.mubr.f32.mxu0 0.0
    %2848 = vmatmul.mubr.f32.gmra.mxu0 %v2778
    %v2849 = vpop.f32.mrf.mxu0
    %v2850 = vadd.f32 0.0, %v2849
    %v2851 = vpop.f32.mrf.mxu0
    %2852 = vmatprep.mubr.f32.mxu0 0.0
    %2853 = vmatmul.mubr.f32.gmra.mxu0 %v2781
    %v2854 = vpop.f32.mrf.mxu0
    %v2855 = vadd.f32 0.0, %v2854
    %v2856 = vpop.f32.mrf.mxu0
    %2857 = vdwg.mxu0
    %s2858 = scalar_lea.vmem [#allocation10], 256
    %v2859 = vld [vmem:[%s2858] sm:$0xff]
    %v2860 = vld [vmem:[%s2858 + $0x8] sm:$0xff]
    %v2861 = vld [vmem:[%s2858 + $0x10] sm:$0xff]
    %v2862 = vld [vmem:[%s2858 + $0x18] sm:$0xff]
    %v2863 = vld [vmem:[%s2858 + $0x20] sm:$0xff]
    %v2864 = vld [vmem:[%s2858 + $0x28] sm:$0xff]
    %v2865 = vld [vmem:[%s2858 + $0x30] sm:$0xff]
    %v2866 = vld [vmem:[%s2858 + $0x38] sm:$0xff]
    %v2867 = vld [vmem:[%s2858 + $0x40] sm:$0xff]
    %v2868 = vld [vmem:[%s2858 + $0x48] sm:$0xff]
    %v2869 = vld [vmem:[%s2858 + $0x50] sm:$0xff]
    %v2870 = vld [vmem:[%s2858 + $0x58] sm:$0xff]
    %v2871 = vld [vmem:[%s2858 + $0x60] sm:$0xff]
    %v2872 = vld [vmem:[%s2858 + $0x68] sm:$0xff]
    %v2873 = vld [vmem:[%s2858 + $0x70] sm:$0xff]
    %v2874 = vld [vmem:[%s2858 + $0x78] sm:$0xff]
    %s2875 = scalar_lea.vmem [#allocation11], 256
    %v2876 = vld [vmem:[%s2875] sm:$0xff]
    %v2877 = vld [vmem:[%s2875 + $0x8] sm:$0xff]
    %v2878 = vld [vmem:[%s2875 + $0x10] sm:$0xff]
    %v2879 = vld [vmem:[%s2875 + $0x18] sm:$0xff]
    %v2880 = vld [vmem:[%s2875 + $0x20] sm:$0xff]
    %v2881 = vld [vmem:[%s2875 + $0x28] sm:$0xff]
    %v2882 = vld [vmem:[%s2875 + $0x30] sm:$0xff]
    %v2883 = vld [vmem:[%s2875 + $0x38] sm:$0xff]
    %v2884 = vld [vmem:[%s2875 + $0x40] sm:$0xff]
    %v2885 = vld [vmem:[%s2875 + $0x48] sm:$0xff]
    %v2886 = vld [vmem:[%s2875 + $0x50] sm:$0xff]
    %v2887 = vld [vmem:[%s2875 + $0x58] sm:$0xff]
    %v2888 = vld [vmem:[%s2875 + $0x60] sm:$0xff]
    %v2889 = vld [vmem:[%s2875 + $0x68] sm:$0xff]
    %v2890 = vld [vmem:[%s2875 + $0x70] sm:$0xff]
    %v2891 = vld [vmem:[%s2875 + $0x78] sm:$0xff]
    %2892 = vmatprep.subr.mxu0 0.0
    %2893 = vmatpush1.msra.mxu0 %v2891
    %2894 = vmatprep.subr.mxu0 0.0
    %2895 = vmatpush1.msra.mxu0 %v2890
    %2896 = vmatprep.subr.mxu0 0.0
    %2897 = vmatpush1.msra.mxu0 %v2889
    %2898 = vmatprep.subr.mxu0 0.0
    %2899 = vmatpush1.msra.mxu0 %v2888
    %2900 = vmatprep.subr.mxu0 0.0
    %2901 = vmatpush1.msra.mxu0 %v2887
    %2902 = vmatprep.subr.mxu0 0.0
    %2903 = vmatpush1.msra.mxu0 %v2886
    %2904 = vmatprep.subr.mxu0 0.0
    %2905 = vmatpush1.msra.mxu0 %v2885
    %2906 = vmatprep.subr.mxu0 0.0
    %2907 = vmatpush1.msra.mxu0 %v2884
    %2908 = vmatprep.subr.mxu0 0.0
    %2909 = vmatpush1.msra.mxu0 %v2883
    %2910 = vmatprep.subr.mxu0 0.0
    %2911 = vmatpush1.msra.mxu0 %v2882
    %2912 = vmatprep.subr.mxu0 0.0
    %2913 = vmatpush1.msra.mxu0 %v2881
    %2914 = vmatprep.subr.mxu0 0.0
    %2915 = vmatpush1.msra.mxu0 %v2880
    %2916 = vmatprep.subr.mxu0 0.0
    %2917 = vmatpush1.msra.mxu0 %v2879
    %2918 = vmatprep.subr.mxu0 0.0
    %2919 = vmatpush1.msra.mxu0 %v2878
    %2920 = vmatprep.subr.mxu0 0.0
    %2921 = vmatpush1.msra.mxu0 %v2877
    %2922 = vmatprep.subr.mxu0 0.0
    %2923 = vmatpush1.msra.mxu0 %v2876
    %2924 = vmatprep.subr.mxu0 0.0
    %2925 = vmatpush2.msra.mxu0 0.0
    %2926 = vmatprep.subr.mxu0 0.0
    %2927 = vmatpush2.msra.mxu0 0.0
    %2928 = vmatprep.subr.mxu0 0.0
    %2929 = vmatpush2.msra.mxu0 0.0
    %2930 = vmatprep.subr.mxu0 0.0
    %2931 = vmatpush2.msra.mxu0 0.0
    %2932 = vmatprep.subr.mxu0 0.0
    %2933 = vmatpush2.msra.mxu0 0.0
    %2934 = vmatprep.subr.mxu0 0.0
    %2935 = vmatpush2.msra.mxu0 0.0
    %2936 = vmatprep.subr.mxu0 0.0
    %2937 = vmatpush2.msra.mxu0 0.0
    %2938 = vmatprep.subr.mxu0 0.0
    %2939 = vmatpush2.msra.mxu0 0.0
    %2940 = vmatprep.subr.mxu0 0.0
    %2941 = vmatpush2.msra.mxu0 0.0
    %2942 = vmatprep.subr.mxu0 0.0
    %2943 = vmatpush2.msra.mxu0 0.0
    %2944 = vmatprep.subr.mxu0 0.0
    %2945 = vmatpush2.msra.mxu0 0.0
    %2946 = vmatprep.subr.mxu0 0.0
    %2947 = vmatpush2.msra.mxu0 0.0
    %2948 = vmatprep.subr.mxu0 0.0
    %2949 = vmatpush2.msra.mxu0 0.0
    %2950 = vmatprep.subr.mxu0 0.0
    %2951 = vmatpush2.msra.mxu0 0.0
    %2952 = vmatprep.subr.mxu0 0.0
    %2953 = vmatpush2.msra.mxu0 0.0
    %2954 = vmatprep.subr.mxu0 0.0
    %2955 = vmatpush2.msra.mxu0 0.0
    %2956 = vmatprep.mubr.f32.mxu0 0.0
    %2957 = vmatmul.mubr.f32.gmra.mxu0 %v2769
    %v2958 = vpop.f32.mrf.mxu0
    %v2959 = vadd.f32 0.0, %v2958
    %v2960 = vpop.f32.mrf.mxu0
    %2961 = vmatprep.mubr.f32.mxu0 0.0
    %2962 = vmatmul.mubr.f32.gmra.mxu0 %v2774
    %v2963 = vpop.f32.mrf.mxu0
    %v2964 = vadd.f32 0.0, %v2963
    %v2965 = vpop.f32.mrf.mxu0
    %2966 = vmatprep.mubr.f32.mxu0 0.0
    %2967 = vmatmul.mubr.f32.gmra.mxu0 %v2850
    %v2968 = vpop.f32.mrf.mxu0
    %v2969 = vadd.f32 0.0, %v2968
    %v2970 = vpop.f32.mrf.mxu0
    %2971 = vmatprep.mubr.f32.mxu0 0.0
    %2972 = vmatmul.mubr.f32.gmra.mxu0 %v2855
    %v2973 = vpop.f32.mrf.mxu0
    %v2974 = vadd.f32 0.0, %v2973
    %v2975 = vpop.f32.mrf.mxu0
    %2976 = vdwg.mxu0
    %2977 = vmatprep.subr.mxu0 0.0
    %2978 = vmatpush1.msra.mxu0 %v2874
    %2979 = vmatprep.subr.mxu0 0.0
    %2980 = vmatpush1.msra.mxu0 %v2873
    %2981 = vmatprep.subr.mxu0 0.0
    %2982 = vmatpush1.msra.mxu0 %v2872
    %2983 = vmatprep.subr.mxu0 0.0
    %2984 = vmatpush1.msra.mxu0 %v2871
    %2985 = vmatprep.subr.mxu0 0.0
    %2986 = vmatpush1.msra.mxu0 %v2870
    %2987 = vmatprep.subr.mxu0 0.0
    %2988 = vmatpush1.msra.mxu0 %v2869
    %2989 = vmatprep.subr.mxu0 0.0
    %2990 = vmatpush1.msra.mxu0 %v2868
    %2991 = vmatprep.subr.mxu0 0.0
    %2992 = vmatpush1.msra.mxu0 %v2867
    %2993 = vmatprep.subr.mxu0 0.0
    %2994 = vmatpush1.msra.mxu0 %v2866
    %2995 = vmatprep.subr.mxu0 0.0
    %2996 = vmatpush1.msra.mxu0 %v2865
    %2997 = vmatprep.subr.mxu0 0.0
    %2998 = vmatpush1.msra.mxu0 %v2864
    %2999 = vmatprep.subr.mxu0 0.0
    %3000 = vmatpush1.msra.mxu0 %v2863
    %3001 = vmatprep.subr.mxu0 0.0
    %3002 = vmatpush1.msra.mxu0 %v2862
    %3003 = vmatprep.subr.mxu0 0.0
    %3004 = vmatpush1.msra.mxu0 %v2861
    %3005 = vmatprep.subr.mxu0 0.0
    %3006 = vmatpush1.msra.mxu0 %v2860
    %3007 = vmatprep.subr.mxu0 0.0
    %3008 = vmatpush1.msra.mxu0 %v2859
    %3009 = vmatprep.subr.mxu0 0.0
    %3010 = vmatpush2.msra.mxu0 0.0
    %3011 = vmatprep.subr.mxu0 0.0
    %3012 = vmatpush2.msra.mxu0 0.0
    %3013 = vmatprep.subr.mxu0 0.0
    %3014 = vmatpush2.msra.mxu0 0.0
    %3015 = vmatprep.subr.mxu0 0.0
    %3016 = vmatpush2.msra.mxu0 0.0
    %3017 = vmatprep.subr.mxu0 0.0
    %3018 = vmatpush2.msra.mxu0 0.0
    %3019 = vmatprep.subr.mxu0 0.0
    %3020 = vmatpush2.msra.mxu0 0.0
    %3021 = vmatprep.subr.mxu0 0.0
    %3022 = vmatpush2.msra.mxu0 0.0
    %3023 = vmatprep.subr.mxu0 0.0
    %3024 = vmatpush2.msra.mxu0 0.0
    %3025 = vmatprep.subr.mxu0 0.0
    %3026 = vmatpush2.msra.mxu0 0.0
    %3027 = vmatprep.subr.mxu0 0.0
    %3028 = vmatpush2.msra.mxu0 0.0
    %3029 = vmatprep.subr.mxu0 0.0
    %3030 = vmatpush2.msra.mxu0 0.0
    %3031 = vmatprep.subr.mxu0 0.0
    %3032 = vmatpush2.msra.mxu0 0.0
    %3033 = vmatprep.subr.mxu0 0.0
    %3034 = vmatpush2.msra.mxu0 0.0
    %3035 = vmatprep.subr.mxu0 0.0
    %3036 = vmatpush2.msra.mxu0 0.0
    %3037 = vmatprep.subr.mxu0 0.0
    %3038 = vmatpush2.msra.mxu0 0.0
    %3039 = vmatprep.subr.mxu0 0.0
    %3040 = vmatpush2.msra.mxu0 0.0
    %3041 = vmatprep.mubr.f32.mxu0 0.0
    %3042 = vmatmul.mubr.f32.gmra.mxu0 %v2607
    %v3043 = vpop.f32.mrf.mxu0
    %v3044 = vadd.f32 %v2959, %v3043
    %v3045 = vpop.f32.mrf.mxu0
    %3046 = vmatprep.mubr.f32.mxu0 0.0
    %3047 = vmatmul.mubr.f32.gmra.mxu0 %v2612
    %v3048 = vpop.f32.mrf.mxu0
    %v3049 = vadd.f32 %v2964, %v3048
    %v3050 = vpop.f32.mrf.mxu0
    %3051 = vmatprep.mubr.f32.mxu0 0.0
    %3052 = vmatmul.mubr.f32.gmra.mxu0 %v2688
    %v3053 = vpop.f32.mrf.mxu0
    %v3054 = vadd.f32 %v2969, %v3053
    %v3055 = vpop.f32.mrf.mxu0
    %3056 = vmatprep.mubr.f32.mxu0 0.0
    %3057 = vmatmul.mubr.f32.gmra.mxu0 %v2693
    %v3058 = vpop.f32.mrf.mxu0
    %v3059 = vadd.f32 %v2974, %v3058
    %v3060 = vpop.f32.mrf.mxu0
    %3061 = vdwg.mxu0
    %s3062 = scalar_lea.vmem %s6, 2
    %v3063 = vld [vmem:[%s3062] sm:$0x1]
    %v3065 = vlaneseq
    %v3066 = vshrl.u32 %v3065, 7
    %v3067 = vsub.s32 0, %v3066
    %v3068 = vrot.slane %v3063, %v3067
    %v3070 = vadd.f32 %v3044, %v3068
    %v3071 = vadd.f32 %v3049, %v3068
    %v3072 = vadd.f32 %v3054, %v3068
    %v3073 = vadd.f32 %v3059, %v3068
    %v3074 = vmax.f32 %v3070, 0.0
    %v3075 = vmax.f32 %v3071, 0.0
    %v3076 = vmax.f32 %v3072, 0.0
    %v3077 = vmax.f32 %v3073, 0.0
    %s3078 = scalar_lea.vmem %s7, 2
    %v3079 = vld [vmem:[%s3078] sm:$0x1]
    %v3081 = vlaneseq
    %v3082 = vshrl.u32 %v3081, 7
    %v3083 = vsub.s32 0, %v3082
    %v3084 = vrot.slane %v3079, %v3083
    %v3086 = vmul.f32 %v3074, %v3084
    %v3087 = vmul.f32 %v3075, %v3084
    %v3088 = vmul.f32 %v3076, %v3084
    %v3089 = vmul.f32 %v3077, %v3084
    %3090 = vadd.xlane.f32.xlu0 %v3086
    %v3091 = vpop.xlane.xlu0 %3090
    %3092 = vadd.xlane.f32.xlu0 %v3087
    %v3093 = vpop.xlane.xlu0 %3092
    %3094 = vadd.xlane.f32.xlu0 %v3088
    %v3095 = vpop.xlane.xlu0 %3094
    %3096 = vadd.xlane.f32.xlu0 %v3089
    %v3097 = vpop.xlane.xlu0 %3096
    %v3098 = vmax.f32 %v2210, %v3091
    %v3099 = vmax.f32 %v2211, %v3093
    %v3100 = vmax.f32 %v2212, %v3095
    %v3101 = vmax.f32 %v2213, %v3097
    %v3102 = vsub.f32 %v2210, %v3098
    %v3103 = vsub.f32 %v2211, %v3099
    %v3104 = vsub.f32 %v2212, %v3100
    %v3105 = vsub.f32 %v2213, %v3101
    %v3106 = vmul.f32 %v3102, 1.442695
    %v3107 = vpow.pop %v3106
    %v3108 = vmul.f32 %v3103, 1.442695
    %v3109 = vpow.pop %v3108
    %v3110 = vmul.f32 %v3104, 1.442695
    %v3111 = vpow.pop %v3110
    %v3112 = vmul.f32 %v3105, 1.442695
    %v3113 = vpow.pop %v3112
    %v3114 = vsub.f32 %v3091, %v3098
    %v3115 = vsub.f32 %v3093, %v3099
    %v3116 = vsub.f32 %v3095, %v3100
    %v3117 = vsub.f32 %v3097, %v3101
    %v3118 = vmul.f32 %v3114, 1.442695
    %v3119 = vpow.pop %v3118
    %v3120 = vmul.f32 %v3115, 1.442695
    %v3121 = vpow.pop %v3120
    %v3122 = vmul.f32 %v3116, 1.442695
    %v3123 = vpow.pop %v3122
    %v3124 = vmul.f32 %v3117, 1.442695
    %v3125 = vpow.pop %v3124
    %v3126 = vmul.f32 %v2238, %v3107
    %v3127 = vmul.f32 %v2239, %v3109
    %v3128 = vmul.f32 %v2240, %v3111
    %v3129 = vmul.f32 %v2241, %v3113
    %v3130 = vadd.f32 %v3126, %v3119
    %v3131 = vadd.f32 %v3127, %v3121
    %v3132 = vadd.f32 %v3128, %v3123
    %v3133 = vadd.f32 %v3129, %v3125
    %v3134 = vmul.f32 %v2250, %v3107
    %v3135 = vmul.f32 %v2251, %v3109
    %v3136 = vmul.f32 %v2252, %v3111
    %v3137 = vmul.f32 %v2253, %v3113
    %v3138 = vmul.f32 %v3119, %v3074
    %v3139 = vmul.f32 %v3121, %v3075
    %v3140 = vmul.f32 %v3123, %v3076
    %v3141 = vmul.f32 %v3125, %v3077
    %v3142 = vadd.f32 %v3134, %v3138
    %v3143 = vadd.f32 %v3135, %v3139
    %v3144 = vadd.f32 %v3136, %v3140
    %v3145 = vadd.f32 %v3137, %v3141
    %v3147 = vsel %vm695, %v2327, 0
    %v3150 = vsel %vm695, %v2332, 0
    %3152 = vmatprep.subr.mxu0 0.0
    %3153 = vmatpush1.msra.mxu0 0.0
    %3154 = vmatprep.subr.mxu0 0.0
    %3155 = vmatpush1.msra.mxu0 0.0
    %3156 = vmatprep.subr.mxu0 0.0
    %3157 = vmatpush1.msra.mxu0 0.0
    %3158 = vmatprep.subr.mxu0 0.0
    %3159 = vmatpush1.msra.mxu0 0.0
    %3160 = vmatprep.subr.mxu0 0.0
    %3161 = vmatpush1.msra.mxu0 0.0
    %3162 = vmatprep.subr.mxu0 0.0
    %3163 = vmatpush1.msra.mxu0 0.0
    %3164 = vmatprep.subr.mxu0 0.0
    %3165 = vmatpush1.msra.mxu0 0.0
    %3166 = vmatprep.subr.mxu0 0.0
    %3167 = vmatpush1.msra.mxu0 0.0
    %3168 = vmatprep.subr.mxu0 0.0
    %3169 = vmatpush1.msra.mxu0 0.0
    %3170 = vmatprep.subr.mxu0 0.0
    %3171 = vmatpush1.msra.mxu0 0.0
    %3172 = vmatprep.subr.mxu0 0.0
    %3173 = vmatpush1.msra.mxu0 0.0
    %3174 = vmatprep.subr.mxu0 0.0
    %3175 = vmatpush1.msra.mxu0 0.0
    %3176 = vmatprep.subr.mxu0 0.0
    %3177 = vmatpush1.msra.mxu0 0.0
    %3178 = vmatprep.subr.mxu0 0.0
    %3179 = vmatpush1.msra.mxu0 0.0
    %3180 = vmatprep.subr.mxu0 0.0
    %3181 = vmatpush1.msra.mxu0 %v121
    %3182 = vmatprep.subr.mxu0 0.0
    %3183 = vmatpush1.msra.mxu0 %v120
    %3184 = vmatprep.subr.mxu0 0.0
    %3185 = vmatpush2.msra.mxu0 0.0
    %3186 = vmatprep.subr.mxu0 0.0
    %3187 = vmatpush2.msra.mxu0 0.0
    %3188 = vmatprep.subr.mxu0 0.0
    %3189 = vmatpush2.msra.mxu0 0.0
    %3190 = vmatprep.subr.mxu0 0.0
    %3191 = vmatpush2.msra.mxu0 0.0
    %3192 = vmatprep.subr.mxu0 0.0
    %3193 = vmatpush2.msra.mxu0 0.0
    %3194 = vmatprep.subr.mxu0 0.0
    %3195 = vmatpush2.msra.mxu0 0.0
    %3196 = vmatprep.subr.mxu0 0.0
    %3197 = vmatpush2.msra.mxu0 0.0
    %3198 = vmatprep.subr.mxu0 0.0
    %3199 = vmatpush2.msra.mxu0 0.0
    %3200 = vmatprep.subr.mxu0 0.0
    %3201 = vmatpush2.msra.mxu0 0.0
    %3202 = vmatprep.subr.mxu0 0.0
    %3203 = vmatpush2.msra.mxu0 0.0
    %3204 = vmatprep.subr.mxu0 0.0
    %3205 = vmatpush2.msra.mxu0 0.0
    %3206 = vmatprep.subr.mxu0 0.0
    %3207 = vmatpush2.msra.mxu0 0.0
    %3208 = vmatprep.subr.mxu0 0.0
    %3209 = vmatpush2.msra.mxu0 0.0
    %3210 = vmatprep.subr.mxu0 0.0
    %3211 = vmatpush2.msra.mxu0 0.0
    %3212 = vmatprep.subr.mxu0 0.0
    %3213 = vmatpush2.msra.mxu0 0.0
    %3214 = vmatprep.subr.mxu0 0.0
    %3215 = vmatpush2.msra.mxu0 0.0
    %3216 = vmatprep.mubr.f32.mxu0 0.0
    %3217 = vmatmul.mubr.f32.gmra.mxu0 %v3147
    %v3218 = vpop.f32.mrf.mxu0
    %v3219 = vadd.f32 0.0, %v3218
    %v3220 = vpop.f32.mrf.mxu0
    %3221 = vmatprep.mubr.f32.mxu0 0.0
    %3222 = vmatmul.mubr.f32.gmra.mxu0 %v3150
    %v3223 = vpop.f32.mrf.mxu0
    %v3224 = vadd.f32 0.0, %v3223
    %v3225 = vpop.f32.mrf.mxu0
    %3226 = vdwg.mxu0
    %v3228 = vsel %vm695, %v2408, 0
    %v3231 = vsel %vm695, %v2413, 0
    %3233 = vmatprep.subr.mxu0 0.0
    %3234 = vmatpush1.msra.mxu0 0.0
    %3235 = vmatprep.subr.mxu0 0.0
    %3236 = vmatpush1.msra.mxu0 0.0
    %3237 = vmatprep.subr.mxu0 0.0
    %3238 = vmatpush1.msra.mxu0 0.0
    %3239 = vmatprep.subr.mxu0 0.0
    %3240 = vmatpush1.msra.mxu0 0.0
    %3241 = vmatprep.subr.mxu0 0.0
    %3242 = vmatpush1.msra.mxu0 0.0
    %3243 = vmatprep.subr.mxu0 0.0
    %3244 = vmatpush1.msra.mxu0 0.0
    %3245 = vmatprep.subr.mxu0 0.0
    %3246 = vmatpush1.msra.mxu0 0.0
    %3247 = vmatprep.subr.mxu0 0.0
    %3248 = vmatpush1.msra.mxu0 0.0
    %3249 = vmatprep.subr.mxu0 0.0
    %3250 = vmatpush1.msra.mxu0 0.0
    %3251 = vmatprep.subr.mxu0 0.0
    %3252 = vmatpush1.msra.mxu0 0.0
    %3253 = vmatprep.subr.mxu0 0.0
    %3254 = vmatpush1.msra.mxu0 0.0
    %3255 = vmatprep.subr.mxu0 0.0
    %3256 = vmatpush1.msra.mxu0 0.0
    %3257 = vmatprep.subr.mxu0 0.0
    %3258 = vmatpush1.msra.mxu0 0.0
    %3259 = vmatprep.subr.mxu0 0.0
    %3260 = vmatpush1.msra.mxu0 0.0
    %3261 = vmatprep.subr.mxu0 0.0
    %3262 = vmatpush1.msra.mxu0 %v123
    %3263 = vmatprep.subr.mxu0 0.0
    %3264 = vmatpush1.msra.mxu0 %v122
    %3265 = vmatprep.subr.mxu0 0.0
    %3266 = vmatpush2.msra.mxu0 0.0
    %3267 = vmatprep.subr.mxu0 0.0
    %3268 = vmatpush2.msra.mxu0 0.0
    %3269 = vmatprep.subr.mxu0 0.0
    %3270 = vmatpush2.msra.mxu0 0.0
    %3271 = vmatprep.subr.mxu0 0.0
    %3272 = vmatpush2.msra.mxu0 0.0
    %3273 = vmatprep.subr.mxu0 0.0
    %3274 = vmatpush2.msra.mxu0 0.0
    %3275 = vmatprep.subr.mxu0 0.0
    %3276 = vmatpush2.msra.mxu0 0.0
    %3277 = vmatprep.subr.mxu0 0.0
    %3278 = vmatpush2.msra.mxu0 0.0
    %3279 = vmatprep.subr.mxu0 0.0
    %3280 = vmatpush2.msra.mxu0 0.0
    %3281 = vmatprep.subr.mxu0 0.0
    %3282 = vmatpush2.msra.mxu0 0.0
    %3283 = vmatprep.subr.mxu0 0.0
    %3284 = vmatpush2.msra.mxu0 0.0
    %3285 = vmatprep.subr.mxu0 0.0
    %3286 = vmatpush2.msra.mxu0 0.0
    %3287 = vmatprep.subr.mxu0 0.0
    %3288 = vmatpush2.msra.mxu0 0.0
    %3289 = vmatprep.subr.mxu0 0.0
    %3290 = vmatpush2.msra.mxu0 0.0
    %3291 = vmatprep.subr.mxu0 0.0
    %3292 = vmatpush2.msra.mxu0 0.0
    %3293 = vmatprep.subr.mxu0 0.0
    %3294 = vmatpush2.msra.mxu0 0.0
    %3295 = vmatprep.subr.mxu0 0.0
    %3296 = vmatpush2.msra.mxu0 0.0
    %3297 = vmatprep.mubr.f32.mxu0 0.0
    %3298 = vmatmul.mubr.f32.gmra.mxu0 %v3228
    %v3299 = vpop.f32.mrf.mxu0
    %v3300 = vadd.f32 0.0, %v3299
    %v3301 = vpop.f32.mrf.mxu0
    %3302 = vmatprep.mubr.f32.mxu0 0.0
    %3303 = vmatmul.mubr.f32.gmra.mxu0 %v3231
    %v3304 = vpop.f32.mrf.mxu0
    %v3305 = vadd.f32 0.0, %v3304
    %v3306 = vpop.f32.mrf.mxu0
    %3307 = vdwg.mxu0
    %v3308 = vadd.f32 %v3219, 1.0
    %v3309 = vadd.f32 %v3224, 1.0
    %v3310 = vadd.f32 %v3300, 1.0
    %v3311 = vadd.f32 %v3305, 1.0
    %v3312 = vsel %vm689, %v3308, %v3219
    %v3313 = vsel %vm690, %v3309, %v3224
    %v3314 = vsel %vm689, %v3310, %v3300
    %v3315 = vsel %vm690, %v3311, %v3305
    %v3316 = vsel %vm695, %v3312, 0.0
    %3317 = vadd.xlane.f32.xlu0 %v3316
    %v3318 = vpop.xlane.xlu0 %3317
    %v3319 = vsel %vm695, %v3313, 0.0
    %3320 = vadd.xlane.f32.xlu0 %v3319
    %v3321 = vpop.xlane.xlu0 %3320
    %v3322 = vsel %vm695, %v3314, 0.0
    %3323 = vadd.xlane.f32.xlu0 %v3322
    %v3324 = vpop.xlane.xlu0 %3323
    %v3325 = vsel %vm695, %v3315, 0.0
    %3326 = vadd.xlane.f32.xlu0 %v3325
    %v3327 = vpop.xlane.xlu0 %3326
    %v3328 = vmax.f32 %v3318, 1e-12
    %v3329 = vmax.f32 %v3321, 1e-12
    %v3330 = vmax.f32 %v3324, 1e-12
    %v3331 = vmax.f32 %v3327, 1e-12
    %v3332 = vadd.f32 %v3316, %v3319
    %v3333 = vrot.slane %v3332, 4
    %v3334 = vadd.f32 %v3332, %v3333
    %v3335 = vrot.slane %v3334, 2
    %v3336 = vadd.f32 %v3334, %v3335
    %v3337 = vrot.slane %v3336, 1
    %v3338 = vadd.f32 %v3336, %v3337
    %v3339 = vadd.f32 %v3322, %v3325
    %v3340 = vrot.slane %v3339, 4
    %v3341 = vadd.f32 %v3339, %v3340
    %v3342 = vrot.slane %v3341, 2
    %v3343 = vadd.f32 %v3341, %v3342
    %v3344 = vrot.slane %v3343, 1
    %v3345 = vadd.f32 %v3343, %v3344
    %v3346 = vmax.f32 %v3338, 1e-12
    %v3347 = vmax.f32 %v3345, 1e-12
    %v3348 = vrsqrt.pop %v3328
    %v3349 = vrsqrt.pop %v3329
    %v3350 = vrsqrt.pop %v3330
    %v3351 = vrsqrt.pop %v3331
    %v3352 = vrsqrt.pop %v3346
    %v3353 = vrsqrt.pop %v3347
    %v3354 = vmul.f32 %v3348, %v3352
    %v3355 = vmul.f32 %v3349, %v3352
    %v3356 = vmul.f32 %v3350, %v3353
    %v3357 = vmul.f32 %v3351, %v3353
    %v3358 = vmul.f32 %v3312, %v3354
    %v3359 = vmul.f32 %v3313, %v3355
    %v3360 = vmul.f32 %v3314, %v3356
    %v3361 = vmul.f32 %v3315, %v3357
    %3362 = vxpose.xlu0.b32.start [1/16] %v3358, 128
    %3363 = vxpose.xlu0.b32.cont [2/16] %v3359, 128
    %3364 = vxpose.xlu0.b32.cont [3/16] 0.0, 128
    %3365 = vxpose.xlu0.b32.cont [4/16] 0.0, 128
    %3366 = vxpose.xlu0.b32.cont [5/16] 0.0, 128
    %3367 = vxpose.xlu0.b32.cont [6/16] 0.0, 128
    %3368 = vxpose.xlu0.b32.cont [7/16] 0.0, 128
    %3369 = vxpose.xlu0.b32.cont [8/16] 0.0, 128
    %3370 = vxpose.xlu0.b32.cont [9/16] 0.0, 128
    %3371 = vxpose.xlu0.b32.cont [10/16] 0.0, 128
    %3372 = vxpose.xlu0.b32.cont [11/16] 0.0, 128
    %3373 = vxpose.xlu0.b32.cont [12/16] 0.0, 128
    %3374 = vxpose.xlu0.b32.cont [13/16] 0.0, 128
    %3375 = vxpose.xlu0.b32.cont [14/16] 0.0, 128
    %3376 = vxpose.xlu0.b32.cont [15/16] 0.0, 128
    %3377 = vxpose.xlu0.b32.end [16/16] 0.0, 128
    %v3378 = vpop.trf.xlu0
    %v3379 = vpop.trf.xlu0
    %v3380 = vpop.trf.xlu0
    %v3381 = vpop.trf.xlu0
    %v3382 = vpop.trf.xlu0
    %v3383 = vpop.trf.xlu0
    %v3384 = vpop.trf.xlu0
    %v3385 = vpop.trf.xlu0
    %v3386 = vpop.trf.xlu0
    %v3387 = vpop.trf.xlu0
    %v3388 = vpop.trf.xlu0
    %v3389 = vpop.trf.xlu0
    %v3390 = vpop.trf.xlu0
    %v3391 = vpop.trf.xlu0
    %v3392 = vpop.trf.xlu0
    %v3393 = vpop.trf.xlu0
    %3394 = vxpose.xlu0.b32.start [1/16] %v3360, 128
    %3395 = vxpose.xlu0.b32.cont [2/16] %v3361, 128
    %3396 = vxpose.xlu0.b32.cont [3/16] 0.0, 128
    %3397 = vxpose.xlu0.b32.cont [4/16] 0.0, 128
    %3398 = vxpose.xlu0.b32.cont [5/16] 0.0, 128
    %3399 = vxpose.xlu0.b32.cont [6/16] 0.0, 128
    %3400 = vxpose.xlu0.b32.cont [7/16] 0.0, 128
    %3401 = vxpose.xlu0.b32.cont [8/16] 0.0, 128
    %3402 = vxpose.xlu0.b32.cont [9/16] 0.0, 128
    %3403 = vxpose.xlu0.b32.cont [10/16] 0.0, 128
    %3404 = vxpose.xlu0.b32.cont [11/16] 0.0, 128
    %3405 = vxpose.xlu0.b32.cont [12/16] 0.0, 128
    %3406 = vxpose.xlu0.b32.cont [13/16] 0.0, 128
    %3407 = vxpose.xlu0.b32.cont [14/16] 0.0, 128
    %3408 = vxpose.xlu0.b32.cont [15/16] 0.0, 128
    %3409 = vxpose.xlu0.b32.end [16/16] 0.0, 128
    %v3410 = vpop.trf.xlu0
    %v3411 = vpop.trf.xlu0
    %v3412 = vpop.trf.xlu0
    %v3413 = vpop.trf.xlu0
    %v3414 = vpop.trf.xlu0
    %v3415 = vpop.trf.xlu0
    %v3416 = vpop.trf.xlu0
    %v3417 = vpop.trf.xlu0
    %v3418 = vpop.trf.xlu0
    %v3419 = vpop.trf.xlu0
    %v3420 = vpop.trf.xlu0
    %v3421 = vpop.trf.xlu0
    %v3422 = vpop.trf.xlu0
    %v3423 = vpop.trf.xlu0
    %v3424 = vpop.trf.xlu0
    %v3425 = vpop.trf.xlu0
    %v3427 = vsel %vm695, %v3358, 0
    %v3430 = vsel %vm695, %v3359, 0
    %3432 = vmatprep.subr.mxu0 0.0
    %3433 = vmatpush1.msra.mxu0 0.0
    %3434 = vmatprep.subr.mxu0 0.0
    %3435 = vmatpush1.msra.mxu0 0.0
    %3436 = vmatprep.subr.mxu0 0.0
    %3437 = vmatpush1.msra.mxu0 0.0
    %3438 = vmatprep.subr.mxu0 0.0
    %3439 = vmatpush1.msra.mxu0 0.0
    %3440 = vmatprep.subr.mxu0 0.0
    %3441 = vmatpush1.msra.mxu0 0.0
    %3442 = vmatprep.subr.mxu0 0.0
    %3443 = vmatpush1.msra.mxu0 0.0
    %3444 = vmatprep.subr.mxu0 0.0
    %3445 = vmatpush1.msra.mxu0 0.0
    %3446 = vmatprep.subr.mxu0 0.0
    %3447 = vmatpush1.msra.mxu0 0.0
    %3448 = vmatprep.subr.mxu0 0.0
    %3449 = vmatpush1.msra.mxu0 0.0
    %3450 = vmatprep.subr.mxu0 0.0
    %3451 = vmatpush1.msra.mxu0 0.0
    %3452 = vmatprep.subr.mxu0 0.0
    %3453 = vmatpush1.msra.mxu0 0.0
    %3454 = vmatprep.subr.mxu0 0.0
    %3455 = vmatpush1.msra.mxu0 0.0
    %3456 = vmatprep.subr.mxu0 0.0
    %3457 = vmatpush1.msra.mxu0 0.0
    %3458 = vmatprep.subr.mxu0 0.0
    %3459 = vmatpush1.msra.mxu0 0.0
    %3460 = vmatprep.subr.mxu0 0.0
    %3461 = vmatpush1.msra.mxu0 %v578
    %3462 = vmatprep.subr.mxu0 0.0
    %3463 = vmatpush1.msra.mxu0 %v572
    %3464 = vmatprep.subr.mxu0 0.0
    %3465 = vmatpush2.msra.mxu0 0.0
    %3466 = vmatprep.subr.mxu0 0.0
    %3467 = vmatpush2.msra.mxu0 0.0
    %3468 = vmatprep.subr.mxu0 0.0
    %3469 = vmatpush2.msra.mxu0 0.0
    %3470 = vmatprep.subr.mxu0 0.0
    %3471 = vmatpush2.msra.mxu0 0.0
    %3472 = vmatprep.subr.mxu0 0.0
    %3473 = vmatpush2.msra.mxu0 0.0
    %3474 = vmatprep.subr.mxu0 0.0
    %3475 = vmatpush2.msra.mxu0 0.0
    %3476 = vmatprep.subr.mxu0 0.0
    %3477 = vmatpush2.msra.mxu0 0.0
    %3478 = vmatprep.subr.mxu0 0.0
    %3479 = vmatpush2.msra.mxu0 0.0
    %3480 = vmatprep.subr.mxu0 0.0
    %3481 = vmatpush2.msra.mxu0 0.0
    %3482 = vmatprep.subr.mxu0 0.0
    %3483 = vmatpush2.msra.mxu0 0.0
    %3484 = vmatprep.subr.mxu0 0.0
    %3485 = vmatpush2.msra.mxu0 0.0
    %3486 = vmatprep.subr.mxu0 0.0
    %3487 = vmatpush2.msra.mxu0 0.0
    %3488 = vmatprep.subr.mxu0 0.0
    %3489 = vmatpush2.msra.mxu0 0.0
    %3490 = vmatprep.subr.mxu0 0.0
    %3491 = vmatpush2.msra.mxu0 0.0
    %3492 = vmatprep.subr.mxu0 0.0
    %3493 = vmatpush2.msra.mxu0 0.0
    %3494 = vmatprep.subr.mxu0 0.0
    %3495 = vmatpush2.msra.mxu0 0.0
    %3496 = vmatprep.mubr.f32.mxu0 0.0
    %3497 = vmatmul.mubr.f32.gmra.mxu0 %v3427
    %v3498 = vpop.f32.mrf.mxu0
    %v3499 = vadd.f32 0.0, %v3498
    %v3500 = vpop.f32.mrf.mxu0
    %3501 = vmatprep.mubr.f32.mxu0 0.0
    %3502 = vmatmul.mubr.f32.gmra.mxu0 %v3430
    %v3503 = vpop.f32.mrf.mxu0
    %v3504 = vadd.f32 0.0, %v3503
    %v3505 = vpop.f32.mrf.mxu0
    %3506 = vdwg.mxu0
    %v3508 = vsel %vm695, %v3360, 0
    %v3511 = vsel %vm695, %v3361, 0
    %3513 = vmatprep.subr.mxu0 0.0
    %3514 = vmatpush1.msra.mxu0 0.0
    %3515 = vmatprep.subr.mxu0 0.0
    %3516 = vmatpush1.msra.mxu0 0.0
    %3517 = vmatprep.subr.mxu0 0.0
    %3518 = vmatpush1.msra.mxu0 0.0
    %3519 = vmatprep.subr.mxu0 0.0
    %3520 = vmatpush1.msra.mxu0 0.0
    %3521 = vmatprep.subr.mxu0 0.0
    %3522 = vmatpush1.msra.mxu0 0.0
    %3523 = vmatprep.subr.mxu0 0.0
    %3524 = vmatpush1.msra.mxu0 0.0
    %3525 = vmatprep.subr.mxu0 0.0
    %3526 = vmatpush1.msra.mxu0 0.0
    %3527 = vmatprep.subr.mxu0 0.0
    %3528 = vmatpush1.msra.mxu0 0.0
    %3529 = vmatprep.subr.mxu0 0.0
    %3530 = vmatpush1.msra.mxu0 0.0
    %3531 = vmatprep.subr.mxu0 0.0
    %3532 = vmatpush1.msra.mxu0 0.0
    %3533 = vmatprep.subr.mxu0 0.0
    %3534 = vmatpush1.msra.mxu0 0.0
    %3535 = vmatprep.subr.mxu0 0.0
    %3536 = vmatpush1.msra.mxu0 0.0
    %3537 = vmatprep.subr.mxu0 0.0
    %3538 = vmatpush1.msra.mxu0 0.0
    %3539 = vmatprep.subr.mxu0 0.0
    %3540 = vmatpush1.msra.mxu0 0.0
    %3541 = vmatprep.subr.mxu0 0.0
    %3542 = vmatpush1.msra.mxu0 %v590
    %3543 = vmatprep.subr.mxu0 0.0
    %3544 = vmatpush1.msra.mxu0 %v584
    %3545 = vmatprep.subr.mxu0 0.0
    %3546 = vmatpush2.msra.mxu0 0.0
    %3547 = vmatprep.subr.mxu0 0.0
    %3548 = vmatpush2.msra.mxu0 0.0
    %3549 = vmatprep.subr.mxu0 0.0
    %3550 = vmatpush2.msra.mxu0 0.0
    %3551 = vmatprep.subr.mxu0 0.0
    %3552 = vmatpush2.msra.mxu0 0.0
    %3553 = vmatprep.subr.mxu0 0.0
    %3554 = vmatpush2.msra.mxu0 0.0
    %3555 = vmatprep.subr.mxu0 0.0
    %3556 = vmatpush2.msra.mxu0 0.0
    %3557 = vmatprep.subr.mxu0 0.0
    %3558 = vmatpush2.msra.mxu0 0.0
    %3559 = vmatprep.subr.mxu0 0.0
    %3560 = vmatpush2.msra.mxu0 0.0
    %3561 = vmatprep.subr.mxu0 0.0
    %3562 = vmatpush2.msra.mxu0 0.0
    %3563 = vmatprep.subr.mxu0 0.0
    %3564 = vmatpush2.msra.mxu0 0.0
    %3565 = vmatprep.subr.mxu0 0.0
    %3566 = vmatpush2.msra.mxu0 0.0
    %3567 = vmatprep.subr.mxu0 0.0
    %3568 = vmatpush2.msra.mxu0 0.0
    %3569 = vmatprep.subr.mxu0 0.0
    %3570 = vmatpush2.msra.mxu0 0.0
    %3571 = vmatprep.subr.mxu0 0.0
    %3572 = vmatpush2.msra.mxu0 0.0
    %3573 = vmatprep.subr.mxu0 0.0
    %3574 = vmatpush2.msra.mxu0 0.0
    %3575 = vmatprep.subr.mxu0 0.0
    %3576 = vmatpush2.msra.mxu0 0.0
    %3577 = vmatprep.mubr.f32.mxu0 0.0
    %3578 = vmatmul.mubr.f32.gmra.mxu0 %v3508
    %v3579 = vpop.f32.mrf.mxu0
    %v3580 = vadd.f32 0.0, %v3579
    %v3581 = vpop.f32.mrf.mxu0
    %3582 = vmatprep.mubr.f32.mxu0 0.0
    %3583 = vmatmul.mubr.f32.gmra.mxu0 %v3511
    %v3584 = vpop.f32.mrf.mxu0
    %v3585 = vadd.f32 0.0, %v3584
    %v3586 = vpop.f32.mrf.mxu0
    %3587 = vdwg.mxu0
    %v3589 = vsel %vm695, %v3378, 0
    %v3592 = vsel %vm695, %v3379, 0
    %3594 = vmatprep.subr.mxu0 0.0
    %3595 = vmatpush1.msra.mxu0 0.0
    %3596 = vmatprep.subr.mxu0 0.0
    %3597 = vmatpush1.msra.mxu0 0.0
    %3598 = vmatprep.subr.mxu0 0.0
    %3599 = vmatpush1.msra.mxu0 0.0
    %3600 = vmatprep.subr.mxu0 0.0
    %3601 = vmatpush1.msra.mxu0 0.0
    %3602 = vmatprep.subr.mxu0 0.0
    %3603 = vmatpush1.msra.mxu0 0.0
    %3604 = vmatprep.subr.mxu0 0.0
    %3605 = vmatpush1.msra.mxu0 0.0
    %3606 = vmatprep.subr.mxu0 0.0
    %3607 = vmatpush1.msra.mxu0 0.0
    %3608 = vmatprep.subr.mxu0 0.0
    %3609 = vmatpush1.msra.mxu0 0.0
    %3610 = vmatprep.subr.mxu0 0.0
    %3611 = vmatpush1.msra.mxu0 0.0
    %3612 = vmatprep.subr.mxu0 0.0
    %3613 = vmatpush1.msra.mxu0 0.0
    %3614 = vmatprep.subr.mxu0 0.0
    %3615 = vmatpush1.msra.mxu0 0.0
    %3616 = vmatprep.subr.mxu0 0.0
    %3617 = vmatpush1.msra.mxu0 0.0
    %3618 = vmatprep.subr.mxu0 0.0
    %3619 = vmatpush1.msra.mxu0 0.0
    %3620 = vmatprep.subr.mxu0 0.0
    %3621 = vmatpush1.msra.mxu0 0.0
    %3622 = vmatprep.subr.mxu0 0.0
    %3623 = vmatpush1.msra.mxu0 %v580
    %3624 = vmatprep.subr.mxu0 0.0
    %3625 = vmatpush1.msra.mxu0 %v574
    %3626 = vmatprep.subr.mxu0 0.0
    %3627 = vmatpush2.msra.mxu0 0.0
    %3628 = vmatprep.subr.mxu0 0.0
    %3629 = vmatpush2.msra.mxu0 0.0
    %3630 = vmatprep.subr.mxu0 0.0
    %3631 = vmatpush2.msra.mxu0 0.0
    %3632 = vmatprep.subr.mxu0 0.0
    %3633 = vmatpush2.msra.mxu0 0.0
    %3634 = vmatprep.subr.mxu0 0.0
    %3635 = vmatpush2.msra.mxu0 0.0
    %3636 = vmatprep.subr.mxu0 0.0
    %3637 = vmatpush2.msra.mxu0 0.0
    %3638 = vmatprep.subr.mxu0 0.0
    %3639 = vmatpush2.msra.mxu0 0.0
    %3640 = vmatprep.subr.mxu0 0.0
    %3641 = vmatpush2.msra.mxu0 0.0
    %3642 = vmatprep.subr.mxu0 0.0
    %3643 = vmatpush2.msra.mxu0 0.0
    %3644 = vmatprep.subr.mxu0 0.0
    %3645 = vmatpush2.msra.mxu0 0.0
    %3646 = vmatprep.subr.mxu0 0.0
    %3647 = vmatpush2.msra.mxu0 0.0
    %3648 = vmatprep.subr.mxu0 0.0
    %3649 = vmatpush2.msra.mxu0 0.0
    %3650 = vmatprep.subr.mxu0 0.0
    %3651 = vmatpush2.msra.mxu0 0.0
    %3652 = vmatprep.subr.mxu0 0.0
    %3653 = vmatpush2.msra.mxu0 0.0
    %3654 = vmatprep.subr.mxu0 0.0
    %3655 = vmatpush2.msra.mxu0 0.0
    %3656 = vmatprep.subr.mxu0 0.0
    %3657 = vmatpush2.msra.mxu0 0.0
    %3658 = vmatprep.mubr.f32.mxu0 0.0
    %3659 = vmatmul.mubr.f32.gmra.mxu0 %v3589
    %v3660 = vpop.f32.mrf.mxu0
    %v3661 = vadd.f32 0.0, %v3660
    %v3662 = vpop.f32.mrf.mxu0
    %3663 = vmatprep.mubr.f32.mxu0 0.0
    %3664 = vmatmul.mubr.f32.gmra.mxu0 %v3592
    %v3665 = vpop.f32.mrf.mxu0
    %v3666 = vadd.f32 0.0, %v3665
    %v3667 = vpop.f32.mrf.mxu0
    %3668 = vdwg.mxu0
    %v3670 = vsel %vm695, %v3410, 0
    %v3673 = vsel %vm695, %v3411, 0
    %3675 = vmatprep.subr.mxu0 0.0
    %3676 = vmatpush1.msra.mxu0 0.0
    %3677 = vmatprep.subr.mxu0 0.0
    %3678 = vmatpush1.msra.mxu0 0.0
    %3679 = vmatprep.subr.mxu0 0.0
    %3680 = vmatpush1.msra.mxu0 0.0
    %3681 = vmatprep.subr.mxu0 0.0
    %3682 = vmatpush1.msra.mxu0 0.0
    %3683 = vmatprep.subr.mxu0 0.0
    %3684 = vmatpush1.msra.mxu0 0.0
    %3685 = vmatprep.subr.mxu0 0.0
    %3686 = vmatpush1.msra.mxu0 0.0
    %3687 = vmatprep.subr.mxu0 0.0
    %3688 = vmatpush1.msra.mxu0 0.0
    %3689 = vmatprep.subr.mxu0 0.0
    %3690 = vmatpush1.msra.mxu0 0.0
    %3691 = vmatprep.subr.mxu0 0.0
    %3692 = vmatpush1.msra.mxu0 0.0
    %3693 = vmatprep.subr.mxu0 0.0
    %3694 = vmatpush1.msra.mxu0 0.0
    %3695 = vmatprep.subr.mxu0 0.0
    %3696 = vmatpush1.msra.mxu0 0.0
    %3697 = vmatprep.subr.mxu0 0.0
    %3698 = vmatpush1.msra.mxu0 0.0
    %3699 = vmatprep.subr.mxu0 0.0
    %3700 = vmatpush1.msra.mxu0 0.0
    %3701 = vmatprep.subr.mxu0 0.0
    %3702 = vmatpush1.msra.mxu0 0.0
    %3703 = vmatprep.subr.mxu0 0.0
    %3704 = vmatpush1.msra.mxu0 %v592
    %3705 = vmatprep.subr.mxu0 0.0
    %3706 = vmatpush1.msra.mxu0 %v586
    %3707 = vmatprep.subr.mxu0 0.0
    %3708 = vmatpush2.msra.mxu0 0.0
    %3709 = vmatprep.subr.mxu0 0.0
    %3710 = vmatpush2.msra.mxu0 0.0
    %3711 = vmatprep.subr.mxu0 0.0
    %3712 = vmatpush2.msra.mxu0 0.0
    %3713 = vmatprep.subr.mxu0 0.0
    %3714 = vmatpush2.msra.mxu0 0.0
    %3715 = vmatprep.subr.mxu0 0.0
    %3716 = vmatpush2.msra.mxu0 0.0
    %3717 = vmatprep.subr.mxu0 0.0
    %3718 = vmatpush2.msra.mxu0 0.0
    %3719 = vmatprep.subr.mxu0 0.0
    %3720 = vmatpush2.msra.mxu0 0.0
    %3721 = vmatprep.subr.mxu0 0.0
    %3722 = vmatpush2.msra.mxu0 0.0
    %3723 = vmatprep.subr.mxu0 0.0
    %3724 = vmatpush2.msra.mxu0 0.0
    %3725 = vmatprep.subr.mxu0 0.0
    %3726 = vmatpush2.msra.mxu0 0.0
    %3727 = vmatprep.subr.mxu0 0.0
    %3728 = vmatpush2.msra.mxu0 0.0
    %3729 = vmatprep.subr.mxu0 0.0
    %3730 = vmatpush2.msra.mxu0 0.0
    %3731 = vmatprep.subr.mxu0 0.0
    %3732 = vmatpush2.msra.mxu0 0.0
    %3733 = vmatprep.subr.mxu0 0.0
    %3734 = vmatpush2.msra.mxu0 0.0
    %3735 = vmatprep.subr.mxu0 0.0
    %3736 = vmatpush2.msra.mxu0 0.0
    %3737 = vmatprep.subr.mxu0 0.0
    %3738 = vmatpush2.msra.mxu0 0.0
    %3739 = vmatprep.mubr.f32.mxu0 0.0
    %3740 = vmatmul.mubr.f32.gmra.mxu0 %v3670
    %v3741 = vpop.f32.mrf.mxu0
    %v3742 = vadd.f32 0.0, %v3741
    %v3743 = vpop.f32.mrf.mxu0
    %3744 = vmatprep.mubr.f32.mxu0 0.0
    %3745 = vmatmul.mubr.f32.gmra.mxu0 %v3673
    %v3746 = vpop.f32.mrf.mxu0
    %v3747 = vadd.f32 0.0, %v3746
    %v3748 = vpop.f32.mrf.mxu0
    %3749 = vdwg.mxu0
    %s3750 = scalar_lea.vmem [#allocation10], 384
    %v3751 = vld [vmem:[%s3750] sm:$0xff]
    %v3752 = vld [vmem:[%s3750 + $0x8] sm:$0xff]
    %v3753 = vld [vmem:[%s3750 + $0x10] sm:$0xff]
    %v3754 = vld [vmem:[%s3750 + $0x18] sm:$0xff]
    %v3755 = vld [vmem:[%s3750 + $0x20] sm:$0xff]
    %v3756 = vld [vmem:[%s3750 + $0x28] sm:$0xff]
    %v3757 = vld [vmem:[%s3750 + $0x30] sm:$0xff]
    %v3758 = vld [vmem:[%s3750 + $0x38] sm:$0xff]
    %v3759 = vld [vmem:[%s3750 + $0x40] sm:$0xff]
    %v3760 = vld [vmem:[%s3750 + $0x48] sm:$0xff]
    %v3761 = vld [vmem:[%s3750 + $0x50] sm:$0xff]
    %v3762 = vld [vmem:[%s3750 + $0x58] sm:$0xff]
    %v3763 = vld [vmem:[%s3750 + $0x60] sm:$0xff]
    %v3764 = vld [vmem:[%s3750 + $0x68] sm:$0xff]
    %v3765 = vld [vmem:[%s3750 + $0x70] sm:$0xff]
    %v3766 = vld [vmem:[%s3750 + $0x78] sm:$0xff]
    %s3767 = scalar_lea.vmem [#allocation11], 384
    %v3768 = vld [vmem:[%s3767] sm:$0xff]
    %v3769 = vld [vmem:[%s3767 + $0x8] sm:$0xff]
    %v3770 = vld [vmem:[%s3767 + $0x10] sm:$0xff]
    %v3771 = vld [vmem:[%s3767 + $0x18] sm:$0xff]
    %v3772 = vld [vmem:[%s3767 + $0x20] sm:$0xff]
    %v3773 = vld [vmem:[%s3767 + $0x28] sm:$0xff]
    %v3774 = vld [vmem:[%s3767 + $0x30] sm:$0xff]
    %v3775 = vld [vmem:[%s3767 + $0x38] sm:$0xff]
    %v3776 = vld [vmem:[%s3767 + $0x40] sm:$0xff]
    %v3777 = vld [vmem:[%s3767 + $0x48] sm:$0xff]
    %v3778 = vld [vmem:[%s3767 + $0x50] sm:$0xff]
    %v3779 = vld [vmem:[%s3767 + $0x58] sm:$0xff]
    %v3780 = vld [vmem:[%s3767 + $0x60] sm:$0xff]
    %v3781 = vld [vmem:[%s3767 + $0x68] sm:$0xff]
    %v3782 = vld [vmem:[%s3767 + $0x70] sm:$0xff]
    %v3783 = vld [vmem:[%s3767 + $0x78] sm:$0xff]
    %3784 = vmatprep.subr.mxu0 0.0
    %3785 = vmatpush1.msra.mxu0 %v3783
    %3786 = vmatprep.subr.mxu0 0.0
    %3787 = vmatpush1.msra.mxu0 %v3782
    %3788 = vmatprep.subr.mxu0 0.0
    %3789 = vmatpush1.msra.mxu0 %v3781
    %3790 = vmatprep.subr.mxu0 0.0
    %3791 = vmatpush1.msra.mxu0 %v3780
    %3792 = vmatprep.subr.mxu0 0.0
    %3793 = vmatpush1.msra.mxu0 %v3779
    %3794 = vmatprep.subr.mxu0 0.0
    %3795 = vmatpush1.msra.mxu0 %v3778
    %3796 = vmatprep.subr.mxu0 0.0
    %3797 = vmatpush1.msra.mxu0 %v3777
    %3798 = vmatprep.subr.mxu0 0.0
    %3799 = vmatpush1.msra.mxu0 %v3776
    %3800 = vmatprep.subr.mxu0 0.0
    %3801 = vmatpush1.msra.mxu0 %v3775
    %3802 = vmatprep.subr.mxu0 0.0
    %3803 = vmatpush1.msra.mxu0 %v3774
    %3804 = vmatprep.subr.mxu0 0.0
    %3805 = vmatpush1.msra.mxu0 %v3773
    %3806 = vmatprep.subr.mxu0 0.0
    %3807 = vmatpush1.msra.mxu0 %v3772
    %3808 = vmatprep.subr.mxu0 0.0
    %3809 = vmatpush1.msra.mxu0 %v3771
    %3810 = vmatprep.subr.mxu0 0.0
    %3811 = vmatpush1.msra.mxu0 %v3770
    %3812 = vmatprep.subr.mxu0 0.0
    %3813 = vmatpush1.msra.mxu0 %v3769
    %3814 = vmatprep.subr.mxu0 0.0
    %3815 = vmatpush1.msra.mxu0 %v3768
    %3816 = vmatprep.subr.mxu0 0.0
    %3817 = vmatpush2.msra.mxu0 0.0
    %3818 = vmatprep.subr.mxu0 0.0
    %3819 = vmatpush2.msra.mxu0 0.0
    %3820 = vmatprep.subr.mxu0 0.0
    %3821 = vmatpush2.msra.mxu0 0.0
    %3822 = vmatprep.subr.mxu0 0.0
    %3823 = vmatpush2.msra.mxu0 0.0
    %3824 = vmatprep.subr.mxu0 0.0
    %3825 = vmatpush2.msra.mxu0 0.0
    %3826 = vmatprep.subr.mxu0 0.0
    %3827 = vmatpush2.msra.mxu0 0.0
    %3828 = vmatprep.subr.mxu0 0.0
    %3829 = vmatpush2.msra.mxu0 0.0
    %3830 = vmatprep.subr.mxu0 0.0
    %3831 = vmatpush2.msra.mxu0 0.0
    %3832 = vmatprep.subr.mxu0 0.0
    %3833 = vmatpush2.msra.mxu0 0.0
    %3834 = vmatprep.subr.mxu0 0.0
    %3835 = vmatpush2.msra.mxu0 0.0
    %3836 = vmatprep.subr.mxu0 0.0
    %3837 = vmatpush2.msra.mxu0 0.0
    %3838 = vmatprep.subr.mxu0 0.0
    %3839 = vmatpush2.msra.mxu0 0.0
    %3840 = vmatprep.subr.mxu0 0.0
    %3841 = vmatpush2.msra.mxu0 0.0
    %3842 = vmatprep.subr.mxu0 0.0
    %3843 = vmatpush2.msra.mxu0 0.0
    %3844 = vmatprep.subr.mxu0 0.0
    %3845 = vmatpush2.msra.mxu0 0.0
    %3846 = vmatprep.subr.mxu0 0.0
    %3847 = vmatpush2.msra.mxu0 0.0
    %3848 = vmatprep.mubr.f32.mxu0 0.0
    %3849 = vmatmul.mubr.f32.gmra.mxu0 %v3661
    %v3850 = vpop.f32.mrf.mxu0
    %v3851 = vadd.f32 0.0, %v3850
    %v3852 = vpop.f32.mrf.mxu0
    %3853 = vmatprep.mubr.f32.mxu0 0.0
    %3854 = vmatmul.mubr.f32.gmra.mxu0 %v3666
    %v3855 = vpop.f32.mrf.mxu0
    %v3856 = vadd.f32 0.0, %v3855
    %v3857 = vpop.f32.mrf.mxu0
    %3858 = vmatprep.mubr.f32.mxu0 0.0
    %3859 = vmatmul.mubr.f32.gmra.mxu0 %v3742
    %v3860 = vpop.f32.mrf.mxu0
    %v3861 = vadd.f32 0.0, %v3860
    %v3862 = vpop.f32.mrf.mxu0
    %3863 = vmatprep.mubr.f32.mxu0 0.0
    %3864 = vmatmul.mubr.f32.gmra.mxu0 %v3747
    %v3865 = vpop.f32.mrf.mxu0
    %v3866 = vadd.f32 0.0, %v3865
    %v3867 = vpop.f32.mrf.mxu0
    %3868 = vdwg.mxu0
    %3869 = vmatprep.subr.mxu0 0.0
    %3870 = vmatpush1.msra.mxu0 %v3766
    %3871 = vmatprep.subr.mxu0 0.0
    %3872 = vmatpush1.msra.mxu0 %v3765
    %3873 = vmatprep.subr.mxu0 0.0
    %3874 = vmatpush1.msra.mxu0 %v3764
    %3875 = vmatprep.subr.mxu0 0.0
    %3876 = vmatpush1.msra.mxu0 %v3763
    %3877 = vmatprep.subr.mxu0 0.0
    %3878 = vmatpush1.msra.mxu0 %v3762
    %3879 = vmatprep.subr.mxu0 0.0
    %3880 = vmatpush1.msra.mxu0 %v3761
    %3881 = vmatprep.subr.mxu0 0.0
    %3882 = vmatpush1.msra.mxu0 %v3760
    %3883 = vmatprep.subr.mxu0 0.0
    %3884 = vmatpush1.msra.mxu0 %v3759
    %3885 = vmatprep.subr.mxu0 0.0
    %3886 = vmatpush1.msra.mxu0 %v3758
    %3887 = vmatprep.subr.mxu0 0.0
    %3888 = vmatpush1.msra.mxu0 %v3757
    %3889 = vmatprep.subr.mxu0 0.0
    %3890 = vmatpush1.msra.mxu0 %v3756
    %3891 = vmatprep.subr.mxu0 0.0
    %3892 = vmatpush1.msra.mxu0 %v3755
    %3893 = vmatprep.subr.mxu0 0.0
    %3894 = vmatpush1.msra.mxu0 %v3754
    %3895 = vmatprep.subr.mxu0 0.0
    %3896 = vmatpush1.msra.mxu0 %v3753
    %3897 = vmatprep.subr.mxu0 0.0
    %3898 = vmatpush1.msra.mxu0 %v3752
    %3899 = vmatprep.subr.mxu0 0.0
    %3900 = vmatpush1.msra.mxu0 %v3751
    %3901 = vmatprep.subr.mxu0 0.0
    %3902 = vmatpush2.msra.mxu0 0.0
    %3903 = vmatprep.subr.mxu0 0.0
    %3904 = vmatpush2.msra.mxu0 0.0
    %3905 = vmatprep.subr.mxu0 0.0
    %3906 = vmatpush2.msra.mxu0 0.0
    %3907 = vmatprep.subr.mxu0 0.0
    %3908 = vmatpush2.msra.mxu0 0.0
    %3909 = vmatprep.subr.mxu0 0.0
    %3910 = vmatpush2.msra.mxu0 0.0
    %3911 = vmatprep.subr.mxu0 0.0
    %3912 = vmatpush2.msra.mxu0 0.0
    %3913 = vmatprep.subr.mxu0 0.0
    %3914 = vmatpush2.msra.mxu0 0.0
    %3915 = vmatprep.subr.mxu0 0.0
    %3916 = vmatpush2.msra.mxu0 0.0
    %3917 = vmatprep.subr.mxu0 0.0
    %3918 = vmatpush2.msra.mxu0 0.0
    %3919 = vmatprep.subr.mxu0 0.0
    %3920 = vmatpush2.msra.mxu0 0.0
    %3921 = vmatprep.subr.mxu0 0.0
    %3922 = vmatpush2.msra.mxu0 0.0
    %3923 = vmatprep.subr.mxu0 0.0
    %3924 = vmatpush2.msra.mxu0 0.0
    %3925 = vmatprep.subr.mxu0 0.0
    %3926 = vmatpush2.msra.mxu0 0.0
    %3927 = vmatprep.subr.mxu0 0.0
    %3928 = vmatpush2.msra.mxu0 0.0
    %3929 = vmatprep.subr.mxu0 0.0
    %3930 = vmatpush2.msra.mxu0 0.0
    %3931 = vmatprep.subr.mxu0 0.0
    %3932 = vmatpush2.msra.mxu0 0.0
    %3933 = vmatprep.mubr.f32.mxu0 0.0
    %3934 = vmatmul.mubr.f32.gmra.mxu0 %v3499
    %v3935 = vpop.f32.mrf.mxu0
    %v3936 = vadd.f32 %v3851, %v3935
    %v3937 = vpop.f32.mrf.mxu0
    %3938 = vmatprep.mubr.f32.mxu0 0.0
    %3939 = vmatmul.mubr.f32.gmra.mxu0 %v3504
    %v3940 = vpop.f32.mrf.mxu0
    %v3941 = vadd.f32 %v3856, %v3940
    %v3942 = vpop.f32.mrf.mxu0
    %3943 = vmatprep.mubr.f32.mxu0 0.0
    %3944 = vmatmul.mubr.f32.gmra.mxu0 %v3580
    %v3945 = vpop.f32.mrf.mxu0
    %v3946 = vadd.f32 %v3861, %v3945
    %v3947 = vpop.f32.mrf.mxu0
    %3948 = vmatprep.mubr.f32.mxu0 0.0
    %3949 = vmatmul.mubr.f32.gmra.mxu0 %v3585
    %v3950 = vpop.f32.mrf.mxu0
    %v3951 = vadd.f32 %v3866, %v3950
    %v3952 = vpop.f32.mrf.mxu0
    %3953 = vdwg.mxu0
    %s3954 = scalar_lea.vmem %s6, 3
    %v3955 = vld [vmem:[%s3954] sm:$0x1]
    %v3957 = vlaneseq
    %v3958 = vshrl.u32 %v3957, 7
    %v3959 = vsub.s32 0, %v3958
    %v3960 = vrot.slane %v3955, %v3959
    %v3962 = vadd.f32 %v3936, %v3960
    %v3963 = vadd.f32 %v3941, %v3960
    %v3964 = vadd.f32 %v3946, %v3960
    %v3965 = vadd.f32 %v3951, %v3960
    %v3966 = vmax.f32 %v3962, 0.0
    %v3967 = vmax.f32 %v3963, 0.0
    %v3968 = vmax.f32 %v3964, 0.0
    %v3969 = vmax.f32 %v3965, 0.0
    %s3970 = scalar_lea.vmem %s7, 3
    %v3971 = vld [vmem:[%s3970] sm:$0x1]
    %v3973 = vlaneseq
    %v3974 = vshrl.u32 %v3973, 7
    %v3975 = vsub.s32 0, %v3974
    %v3976 = vrot.slane %v3971, %v3975
    %v3978 = vmul.f32 %v3966, %v3976
    %v3979 = vmul.f32 %v3967, %v3976
    %v3980 = vmul.f32 %v3968, %v3976
    %v3981 = vmul.f32 %v3969, %v3976
    %3982 = vadd.xlane.f32.xlu0 %v3978
    %v3983 = vpop.xlane.xlu0 %3982
    %3984 = vadd.xlane.f32.xlu0 %v3979
    %v3985 = vpop.xlane.xlu0 %3984
    %3986 = vadd.xlane.f32.xlu0 %v3980
    %v3987 = vpop.xlane.xlu0 %3986
    %3988 = vadd.xlane.f32.xlu0 %v3981
    %v3989 = vpop.xlane.xlu0 %3988
    %v3990 = vmax.f32 %v3098, %v3983
    %v3991 = vmax.f32 %v3099, %v3985
    %v3992 = vmax.f32 %v3100, %v3987
    %v3993 = vmax.f32 %v3101, %v3989
    %v3994 = vsub.f32 %v3098, %v3990
    %v3995 = vsub.f32 %v3099, %v3991
    %v3996 = vsub.f32 %v3100, %v3992
    %v3997 = vsub.f32 %v3101, %v3993
    %v3998 = vmul.f32 %v3994, 1.442695
    %v3999 = vpow.pop %v3998
    %v4000 = vmul.f32 %v3995, 1.442695
    %v4001 = vpow.pop %v4000
    %v4002 = vmul.f32 %v3996, 1.442695
    %v4003 = vpow.pop %v4002
    %v4004 = vmul.f32 %v3997, 1.442695
    %v4005 = vpow.pop %v4004
    %v4006 = vsub.f32 %v3983, %v3990
    %v4007 = vsub.f32 %v3985, %v3991
    %v4008 = vsub.f32 %v3987, %v3992
    %v4009 = vsub.f32 %v3989, %v3993
    %v4010 = vmul.f32 %v4006, 1.442695
    %v4011 = vpow.pop %v4010
    %v4012 = vmul.f32 %v4007, 1.442695
    %v4013 = vpow.pop %v4012
    %v4014 = vmul.f32 %v4008, 1.442695
    %v4015 = vpow.pop %v4014
    %v4016 = vmul.f32 %v4009, 1.442695
    %v4017 = vpow.pop %v4016
    %v4018 = vmul.f32 %v3130, %v3999
    %v4019 = vmul.f32 %v3131, %v4001
    %v4020 = vmul.f32 %v3132, %v4003
    %v4021 = vmul.f32 %v3133, %v4005
    %v4022 = vadd.f32 %v4018, %v4011
    %v4023 = vadd.f32 %v4019, %v4013
    %v4024 = vadd.f32 %v4020, %v4015
    %v4025 = vadd.f32 %v4021, %v4017
    %v4026 = vmul.f32 %v3142, %v3999
    %v4027 = vmul.f32 %v3143, %v4001
    %v4028 = vmul.f32 %v3144, %v4003
    %v4029 = vmul.f32 %v3145, %v4005
    %v4030 = vmul.f32 %v4011, %v3966
    %v4031 = vmul.f32 %v4013, %v3967
    %v4032 = vmul.f32 %v4015, %v3968
    %v4033 = vmul.f32 %v4017, %v3969
    %v4034 = vadd.f32 %v4026, %v4030
    %v4035 = vadd.f32 %v4027, %v4031
    %v4036 = vadd.f32 %v4028, %v4032
    %v4037 = vadd.f32 %v4029, %v4033
    %v4039 = vsel %vm695, %v3219, 0
    %v4042 = vsel %vm695, %v3224, 0
    %4044 = vmatprep.subr.mxu0 0.0
    %4045 = vmatpush1.msra.mxu0 0.0
    %4046 = vmatprep.subr.mxu0 0.0
    %4047 = vmatpush1.msra.mxu0 0.0
    %4048 = vmatprep.subr.mxu0 0.0
    %4049 = vmatpush1.msra.mxu0 0.0
    %4050 = vmatprep.subr.mxu0 0.0
    %4051 = vmatpush1.msra.mxu0 0.0
    %4052 = vmatprep.subr.mxu0 0.0
    %4053 = vmatpush1.msra.mxu0 0.0
    %4054 = vmatprep.subr.mxu0 0.0
    %4055 = vmatpush1.msra.mxu0 0.0
    %4056 = vmatprep.subr.mxu0 0.0
    %4057 = vmatpush1.msra.mxu0 0.0
    %4058 = vmatprep.subr.mxu0 0.0
    %4059 = vmatpush1.msra.mxu0 0.0
    %4060 = vmatprep.subr.mxu0 0.0
    %4061 = vmatpush1.msra.mxu0 0.0
    %4062 = vmatprep.subr.mxu0 0.0
    %4063 = vmatpush1.msra.mxu0 0.0
    %4064 = vmatprep.subr.mxu0 0.0
    %4065 = vmatpush1.msra.mxu0 0.0
    %4066 = vmatprep.subr.mxu0 0.0
    %4067 = vmatpush1.msra.mxu0 0.0
    %4068 = vmatprep.subr.mxu0 0.0
    %4069 = vmatpush1.msra.mxu0 0.0
    %4070 = vmatprep.subr.mxu0 0.0
    %4071 = vmatpush1.msra.mxu0 0.0
    %4072 = vmatprep.subr.mxu0 0.0
    %4073 = vmatpush1.msra.mxu0 %v121
    %4074 = vmatprep.subr.mxu0 0.0
    %4075 = vmatpush1.msra.mxu0 %v120
    %4076 = vmatprep.subr.mxu0 0.0
    %4077 = vmatpush2.msra.mxu0 0.0
    %4078 = vmatprep.subr.mxu0 0.0
    %4079 = vmatpush2.msra.mxu0 0.0
    %4080 = vmatprep.subr.mxu0 0.0
    %4081 = vmatpush2.msra.mxu0 0.0
    %4082 = vmatprep.subr.mxu0 0.0
    %4083 = vmatpush2.msra.mxu0 0.0
    %4084 = vmatprep.subr.mxu0 0.0
    %4085 = vmatpush2.msra.mxu0 0.0
    %4086 = vmatprep.subr.mxu0 0.0
    %4087 = vmatpush2.msra.mxu0 0.0
    %4088 = vmatprep.subr.mxu0 0.0
    %4089 = vmatpush2.msra.mxu0 0.0
    %4090 = vmatprep.subr.mxu0 0.0
    %4091 = vmatpush2.msra.mxu0 0.0
    %4092 = vmatprep.subr.mxu0 0.0
    %4093 = vmatpush2.msra.mxu0 0.0
    %4094 = vmatprep.subr.mxu0 0.0
    %4095 = vmatpush2.msra.mxu0 0.0
    %4096 = vmatprep.subr.mxu0 0.0
    %4097 = vmatpush2.msra.mxu0 0.0
    %4098 = vmatprep.subr.mxu0 0.0
    %4099 = vmatpush2.msra.mxu0 0.0
    %4100 = vmatprep.subr.mxu0 0.0
    %4101 = vmatpush2.msra.mxu0 0.0
    %4102 = vmatprep.subr.mxu0 0.0
    %4103 = vmatpush2.msra.mxu0 0.0
    %4104 = vmatprep.subr.mxu0 0.0
    %4105 = vmatpush2.msra.mxu0 0.0
    %4106 = vmatprep.subr.mxu0 0.0
    %4107 = vmatpush2.msra.mxu0 0.0
    %4108 = vmatprep.mubr.f32.mxu0 0.0
    %4109 = vmatmul.mubr.f32.gmra.mxu0 %v4039
    %v4110 = vpop.f32.mrf.mxu0
    %v4111 = vadd.f32 0.0, %v4110
    %v4112 = vpop.f32.mrf.mxu0
    %4113 = vmatprep.mubr.f32.mxu0 0.0
    %4114 = vmatmul.mubr.f32.gmra.mxu0 %v4042
    %v4115 = vpop.f32.mrf.mxu0
    %v4116 = vadd.f32 0.0, %v4115
    %v4117 = vpop.f32.mrf.mxu0
    %4118 = vdwg.mxu0
    %v4120 = vsel %vm695, %v3300, 0
    %v4123 = vsel %vm695, %v3305, 0
    %4125 = vmatprep.subr.mxu0 0.0
    %4126 = vmatpush1.msra.mxu0 0.0
    %4127 = vmatprep.subr.mxu0 0.0
    %4128 = vmatpush1.msra.mxu0 0.0
    %4129 = vmatprep.subr.mxu0 0.0
    %4130 = vmatpush1.msra.mxu0 0.0
    %4131 = vmatprep.subr.mxu0 0.0
    %4132 = vmatpush1.msra.mxu0 0.0
    %4133 = vmatprep.subr.mxu0 0.0
    %4134 = vmatpush1.msra.mxu0 0.0
    %4135 = vmatprep.subr.mxu0 0.0
    %4136 = vmatpush1.msra.mxu0 0.0
    %4137 = vmatprep.subr.mxu0 0.0
    %4138 = vmatpush1.msra.mxu0 0.0
    %4139 = vmatprep.subr.mxu0 0.0
    %4140 = vmatpush1.msra.mxu0 0.0
    %4141 = vmatprep.subr.mxu0 0.0
    %4142 = vmatpush1.msra.mxu0 0.0
    %4143 = vmatprep.subr.mxu0 0.0
    %4144 = vmatpush1.msra.mxu0 0.0
    %4145 = vmatprep.subr.mxu0 0.0
    %4146 = vmatpush1.msra.mxu0 0.0
    %4147 = vmatprep.subr.mxu0 0.0
    %4148 = vmatpush1.msra.mxu0 0.0
    %4149 = vmatprep.subr.mxu0 0.0
    %4150 = vmatpush1.msra.mxu0 0.0
    %4151 = vmatprep.subr.mxu0 0.0
    %4152 = vmatpush1.msra.mxu0 0.0
    %4153 = vmatprep.subr.mxu0 0.0
    %4154 = vmatpush1.msra.mxu0 %v123
    %4155 = vmatprep.subr.mxu0 0.0
    %4156 = vmatpush1.msra.mxu0 %v122
    %4157 = vmatprep.subr.mxu0 0.0
    %4158 = vmatpush2.msra.mxu0 0.0
    %4159 = vmatprep.subr.mxu0 0.0
    %4160 = vmatpush2.msra.mxu0 0.0
    %4161 = vmatprep.subr.mxu0 0.0
    %4162 = vmatpush2.msra.mxu0 0.0
    %4163 = vmatprep.subr.mxu0 0.0
    %4164 = vmatpush2.msra.mxu0 0.0
    %4165 = vmatprep.subr.mxu0 0.0
    %4166 = vmatpush2.msra.mxu0 0.0
    %4167 = vmatprep.subr.mxu0 0.0
    %4168 = vmatpush2.msra.mxu0 0.0
    %4169 = vmatprep.subr.mxu0 0.0
    %4170 = vmatpush2.msra.mxu0 0.0
    %4171 = vmatprep.subr.mxu0 0.0
    %4172 = vmatpush2.msra.mxu0 0.0
    %4173 = vmatprep.subr.mxu0 0.0
    %4174 = vmatpush2.msra.mxu0 0.0
    %4175 = vmatprep.subr.mxu0 0.0
    %4176 = vmatpush2.msra.mxu0 0.0
    %4177 = vmatprep.subr.mxu0 0.0
    %4178 = vmatpush2.msra.mxu0 0.0
    %4179 = vmatprep.subr.mxu0 0.0
    %4180 = vmatpush2.msra.mxu0 0.0
    %4181 = vmatprep.subr.mxu0 0.0
    %4182 = vmatpush2.msra.mxu0 0.0
    %4183 = vmatprep.subr.mxu0 0.0
    %4184 = vmatpush2.msra.mxu0 0.0
    %4185 = vmatprep.subr.mxu0 0.0
    %4186 = vmatpush2.msra.mxu0 0.0
    %4187 = vmatprep.subr.mxu0 0.0
    %4188 = vmatpush2.msra.mxu0 0.0
    %4189 = vmatprep.mubr.f32.mxu0 0.0
    %4190 = vmatmul.mubr.f32.gmra.mxu0 %v4120
    %v4191 = vpop.f32.mrf.mxu0
    %v4192 = vadd.f32 0.0, %v4191
    %v4193 = vpop.f32.mrf.mxu0
    %4194 = vmatprep.mubr.f32.mxu0 0.0
    %4195 = vmatmul.mubr.f32.gmra.mxu0 %v4123
    %v4196 = vpop.f32.mrf.mxu0
    %v4197 = vadd.f32 0.0, %v4196
    %v4198 = vpop.f32.mrf.mxu0
    %4199 = vdwg.mxu0
    %v4200 = vadd.f32 %v4111, 1.0
    %v4201 = vadd.f32 %v4116, 1.0
    %v4202 = vadd.f32 %v4192, 1.0
    %v4203 = vadd.f32 %v4197, 1.0
    %v4204 = vsel %vm689, %v4200, %v4111
    %v4205 = vsel %vm690, %v4201, %v4116
    %v4206 = vsel %vm689, %v4202, %v4192
    %v4207 = vsel %vm690, %v4203, %v4197
    %v4208 = vsel %vm695, %v4204, 0.0
    %4209 = vadd.xlane.f32.xlu0 %v4208
    %v4210 = vpop.xlane.xlu0 %4209
    %v4211 = vsel %vm695, %v4205, 0.0
    %4212 = vadd.xlane.f32.xlu0 %v4211
    %v4213 = vpop.xlane.xlu0 %4212
    %v4214 = vsel %vm695, %v4206, 0.0
    %4215 = vadd.xlane.f32.xlu0 %v4214
    %v4216 = vpop.xlane.xlu0 %4215
    %v4217 = vsel %vm695, %v4207, 0.0
    %4218 = vadd.xlane.f32.xlu0 %v4217
    %v4219 = vpop.xlane.xlu0 %4218
    %v4220 = vmax.f32 %v4210, 1e-12
    %v4221 = vmax.f32 %v4213, 1e-12
    %v4222 = vmax.f32 %v4216, 1e-12
    %v4223 = vmax.f32 %v4219, 1e-12
    %v4224 = vadd.f32 %v4208, %v4211
    %v4225 = vrot.slane %v4224, 4
    %v4226 = vadd.f32 %v4224, %v4225
    %v4227 = vrot.slane %v4226, 2
    %v4228 = vadd.f32 %v4226, %v4227
    %v4229 = vrot.slane %v4228, 1
    %v4230 = vadd.f32 %v4228, %v4229
    %v4231 = vadd.f32 %v4214, %v4217
    %v4232 = vrot.slane %v4231, 4
    %v4233 = vadd.f32 %v4231, %v4232
    %v4234 = vrot.slane %v4233, 2
    %v4235 = vadd.f32 %v4233, %v4234
    %v4236 = vrot.slane %v4235, 1
    %v4237 = vadd.f32 %v4235, %v4236
    %v4238 = vmax.f32 %v4230, 1e-12
    %v4239 = vmax.f32 %v4237, 1e-12
    %v4240 = vrsqrt.pop %v4220
    %v4241 = vrsqrt.pop %v4221
    %v4242 = vrsqrt.pop %v4222
    %v4243 = vrsqrt.pop %v4223
    %v4244 = vrsqrt.pop %v4238
    %v4245 = vrsqrt.pop %v4239
    %v4246 = vmul.f32 %v4240, %v4244
    %v4247 = vmul.f32 %v4241, %v4244
    %v4248 = vmul.f32 %v4242, %v4245
    %v4249 = vmul.f32 %v4243, %v4245
    %v4250 = vmul.f32 %v4204, %v4246
    %v4251 = vmul.f32 %v4205, %v4247
    %v4252 = vmul.f32 %v4206, %v4248
    %v4253 = vmul.f32 %v4207, %v4249
    %4254 = vxpose.xlu0.b32.start [1/16] %v4250, 128
    %4255 = vxpose.xlu0.b32.cont [2/16] %v4251, 128
    %4256 = vxpose.xlu0.b32.cont [3/16] 0.0, 128
    %4257 = vxpose.xlu0.b32.cont [4/16] 0.0, 128
    %4258 = vxpose.xlu0.b32.cont [5/16] 0.0, 128
    %4259 = vxpose.xlu0.b32.cont [6/16] 0.0, 128
    %4260 = vxpose.xlu0.b32.cont [7/16] 0.0, 128
    %4261 = vxpose.xlu0.b32.cont [8/16] 0.0, 128
    %4262 = vxpose.xlu0.b32.cont [9/16] 0.0, 128
    %4263 = vxpose.xlu0.b32.cont [10/16] 0.0, 128
    %4264 = vxpose.xlu0.b32.cont [11/16] 0.0, 128
    %4265 = vxpose.xlu0.b32.cont [12/16] 0.0, 128
    %4266 = vxpose.xlu0.b32.cont [13/16] 0.0, 128
    %4267 = vxpose.xlu0.b32.cont [14/16] 0.0, 128
    %4268 = vxpose.xlu0.b32.cont [15/16] 0.0, 128
    %4269 = vxpose.xlu0.b32.end [16/16] 0.0, 128
    %v4270 = vpop.trf.xlu0
    %v4271 = vpop.trf.xlu0
    %v4272 = vpop.trf.xlu0
    %v4273 = vpop.trf.xlu0
    %v4274 = vpop.trf.xlu0
    %v4275 = vpop.trf.xlu0
    %v4276 = vpop.trf.xlu0
    %v4277 = vpop.trf.xlu0
    %v4278 = vpop.trf.xlu0
    %v4279 = vpop.trf.xlu0
    %v4280 = vpop.trf.xlu0
    %v4281 = vpop.trf.xlu0
    %v4282 = vpop.trf.xlu0
    %v4283 = vpop.trf.xlu0
    %v4284 = vpop.trf.xlu0
    %v4285 = vpop.trf.xlu0
    %4286 = vxpose.xlu0.b32.start [1/16] %v4252, 128
    %4287 = vxpose.xlu0.b32.cont [2/16] %v4253, 128
    %4288 = vxpose.xlu0.b32.cont [3/16] 0.0, 128
    %4289 = vxpose.xlu0.b32.cont [4/16] 0.0, 128
    %4290 = vxpose.xlu0.b32.cont [5/16] 0.0, 128
    %4291 = vxpose.xlu0.b32.cont [6/16] 0.0, 128
    %4292 = vxpose.xlu0.b32.cont [7/16] 0.0, 128
    %4293 = vxpose.xlu0.b32.cont [8/16] 0.0, 128
    %4294 = vxpose.xlu0.b32.cont [9/16] 0.0, 128
    %4295 = vxpose.xlu0.b32.cont [10/16] 0.0, 128
    %4296 = vxpose.xlu0.b32.cont [11/16] 0.0, 128
    %4297 = vxpose.xlu0.b32.cont [12/16] 0.0, 128
    %4298 = vxpose.xlu0.b32.cont [13/16] 0.0, 128
    %4299 = vxpose.xlu0.b32.cont [14/16] 0.0, 128
    %4300 = vxpose.xlu0.b32.cont [15/16] 0.0, 128
    %4301 = vxpose.xlu0.b32.end [16/16] 0.0, 128
    %v4302 = vpop.trf.xlu0
    %v4303 = vpop.trf.xlu0
    %v4304 = vpop.trf.xlu0
    %v4305 = vpop.trf.xlu0
    %v4306 = vpop.trf.xlu0
    %v4307 = vpop.trf.xlu0
    %v4308 = vpop.trf.xlu0
    %v4309 = vpop.trf.xlu0
    %v4310 = vpop.trf.xlu0
    %v4311 = vpop.trf.xlu0
    %v4312 = vpop.trf.xlu0
    %v4313 = vpop.trf.xlu0
    %v4314 = vpop.trf.xlu0
    %v4315 = vpop.trf.xlu0
    %v4316 = vpop.trf.xlu0
    %v4317 = vpop.trf.xlu0
    %v4319 = vsel %vm695, %v4250, 0
    %v4322 = vsel %vm695, %v4251, 0
    %4324 = vmatprep.subr.mxu0 0.0
    %4325 = vmatpush1.msra.mxu0 0.0
    %4326 = vmatprep.subr.mxu0 0.0
    %4327 = vmatpush1.msra.mxu0 0.0
    %4328 = vmatprep.subr.mxu0 0.0
    %4329 = vmatpush1.msra.mxu0 0.0
    %4330 = vmatprep.subr.mxu0 0.0
    %4331 = vmatpush1.msra.mxu0 0.0
    %4332 = vmatprep.subr.mxu0 0.0
    %4333 = vmatpush1.msra.mxu0 0.0
    %4334 = vmatprep.subr.mxu0 0.0
    %4335 = vmatpush1.msra.mxu0 0.0
    %4336 = vmatprep.subr.mxu0 0.0
    %4337 = vmatpush1.msra.mxu0 0.0
    %4338 = vmatprep.subr.mxu0 0.0
    %4339 = vmatpush1.msra.mxu0 0.0
    %4340 = vmatprep.subr.mxu0 0.0
    %4341 = vmatpush1.msra.mxu0 0.0
    %4342 = vmatprep.subr.mxu0 0.0
    %4343 = vmatpush1.msra.mxu0 0.0
    %4344 = vmatprep.subr.mxu0 0.0
    %4345 = vmatpush1.msra.mxu0 0.0
    %4346 = vmatprep.subr.mxu0 0.0
    %4347 = vmatpush1.msra.mxu0 0.0
    %4348 = vmatprep.subr.mxu0 0.0
    %4349 = vmatpush1.msra.mxu0 0.0
    %4350 = vmatprep.subr.mxu0 0.0
    %4351 = vmatpush1.msra.mxu0 0.0
    %4352 = vmatprep.subr.mxu0 0.0
    %4353 = vmatpush1.msra.mxu0 %v667
    %4354 = vmatprep.subr.mxu0 0.0
    %4355 = vmatpush1.msra.mxu0 %v661
    %4356 = vmatprep.subr.mxu0 0.0
    %4357 = vmatpush2.msra.mxu0 0.0
    %4358 = vmatprep.subr.mxu0 0.0
    %4359 = vmatpush2.msra.mxu0 0.0
    %4360 = vmatprep.subr.mxu0 0.0
    %4361 = vmatpush2.msra.mxu0 0.0
    %4362 = vmatprep.subr.mxu0 0.0
    %4363 = vmatpush2.msra.mxu0 0.0
    %4364 = vmatprep.subr.mxu0 0.0
    %4365 = vmatpush2.msra.mxu0 0.0
    %4366 = vmatprep.subr.mxu0 0.0
    %4367 = vmatpush2.msra.mxu0 0.0
    %4368 = vmatprep.subr.mxu0 0.0
    %4369 = vmatpush2.msra.mxu0 0.0
    %4370 = vmatprep.subr.mxu0 0.0
    %4371 = vmatpush2.msra.mxu0 0.0
    %4372 = vmatprep.subr.mxu0 0.0
    %4373 = vmatpush2.msra.mxu0 0.0
    %4374 = vmatprep.subr.mxu0 0.0
    %4375 = vmatpush2.msra.mxu0 0.0
    %4376 = vmatprep.subr.mxu0 0.0
    %4377 = vmatpush2.msra.mxu0 0.0
    %4378 = vmatprep.subr.mxu0 0.0
    %4379 = vmatpush2.msra.mxu0 0.0
    %4380 = vmatprep.subr.mxu0 0.0
    %4381 = vmatpush2.msra.mxu0 0.0
    %4382 = vmatprep.subr.mxu0 0.0
    %4383 = vmatpush2.msra.mxu0 0.0
    %4384 = vmatprep.subr.mxu0 0.0
    %4385 = vmatpush2.msra.mxu0 0.0
    %4386 = vmatprep.subr.mxu0 0.0
    %4387 = vmatpush2.msra.mxu0 0.0
    %4388 = vmatprep.mubr.f32.mxu0 0.0
    %4389 = vmatmul.mubr.f32.gmra.mxu0 %v4319
    %v4390 = vpop.f32.mrf.mxu0
    %v4391 = vadd.f32 0.0, %v4390
    %v4392 = vpop.f32.mrf.mxu0
    %4393 = vmatprep.mubr.f32.mxu0 0.0
    %4394 = vmatmul.mubr.f32.gmra.mxu0 %v4322
    %v4395 = vpop.f32.mrf.mxu0
    %v4396 = vadd.f32 0.0, %v4395
    %v4397 = vpop.f32.mrf.mxu0
    %4398 = vdwg.mxu0
    %v4400 = vsel %vm695, %v4252, 0
    %v4403 = vsel %vm695, %v4253, 0
    %4405 = vmatprep.subr.mxu0 0.0
    %4406 = vmatpush1.msra.mxu0 0.0
    %4407 = vmatprep.subr.mxu0 0.0
    %4408 = vmatpush1.msra.mxu0 0.0
    %4409 = vmatprep.subr.mxu0 0.0
    %4410 = vmatpush1.msra.mxu0 0.0
    %4411 = vmatprep.subr.mxu0 0.0
    %4412 = vmatpush1.msra.mxu0 0.0
    %4413 = vmatprep.subr.mxu0 0.0
    %4414 = vmatpush1.msra.mxu0 0.0
    %4415 = vmatprep.subr.mxu0 0.0
    %4416 = vmatpush1.msra.mxu0 0.0
    %4417 = vmatprep.subr.mxu0 0.0
    %4418 = vmatpush1.msra.mxu0 0.0
    %4419 = vmatprep.subr.mxu0 0.0
    %4420 = vmatpush1.msra.mxu0 0.0
    %4421 = vmatprep.subr.mxu0 0.0
    %4422 = vmatpush1.msra.mxu0 0.0
    %4423 = vmatprep.subr.mxu0 0.0
    %4424 = vmatpush1.msra.mxu0 0.0
    %4425 = vmatprep.subr.mxu0 0.0
    %4426 = vmatpush1.msra.mxu0 0.0
    %4427 = vmatprep.subr.mxu0 0.0
    %4428 = vmatpush1.msra.mxu0 0.0
    %4429 = vmatprep.subr.mxu0 0.0
    %4430 = vmatpush1.msra.mxu0 0.0
    %4431 = vmatprep.subr.mxu0 0.0
    %4432 = vmatpush1.msra.mxu0 0.0
    %4433 = vmatprep.subr.mxu0 0.0
    %4434 = vmatpush1.msra.mxu0 %v679
    %4435 = vmatprep.subr.mxu0 0.0
    %4436 = vmatpush1.msra.mxu0 %v673
    %4437 = vmatprep.subr.mxu0 0.0
    %4438 = vmatpush2.msra.mxu0 0.0
    %4439 = vmatprep.subr.mxu0 0.0
    %4440 = vmatpush2.msra.mxu0 0.0
    %4441 = vmatprep.subr.mxu0 0.0
    %4442 = vmatpush2.msra.mxu0 0.0
    %4443 = vmatprep.subr.mxu0 0.0
    %4444 = vmatpush2.msra.mxu0 0.0
    %4445 = vmatprep.subr.mxu0 0.0
    %4446 = vmatpush2.msra.mxu0 0.0
    %4447 = vmatprep.subr.mxu0 0.0
    %4448 = vmatpush2.msra.mxu0 0.0
    %4449 = vmatprep.subr.mxu0 0.0
    %4450 = vmatpush2.msra.mxu0 0.0
    %4451 = vmatprep.subr.mxu0 0.0
    %4452 = vmatpush2.msra.mxu0 0.0
    %4453 = vmatprep.subr.mxu0 0.0
    %4454 = vmatpush2.msra.mxu0 0.0
    %4455 = vmatprep.subr.mxu0 0.0
    %4456 = vmatpush2.msra.mxu0 0.0
    %4457 = vmatprep.subr.mxu0 0.0
    %4458 = vmatpush2.msra.mxu0 0.0
    %4459 = vmatprep.subr.mxu0 0.0
    %4460 = vmatpush2.msra.mxu0 0.0
    %4461 = vmatprep.subr.mxu0 0.0
    %4462 = vmatpush2.msra.mxu0 0.0
    %4463 = vmatprep.subr.mxu0 0.0
    %4464 = vmatpush2.msra.mxu0 0.0
    %4465 = vmatprep.subr.mxu0 0.0
    %4466 = vmatpush2.msra.mxu0 0.0
    %4467 = vmatprep.subr.mxu0 0.0
    %4468 = vmatpush2.msra.mxu0 0.0
    %4469 = vmatprep.mubr.f32.mxu0 0.0
    %4470 = vmatmul.mubr.f32.gmra.mxu0 %v4400
    %v4471 = vpop.f32.mrf.mxu0
    %v4472 = vadd.f32 0.0, %v4471
    %v4473 = vpop.f32.mrf.mxu0
    %4474 = vmatprep.mubr.f32.mxu0 0.0
    %4475 = vmatmul.mubr.f32.gmra.mxu0 %v4403
    %v4476 = vpop.f32.mrf.mxu0
    %v4477 = vadd.f32 0.0, %v4476
    %v4478 = vpop.f32.mrf.mxu0
    %4479 = vdwg.mxu0
    %v4481 = vsel %vm695, %v4270, 0
    %v4484 = vsel %vm695, %v4271, 0
    %4486 = vmatprep.subr.mxu0 0.0
    %4487 = vmatpush1.msra.mxu0 0.0
    %4488 = vmatprep.subr.mxu0 0.0
    %4489 = vmatpush1.msra.mxu0 0.0
    %4490 = vmatprep.subr.mxu0 0.0
    %4491 = vmatpush1.msra.mxu0 0.0
    %4492 = vmatprep.subr.mxu0 0.0
    %4493 = vmatpush1.msra.mxu0 0.0
    %4494 = vmatprep.subr.mxu0 0.0
    %4495 = vmatpush1.msra.mxu0 0.0
    %4496 = vmatprep.subr.mxu0 0.0
    %4497 = vmatpush1.msra.mxu0 0.0
    %4498 = vmatprep.subr.mxu0 0.0
    %4499 = vmatpush1.msra.mxu0 0.0
    %4500 = vmatprep.subr.mxu0 0.0
    %4501 = vmatpush1.msra.mxu0 0.0
    %4502 = vmatprep.subr.mxu0 0.0
    %4503 = vmatpush1.msra.mxu0 0.0
    %4504 = vmatprep.subr.mxu0 0.0
    %4505 = vmatpush1.msra.mxu0 0.0
    %4506 = vmatprep.subr.mxu0 0.0
    %4507 = vmatpush1.msra.mxu0 0.0
    %4508 = vmatprep.subr.mxu0 0.0
    %4509 = vmatpush1.msra.mxu0 0.0
    %4510 = vmatprep.subr.mxu0 0.0
    %4511 = vmatpush1.msra.mxu0 0.0
    %4512 = vmatprep.subr.mxu0 0.0
    %4513 = vmatpush1.msra.mxu0 0.0
    %4514 = vmatprep.subr.mxu0 0.0
    %4515 = vmatpush1.msra.mxu0 %v669
    %4516 = vmatprep.subr.mxu0 0.0
    %4517 = vmatpush1.msra.mxu0 %v663
    %4518 = vmatprep.subr.mxu0 0.0
    %4519 = vmatpush2.msra.mxu0 0.0
    %4520 = vmatprep.subr.mxu0 0.0
    %4521 = vmatpush2.msra.mxu0 0.0
    %4522 = vmatprep.subr.mxu0 0.0
    %4523 = vmatpush2.msra.mxu0 0.0
    %4524 = vmatprep.subr.mxu0 0.0
    %4525 = vmatpush2.msra.mxu0 0.0
    %4526 = vmatprep.subr.mxu0 0.0
    %4527 = vmatpush2.msra.mxu0 0.0
    %4528 = vmatprep.subr.mxu0 0.0
    %4529 = vmatpush2.msra.mxu0 0.0
    %4530 = vmatprep.subr.mxu0 0.0
    %4531 = vmatpush2.msra.mxu0 0.0
    %4532 = vmatprep.subr.mxu0 0.0
    %4533 = vmatpush2.msra.mxu0 0.0
    %4534 = vmatprep.subr.mxu0 0.0
    %4535 = vmatpush2.msra.mxu0 0.0
    %4536 = vmatprep.subr.mxu0 0.0
    %4537 = vmatpush2.msra.mxu0 0.0
    %4538 = vmatprep.subr.mxu0 0.0
    %4539 = vmatpush2.msra.mxu0 0.0
    %4540 = vmatprep.subr.mxu0 0.0
    %4541 = vmatpush2.msra.mxu0 0.0
    %4542 = vmatprep.subr.mxu0 0.0
    %4543 = vmatpush2.msra.mxu0 0.0
    %4544 = vmatprep.subr.mxu0 0.0
    %4545 = vmatpush2.msra.mxu0 0.0
    %4546 = vmatprep.subr.mxu0 0.0
    %4547 = vmatpush2.msra.mxu0 0.0
    %4548 = vmatprep.subr.mxu0 0.0
    %4549 = vmatpush2.msra.mxu0 0.0
    %4550 = vmatprep.mubr.f32.mxu0 0.0
    %4551 = vmatmul.mubr.f32.gmra.mxu0 %v4481
    %v4552 = vpop.f32.mrf.mxu0
    %v4553 = vadd.f32 0.0, %v4552
    %v4554 = vpop.f32.mrf.mxu0
    %4555 = vmatprep.mubr.f32.mxu0 0.0
    %4556 = vmatmul.mubr.f32.gmra.mxu0 %v4484
    %v4557 = vpop.f32.mrf.mxu0
    %v4558 = vadd.f32 0.0, %v4557
    %v4559 = vpop.f32.mrf.mxu0
    %4560 = vdwg.mxu0
    %v4562 = vsel %vm695, %v4302, 0
    %v4565 = vsel %vm695, %v4303, 0
    %4567 = vmatprep.subr.mxu0 0.0
    %4568 = vmatpush1.msra.mxu0 0.0
    %4569 = vmatprep.subr.mxu0 0.0
    %4570 = vmatpush1.msra.mxu0 0.0
    %4571 = vmatprep.subr.mxu0 0.0
    %4572 = vmatpush1.msra.mxu0 0.0
    %4573 = vmatprep.subr.mxu0 0.0
    %4574 = vmatpush1.msra.mxu0 0.0
    %4575 = vmatprep.subr.mxu0 0.0
    %4576 = vmatpush1.msra.mxu0 0.0
    %4577 = vmatprep.subr.mxu0 0.0
    %4578 = vmatpush1.msra.mxu0 0.0
    %4579 = vmatprep.subr.mxu0 0.0
    %4580 = vmatpush1.msra.mxu0 0.0
    %4581 = vmatprep.subr.mxu0 0.0
    %4582 = vmatpush1.msra.mxu0 0.0
    %4583 = vmatprep.subr.mxu0 0.0
    %4584 = vmatpush1.msra.mxu0 0.0
    %4585 = vmatprep.subr.mxu0 0.0
    %4586 = vmatpush1.msra.mxu0 0.0
    %4587 = vmatprep.subr.mxu0 0.0
    %4588 = vmatpush1.msra.mxu0 0.0
    %4589 = vmatprep.subr.mxu0 0.0
    %4590 = vmatpush1.msra.mxu0 0.0
    %4591 = vmatprep.subr.mxu0 0.0
    %4592 = vmatpush1.msra.mxu0 0.0
    %4593 = vmatprep.subr.mxu0 0.0
    %4594 = vmatpush1.msra.mxu0 0.0
    %4595 = vmatprep.subr.mxu0 0.0
    %4596 = vmatpush1.msra.mxu0 %v681
    %4597 = vmatprep.subr.mxu0 0.0
    %4598 = vmatpush1.msra.mxu0 %v675
    %4599 = vmatprep.subr.mxu0 0.0
    %4600 = vmatpush2.msra.mxu0 0.0
    %4601 = vmatprep.subr.mxu0 0.0
    %4602 = vmatpush2.msra.mxu0 0.0
    %4603 = vmatprep.subr.mxu0 0.0
    %4604 = vmatpush2.msra.mxu0 0.0
    %4605 = vmatprep.subr.mxu0 0.0
    %4606 = vmatpush2.msra.mxu0 0.0
    %4607 = vmatprep.subr.mxu0 0.0
    %4608 = vmatpush2.msra.mxu0 0.0
    %4609 = vmatprep.subr.mxu0 0.0
    %4610 = vmatpush2.msra.mxu0 0.0
    %4611 = vmatprep.subr.mxu0 0.0
    %4612 = vmatpush2.msra.mxu0 0.0
    %4613 = vmatprep.subr.mxu0 0.0
    %4614 = vmatpush2.msra.mxu0 0.0
    %4615 = vmatprep.subr.mxu0 0.0
    %4616 = vmatpush2.msra.mxu0 0.0
    %4617 = vmatprep.subr.mxu0 0.0
    %4618 = vmatpush2.msra.mxu0 0.0
    %4619 = vmatprep.subr.mxu0 0.0
    %4620 = vmatpush2.msra.mxu0 0.0
    %4621 = vmatprep.subr.mxu0 0.0
    %4622 = vmatpush2.msra.mxu0 0.0
    %4623 = vmatprep.subr.mxu0 0.0
    %4624 = vmatpush2.msra.mxu0 0.0
    %4625 = vmatprep.subr.mxu0 0.0
    %4626 = vmatpush2.msra.mxu0 0.0
    %4627 = vmatprep.subr.mxu0 0.0
    %4628 = vmatpush2.msra.mxu0 0.0
    %4629 = vmatprep.subr.mxu0 0.0
    %4630 = vmatpush2.msra.mxu0 0.0
    %4631 = vmatprep.mubr.f32.mxu0 0.0
    %4632 = vmatmul.mubr.f32.gmra.mxu0 %v4562
    %v4633 = vpop.f32.mrf.mxu0
    %v4634 = vadd.f32 0.0, %v4633
    %v4635 = vpop.f32.mrf.mxu0
    %4636 = vmatprep.mubr.f32.mxu0 0.0
    %4637 = vmatmul.mubr.f32.gmra.mxu0 %v4565
    %v4638 = vpop.f32.mrf.mxu0
    %v4639 = vadd.f32 0.0, %v4638
    %v4640 = vpop.f32.mrf.mxu0
    %4641 = vdwg.mxu0
    %s4642 = scalar_lea.vmem [#allocation10], 512
    %v4643 = vld [vmem:[%s4642] sm:$0xff]
    %v4644 = vld [vmem:[%s4642 + $0x8] sm:$0xff]
    %v4645 = vld [vmem:[%s4642 + $0x10] sm:$0xff]
    %v4646 = vld [vmem:[%s4642 + $0x18] sm:$0xff]
    %v4647 = vld [vmem:[%s4642 + $0x20] sm:$0xff]
    %v4648 = vld [vmem:[%s4642 + $0x28] sm:$0xff]
    %v4649 = vld [vmem:[%s4642 + $0x30] sm:$0xff]
    %v4650 = vld [vmem:[%s4642 + $0x38] sm:$0xff]
    %v4651 = vld [vmem:[%s4642 + $0x40] sm:$0xff]
    %v4652 = vld [vmem:[%s4642 + $0x48] sm:$0xff]
    %v4653 = vld [vmem:[%s4642 + $0x50] sm:$0xff]
    %v4654 = vld [vmem:[%s4642 + $0x58] sm:$0xff]
    %v4655 = vld [vmem:[%s4642 + $0x60] sm:$0xff]
    %v4656 = vld [vmem:[%s4642 + $0x68] sm:$0xff]
    %v4657 = vld [vmem:[%s4642 + $0x70] sm:$0xff]
    %v4658 = vld [vmem:[%s4642 + $0x78] sm:$0xff]
    %s4659 = scalar_lea.vmem [#allocation11], 512
    %v4660 = vld [vmem:[%s4659] sm:$0xff]
    %v4661 = vld [vmem:[%s4659 + $0x8] sm:$0xff]
    %v4662 = vld [vmem:[%s4659 + $0x10] sm:$0xff]
    %v4663 = vld [vmem:[%s4659 + $0x18] sm:$0xff]
    %v4664 = vld [vmem:[%s4659 + $0x20] sm:$0xff]
    %v4665 = vld [vmem:[%s4659 + $0x28] sm:$0xff]
    %v4666 = vld [vmem:[%s4659 + $0x30] sm:$0xff]
    %v4667 = vld [vmem:[%s4659 + $0x38] sm:$0xff]
    %v4668 = vld [vmem:[%s4659 + $0x40] sm:$0xff]
    %v4669 = vld [vmem:[%s4659 + $0x48] sm:$0xff]
    %v4670 = vld [vmem:[%s4659 + $0x50] sm:$0xff]
    %v4671 = vld [vmem:[%s4659 + $0x58] sm:$0xff]
    %v4672 = vld [vmem:[%s4659 + $0x60] sm:$0xff]
    %v4673 = vld [vmem:[%s4659 + $0x68] sm:$0xff]
    %v4674 = vld [vmem:[%s4659 + $0x70] sm:$0xff]
    %v4675 = vld [vmem:[%s4659 + $0x78] sm:$0xff]
    %4676 = vmatprep.subr.mxu0 0.0
    %4677 = vmatpush1.msra.mxu0 %v4675
    %4678 = vmatprep.subr.mxu0 0.0
    %4679 = vmatpush1.msra.mxu0 %v4674
    %4680 = vmatprep.subr.mxu0 0.0
    %4681 = vmatpush1.msra.mxu0 %v4673
    %4682 = vmatprep.subr.mxu0 0.0
    %4683 = vmatpush1.msra.mxu0 %v4672
    %4684 = vmatprep.subr.mxu0 0.0
    %4685 = vmatpush1.msra.mxu0 %v4671
    %4686 = vmatprep.subr.mxu0 0.0
    %4687 = vmatpush1.msra.mxu0 %v4670
    %4688 = vmatprep.subr.mxu0 0.0
    %4689 = vmatpush1.msra.mxu0 %v4669
    %4690 = vmatprep.subr.mxu0 0.0
    %4691 = vmatpush1.msra.mxu0 %v4668
    %4692 = vmatprep.subr.mxu0 0.0
    %4693 = vmatpush1.msra.mxu0 %v4667
    %4694 = vmatprep.subr.mxu0 0.0
    %4695 = vmatpush1.msra.mxu0 %v4666
    %4696 = vmatprep.subr.mxu0 0.0
    %4697 = vmatpush1.msra.mxu0 %v4665
    %4698 = vmatprep.subr.mxu0 0.0
    %4699 = vmatpush1.msra.mxu0 %v4664
    %4700 = vmatprep.subr.mxu0 0.0
    %4701 = vmatpush1.msra.mxu0 %v4663
    %4702 = vmatprep.subr.mxu0 0.0
    %4703 = vmatpush1.msra.mxu0 %v4662
    %4704 = vmatprep.subr.mxu0 0.0
    %4705 = vmatpush1.msra.mxu0 %v4661
    %4706 = vmatprep.subr.mxu0 0.0
    %4707 = vmatpush1.msra.mxu0 %v4660
    %4708 = vmatprep.subr.mxu0 0.0
    %4709 = vmatpush2.msra.mxu0 0.0
    %4710 = vmatprep.subr.mxu0 0.0
    %4711 = vmatpush2.msra.mxu0 0.0
    %4712 = vmatprep.subr.mxu0 0.0
    %4713 = vmatpush2.msra.mxu0 0.0
    %4714 = vmatprep.subr.mxu0 0.0
    %4715 = vmatpush2.msra.mxu0 0.0
    %4716 = vmatprep.subr.mxu0 0.0
    %4717 = vmatpush2.msra.mxu0 0.0
    %4718 = vmatprep.subr.mxu0 0.0
    %4719 = vmatpush2.msra.mxu0 0.0
    %4720 = vmatprep.subr.mxu0 0.0
    %4721 = vmatpush2.msra.mxu0 0.0
    %4722 = vmatprep.subr.mxu0 0.0
    %4723 = vmatpush2.msra.mxu0 0.0
    %4724 = vmatprep.subr.mxu0 0.0
    %4725 = vmatpush2.msra.mxu0 0.0
    %4726 = vmatprep.subr.mxu0 0.0
    %4727 = vmatpush2.msra.mxu0 0.0
    %4728 = vmatprep.subr.mxu0 0.0
    %4729 = vmatpush2.msra.mxu0 0.0
    %4730 = vmatprep.subr.mxu0 0.0
    %4731 = vmatpush2.msra.mxu0 0.0
    %4732 = vmatprep.subr.mxu0 0.0
    %4733 = vmatpush2.msra.mxu0 0.0
    %4734 = vmatprep.subr.mxu0 0.0
    %4735 = vmatpush2.msra.mxu0 0.0
    %4736 = vmatprep.subr.mxu0 0.0
    %4737 = vmatpush2.msra.mxu0 0.0
    %4738 = vmatprep.subr.mxu0 0.0
    %4739 = vmatpush2.msra.mxu0 0.0
    %4740 = vmatprep.mubr.f32.mxu0 0.0
    %4741 = vmatmul.mubr.f32.gmra.mxu0 %v4553
    %v4742 = vpop.f32.mrf.mxu0
    %v4743 = vadd.f32 0.0, %v4742
    %v4744 = vpop.f32.mrf.mxu0
    %4745 = vmatprep.mubr.f32.mxu0 0.0
    %4746 = vmatmul.mubr.f32.gmra.mxu0 %v4558
    %v4747 = vpop.f32.mrf.mxu0
    %v4748 = vadd.f32 0.0, %v4747
    %v4749 = vpop.f32.mrf.mxu0
    %4750 = vmatprep.mubr.f32.mxu0 0.0
    %4751 = vmatmul.mubr.f32.gmra.mxu0 %v4634
    %v4752 = vpop.f32.mrf.mxu0
    %v4753 = vadd.f32 0.0, %v4752
    %v4754 = vpop.f32.mrf.mxu0
    %4755 = vmatprep.mubr.f32.mxu0 0.0
    %4756 = vmatmul.mubr.f32.gmra.mxu0 %v4639
    %v4757 = vpop.f32.mrf.mxu0
    %v4758 = vadd.f32 0.0, %v4757
    %v4759 = vpop.f32.mrf.mxu0
    %4760 = vdwg.mxu0
    %4761 = vmatprep.subr.mxu0 0.0
    %4762 = vmatpush1.msra.mxu0 %v4658
    %4763 = vmatprep.subr.mxu0 0.0
    %4764 = vmatpush1.msra.mxu0 %v4657
    %4765 = vmatprep.subr.mxu0 0.0
    %4766 = vmatpush1.msra.mxu0 %v4656
    %4767 = vmatprep.subr.mxu0 0.0
    %4768 = vmatpush1.msra.mxu0 %v4655
    %4769 = vmatprep.subr.mxu0 0.0
    %4770 = vmatpush1.msra.mxu0 %v4654
    %4771 = vmatprep.subr.mxu0 0.0
    %4772 = vmatpush1.msra.mxu0 %v4653
    %4773 = vmatprep.subr.mxu0 0.0
    %4774 = vmatpush1.msra.mxu0 %v4652
    %4775 = vmatprep.subr.mxu0 0.0
    %4776 = vmatpush1.msra.mxu0 %v4651
    %4777 = vmatprep.subr.mxu0 0.0
    %4778 = vmatpush1.msra.mxu0 %v4650
    %4779 = vmatprep.subr.mxu0 0.0
    %4780 = vmatpush1.msra.mxu0 %v4649
    %4781 = vmatprep.subr.mxu0 0.0
    %4782 = vmatpush1.msra.mxu0 %v4648
    %4783 = vmatprep.subr.mxu0 0.0
    %4784 = vmatpush1.msra.mxu0 %v4647
    %4785 = vmatprep.subr.mxu0 0.0
    %4786 = vmatpush1.msra.mxu0 %v4646
    %4787 = vmatprep.subr.mxu0 0.0
    %4788 = vmatpush1.msra.mxu0 %v4645
    %4789 = vmatprep.subr.mxu0 0.0
    %4790 = vmatpush1.msra.mxu0 %v4644
    %4791 = vmatprep.subr.mxu0 0.0
    %4792 = vmatpush1.msra.mxu0 %v4643
    %4793 = vmatprep.subr.mxu0 0.0
    %4794 = vmatpush2.msra.mxu0 0.0
    %4795 = vmatprep.subr.mxu0 0.0
    %4796 = vmatpush2.msra.mxu0 0.0
    %4797 = vmatprep.subr.mxu0 0.0
    %4798 = vmatpush2.msra.mxu0 0.0
    %4799 = vmatprep.subr.mxu0 0.0
    %4800 = vmatpush2.msra.mxu0 0.0
    %4801 = vmatprep.subr.mxu0 0.0
    %4802 = vmatpush2.msra.mxu0 0.0
    %4803 = vmatprep.subr.mxu0 0.0
    %4804 = vmatpush2.msra.mxu0 0.0
    %4805 = vmatprep.subr.mxu0 0.0
    %4806 = vmatpush2.msra.mxu0 0.0
    %4807 = vmatprep.subr.mxu0 0.0
    %4808 = vmatpush2.msra.mxu0 0.0
    %4809 = vmatprep.subr.mxu0 0.0
    %4810 = vmatpush2.msra.mxu0 0.0
    %4811 = vmatprep.subr.mxu0 0.0
    %4812 = vmatpush2.msra.mxu0 0.0
    %4813 = vmatprep.subr.mxu0 0.0
    %4814 = vmatpush2.msra.mxu0 0.0
    %4815 = vmatprep.subr.mxu0 0.0
    %4816 = vmatpush2.msra.mxu0 0.0
    %4817 = vmatprep.subr.mxu0 0.0
    %4818 = vmatpush2.msra.mxu0 0.0
    %4819 = vmatprep.subr.mxu0 0.0
    %4820 = vmatpush2.msra.mxu0 0.0
    %4821 = vmatprep.subr.mxu0 0.0
    %4822 = vmatpush2.msra.mxu0 0.0
    %4823 = vmatprep.subr.mxu0 0.0
    %4824 = vmatpush2.msra.mxu0 0.0
    %4825 = vmatprep.mubr.f32.mxu0 0.0
    %4826 = vmatmul.mubr.f32.gmra.mxu0 %v4391
    %v4827 = vpop.f32.mrf.mxu0
    %v4828 = vadd.f32 %v4743, %v4827
    %v4829 = vpop.f32.mrf.mxu0
    %4830 = vmatprep.mubr.f32.mxu0 0.0
    %4831 = vmatmul.mubr.f32.gmra.mxu0 %v4396
    %v4832 = vpop.f32.mrf.mxu0
    %v4833 = vadd.f32 %v4748, %v4832
    %v4834 = vpop.f32.mrf.mxu0
    %4835 = vmatprep.mubr.f32.mxu0 0.0
    %4836 = vmatmul.mubr.f32.gmra.mxu0 %v4472
    %v4837 = vpop.f32.mrf.mxu0
    %v4838 = vadd.f32 %v4753, %v4837
    %v4839 = vpop.f32.mrf.mxu0
    %4840 = vmatprep.mubr.f32.mxu0 0.0
    %4841 = vmatmul.mubr.f32.gmra.mxu0 %v4477
    %v4842 = vpop.f32.mrf.mxu0
    %v4843 = vadd.f32 %v4758, %v4842
    %v4844 = vpop.f32.mrf.mxu0
    %4845 = vdwg.mxu0
    %s4846 = scalar_lea.vmem %s6, 4
    %v4847 = vld [vmem:[%s4846] sm:$0x1]
    %v4849 = vlaneseq
    %v4850 = vshrl.u32 %v4849, 7
    %v4851 = vsub.s32 0, %v4850
    %v4852 = vrot.slane %v4847, %v4851
    %v4854 = vadd.f32 %v4828, %v4852
    %v4855 = vadd.f32 %v4833, %v4852
    %v4856 = vadd.f32 %v4838, %v4852
    %v4857 = vadd.f32 %v4843, %v4852
    %v4858 = vmax.f32 %v4854, 0.0
    %v4859 = vmax.f32 %v4855, 0.0
    %v4860 = vmax.f32 %v4856, 0.0
    %v4861 = vmax.f32 %v4857, 0.0
    %s4862 = scalar_lea.vmem %s7, 4
    %v4863 = vld [vmem:[%s4862] sm:$0x1]
    %v4865 = vlaneseq
    %v4866 = vshrl.u32 %v4865, 7
    %v4867 = vsub.s32 0, %v4866
    %v4868 = vrot.slane %v4863, %v4867
    %v4870 = vmul.f32 %v4858, %v4868
    %v4871 = vmul.f32 %v4859, %v4868
    %v4872 = vmul.f32 %v4860, %v4868
    %v4873 = vmul.f32 %v4861, %v4868
    %4874 = vadd.xlane.f32.xlu0 %v4870
    %v4875 = vpop.xlane.xlu0 %4874
    %4876 = vadd.xlane.f32.xlu0 %v4871
    %v4877 = vpop.xlane.xlu0 %4876
    %4878 = vadd.xlane.f32.xlu0 %v4872
    %v4879 = vpop.xlane.xlu0 %4878
    %4880 = vadd.xlane.f32.xlu0 %v4873
    %v4881 = vpop.xlane.xlu0 %4880
    %v4882 = vmax.f32 %v3990, %v4875
    %v4883 = vmax.f32 %v3991, %v4877
    %v4884 = vmax.f32 %v3992, %v4879
    %v4885 = vmax.f32 %v3993, %v4881
    %v4886 = vsub.f32 %v3990, %v4882
    %v4887 = vsub.f32 %v3991, %v4883
    %v4888 = vsub.f32 %v3992, %v4884
    %v4889 = vsub.f32 %v3993, %v4885
    %v4890 = vmul.f32 %v4886, 1.442695
    %v4891 = vpow.pop %v4890
    %v4892 = vmul.f32 %v4887, 1.442695
    %v4893 = vpow.pop %v4892
    %v4894 = vmul.f32 %v4888, 1.442695
    %v4895 = vpow.pop %v4894
    %v4896 = vmul.f32 %v4889, 1.442695
    %v4897 = vpow.pop %v4896
    %v4898 = vsub.f32 %v4875, %v4882
    %v4899 = vsub.f32 %v4877, %v4883
    %v4900 = vsub.f32 %v4879, %v4884
    %v4901 = vsub.f32 %v4881, %v4885
    %v4902 = vmul.f32 %v4898, 1.442695
    %v4903 = vpow.pop %v4902
    %v4904 = vmul.f32 %v4899, 1.442695
    %v4905 = vpow.pop %v4904
    %v4906 = vmul.f32 %v4900, 1.442695
    %v4907 = vpow.pop %v4906
    %v4908 = vmul.f32 %v4901, 1.442695
    %v4909 = vpow.pop %v4908
    %v4910 = vmul.f32 %v4022, %v4891
    %v4911 = vmul.f32 %v4023, %v4893
    %v4912 = vmul.f32 %v4024, %v4895
    %v4913 = vmul.f32 %v4025, %v4897
    %v4914 = vadd.f32 %v4910, %v4903
    %v4915 = vadd.f32 %v4911, %v4905
    %v4916 = vadd.f32 %v4912, %v4907
    %v4917 = vadd.f32 %v4913, %v4909
    %v4918 = vmul.f32 %v4034, %v4891
    %v4919 = vmul.f32 %v4035, %v4893
    %v4920 = vmul.f32 %v4036, %v4895
    %v4921 = vmul.f32 %v4037, %v4897
    %v4922 = vmul.f32 %v4903, %v4858
    %v4923 = vmul.f32 %v4905, %v4859
    %v4924 = vmul.f32 %v4907, %v4860
    %v4925 = vmul.f32 %v4909, %v4861
    %v4926 = vadd.f32 %v4918, %v4922
    %v4927 = vadd.f32 %v4919, %v4923
    %v4928 = vadd.f32 %v4920, %v4924
    %v4929 = vadd.f32 %v4921, %v4925
    %v4930 = vrcp.pop %v4914
    %v4931 = vrcp.pop %v4915
    %v4932 = vrcp.pop %v4916
    %v4933 = vrcp.pop %v4917
    %v4934 = vmul.f32 %v4926, %v4930
    %v4935 = vmul.f32 %v4927, %v4931
    %v4936 = vmul.f32 %v4928, %v4932
    %v4937 = vmul.f32 %v4929, %v4933
    %4938 = vadd.xlane.f32.xlu0 %v4934
    %v4939 = vpop.xlane.xlu0 %4938
    %4940 = vadd.xlane.f32.xlu0 %v4935
    %v4941 = vpop.xlane.xlu0 %4940
    %4942 = vadd.xlane.f32.xlu0 %v4936
    %v4943 = vpop.xlane.xlu0 %4942
    %4944 = vadd.xlane.f32.xlu0 %v4937
    %v4945 = vpop.xlane.xlu0 %4944
    %v4946 = vmul.f32 %v4939, 0.03125
    %v4947 = vmul.f32 %v4941, 0.03125
    %v4948 = vmul.f32 %v4943, 0.03125
    %v4949 = vmul.f32 %v4945, 0.03125
    %vm4950 = vcmp.lt.s32.totalorder %v128, 32
    %v4951 = vsub.f32 %v4934, %v4946
    %v4952 = vsub.f32 %v4935, %v4947
    %v4953 = vsub.f32 %v4936, %v4948
    %v4954 = vsub.f32 %v4937, %v4949
    %v4955 = vsel %vm4950, 1, 0
    %vm4956 = vcmp.eq.s32.totalorder %v4955, 1
    %v4957 = vsel %vm4956, %v4951, 0.0
    %v4958 = vsel %vm4956, %v4952, 0.0
    %v4959 = vsel %vm4956, %v4953, 0.0
    %v4960 = vsel %vm4956, %v4954, 0.0
    %v4961 = vmul.f32 %v4957, %v4957
    %v4962 = vmul.f32 %v4958, %v4958
    %v4963 = vmul.f32 %v4959, %v4959
    %v4964 = vmul.f32 %v4960, %v4960
    %4965 = vadd.xlane.f32.xlu0 %v4961
    %v4966 = vpop.xlane.xlu0 %4965
    %4967 = vadd.xlane.f32.xlu0 %v4962
    %v4968 = vpop.xlane.xlu0 %4967
    %4969 = vadd.xlane.f32.xlu0 %v4963
    %v4970 = vpop.xlane.xlu0 %4969
    %4971 = vadd.xlane.f32.xlu0 %v4964
    %v4972 = vpop.xlane.xlu0 %4971
    %v4973 = vmul.f32 %v4966, 0.03125
    %v4974 = vmul.f32 %v4968, 0.03125
    %v4975 = vmul.f32 %v4970, 0.03125
    %v4976 = vmul.f32 %v4972, 0.03125
    %v4977 = vadd.f32 %v4973, 1e-05
    %v4978 = vadd.f32 %v4974, 1e-05
    %v4979 = vadd.f32 %v4975, 1e-05
    %v4980 = vadd.f32 %v4976, 1e-05
    %v4981 = vrsqrt.pop %v4977
    %v4982 = vrsqrt.pop %v4978
    %v4983 = vrsqrt.pop %v4979
    %v4984 = vrsqrt.pop %v4980
    %v4985 = vmul.f32 %v4951, %v4981
    %v4986 = vmul.f32 %v4952, %v4982
    %v4987 = vmul.f32 %v4953, %v4983
    %v4988 = vmul.f32 %v4954, %v4984
    %v4989 = vld [vmem:[%s8] sm:$0x1]
    %v4991 = vlaneseq
    %v4992 = vshrl.u32 %v4991, 7
    %v4993 = vsub.s32 0, %v4992
    %v4994 = vrot.slane %v4989, %v4993
    %v4996 = vmul.f32 %v4985, %v4994
    %v4997 = vmul.f32 %v4986, %v4994
    %v4998 = vmul.f32 %v4987, %v4994
    %v4999 = vmul.f32 %v4988, %v4994
    %v5000 = vld [vmem:[%s9] sm:$0x1]
    %v5002 = vlaneseq
    %v5003 = vshrl.u32 %v5002, 7
    %v5004 = vsub.s32 0, %v5003
    %v5005 = vrot.slane %v5000, %v5004
    %v5007 = vadd.f32 %v4996, %v5005
    %v5008 = vadd.f32 %v4997, %v5005
    %v5009 = vadd.f32 %v4998, %v5005
    %v5010 = vadd.f32 %v4999, %v5005
    %v5011 = vmax.f32 %v5007, 0.0
    %v5012 = vmax.f32 %v5008, 0.0
    %v5013 = vmax.f32 %v5009, 0.0
    %v5014 = vmax.f32 %v5010, 0.0
    %5015 = vst [vmem:[#allocation13] sm:$0xff] %v5011
    %5016 = vst [vmem:[#allocation13 + $0x8] sm:$0xff] %v5012
    %5017 = vst [vmem:[#allocation13 + $0x10] sm:$0xff] %v5013
    %5018 = vst [vmem:[#allocation13 + $0x18] sm:$0xff] %v5014
    // Predicated region
    $region66: #{tpu_custom_call.1} parent=1 // pred_check
      _
    $region67: #{tpu_custom_call.1} parent=1 // pred_check_branch
      %5020 = sbr.rel (0) target = $region69
    $region68: #{tpu_custom_call.1} parent=1 // pred_region
      %s5022 = ssub.s32 512, 512
      %5023 = vsyncadd [#allocation4], %s5022
      %s5024 = sshll.u32 [#allocation13], 4
      %s5025 = int_to_ptr.vmem [resolvable:$true] %s5024
      %5030 = dma.vmem_to_hbm [thread:$0]  %s5025, 512, %s10, [#allocation4], 128, 128, 8
    $region69: #{tpu_custom_call.1} parent=1 // pred_fallthru
      _
    // Predicated region
    $region70: #{tpu_custom_call.1} parent=1 // pred_check
      _
    $region71: #{tpu_custom_call.1} parent=1 // pred_check_branch
      %5032 = sbr.rel (0) target = $region73
    $region72: #{tpu_custom_call.1} parent=1 // pred_region
      %5033 = dma.done [#allocation4], 512
    $region73: #{tpu_custom_call.1} parent=1 // pred_fallthru
      _
    %5034 = vsyncpa [#allocation3], 1
    %5035 = vsyncpa [#allocation6], 1
    %5036 = vsyncpa [#allocation9], 1
    %5037 = vsyncpa [#allocation12], 1
    %5038 = vsyncpa [#allocation4], 1

// kernel: tpu_custom_call.1
$region0: #{tpu_custom_call.1}
  #allocation0 [shape = 'u32[]', space=smem, size = 0x4, offset = 0x4, fixed_abs, tag = 'smem constant byte address 0x4 - core index']
  #allocation1 [shape = 'u32[144,128]{1,0:T(1,128)}', space=vmem, size = 0x12000, scoped, tag = 'internal scratch']
  %s0 = inlined_call_operand.hbm [shape: f32[2,16,32], index: 0, kind: input, shape index: {}]
  %s1 = inlined_call_operand.hbm [shape: f32[2,16,16], index: 1, kind: input, shape index: {}]
  %s2 = inlined_call_operand.hbm [shape: f32[32,1280], index: 2, kind: input, shape index: {}]
  %s3 = inlined_call_operand.hbm [shape: f32[1,1280], index: 3, kind: input, shape index: {}]
  %s4 = inlined_call_operand.hbm [shape: f32[5,128,128], index: 4, kind: input, shape index: {}]
  %s5 = inlined_call_operand.hbm [shape: f32[5,128,128], index: 5, kind: input, shape index: {}]
  %s6 = inlined_call_operand.vmem [shape: f32[5,1,128], index: 6, kind: input, shape index: {}]
  %s7 = inlined_call_operand.vmem [shape: f32[5,1,128], index: 7, kind: input, shape index: {}]
  %s8 = inlined_call_operand.vmem [shape: f32[1,128], index: 8, kind: input, shape index: {}]
  %s9 = inlined_call_operand.vmem [shape: f32[1,128], index: 9, kind: input, shape index: {}]
  %s10 = inlined_call_operand.hbm [shape: f32[2,16,128], index: 10, kind: output, shape index: {}]
  %s11 = sld [smem:[#allocation0]]
  $region74: #{tpu_custom_call.1} parent=0
    _
  %s13 = ssub.s32 1, %s11
  %s14 = scalar_select 0, %s13, %s11
  $region1: #{tpu_custom_call.1} parent=0
    #allocation2 [shape = 'u8[16384]{0}', space=vmem, size = 0x4000, scoped, tag = 'input window, operand 0, single buffered']
    #allocation3 [shape = 's32[1]{0}', space=sflag, size = 0x4, scoped, tag = 'scoped memory for tpu_custom_call.1']
    #allocation4 [shape = 's32[1]{0}', space=sflag, size = 0x4, scoped, tag = 'scoped memory for tpu_custom_call.1']
    #allocation5 [shape = 'u8[16384]{0}', space=vmem, size = 0x4000, scoped, tag = 'input window, operand 1, single buffered']
    #allocation6 [shape = 's32[1]{0}', space=sflag, size = 0x4, scoped, tag = 'scoped memory for tpu_custom_call.1']
    #allocation7 [shape = 'u8[163840]{0}', space=vmem, size = 0x28000, scoped, tag = 'input window, operand 2, single buffered']
    #allocation8 [shape = 'u8[5120]{0}', space=vmem, size = 0x1400, scoped, tag = 'input window, operand 3, single buffered']
    #allocation9 [shape = 's32[1]{0}', space=sflag, size = 0x4, scoped, tag = 'scoped memory for tpu_custom_call.1']
    #allocation10 [shape = 'u8[327680]{0}', space=vmem, size = 0x50000, scoped, tag = 'input window, operand 4, single buffered']
    #allocation11 [shape = 'u8[327680]{0}', space=vmem, size = 0x50000, scoped, tag = 'input window, operand 5, single buffered']
    #allocation12 [shape = 's32[1]{0}', space=sflag, size = 0x4, scoped, tag = 'scoped memory for tpu_custom_call.1']
    #allocation13 [shape = 'u8[16384]{0}', space=vmem, size = 0x4000, scoped, tag = 'output window, operand 0, single buffered']
    %15 = vsyncpa [#allocation3], 0
    %16 = vsyncpa [#allocation6], 0
    %17 = vsyncpa [#allocation9], 0
    %18 = vsyncpa [#allocation12], 0
    %19 = vsyncpa [#allocation4], 0
    // Predicated region
    $region2: #{tpu_custom_call.1} parent=1 // pred_check
      _
    $region3: #{tpu_custom_call.1} parent=1 // pred_check_branch
      %21 = sbr.rel (0) target = $region5
    $region4: #{tpu_custom_call.1} parent=1 // pred_region
      %s23 = ssub.s32 512, 512
      %24 = vsyncadd [#allocation3], %s23
      %s25 = sshll.u32 [#allocation2], 4
      %s26 = int_to_ptr.vmem [resolvable:$true] %s25
      %31 = dma.hbm_to_vmem [thread:$0]  %s0, 512, %s26, [#allocation3], 128, 128, 8
    $region5: #{tpu_custom_call.1} parent=1 // pred_fallthru
      _
    // Predicated region
    $region6: #{tpu_custom_call.1} parent=1 // pred_check
      _
    $region7: #{tpu_custom_call.1} parent=1 // pred_check_branch
      %33 = sbr.rel (0) target = $region9
    $region8: #{tpu_custom_call.1} parent=1 // pred_region
      %s35 = ssub.s32 512, 512
      %36 = vsyncadd [#allocation6], %s35
      %s37 = sshll.u32 [#allocation5], 4
      %s38 = int_to_ptr.vmem [resolvable:$true] %s37
      %43 = dma.hbm_to_vmem [thread:$0]  %s1, 512, %s38, [#allocation6], 128, 128, 8
    $region9: #{tpu_custom_call.1} parent=1 // pred_fallthru
      _
    // Predicated region
    $region10: #{tpu_custom_call.1} parent=1 // pred_check
      _
    $region11: #{tpu_custom_call.1} parent=1 // pred_check_branch
      %45 = sbr.rel (0) target = $region13
    $region12: #{tpu_custom_call.1} parent=1 // pred_region
      %s47 = ssub.s32 5120, 5120
      %48 = vsyncadd [#allocation6], %s47
      %s49 = sshll.u32 [#allocation7], 4
      %s50 = int_to_ptr.vmem [resolvable:$true] %s49
      %55 = dma.hbm_to_vmem [thread:$0]  %s2, 5120, %s50, [#allocation6], 1280, 1280, 80
    $region13: #{tpu_custom_call.1} parent=1 // pred_fallthru
      _
    // Predicated region
    $region14: #{tpu_custom_call.1} parent=1 // pred_check
      _
    $region15: #{tpu_custom_call.1} parent=1 // pred_check_branch
      %57 = sbr.rel (0) target = $region17
    $region16: #{tpu_custom_call.1} parent=1 // pred_region
      %s59 = ssub.s32 160, 160
      %60 = vsyncadd [#allocation9], %s59
      %s62 = sshll.u32 [#allocation8], 4
      %s63 = int_to_ptr.vmem [resolvable:$true] %s62
      %65 = dma.hbm_to_vmem [thread:$0]  %s3, 160, %s63, [#allocation9]
    $region17: #{tpu_custom_call.1} parent=1 // pred_fallthru
      _
    // Predicated region
    $region18: #{tpu_custom_call.1} parent=1 // pred_check
      _
    $region19: #{tpu_custom_call.1} parent=1 // pred_check_branch
      %67 = sbr.rel (0) target = $region21
    $region20: #{tpu_custom_call.1} parent=1 // pred_region
      %s69 = ssub.s32 10240, 10240
      %70 = vsyncadd [#allocation9], %s69
      %s71 = sshll.u32 [#allocation10], 4
      %s72 = int_to_ptr.vmem [resolvable:$true] %s71
      %77 = dma.hbm_to_vmem [thread:$0]  %s4, 10240, %s72, [#allocation9], 128, 128, 8
    $region21: #{tpu_custom_call.1} parent=1 // pred_fallthru
      _
    // Predicated region
    $region22: #{tpu_custom_call.1} parent=1 // pred_check
      _
    $region23: #{tpu_custom_call.1} parent=1 // pred_check_branch
      %79 = sbr.rel (0) target = $region25
    $region24: #{tpu_custom_call.1} parent=1 // pred_region
      %s81 = ssub.s32 10240, 10240
      %82 = vsyncadd [#allocation12], %s81
      %s83 = sshll.u32 [#allocation11], 4
      %s84 = int_to_ptr.vmem [resolvable:$true] %s83
      %89 = dma.hbm_to_vmem [thread:$0]  %s5, 10240, %s84, [#allocation12], 128, 128, 8
    $region25: #{tpu_custom_call.1} parent=1 // pred_fallthru
      _
    // Predicated region
    $region26: #{tpu_custom_call.1} parent=1 // pred_check
      _
    $region27: #{tpu_custom_call.1} parent=1 // pred_check_branch
      %91 = sbr.rel (0) target = $region29
    $region28: #{tpu_custom_call.1} parent=1 // pred_region
      _
    $region29: #{tpu_custom_call.1} parent=1 // pred_fallthru
      _
    // Predicated region
    $region30: #{tpu_custom_call.1} parent=1 // pred_check
      _
    $region31: #{tpu_custom_call.1} parent=1 // pred_check_branch
      %93 = sbr.rel (0) target = $region33
    $region32: #{tpu_custom_call.1} parent=1 // pred_region
      _
    $region33: #{tpu_custom_call.1} parent=1 // pred_fallthru
      _
    // Predicated region
    $region34: #{tpu_custom_call.1} parent=1 // pred_check
      _
    $region35: #{tpu_custom_call.1} parent=1 // pred_check_branch
      %95 = sbr.rel (0) target = $region37
    $region36: #{tpu_custom_call.1} parent=1 // pred_region
      _
    $region37: #{tpu_custom_call.1} parent=1 // pred_fallthru
      _
    // Predicated region
    $region38: #{tpu_custom_call.1} parent=1 // pred_check
      _
    $region39: #{tpu_custom_call.1} parent=1 // pred_check_branch
      %97 = sbr.rel (0) target = $region41
    $region40: #{tpu_custom_call.1} parent=1 // pred_region
      _
    $region41: #{tpu_custom_call.1} parent=1 // pred_fallthru
      _
    // Predicated region
    $region42: #{tpu_custom_call.1} parent=1 // pred_check
      _
    $region43: #{tpu_custom_call.1} parent=1 // pred_check_branch
      %99 = sbr.rel (0) target = $region45
    $region44: #{tpu_custom_call.1} parent=1 // pred_region
      %100 = dma.done [#allocation3], 512
    $region45: #{tpu_custom_call.1} parent=1 // pred_fallthru
      _
    // Predicated region
    $region46: #{tpu_custom_call.1} parent=1 // pred_check
      _
    $region47: #{tpu_custom_call.1} parent=1 // pred_check_branch
      %102 = sbr.rel (0) target = $region49
    $region48: #{tpu_custom_call.1} parent=1 // pred_region
      %103 = dma.done [#allocation6], 512
    $region49: #{tpu_custom_call.1} parent=1 // pred_fallthru
      _
    // Predicated region
    $region50: #{tpu_custom_call.1} parent=1 // pred_check
      _
    $region51: #{tpu_custom_call.1} parent=1 // pred_check_branch
      %105 = sbr.rel (0) target = $region53
    $region52: #{tpu_custom_call.1} parent=1 // pred_region
      %106 = dma.done [#allocation6], 5120
    $region53: #{tpu_custom_call.1} parent=1 // pred_fallthru
      _
    // Predicated region
    $region54: #{tpu_custom_call.1} parent=1 // pred_check
      _
    $region55: #{tpu_custom_call.1} parent=1 // pred_check_branch
      %108 = sbr.rel (0) target = $region57
    $region56: #{tpu_custom_call.1} parent=1 // pred_region
      %109 = dma.done [#allocation9], 160
    $region57: #{tpu_custom_call.1} parent=1 // pred_fallthru
      _
    // Predicated region
    $region58: #{tpu_custom_call.1} parent=1 // pred_check
      _
    $region59: #{tpu_custom_call.1} parent=1 // pred_check_branch
      %111 = sbr.rel (0) target = $region61
    $region60: #{tpu_custom_call.1} parent=1 // pred_region
      %112 = dma.done [#allocation9], 10240
    $region61: #{tpu_custom_call.1} parent=1 // pred_fallthru
      _
    // Predicated region
    $region62: #{tpu_custom_call.1} parent=1 // pred_check
      _
    $region63: #{tpu_custom_call.1} parent=1 // pred_check_branch
      %114 = sbr.rel (0) target = $region65
    $region64: #{tpu_custom_call.1} parent=1 // pred_region
      %115 = dma.done [#allocation12], 10240
    $region65: #{tpu_custom_call.1} parent=1 // pred_fallthru
      _
    %v116 = vld [vmem:[#allocation2] sm:$0xff]
    %v117 = vld [vmem:[#allocation2 + $0x8] sm:$0xff]
    %v118 = vld [vmem:[#allocation2 + $0x10] sm:$0xff]
    %v119 = vld [vmem:[#allocation2 + $0x18] sm:$0xff]
    %v120 = vld [vmem:[#allocation5] sm:$0xff]
    %v121 = vld [vmem:[#allocation5 + $0x8] sm:$0xff]
    %v122 = vld [vmem:[#allocation5 + $0x10] sm:$0xff]
    %v123 = vld [vmem:[#allocation5 + $0x18] sm:$0xff]
    %v124 = vlaneseq
    %v125 = vshrl.u32 %v124, 7
    %v126 = vadd.s32 %v125, 8
    %v127 = vlaneseq
    %v128 = vand.u32 %v127, 127
    %vm129 = vcmp.eq.s32.totalorder %v125, %v128
    %vm130 = vcmp.eq.s32.totalorder %v126, %v128
    %v131 = vld [vmem:[#allocation7] sm:$0xff]
    %v132 = vld [vmem:[#allocation7 + $0x8] sm:$0xff]
    %v133 = vld [vmem:[#allocation7 + $0x10] sm:$0xff]
    %v134 = vld [vmem:[#allocation7 + $0x18] sm:$0xff]
    %v135 = vld [vmem:[#allocation7 + $0x20] sm:$0xff]
    %v136 = vld [vmem:[#allocation7 + $0x28] sm:$0xff]
    %v137 = vld [vmem:[#allocation7 + $0x30] sm:$0xff]
    %v138 = vld [vmem:[#allocation7 + $0x38] sm:$0xff]
    %v139 = vld [vmem:[#allocation7 + $0x40] sm:$0xff]
    %v140 = vld [vmem:[#allocation7 + $0x48] sm:$0xff]
    %v141 = vld [vmem:[#allocation7 + $0x50] sm:$0xff]
    %v142 = vld [vmem:[#allocation7 + $0x58] sm:$0xff]
    %v143 = vld [vmem:[#allocation7 + $0x60] sm:$0xff]
    %v144 = vld [vmem:[#allocation7 + $0x68] sm:$0xff]
    %v145 = vld [vmem:[#allocation7 + $0x70] sm:$0xff]
    %v146 = vld [vmem:[#allocation7 + $0x78] sm:$0xff]
    %v147 = vld [vmem:[#allocation7 + $0x80] sm:$0xff]
    %v148 = vld [vmem:[#allocation7 + $0x88] sm:$0xff]
    %v149 = vld [vmem:[#allocation7 + $0x90] sm:$0xff]
    %v150 = vld [vmem:[#allocation7 + $0x98] sm:$0xff]
    %v151 = vld [vmem:[#allocation7 + $0xa0] sm:$0xff]
    %v152 = vld [vmem:[#allocation7 + $0xa8] sm:$0xff]
    %v153 = vld [vmem:[#allocation7 + $0xb0] sm:$0xff]
    %v154 = vld [vmem:[#allocation7 + $0xb8] sm:$0xff]
    %v155 = vld [vmem:[#allocation7 + $0xc0] sm:$0xff]
    %v156 = vld [vmem:[#allocation7 + $0xc8] sm:$0xff]
    %v157 = vld [vmem:[#allocation7 + $0xd0] sm:$0xff]
    %v158 = vld [vmem:[#allocation7 + $0xd8] sm:$0xff]
    %v159 = vld [vmem:[#allocation7 + $0xe0] sm:$0xff]
    %v160 = vld [vmem:[#allocation7 + $0xe8] sm:$0xff]
    %v161 = vld [vmem:[#allocation7 + $0xf0] sm:$0xff]
    %v162 = vld [vmem:[#allocation7 + $0xf8] sm:$0xff]
    %v163 = vld [vmem:[#allocation7 + $0x100] sm:$0xff]
    %v164 = vld [vmem:[#allocation7 + $0x108] sm:$0xff]
    %v165 = vld [vmem:[#allocation7 + $0x110] sm:$0xff]
    %v166 = vld [vmem:[#allocation7 + $0x118] sm:$0xff]
    %v167 = vld [vmem:[#allocation7 + $0x120] sm:$0xff]
    %v168 = vld [vmem:[#allocation7 + $0x128] sm:$0xff]
    %v169 = vld [vmem:[#allocation7 + $0x130] sm:$0xff]
    %v170 = vld [vmem:[#allocation7 + $0x138] sm:$0xff]
    %v171 = vld [vmem:[#allocation8] sm:$0xff]
    %v172 = vld [vmem:[#allocation8 + $0x8] sm:$0x3]
    %v175 = vlaneseq
    %v176 = vshrl.u32 %v175, 7
    %v177 = vsub.s32 0, %v176
    %v178 = vrot.slane %v171, %v177
    %v179 = vlaneseq
    %v180 = vshrl.u32 %v179, 7
    %v181 = vsub.s32 1, %v180
    %v182 = vrot.slane %v171, %v181
    %v183 = vlaneseq
    %v184 = vshrl.u32 %v183, 7
    %v185 = vsub.s32 2, %v184
    %v186 = vrot.slane %v171, %v185
    %v187 = vlaneseq
    %v188 = vshrl.u32 %v187, 7
    %v189 = vsub.s32 3, %v188
    %v190 = vrot.slane %v171, %v189
    %v191 = vlaneseq
    %v192 = vshrl.u32 %v191, 7
    %v193 = vsub.s32 4, %v192
    %v194 = vrot.slane %v171, %v193
    %v195 = vlaneseq
    %v196 = vshrl.u32 %v195, 7
    %v197 = vsub.s32 5, %v196
    %v198 = vrot.slane %v171, %v197
    %v199 = vlaneseq
    %v200 = vshrl.u32 %v199, 7
    %v201 = vsub.s32 6, %v200
    %v202 = vrot.slane %v171, %v201
    %v203 = vlaneseq
    %v204 = vshrl.u32 %v203, 7
    %v205 = vsub.s32 7, %v204
    %v206 = vrot.slane %v171, %v205
    %v207 = vlaneseq
    %v208 = vshrl.u32 %v207, 7
    %v209 = vsub.s32 0, %v208
    %v210 = vrot.slane %v172, %v209
    %v211 = vlaneseq
    %v212 = vshrl.u32 %v211, 7
    %v213 = vsub.s32 1, %v212
    %v214 = vrot.slane %v172, %v213
    %vm225 = vcmask 261120
    %v227 = vsel %vm225, %v116, 0
    %v230 = vsel %vm225, %v117, 0
    %v233 = vsel %vm225, %v118, 0
    %v236 = vsel %vm225, %v119, 0
    %238 = vmatprep.subr.mxu0 0.0
    %239 = vmatpush1.msra.mxu0 0.0
    %240 = vmatprep.subr.mxu0 0.0
    %241 = vmatpush1.msra.mxu0 0.0
    %242 = vmatprep.subr.mxu0 0.0
    %243 = vmatpush1.msra.mxu0 0.0
    %244 = vmatprep.subr.mxu0 0.0
    %245 = vmatpush1.msra.mxu0 0.0
    %246 = vmatprep.subr.mxu0 0.0
    %247 = vmatpush1.msra.mxu0 0.0
    %248 = vmatprep.subr.mxu0 0.0
    %249 = vmatpush1.msra.mxu0 0.0
    %250 = vmatprep.subr.mxu0 0.0
    %251 = vmatpush1.msra.mxu0 0.0
    %252 = vmatprep.subr.mxu0 0.0
    %253 = vmatpush1.msra.mxu0 0.0
    %254 = vmatprep.subr.mxu0 0.0
    %255 = vmatpush1.msra.mxu0 0.0
    %256 = vmatprep.subr.mxu0 0.0
    %257 = vmatpush1.msra.mxu0 0.0
    %258 = vmatprep.subr.mxu0 0.0
    %259 = vmatpush1.msra.mxu0 0.0
    %260 = vmatprep.subr.mxu0 0.0
    %261 = vmatpush1.msra.mxu0 0.0
    %262 = vmatprep.subr.mxu0 %v162
    %263 = vmatpush1.msra.mxu0 %v161
    %264 = vmatprep.subr.mxu0 %v152
    %265 = vmatpush1.msra.mxu0 %v151
    %266 = vmatprep.subr.mxu0 %v142
    %267 = vmatpush1.msra.mxu0 %v141
    %268 = vmatprep.subr.mxu0 %v132
    %269 = vmatpush1.msra.mxu0 %v131
    %270 = vmatprep.subr.mxu0 0.0
    %271 = vmatpush2.msra.mxu0 0.0
    %272 = vmatprep.subr.mxu0 0.0
    %273 = vmatpush2.msra.mxu0 0.0
    %274 = vmatprep.subr.mxu0 0.0
    %275 = vmatpush2.msra.mxu0 0.0
    %276 = vmatprep.subr.mxu0 0.0
    %277 = vmatpush2.msra.mxu0 0.0
    %278 = vmatprep.subr.mxu0 0.0
    %279 = vmatpush2.msra.mxu0 0.0
    %280 = vmatprep.subr.mxu0 0.0
    %281 = vmatpush2.msra.mxu0 0.0
    %282 = vmatprep.subr.mxu0 0.0
    %283 = vmatpush2.msra.mxu0 0.0
    %284 = vmatprep.subr.mxu0 0.0
    %285 = vmatpush2.msra.mxu0 0.0
    %286 = vmatprep.subr.mxu0 0.0
    %287 = vmatpush2.msra.mxu0 0.0
    %288 = vmatprep.subr.mxu0 0.0
    %289 = vmatpush2.msra.mxu0 0.0
    %290 = vmatprep.subr.mxu0 0.0
    %291 = vmatpush2.msra.mxu0 0.0
    %292 = vmatprep.subr.mxu0 0.0
    %293 = vmatpush2.msra.mxu0 0.0
    %294 = vmatprep.subr.mxu0 0.0
    %295 = vmatpush2.msra.mxu0 0.0
    %296 = vmatprep.subr.mxu0 0.0
    %297 = vmatpush2.msra.mxu0 0.0
    %298 = vmatprep.subr.mxu0 0.0
    %299 = vmatpush2.msra.mxu0 0.0
    %300 = vmatprep.subr.mxu0 0.0
    %301 = vmatpush2.msra.mxu0 0.0
    %302 = vmatprep.mubr.f32.mxu0 0.0
    %303 = vmatmul.mubr.f32.gmra.mxu0 %v227
    %v304 = vpop.f32.mrf.mxu0
    %v305 = vadd.f32 %v178, %v304
    %v306 = vpop.f32.mrf.mxu0
    %v307 = vadd.f32 %v182, %v306
    %308 = vmatprep.mubr.f32.mxu0 0.0
    %309 = vmatmul.mubr.f32.gmra.mxu0 %v230
    %v310 = vpop.f32.mrf.mxu0
    %v311 = vadd.f32 %v178, %v310
    %v312 = vpop.f32.mrf.mxu0
    %v313 = vadd.f32 %v182, %v312
    %314 = vmatprep.mubr.f32.mxu0 0.0
    %315 = vmatmul.mubr.f32.gmra.mxu0 %v233
    %v316 = vpop.f32.mrf.mxu0
    %v317 = vadd.f32 %v178, %v316
    %v318 = vpop.f32.mrf.mxu0
    %v319 = vadd.f32 %v182, %v318
    %320 = vmatprep.mubr.f32.mxu0 0.0
    %321 = vmatmul.mubr.f32.gmra.mxu0 %v236
    %v322 = vpop.f32.mrf.mxu0
    %v323 = vadd.f32 %v178, %v322
    %v324 = vpop.f32.mrf.mxu0
    %v325 = vadd.f32 %v182, %v324
    %326 = vdwg.mxu0
    %327 = vmatprep.subr.mxu0 0.0
    %328 = vmatpush1.msra.mxu0 0.0
    %329 = vmatprep.subr.mxu0 0.0
    %330 = vmatpush1.msra.mxu0 0.0
    %331 = vmatprep.subr.mxu0 0.0
    %332 = vmatpush1.msra.mxu0 0.0
    %333 = vmatprep.subr.mxu0 0.0
    %334 = vmatpush1.msra.mxu0 0.0
    %335 = vmatprep.subr.mxu0 0.0
    %336 = vmatpush1.msra.mxu0 0.0
    %337 = vmatprep.subr.mxu0 0.0
    %338 = vmatpush1.msra.mxu0 0.0
    %339 = vmatprep.subr.mxu0 0.0
    %340 = vmatpush1.msra.mxu0 0.0
    %341 = vmatprep.subr.mxu0 0.0
    %342 = vmatpush1.msra.mxu0 0.0
    %343 = vmatprep.subr.mxu0 0.0
    %344 = vmatpush1.msra.mxu0 0.0
    %345 = vmatprep.subr.mxu0 0.0
    %346 = vmatpush1.msra.mxu0 0.0
    %347 = vmatprep.subr.mxu0 0.0
    %348 = vmatpush1.msra.mxu0 0.0
    %349 = vmatprep.subr.mxu0 0.0
    %350 = vmatpush1.msra.mxu0 0.0
    %351 = vmatprep.subr.mxu0 %v164
    %352 = vmatpush1.msra.mxu0 %v163
    %353 = vmatprep.subr.mxu0 %v154
    %354 = vmatpush1.msra.mxu0 %v153
    %355 = vmatprep.subr.mxu0 %v144
    %356 = vmatpush1.msra.mxu0 %v143
    %357 = vmatprep.subr.mxu0 %v134
    %358 = vmatpush1.msra.mxu0 %v133
    %359 = vmatprep.subr.mxu0 0.0
    %360 = vmatpush2.msra.mxu0 0.0
    %361 = vmatprep.subr.mxu0 0.0
    %362 = vmatpush2.msra.mxu0 0.0
    %363 = vmatprep.subr.mxu0 0.0
    %364 = vmatpush2.msra.mxu0 0.0
    %365 = vmatprep.subr.mxu0 0.0
    %366 = vmatpush2.msra.mxu0 0.0
    %367 = vmatprep.subr.mxu0 0.0
    %368 = vmatpush2.msra.mxu0 0.0
    %369 = vmatprep.subr.mxu0 0.0
    %370 = vmatpush2.msra.mxu0 0.0
    %371 = vmatprep.subr.mxu0 0.0
    %372 = vmatpush2.msra.mxu0 0.0
    %373 = vmatprep.subr.mxu0 0.0
    %374 = vmatpush2.msra.mxu0 0.0
    %375 = vmatprep.subr.mxu0 0.0
    %376 = vmatpush2.msra.mxu0 0.0
    %377 = vmatprep.subr.mxu0 0.0
    %378 = vmatpush2.msra.mxu0 0.0
    %379 = vmatprep.subr.mxu0 0.0
    %380 = vmatpush2.msra.mxu0 0.0
    %381 = vmatprep.subr.mxu0 0.0
    %382 = vmatpush2.msra.mxu0 0.0
    %383 = vmatprep.subr.mxu0 0.0
    %384 = vmatpush2.msra.mxu0 0.0
    %385 = vmatprep.subr.mxu0 0.0
    %386 = vmatpush2.msra.mxu0 0.0
    %387 = vmatprep.subr.mxu0 0.0
    %388 = vmatpush2.msra.mxu0 0.0
    %389 = vmatprep.subr.mxu0 0.0
    %390 = vmatpush2.msra.mxu0 0.0
    %391 = vmatprep.mubr.f32.mxu0 0.0
    %392 = vmatmul.mubr.f32.gmra.mxu0 %v227
    %v393 = vpop.f32.mrf.mxu0
    %v394 = vadd.f32 %v186, %v393
    %v395 = vpop.f32.mrf.mxu0
    %v396 = vadd.f32 %v190, %v395
    %397 = vmatprep.mubr.f32.mxu0 0.0
    %398 = vmatmul.mubr.f32.gmra.mxu0 %v230
    %v399 = vpop.f32.mrf.mxu0
    %v400 = vadd.f32 %v186, %v399
    %v401 = vpop.f32.mrf.mxu0
    %v402 = vadd.f32 %v190, %v401
    %403 = vmatprep.mubr.f32.mxu0 0.0
    %404 = vmatmul.mubr.f32.gmra.mxu0 %v233
    %v405 = vpop.f32.mrf.mxu0
    %v406 = vadd.f32 %v186, %v405
    %v407 = vpop.f32.mrf.mxu0
    %v408 = vadd.f32 %v190, %v407
    %409 = vmatprep.mubr.f32.mxu0 0.0
    %410 = vmatmul.mubr.f32.gmra.mxu0 %v236
    %v411 = vpop.f32.mrf.mxu0
    %v412 = vadd.f32 %v186, %v411
    %v413 = vpop.f32.mrf.mxu0
    %v414 = vadd.f32 %v190, %v413
    %415 = vdwg.mxu0
    %416 = vmatprep.subr.mxu0 0.0
    %417 = vmatpush1.msra.mxu0 0.0
    %418 = vmatprep.subr.mxu0 0.0
    %419 = vmatpush1.msra.mxu0 0.0
    %420 = vmatprep.subr.mxu0 0.0
    %421 = vmatpush1.msra.mxu0 0.0
    %422 = vmatprep.subr.mxu0 0.0
    %423 = vmatpush1.msra.mxu0 0.0
    %424 = vmatprep.subr.mxu0 0.0
    %425 = vmatpush1.msra.mxu0 0.0
    %426 = vmatprep.subr.mxu0 0.0
    %427 = vmatpush1.msra.mxu0 0.0
    %428 = vmatprep.subr.mxu0 0.0
    %429 = vmatpush1.msra.mxu0 0.0
    %430 = vmatprep.subr.mxu0 0.0
    %431 = vmatpush1.msra.mxu0 0.0
    %432 = vmatprep.subr.mxu0 0.0
    %433 = vmatpush1.msra.mxu0 0.0
    %434 = vmatprep.subr.mxu0 0.0
    %435 = vmatpush1.msra.mxu0 0.0
    %436 = vmatprep.subr.mxu0 0.0
    %437 = vmatpush1.msra.mxu0 0.0
    %438 = vmatprep.subr.mxu0 0.0
    %439 = vmatpush1.msra.mxu0 0.0
    %440 = vmatprep.subr.mxu0 %v166
    %441 = vmatpush1.msra.mxu0 %v165
    %442 = vmatprep.subr.mxu0 %v156
    %443 = vmatpush1.msra.mxu0 %v155
    %444 = vmatprep.subr.mxu0 %v146
    %445 = vmatpush1.msra.mxu0 %v145
    %446 = vmatprep.subr.mxu0 %v136
    %447 = vmatpush1.msra.mxu0 %v135
    %448 = vmatprep.subr.mxu0 0.0
    %449 = vmatpush2.msra.mxu0 0.0
    %450 = vmatprep.subr.mxu0 0.0
    %451 = vmatpush2.msra.mxu0 0.0
    %452 = vmatprep.subr.mxu0 0.0
    %453 = vmatpush2.msra.mxu0 0.0
    %454 = vmatprep.subr.mxu0 0.0
    %455 = vmatpush2.msra.mxu0 0.0
    %456 = vmatprep.subr.mxu0 0.0
    %457 = vmatpush2.msra.mxu0 0.0
    %458 = vmatprep.subr.mxu0 0.0
    %459 = vmatpush2.msra.mxu0 0.0
    %460 = vmatprep.subr.mxu0 0.0
    %461 = vmatpush2.msra.mxu0 0.0
    %462 = vmatprep.subr.mxu0 0.0
    %463 = vmatpush2.msra.mxu0 0.0
    %464 = vmatprep.subr.mxu0 0.0
    %465 = vmatpush2.msra.mxu0 0.0
    %466 = vmatprep.subr.mxu0 0.0
    %467 = vmatpush2.msra.mxu0 0.0
    %468 = vmatprep.subr.mxu0 0.0
    %469 = vmatpush2.msra.mxu0 0.0
    %470 = vmatprep.subr.mxu0 0.0
    %471 = vmatpush2.msra.mxu0 0.0
    %472 = vmatprep.subr.mxu0 0.0
    %473 = vmatpush2.msra.mxu0 0.0
    %474 = vmatprep.subr.mxu0 0.0
    %475 = vmatpush2.msra.mxu0 0.0
    %476 = vmatprep.subr.mxu0 0.0
    %477 = vmatpush2.msra.mxu0 0.0
    %478 = vmatprep.subr.mxu0 0.0
    %479 = vmatpush2.msra.mxu0 0.0
    %480 = vmatprep.mubr.f32.mxu0 0.0
    %481 = vmatmul.mubr.f32.gmra.mxu0 %v227
    %v482 = vpop.f32.mrf.mxu0
    %v483 = vadd.f32 %v194, %v482
    %v484 = vpop.f32.mrf.mxu0
    %v485 = vadd.f32 %v198, %v484
    %486 = vmatprep.mubr.f32.mxu0 0.0
    %487 = vmatmul.mubr.f32.gmra.mxu0 %v230
    %v488 = vpop.f32.mrf.mxu0
    %v489 = vadd.f32 %v194, %v488
    %v490 = vpop.f32.mrf.mxu0
    %v491 = vadd.f32 %v198, %v490
    %492 = vmatprep.mubr.f32.mxu0 0.0
    %493 = vmatmul.mubr.f32.gmra.mxu0 %v233
    %v494 = vpop.f32.mrf.mxu0
    %v495 = vadd.f32 %v194, %v494
    %v496 = vpop.f32.mrf.mxu0
    %v497 = vadd.f32 %v198, %v496
    %498 = vmatprep.mubr.f32.mxu0 0.0
    %499 = vmatmul.mubr.f32.gmra.mxu0 %v236
    %v500 = vpop.f32.mrf.mxu0
    %v501 = vadd.f32 %v194, %v500
    %v502 = vpop.f32.mrf.mxu0
    %v503 = vadd.f32 %v198, %v502
    %504 = vdwg.mxu0
    %505 = vmatprep.subr.mxu0 0.0
    %506 = vmatpush1.msra.mxu0 0.0
    %507 = vmatprep.subr.mxu0 0.0
    %508 = vmatpush1.msra.mxu0 0.0
    %509 = vmatprep.subr.mxu0 0.0
    %510 = vmatpush1.msra.mxu0 0.0
    %511 = vmatprep.subr.mxu0 0.0
    %512 = vmatpush1.msra.mxu0 0.0
    %513 = vmatprep.subr.mxu0 0.0
    %514 = vmatpush1.msra.mxu0 0.0
    %515 = vmatprep.subr.mxu0 0.0
    %516 = vmatpush1.msra.mxu0 0.0
    %517 = vmatprep.subr.mxu0 0.0
    %518 = vmatpush1.msra.mxu0 0.0
    %519 = vmatprep.subr.mxu0 0.0
    %520 = vmatpush1.msra.mxu0 0.0
    %521 = vmatprep.subr.mxu0 0.0
    %522 = vmatpush1.msra.mxu0 0.0
    %523 = vmatprep.subr.mxu0 0.0
    %524 = vmatpush1.msra.mxu0 0.0
    %525 = vmatprep.subr.mxu0 0.0
    %526 = vmatpush1.msra.mxu0 0.0
    %527 = vmatprep.subr.mxu0 0.0
    %528 = vmatpush1.msra.mxu0 0.0
    %529 = vmatprep.subr.mxu0 %v168
    %530 = vmatpush1.msra.mxu0 %v167
    %531 = vmatprep.subr.mxu0 %v158
    %532 = vmatpush1.msra.mxu0 %v157
    %533 = vmatprep.subr.mxu0 %v148
    %534 = vmatpush1.msra.mxu0 %v147
    %535 = vmatprep.subr.mxu0 %v138
    %536 = vmatpush1.msra.mxu0 %v137
    %537 = vmatprep.subr.mxu0 0.0
    %538 = vmatpush2.msra.mxu0 0.0
    %539 = vmatprep.subr.mxu0 0.0
    %540 = vmatpush2.msra.mxu0 0.0
    %541 = vmatprep.subr.mxu0 0.0
    %542 = vmatpush2.msra.mxu0 0.0
    %543 = vmatprep.subr.mxu0 0.0
    %544 = vmatpush2.msra.mxu0 0.0
    %545 = vmatprep.subr.mxu0 0.0
    %546 = vmatpush2.msra.mxu0 0.0
    %547 = vmatprep.subr.mxu0 0.0
    %548 = vmatpush2.msra.mxu0 0.0
    %549 = vmatprep.subr.mxu0 0.0
    %550 = vmatpush2.msra.mxu0 0.0
    %551 = vmatprep.subr.mxu0 0.0
    %552 = vmatpush2.msra.mxu0 0.0
    %553 = vmatprep.subr.mxu0 0.0
    %554 = vmatpush2.msra.mxu0 0.0
    %555 = vmatprep.subr.mxu0 0.0
    %556 = vmatpush2.msra.mxu0 0.0
    %557 = vmatprep.subr.mxu0 0.0
    %558 = vmatpush2.msra.mxu0 0.0
    %559 = vmatprep.subr.mxu0 0.0
    %560 = vmatpush2.msra.mxu0 0.0
    %561 = vmatprep.subr.mxu0 0.0
    %562 = vmatpush2.msra.mxu0 0.0
    %563 = vmatprep.subr.mxu0 0.0
    %564 = vmatpush2.msra.mxu0 0.0
    %565 = vmatprep.subr.mxu0 0.0
    %566 = vmatpush2.msra.mxu0 0.0
    %567 = vmatprep.subr.mxu0 0.0
    %568 = vmatpush2.msra.mxu0 0.0
    %569 = vmatprep.mubr.f32.mxu0 0.0
    %570 = vmatmul.mubr.f32.gmra.mxu0 %v227
    %v571 = vpop.f32.mrf.mxu0
    %v572 = vadd.f32 %v202, %v571
    %v573 = vpop.f32.mrf.mxu0
    %v574 = vadd.f32 %v206, %v573
    %575 = vmatprep.mubr.f32.mxu0 0.0
    %576 = vmatmul.mubr.f32.gmra.mxu0 %v230
    %v577 = vpop.f32.mrf.mxu0
    %v578 = vadd.f32 %v202, %v577
    %v579 = vpop.f32.mrf.mxu0
    %v580 = vadd.f32 %v206, %v579
    %581 = vmatprep.mubr.f32.mxu0 0.0
    %582 = vmatmul.mubr.f32.gmra.mxu0 %v233
    %v583 = vpop.f32.mrf.mxu0
    %v584 = vadd.f32 %v202, %v583
    %v585 = vpop.f32.mrf.mxu0
    %v586 = vadd.f32 %v206, %v585
    %587 = vmatprep.mubr.f32.mxu0 0.0
    %588 = vmatmul.mubr.f32.gmra.mxu0 %v236
    %v589 = vpop.f32.mrf.mxu0
    %v590 = vadd.f32 %v202, %v589
    %v591 = vpop.f32.mrf.mxu0
    %v592 = vadd.f32 %v206, %v591
    %593 = vdwg.mxu0
    %594 = vmatprep.subr.mxu0 0.0
    %595 = vmatpush1.msra.mxu0 0.0
    %596 = vmatprep.subr.mxu0 0.0
    %597 = vmatpush1.msra.mxu0 0.0
    %598 = vmatprep.subr.mxu0 0.0
    %599 = vmatpush1.msra.mxu0 0.0
    %600 = vmatprep.subr.mxu0 0.0
    %601 = vmatpush1.msra.mxu0 0.0
    %602 = vmatprep.subr.mxu0 0.0
    %603 = vmatpush1.msra.mxu0 0.0
    %604 = vmatprep.subr.mxu0 0.0
    %605 = vmatpush1.msra.mxu0 0.0
    %606 = vmatprep.subr.mxu0 0.0
    %607 = vmatpush1.msra.mxu0 0.0
    %608 = vmatprep.subr.mxu0 0.0
    %609 = vmatpush1.msra.mxu0 0.0
    %610 = vmatprep.subr.mxu0 0.0
    %611 = vmatpush1.msra.mxu0 0.0
    %612 = vmatprep.subr.mxu0 0.0
    %613 = vmatpush1.msra.mxu0 0.0
    %614 = vmatprep.subr.mxu0 0.0
    %615 = vmatpush1.msra.mxu0 0.0
    %616 = vmatprep.subr.mxu0 0.0
    %617 = vmatpush1.msra.mxu0 0.0
    %618 = vmatprep.subr.mxu0 %v170
    %619 = vmatpush1.msra.mxu0 %v169
    %620 = vmatprep.subr.mxu0 %v160
    %621 = vmatpush1.msra.mxu0 %v159
    %622 = vmatprep.subr.mxu0 %v150
    %623 = vmatpush1.msra.mxu0 %v149
    %624 = vmatprep.subr.mxu0 %v140
    %625 = vmatpush1.msra.mxu0 %v139
    %626 = vmatprep.subr.mxu0 0.0
    %627 = vmatpush2.msra.mxu0 0.0
    %628 = vmatprep.subr.mxu0 0.0
    %629 = vmatpush2.msra.mxu0 0.0
    %630 = vmatprep.subr.mxu0 0.0
    %631 = vmatpush2.msra.mxu0 0.0
    %632 = vmatprep.subr.mxu0 0.0
    %633 = vmatpush2.msra.mxu0 0.0
    %634 = vmatprep.subr.mxu0 0.0
    %635 = vmatpush2.msra.mxu0 0.0
    %636 = vmatprep.subr.mxu0 0.0
    %637 = vmatpush2.msra.mxu0 0.0
    %638 = vmatprep.subr.mxu0 0.0
    %639 = vmatpush2.msra.mxu0 0.0
    %640 = vmatprep.subr.mxu0 0.0
    %641 = vmatpush2.msra.mxu0 0.0
    %642 = vmatprep.subr.mxu0 0.0
    %643 = vmatpush2.msra.mxu0 0.0
    %644 = vmatprep.subr.mxu0 0.0
    %645 = vmatpush2.msra.mxu0 0.0
    %646 = vmatprep.subr.mxu0 0.0
    %647 = vmatpush2.msra.mxu0 0.0
    %648 = vmatprep.subr.mxu0 0.0
    %649 = vmatpush2.msra.mxu0 0.0
    %650 = vmatprep.subr.mxu0 0.0
    %651 = vmatpush2.msra.mxu0 0.0
    %652 = vmatprep.subr.mxu0 0.0
    %653 = vmatpush2.msra.mxu0 0.0
    %654 = vmatprep.subr.mxu0 0.0
    %655 = vmatpush2.msra.mxu0 0.0
    %656 = vmatprep.subr.mxu0 0.0
    %657 = vmatpush2.msra.mxu0 0.0
    %658 = vmatprep.mubr.f32.mxu0 0.0
    %659 = vmatmul.mubr.f32.gmra.mxu0 %v227
    %v660 = vpop.f32.mrf.mxu0
    %v661 = vadd.f32 %v210, %v660
    %v662 = vpop.f32.mrf.mxu0
    %v663 = vadd.f32 %v214, %v662
    %664 = vmatprep.mubr.f32.mxu0 0.0
    %665 = vmatmul.mubr.f32.gmra.mxu0 %v230
    %v666 = vpop.f32.mrf.mxu0
    %v667 = vadd.f32 %v210, %v666
    %v668 = vpop.f32.mrf.mxu0
    %v669 = vadd.f32 %v214, %v668
    %670 = vmatprep.mubr.f32.mxu0 0.0
    %671 = vmatmul.mubr.f32.gmra.mxu0 %v233
    %v672 = vpop.f32.mrf.mxu0
    %v673 = vadd.f32 %v210, %v672
    %v674 = vpop.f32.mrf.mxu0
    %v675 = vadd.f32 %v214, %v674
    %676 = vmatprep.mubr.f32.mxu0 0.0
    %677 = vmatmul.mubr.f32.gmra.mxu0 %v236
    %v678 = vpop.f32.mrf.mxu0
    %v679 = vadd.f32 %v210, %v678
    %v680 = vpop.f32.mrf.mxu0
    %v681 = vadd.f32 %v214, %v680
    %682 = vdwg.mxu0
    %v683 = vadd.f32 %v120, 1.0
    %v684 = vadd.f32 %v121, 1.0
    %v685 = vadd.f32 %v122, 1.0
    %v686 = vadd.f32 %v123, 1.0
    %v687 = vsel %vm129, 1, 0
    %v688 = vsel %vm130, 1, 0
    %vm689 = vcmp.eq.s32.totalorder %v687, 1
    %vm690 = vcmp.eq.s32.totalorder %v688, 1
    %v691 = vsel %vm689, %v683, %v120
    %v692 = vsel %vm690, %v684, %v121
    %v693 = vsel %vm689, %v685, %v122
    %v694 = vsel %vm690, %v686, %v123
    %vm695 = vcmask 130048
    %v696 = vsel %vm695, %v691, 0.0
    %697 = vadd.xlane.f32.xlu0 %v696
    %v698 = vpop.xlane.xlu0 %697
    %v699 = vsel %vm695, %v692, 0.0
    %700 = vadd.xlane.f32.xlu0 %v699
    %v701 = vpop.xlane.xlu0 %700
    %v702 = vsel %vm695, %v693, 0.0
    %703 = vadd.xlane.f32.xlu0 %v702
    %v704 = vpop.xlane.xlu0 %703
    %v705 = vsel %vm695, %v694, 0.0
    %706 = vadd.xlane.f32.xlu0 %v705
    %v707 = vpop.xlane.xlu0 %706
    %v708 = vmax.f32 %v698, 1e-12
    %v709 = vmax.f32 %v701, 1e-12
    %v710 = vmax.f32 %v704, 1e-12
    %v711 = vmax.f32 %v707, 1e-12
    %v712 = vadd.f32 %v696, %v699
    %v713 = vrot.slane %v712, 4
    %v714 = vadd.f32 %v712, %v713
    %v715 = vrot.slane %v714, 2
    %v716 = vadd.f32 %v714, %v715
    %v717 = vrot.slane %v716, 1
    %v718 = vadd.f32 %v716, %v717
    %v719 = vadd.f32 %v702, %v705
    %v720 = vrot.slane %v719, 4
    %v721 = vadd.f32 %v719, %v720
    %v722 = vrot.slane %v721, 2
    %v723 = vadd.f32 %v721, %v722
    %v724 = vrot.slane %v723, 1
    %v725 = vadd.f32 %v723, %v724
    %v726 = vmax.f32 %v718, 1e-12
    %v727 = vmax.f32 %v725, 1e-12
    %v728 = vrsqrt.pop %v708
    %v729 = vrsqrt.pop %v709
    %v730 = vrsqrt.pop %v710
    %v731 = vrsqrt.pop %v711
    %v732 = vrsqrt.pop %v726
    %v733 = vrsqrt.pop %v727
    %v734 = vmul.f32 %v728, %v732
    %v735 = vmul.f32 %v729, %v732
    %v736 = vmul.f32 %v730, %v733
    %v737 = vmul.f32 %v731, %v733
    %v738 = vmul.f32 %v691, %v734
    %v739 = vmul.f32 %v692, %v735
    %v740 = vmul.f32 %v693, %v736
    %v741 = vmul.f32 %v694, %v737
    %742 = vxpose.xlu0.b32.start [1/16] %v738, 128
    %743 = vxpose.xlu0.b32.cont [2/16] %v739, 128
    %744 = vxpose.xlu0.b32.cont [3/16] 0.0, 128
    %745 = vxpose.xlu0.b32.cont [4/16] 0.0, 128
    %746 = vxpose.xlu0.b32.cont [5/16] 0.0, 128
    %747 = vxpose.xlu0.b32.cont [6/16] 0.0, 128
    %748 = vxpose.xlu0.b32.cont [7/16] 0.0, 128
    %749 = vxpose.xlu0.b32.cont [8/16] 0.0, 128
    %750 = vxpose.xlu0.b32.cont [9/16] 0.0, 128
    %751 = vxpose.xlu0.b32.cont [10/16] 0.0, 128
    %752 = vxpose.xlu0.b32.cont [11/16] 0.0, 128
    %753 = vxpose.xlu0.b32.cont [12/16] 0.0, 128
    %754 = vxpose.xlu0.b32.cont [13/16] 0.0, 128
    %755 = vxpose.xlu0.b32.cont [14/16] 0.0, 128
    %756 = vxpose.xlu0.b32.cont [15/16] 0.0, 128
    %757 = vxpose.xlu0.b32.end [16/16] 0.0, 128
    %v758 = vpop.trf.xlu0
    %v759 = vpop.trf.xlu0
    %v760 = vpop.trf.xlu0
    %v761 = vpop.trf.xlu0
    %v762 = vpop.trf.xlu0
    %v763 = vpop.trf.xlu0
    %v764 = vpop.trf.xlu0
    %v765 = vpop.trf.xlu0
    %v766 = vpop.trf.xlu0
    %v767 = vpop.trf.xlu0
    %v768 = vpop.trf.xlu0
    %v769 = vpop.trf.xlu0
    %v770 = vpop.trf.xlu0
    %v771 = vpop.trf.xlu0
    %v772 = vpop.trf.xlu0
    %v773 = vpop.trf.xlu0
    %774 = vxpose.xlu0.b32.start [1/16] %v740, 128
    %775 = vxpose.xlu0.b32.cont [2/16] %v741, 128
    %776 = vxpose.xlu0.b32.cont [3/16] 0.0, 128
    %777 = vxpose.xlu0.b32.cont [4/16] 0.0, 128
    %778 = vxpose.xlu0.b32.cont [5/16] 0.0, 128
    %779 = vxpose.xlu0.b32.cont [6/16] 0.0, 128
    %780 = vxpose.xlu0.b32.cont [7/16] 0.0, 128
    %781 = vxpose.xlu0.b32.cont [8/16] 0.0, 128
    %782 = vxpose.xlu0.b32.cont [9/16] 0.0, 128
    %783 = vxpose.xlu0.b32.cont [10/16] 0.0, 128
    %784 = vxpose.xlu0.b32.cont [11/16] 0.0, 128
    %785 = vxpose.xlu0.b32.cont [12/16] 0.0, 128
    %786 = vxpose.xlu0.b32.cont [13/16] 0.0, 128
    %787 = vxpose.xlu0.b32.cont [14/16] 0.0, 128
    %788 = vxpose.xlu0.b32.cont [15/16] 0.0, 128
    %789 = vxpose.xlu0.b32.end [16/16] 0.0, 128
    %v790 = vpop.trf.xlu0
    %v791 = vpop.trf.xlu0
    %v792 = vpop.trf.xlu0
    %v793 = vpop.trf.xlu0
    %v794 = vpop.trf.xlu0
    %v795 = vpop.trf.xlu0
    %v796 = vpop.trf.xlu0
    %v797 = vpop.trf.xlu0
    %v798 = vpop.trf.xlu0
    %v799 = vpop.trf.xlu0
    %v800 = vpop.trf.xlu0
    %v801 = vpop.trf.xlu0
    %v802 = vpop.trf.xlu0
    %v803 = vpop.trf.xlu0
    %v804 = vpop.trf.xlu0
    %v805 = vpop.trf.xlu0
    %v807 = vsel %vm695, %v738, 0
    %v810 = vsel %vm695, %v739, 0
    %812 = vmatprep.subr.mxu0 0.0
    %813 = vmatpush1.msra.mxu0 0.0
    %814 = vmatprep.subr.mxu0 0.0
    %815 = vmatpush1.msra.mxu0 0.0
    %816 = vmatprep.subr.mxu0 0.0
    %817 = vmatpush1.msra.mxu0 0.0
    %818 = vmatprep.subr.mxu0 0.0
    %819 = vmatpush1.msra.mxu0 0.0
    %820 = vmatprep.subr.mxu0 0.0
    %821 = vmatpush1.msra.mxu0 0.0
    %822 = vmatprep.subr.mxu0 0.0
    %823 = vmatpush1.msra.mxu0 0.0
    %824 = vmatprep.subr.mxu0 0.0
    %825 = vmatpush1.msra.mxu0 0.0
    %826 = vmatprep.subr.mxu0 0.0
    %827 = vmatpush1.msra.mxu0 0.0
    %828 = vmatprep.subr.mxu0 0.0
    %829 = vmatpush1.msra.mxu0 0.0
    %830 = vmatprep.subr.mxu0 0.0
    %831 = vmatpush1.msra.mxu0 0.0
    %832 = vmatprep.subr.mxu0 0.0
    %833 = vmatpush1.msra.mxu0 0.0
    %834 = vmatprep.subr.mxu0 0.0
    %835 = vmatpush1.msra.mxu0 0.0
    %836 = vmatprep.subr.mxu0 0.0
    %837 = vmatpush1.msra.mxu0 0.0
    %838 = vmatprep.subr.mxu0 0.0
    %839 = vmatpush1.msra.mxu0 0.0
    %840 = vmatprep.subr.mxu0 0.0
    %841 = vmatpush1.msra.mxu0 %v311
    %842 = vmatprep.subr.mxu0 0.0
    %843 = vmatpush1.msra.mxu0 %v305
    %844 = vmatprep.subr.mxu0 0.0
    %845 = vmatpush2.msra.mxu0 0.0
    %846 = vmatprep.subr.mxu0 0.0
    %847 = vmatpush2.msra.mxu0 0.0
    %848 = vmatprep.subr.mxu0 0.0
    %849 = vmatpush2.msra.mxu0 0.0
    %850 = vmatprep.subr.mxu0 0.0
    %851 = vmatpush2.msra.mxu0 0.0
    %852 = vmatprep.subr.mxu0 0.0
    %853 = vmatpush2.msra.mxu0 0.0
    %854 = vmatprep.subr.mxu0 0.0
    %855 = vmatpush2.msra.mxu0 0.0
    %856 = vmatprep.subr.mxu0 0.0
    %857 = vmatpush2.msra.mxu0 0.0
    %858 = vmatprep.subr.mxu0 0.0
    %859 = vmatpush2.msra.mxu0 0.0
    %860 = vmatprep.subr.mxu0 0.0
    %861 = vmatpush2.msra.mxu0 0.0
    %862 = vmatprep.subr.mxu0 0.0
    %863 = vmatpush2.msra.mxu0 0.0
    %864 = vmatprep.subr.mxu0 0.0
    %865 = vmatpush2.msra.mxu0 0.0
    %866 = vmatprep.subr.mxu0 0.0
    %867 = vmatpush2.msra.mxu0 0.0
    %868 = vmatprep.subr.mxu0 0.0
    %869 = vmatpush2.msra.mxu0 0.0
    %870 = vmatprep.subr.mxu0 0.0
    %871 = vmatpush2.msra.mxu0 0.0
    %872 = vmatprep.subr.mxu0 0.0
    %873 = vmatpush2.msra.mxu0 0.0
    %874 = vmatprep.subr.mxu0 0.0
    %875 = vmatpush2.msra.mxu0 0.0
    %876 = vmatprep.mubr.f32.mxu0 0.0
    %877 = vmatmul.mubr.f32.gmra.mxu0 %v807
    %v878 = vpop.f32.mrf.mxu0
    %v879 = vadd.f32 0.0, %v878
    %v880 = vpop.f32.mrf.mxu0
    %881 = vmatprep.mubr.f32.mxu0 0.0
    %882 = vmatmul.mubr.f32.gmra.mxu0 %v810
    %v883 = vpop.f32.mrf.mxu0
    %v884 = vadd.f32 0.0, %v883
    %v885 = vpop.f32.mrf.mxu0
    %886 = vdwg.mxu0
    %v888 = vsel %vm695, %v740, 0
    %v891 = vsel %vm695, %v741, 0
    %893 = vmatprep.subr.mxu0 0.0
    %894 = vmatpush1.msra.mxu0 0.0
    %895 = vmatprep.subr.mxu0 0.0
    %896 = vmatpush1.msra.mxu0 0.0
    %897 = vmatprep.subr.mxu0 0.0
    %898 = vmatpush1.msra.mxu0 0.0
    %899 = vmatprep.subr.mxu0 0.0
    %900 = vmatpush1.msra.mxu0 0.0
    %901 = vmatprep.subr.mxu0 0.0
    %902 = vmatpush1.msra.mxu0 0.0
    %903 = vmatprep.subr.mxu0 0.0
    %904 = vmatpush1.msra.mxu0 0.0
    %905 = vmatprep.subr.mxu0 0.0
    %906 = vmatpush1.msra.mxu0 0.0
    %907 = vmatprep.subr.mxu0 0.0
    %908 = vmatpush1.msra.mxu0 0.0
    %909 = vmatprep.subr.mxu0 0.0
    %910 = vmatpush1.msra.mxu0 0.0
    %911 = vmatprep.subr.mxu0 0.0
    %912 = vmatpush1.msra.mxu0 0.0
    %913 = vmatprep.subr.mxu0 0.0
    %914 = vmatpush1.msra.mxu0 0.0
    %915 = vmatprep.subr.mxu0 0.0
    %916 = vmatpush1.msra.mxu0 0.0
    %917 = vmatprep.subr.mxu0 0.0
    %918 = vmatpush1.msra.mxu0 0.0
    %919 = vmatprep.subr.mxu0 0.0
    %920 = vmatpush1.msra.mxu0 0.0
    %921 = vmatprep.subr.mxu0 0.0
    %922 = vmatpush1.msra.mxu0 %v323
    %923 = vmatprep.subr.mxu0 0.0
    %924 = vmatpush1.msra.mxu0 %v317
    %925 = vmatprep.subr.mxu0 0.0
    %926 = vmatpush2.msra.mxu0 0.0
    %927 = vmatprep.subr.mxu0 0.0
    %928 = vmatpush2.msra.mxu0 0.0
    %929 = vmatprep.subr.mxu0 0.0
    %930 = vmatpush2.msra.mxu0 0.0
    %931 = vmatprep.subr.mxu0 0.0
    %932 = vmatpush2.msra.mxu0 0.0
    %933 = vmatprep.subr.mxu0 0.0
    %934 = vmatpush2.msra.mxu0 0.0
    %935 = vmatprep.subr.mxu0 0.0
    %936 = vmatpush2.msra.mxu0 0.0
    %937 = vmatprep.subr.mxu0 0.0
    %938 = vmatpush2.msra.mxu0 0.0
    %939 = vmatprep.subr.mxu0 0.0
    %940 = vmatpush2.msra.mxu0 0.0
    %941 = vmatprep.subr.mxu0 0.0
    %942 = vmatpush2.msra.mxu0 0.0
    %943 = vmatprep.subr.mxu0 0.0
    %944 = vmatpush2.msra.mxu0 0.0
    %945 = vmatprep.subr.mxu0 0.0
    %946 = vmatpush2.msra.mxu0 0.0
    %947 = vmatprep.subr.mxu0 0.0
    %948 = vmatpush2.msra.mxu0 0.0
    %949 = vmatprep.subr.mxu0 0.0
    %950 = vmatpush2.msra.mxu0 0.0
    %951 = vmatprep.subr.mxu0 0.0
    %952 = vmatpush2.msra.mxu0 0.0
    %953 = vmatprep.subr.mxu0 0.0
    %954 = vmatpush2.msra.mxu0 0.0
    %955 = vmatprep.subr.mxu0 0.0
    %956 = vmatpush2.msra.mxu0 0.0
    %957 = vmatprep.mubr.f32.mxu0 0.0
    %958 = vmatmul.mubr.f32.gmra.mxu0 %v888
    %v959 = vpop.f32.mrf.mxu0
    %v960 = vadd.f32 0.0, %v959
    %v961 = vpop.f32.mrf.mxu0
    %962 = vmatprep.mubr.f32.mxu0 0.0
    %963 = vmatmul.mubr.f32.gmra.mxu0 %v891
    %v964 = vpop.f32.mrf.mxu0
    %v965 = vadd.f32 0.0, %v964
    %v966 = vpop.f32.mrf.mxu0
    %967 = vdwg.mxu0
    %v969 = vsel %vm695, %v758, 0
    %v972 = vsel %vm695, %v759, 0
    %974 = vmatprep.subr.mxu0 0.0
    %975 = vmatpush1.msra.mxu0 0.0
    %976 = vmatprep.subr.mxu0 0.0
    %977 = vmatpush1.msra.mxu0 0.0
    %978 = vmatprep.subr.mxu0 0.0
    %979 = vmatpush1.msra.mxu0 0.0
    %980 = vmatprep.subr.mxu0 0.0
    %981 = vmatpush1.msra.mxu0 0.0
    %982 = vmatprep.subr.mxu0 0.0
    %983 = vmatpush1.msra.mxu0 0.0
    %984 = vmatprep.subr.mxu0 0.0
    %985 = vmatpush1.msra.mxu0 0.0
    %986 = vmatprep.subr.mxu0 0.0
    %987 = vmatpush1.msra.mxu0 0.0
    %988 = vmatprep.subr.mxu0 0.0
    %989 = vmatpush1.msra.mxu0 0.0
    %990 = vmatprep.subr.mxu0 0.0
    %991 = vmatpush1.msra.mxu0 0.0
    %992 = vmatprep.subr.mxu0 0.0
    %993 = vmatpush1.msra.mxu0 0.0
    %994 = vmatprep.subr.mxu0 0.0
    %995 = vmatpush1.msra.mxu0 0.0
    %996 = vmatprep.subr.mxu0 0.0
    %997 = vmatpush1.msra.mxu0 0.0
    %998 = vmatprep.subr.mxu0 0.0
    %999 = vmatpush1.msra.mxu0 0.0
    %1000 = vmatprep.subr.mxu0 0.0
    %1001 = vmatpush1.msra.mxu0 0.0
    %1002 = vmatprep.subr.mxu0 0.0
    %1003 = vmatpush1.msra.mxu0 %v313
    %1004 = vmatprep.subr.mxu0 0.0
    %1005 = vmatpush1.msra.mxu0 %v307
    %1006 = vmatprep.subr.mxu0 0.0
    %1007 = vmatpush2.msra.mxu0 0.0
    %1008 = vmatprep.subr.mxu0 0.0
    %1009 = vmatpush2.msra.mxu0 0.0
    %1010 = vmatprep.subr.mxu0 0.0
    %1011 = vmatpush2.msra.mxu0 0.0
    %1012 = vmatprep.subr.mxu0 0.0
    %1013 = vmatpush2.msra.mxu0 0.0
    %1014 = vmatprep.subr.mxu0 0.0
    %1015 = vmatpush2.msra.mxu0 0.0
    %1016 = vmatprep.subr.mxu0 0.0
    %1017 = vmatpush2.msra.mxu0 0.0
    %1018 = vmatprep.subr.mxu0 0.0
    %1019 = vmatpush2.msra.mxu0 0.0
    %1020 = vmatprep.subr.mxu0 0.0
    %1021 = vmatpush2.msra.mxu0 0.0
    %1022 = vmatprep.subr.mxu0 0.0
    %1023 = vmatpush2.msra.mxu0 0.0
    %1024 = vmatprep.subr.mxu0 0.0
    %1025 = vmatpush2.msra.mxu0 0.0
    %1026 = vmatprep.subr.mxu0 0.0
    %1027 = vmatpush2.msra.mxu0 0.0
    %1028 = vmatprep.subr.mxu0 0.0
    %1029 = vmatpush2.msra.mxu0 0.0
    %1030 = vmatprep.subr.mxu0 0.0
    %1031 = vmatpush2.msra.mxu0 0.0
    %1032 = vmatprep.subr.mxu0 0.0
    %1033 = vmatpush2.msra.mxu0 0.0
    %1034 = vmatprep.subr.mxu0 0.0
    %1035 = vmatpush2.msra.mxu0 0.0
    %1036 = vmatprep.subr.mxu0 0.0
    %1037 = vmatpush2.msra.mxu0 0.0
    %1038 = vmatprep.mubr.f32.mxu0 0.0
    %1039 = vmatmul.mubr.f32.gmra.mxu0 %v969
    %v1040 = vpop.f32.mrf.mxu0
    %v1041 = vadd.f32 0.0, %v1040
    %v1042 = vpop.f32.mrf.mxu0
    %1043 = vmatprep.mubr.f32.mxu0 0.0
    %1044 = vmatmul.mubr.f32.gmra.mxu0 %v972
    %v1045 = vpop.f32.mrf.mxu0
    %v1046 = vadd.f32 0.0, %v1045
    %v1047 = vpop.f32.mrf.mxu0
    %1048 = vdwg.mxu0
    %v1050 = vsel %vm695, %v790, 0
    %v1053 = vsel %vm695, %v791, 0
    %1055 = vmatprep.subr.mxu0 0.0
    %1056 = vmatpush1.msra.mxu0 0.0
    %1057 = vmatprep.subr.mxu0 0.0
    %1058 = vmatpush1.msra.mxu0 0.0
    %1059 = vmatprep.subr.mxu0 0.0
    %1060 = vmatpush1.msra.mxu0 0.0
    %1061 = vmatprep.subr.mxu0 0.0
    %1062 = vmatpush1.msra.mxu0 0.0
    %1063 = vmatprep.subr.mxu0 0.0
    %1064 = vmatpush1.msra.mxu0 0.0
    %1065 = vmatprep.subr.mxu0 0.0
    %1066 = vmatpush1.msra.mxu0 0.0
    %1067 = vmatprep.subr.mxu0 0.0
    %1068 = vmatpush1.msra.mxu0 0.0
    %1069 = vmatprep.subr.mxu0 0.0
    %1070 = vmatpush1.msra.mxu0 0.0
    %1071 = vmatprep.subr.mxu0 0.0
    %1072 = vmatpush1.msra.mxu0 0.0
    %1073 = vmatprep.subr.mxu0 0.0
    %1074 = vmatpush1.msra.mxu0 0.0
    %1075 = vmatprep.subr.mxu0 0.0
    %1076 = vmatpush1.msra.mxu0 0.0
    %1077 = vmatprep.subr.mxu0 0.0
    %1078 = vmatpush1.msra.mxu0 0.0
    %1079 = vmatprep.subr.mxu0 0.0
    %1080 = vmatpush1.msra.mxu0 0.0
    %1081 = vmatprep.subr.mxu0 0.0
    %1082 = vmatpush1.msra.mxu0 0.0
    %1083 = vmatprep.subr.mxu0 0.0
    %1084 = vmatpush1.msra.mxu0 %v325
    %1085 = vmatprep.subr.mxu0 0.0
    %1086 = vmatpush1.msra.mxu0 %v319
    %1087 = vmatprep.subr.mxu0 0.0
    %1088 = vmatpush2.msra.mxu0 0.0
    %1089 = vmatprep.subr.mxu0 0.0
    %1090 = vmatpush2.msra.mxu0 0.0
    %1091 = vmatprep.subr.mxu0 0.0
    %1092 = vmatpush2.msra.mxu0 0.0
    %1093 = vmatprep.subr.mxu0 0.0
    %1094 = vmatpush2.msra.mxu0 0.0
    %1095 = vmatprep.subr.mxu0 0.0
    %1096 = vmatpush2.msra.mxu0 0.0
    %1097 = vmatprep.subr.mxu0 0.0
    %1098 = vmatpush2.msra.mxu0 0.0
    %1099 = vmatprep.subr.mxu0 0.0
    %1100 = vmatpush2.msra.mxu0 0.0
    %1101 = vmatprep.subr.mxu0 0.0
    %1102 = vmatpush2.msra.mxu0 0.0
    %1103 = vmatprep.subr.mxu0 0.0
    %1104 = vmatpush2.msra.mxu0 0.0
    %1105 = vmatprep.subr.mxu0 0.0
    %1106 = vmatpush2.msra.mxu0 0.0
    %1107 = vmatprep.subr.mxu0 0.0
    %1108 = vmatpush2.msra.mxu0 0.0
    %1109 = vmatprep.subr.mxu0 0.0
    %1110 = vmatpush2.msra.mxu0 0.0
    %1111 = vmatprep.subr.mxu0 0.0
    %1112 = vmatpush2.msra.mxu0 0.0
    %1113 = vmatprep.subr.mxu0 0.0
    %1114 = vmatpush2.msra.mxu0 0.0
    %1115 = vmatprep.subr.mxu0 0.0
    %1116 = vmatpush2.msra.mxu0 0.0
    %1117 = vmatprep.subr.mxu0 0.0
    %1118 = vmatpush2.msra.mxu0 0.0
    %1119 = vmatprep.mubr.f32.mxu0 0.0
    %1120 = vmatmul.mubr.f32.gmra.mxu0 %v1050
    %v1121 = vpop.f32.mrf.mxu0
    %v1122 = vadd.f32 0.0, %v1121
    %v1123 = vpop.f32.mrf.mxu0
    %1124 = vmatprep.mubr.f32.mxu0 0.0
    %1125 = vmatmul.mubr.f32.gmra.mxu0 %v1053
    %v1126 = vpop.f32.mrf.mxu0
    %v1127 = vadd.f32 0.0, %v1126
    %v1128 = vpop.f32.mrf.mxu0
    %1129 = vdwg.mxu0
    %v1130 = vld [vmem:[#allocation10] sm:$0xff]
    %v1131 = vld [vmem:[#allocation10 + $0x8] sm:$0xff]
    %v1132 = vld [vmem:[#allocation10 + $0x10] sm:$0xff]
    %v1133 = vld [vmem:[#allocation10 + $0x18] sm:$0xff]
    %v1134 = vld [vmem:[#allocation10 + $0x20] sm:$0xff]
    %v1135 = vld [vmem:[#allocation10 + $0x28] sm:$0xff]
    %v1136 = vld [vmem:[#allocation10 + $0x30] sm:$0xff]
    %v1137 = vld [vmem:[#allocation10 + $0x38] sm:$0xff]
    %v1138 = vld [vmem:[#allocation10 + $0x40] sm:$0xff]
    %v1139 = vld [vmem:[#allocation10 + $0x48] sm:$0xff]
    %v1140 = vld [vmem:[#allocation10 + $0x50] sm:$0xff]
    %v1141 = vld [vmem:[#allocation10 + $0x58] sm:$0xff]
    %v1142 = vld [vmem:[#allocation10 + $0x60] sm:$0xff]
    %v1143 = vld [vmem:[#allocation10 + $0x68] sm:$0xff]
    %v1144 = vld [vmem:[#allocation10 + $0x70] sm:$0xff]
    %v1145 = vld [vmem:[#allocation10 + $0x78] sm:$0xff]
    %v1146 = vld [vmem:[#allocation11] sm:$0xff]
    %v1147 = vld [vmem:[#allocation11 + $0x8] sm:$0xff]
    %v1148 = vld [vmem:[#allocation11 + $0x10] sm:$0xff]
    %v1149 = vld [vmem:[#allocation11 + $0x18] sm:$0xff]
    %v1150 = vld [vmem:[#allocation11 + $0x20] sm:$0xff]
    %v1151 = vld [vmem:[#allocation11 + $0x28] sm:$0xff]
    %v1152 = vld [vmem:[#allocation11 + $0x30] sm:$0xff]
    %v1153 = vld [vmem:[#allocation11 + $0x38] sm:$0xff]
    %v1154 = vld [vmem:[#allocation11 + $0x40] sm:$0xff]
    %v1155 = vld [vmem:[#allocation11 + $0x48] sm:$0xff]
    %v1156 = vld [vmem:[#allocation11 + $0x50] sm:$0xff]
    %v1157 = vld [vmem:[#allocation11 + $0x58] sm:$0xff]
    %v1158 = vld [vmem:[#allocation11 + $0x60] sm:$0xff]
    %v1159 = vld [vmem:[#allocation11 + $0x68] sm:$0xff]
    %v1160 = vld [vmem:[#allocation11 + $0x70] sm:$0xff]
    %v1161 = vld [vmem:[#allocation11 + $0x78] sm:$0xff]
    %1162 = vmatprep.subr.mxu0 0.0
    %1163 = vmatpush1.msra.mxu0 %v1161
    %1164 = vmatprep.subr.mxu0 0.0
    %1165 = vmatpush1.msra.mxu0 %v1160
    %1166 = vmatprep.subr.mxu0 0.0
    %1167 = vmatpush1.msra.mxu0 %v1159
    %1168 = vmatprep.subr.mxu0 0.0
    %1169 = vmatpush1.msra.mxu0 %v1158
    %1170 = vmatprep.subr.mxu0 0.0
    %1171 = vmatpush1.msra.mxu0 %v1157
    %1172 = vmatprep.subr.mxu0 0.0
    %1173 = vmatpush1.msra.mxu0 %v1156
    %1174 = vmatprep.subr.mxu0 0.0
    %1175 = vmatpush1.msra.mxu0 %v1155
    %1176 = vmatprep.subr.mxu0 0.0
    %1177 = vmatpush1.msra.mxu0 %v1154
    %1178 = vmatprep.subr.mxu0 0.0
    %1179 = vmatpush1.msra.mxu0 %v1153
    %1180 = vmatprep.subr.mxu0 0.0
    %1181 = vmatpush1.msra.mxu0 %v1152
    %1182 = vmatprep.subr.mxu0 0.0
    %1183 = vmatpush1.msra.mxu0 %v1151
    %1184 = vmatprep.subr.mxu0 0.0
    %1185 = vmatpush1.msra.mxu0 %v1150
    %1186 = vmatprep.subr.mxu0 0.0
    %1187 = vmatpush1.msra.mxu0 %v1149
    %1188 = vmatprep.subr.mxu0 0.0
    %1189 = vmatpush1.msra.mxu0 %v1148
    %1190 = vmatprep.subr.mxu0 0.0
    %1191 = vmatpush1.msra.mxu0 %v1147
    %1192 = vmatprep.subr.mxu0 0.0
    %1193 = vmatpush1.msra.mxu0 %v1146
    %1194 = vmatprep.subr.mxu0 0.0
    %1195 = vmatpush2.msra.mxu0 0.0
    %1196 = vmatprep.subr.mxu0 0.0
    %1197 = vmatpush2.msra.mxu0 0.0
    %1198 = vmatprep.subr.mxu0 0.0
    %1199 = vmatpush2.msra.mxu0 0.0
    %1200 = vmatprep.subr.mxu0 0.0
    %1201 = vmatpush2.msra.mxu0 0.0
    %1202 = vmatprep.subr.mxu0 0.0
    %1203 = vmatpush2.msra.mxu0 0.0
    %1204 = vmatprep.subr.mxu0 0.0
    %1205 = vmatpush2.msra.mxu0 0.0
    %1206 = vmatprep.subr.mxu0 0.0
    %1207 = vmatpush2.msra.mxu0 0.0
    %1208 = vmatprep.subr.mxu0 0.0
    %1209 = vmatpush2.msra.mxu0 0.0
    %1210 = vmatprep.subr.mxu0 0.0
    %1211 = vmatpush2.msra.mxu0 0.0
    %1212 = vmatprep.subr.mxu0 0.0
    %1213 = vmatpush2.msra.mxu0 0.0
    %1214 = vmatprep.subr.mxu0 0.0
    %1215 = vmatpush2.msra.mxu0 0.0
    %1216 = vmatprep.subr.mxu0 0.0
    %1217 = vmatpush2.msra.mxu0 0.0
    %1218 = vmatprep.subr.mxu0 0.0
    %1219 = vmatpush2.msra.mxu0 0.0
    %1220 = vmatprep.subr.mxu0 0.0
    %1221 = vmatpush2.msra.mxu0 0.0
    %1222 = vmatprep.subr.mxu0 0.0
    %1223 = vmatpush2.msra.mxu0 0.0
    %1224 = vmatprep.subr.mxu0 0.0
    %1225 = vmatpush2.msra.mxu0 0.0
    %1226 = vmatprep.mubr.f32.mxu0 0.0
    %1227 = vmatmul.mubr.f32.gmra.mxu0 %v1041
    %v1228 = vpop.f32.mrf.mxu0
    %v1229 = vadd.f32 0.0, %v1228
    %v1230 = vpop.f32.mrf.mxu0
    %1231 = vmatprep.mubr.f32.mxu0 0.0
    %1232 = vmatmul.mubr.f32.gmra.mxu0 %v1046
    %v1233 = vpop.f32.mrf.mxu0
    %v1234 = vadd.f32 0.0, %v1233
    %v1235 = vpop.f32.mrf.mxu0
    %1236 = vmatprep.mubr.f32.mxu0 0.0
    %1237 = vmatmul.mubr.f32.gmra.mxu0 %v1122
    %v1238 = vpop.f32.mrf.mxu0
    %v1239 = vadd.f32 0.0, %v1238
    %v1240 = vpop.f32.mrf.mxu0
    %1241 = vmatprep.mubr.f32.mxu0 0.0
    %1242 = vmatmul.mubr.f32.gmra.mxu0 %v1127
    %v1243 = vpop.f32.mrf.mxu0
    %v1244 = vadd.f32 0.0, %v1243
    %v1245 = vpop.f32.mrf.mxu0
    %1246 = vdwg.mxu0
    %1247 = vmatprep.subr.mxu0 0.0
    %1248 = vmatpush1.msra.mxu0 %v1145
    %1249 = vmatprep.subr.mxu0 0.0
    %1250 = vmatpush1.msra.mxu0 %v1144
    %1251 = vmatprep.subr.mxu0 0.0
    %1252 = vmatpush1.msra.mxu0 %v1143
    %1253 = vmatprep.subr.mxu0 0.0
    %1254 = vmatpush1.msra.mxu0 %v1142
    %1255 = vmatprep.subr.mxu0 0.0
    %1256 = vmatpush1.msra.mxu0 %v1141
    %1257 = vmatprep.subr.mxu0 0.0
    %1258 = vmatpush1.msra.mxu0 %v1140
    %1259 = vmatprep.subr.mxu0 0.0
    %1260 = vmatpush1.msra.mxu0 %v1139
    %1261 = vmatprep.subr.mxu0 0.0
    %1262 = vmatpush1.msra.mxu0 %v1138
    %1263 = vmatprep.subr.mxu0 0.0
    %1264 = vmatpush1.msra.mxu0 %v1137
    %1265 = vmatprep.subr.mxu0 0.0
    %1266 = vmatpush1.msra.mxu0 %v1136
    %1267 = vmatprep.subr.mxu0 0.0
    %1268 = vmatpush1.msra.mxu0 %v1135
    %1269 = vmatprep.subr.mxu0 0.0
    %1270 = vmatpush1.msra.mxu0 %v1134
    %1271 = vmatprep.subr.mxu0 0.0
    %1272 = vmatpush1.msra.mxu0 %v1133
    %1273 = vmatprep.subr.mxu0 0.0
    %1274 = vmatpush1.msra.mxu0 %v1132
    %1275 = vmatprep.subr.mxu0 0.0
    %1276 = vmatpush1.msra.mxu0 %v1131
    %1277 = vmatprep.subr.mxu0 0.0
    %1278 = vmatpush1.msra.mxu0 %v1130
    %1279 = vmatprep.subr.mxu0 0.0
    %1280 = vmatpush2.msra.mxu0 0.0
    %1281 = vmatprep.subr.mxu0 0.0
    %1282 = vmatpush2.msra.mxu0 0.0
    %1283 = vmatprep.subr.mxu0 0.0
    %1284 = vmatpush2.msra.mxu0 0.0
    %1285 = vmatprep.subr.mxu0 0.0
    %1286 = vmatpush2.msra.mxu0 0.0
    %1287 = vmatprep.subr.mxu0 0.0
    %1288 = vmatpush2.msra.mxu0 0.0
    %1289 = vmatprep.subr.mxu0 0.0
    %1290 = vmatpush2.msra.mxu0 0.0
    %1291 = vmatprep.subr.mxu0 0.0
    %1292 = vmatpush2.msra.mxu0 0.0
    %1293 = vmatprep.subr.mxu0 0.0
    %1294 = vmatpush2.msra.mxu0 0.0
    %1295 = vmatprep.subr.mxu0 0.0
    %1296 = vmatpush2.msra.mxu0 0.0
    %1297 = vmatprep.subr.mxu0 0.0
    %1298 = vmatpush2.msra.mxu0 0.0
    %1299 = vmatprep.subr.mxu0 0.0
    %1300 = vmatpush2.msra.mxu0 0.0
    %1301 = vmatprep.subr.mxu0 0.0
    %1302 = vmatpush2.msra.mxu0 0.0
    %1303 = vmatprep.subr.mxu0 0.0
    %1304 = vmatpush2.msra.mxu0 0.0
    %1305 = vmatprep.subr.mxu0 0.0
    %1306 = vmatpush2.msra.mxu0 0.0
    %1307 = vmatprep.subr.mxu0 0.0
    %1308 = vmatpush2.msra.mxu0 0.0
    %1309 = vmatprep.subr.mxu0 0.0
    %1310 = vmatpush2.msra.mxu0 0.0
    %1311 = vmatprep.mubr.f32.mxu0 0.0
    %1312 = vmatmul.mubr.f32.gmra.mxu0 %v879
    %v1313 = vpop.f32.mrf.mxu0
    %v1314 = vadd.f32 %v1229, %v1313
    %v1315 = vpop.f32.mrf.mxu0
    %1316 = vmatprep.mubr.f32.mxu0 0.0
    %1317 = vmatmul.mubr.f32.gmra.mxu0 %v884
    %v1318 = vpop.f32.mrf.mxu0
    %v1319 = vadd.f32 %v1234, %v1318
    %v1320 = vpop.f32.mrf.mxu0
    %1321 = vmatprep.mubr.f32.mxu0 0.0
    %1322 = vmatmul.mubr.f32.gmra.mxu0 %v960
    %v1323 = vpop.f32.mrf.mxu0
    %v1324 = vadd.f32 %v1239, %v1323
    %v1325 = vpop.f32.mrf.mxu0
    %1326 = vmatprep.mubr.f32.mxu0 0.0
    %1327 = vmatmul.mubr.f32.gmra.mxu0 %v965
    %v1328 = vpop.f32.mrf.mxu0
    %v1329 = vadd.f32 %v1244, %v1328
    %v1330 = vpop.f32.mrf.mxu0
    %1331 = vdwg.mxu0
    %v1332 = vld [vmem:[%s6] sm:$0x1]
    %v1334 = vlaneseq
    %v1335 = vshrl.u32 %v1334, 7
    %v1336 = vsub.s32 0, %v1335
    %v1337 = vrot.slane %v1332, %v1336
    %v1339 = vadd.f32 %v1314, %v1337
    %v1340 = vadd.f32 %v1319, %v1337
    %v1341 = vadd.f32 %v1324, %v1337
    %v1342 = vadd.f32 %v1329, %v1337
    %v1343 = vmax.f32 %v1339, 0.0
    %v1344 = vmax.f32 %v1340, 0.0
    %v1345 = vmax.f32 %v1341, 0.0
    %v1346 = vmax.f32 %v1342, 0.0
    %v1347 = vld [vmem:[%s7] sm:$0x1]
    %v1349 = vlaneseq
    %v1350 = vshrl.u32 %v1349, 7
    %v1351 = vsub.s32 0, %v1350
    %v1352 = vrot.slane %v1347, %v1351
    %v1354 = vmul.f32 %v1343, %v1352
    %v1355 = vmul.f32 %v1344, %v1352
    %v1356 = vmul.f32 %v1345, %v1352
    %v1357 = vmul.f32 %v1346, %v1352
    %1358 = vadd.xlane.f32.xlu0 %v1354
    %v1359 = vpop.xlane.xlu0 %1358
    %1360 = vadd.xlane.f32.xlu0 %v1355
    %v1361 = vpop.xlane.xlu0 %1360
    %1362 = vadd.xlane.f32.xlu0 %v1356
    %v1363 = vpop.xlane.xlu0 %1362
    %1364 = vadd.xlane.f32.xlu0 %v1357
    %v1365 = vpop.xlane.xlu0 %1364
    %v1367 = vsel %vm695, %v120, 0
    %v1370 = vsel %vm695, %v121, 0
    %1372 = vmatprep.subr.mxu0 0.0
    %1373 = vmatpush1.msra.mxu0 0.0
    %1374 = vmatprep.subr.mxu0 0.0
    %1375 = vmatpush1.msra.mxu0 0.0
    %1376 = vmatprep.subr.mxu0 0.0
    %1377 = vmatpush1.msra.mxu0 0.0
    %1378 = vmatprep.subr.mxu0 0.0
    %1379 = vmatpush1.msra.mxu0 0.0
    %1380 = vmatprep.subr.mxu0 0.0
    %1381 = vmatpush1.msra.mxu0 0.0
    %1382 = vmatprep.subr.mxu0 0.0
    %1383 = vmatpush1.msra.mxu0 0.0
    %1384 = vmatprep.subr.mxu0 0.0
    %1385 = vmatpush1.msra.mxu0 0.0
    %1386 = vmatprep.subr.mxu0 0.0
    %1387 = vmatpush1.msra.mxu0 0.0
    %1388 = vmatprep.subr.mxu0 0.0
    %1389 = vmatpush1.msra.mxu0 0.0
    %1390 = vmatprep.subr.mxu0 0.0
    %1391 = vmatpush1.msra.mxu0 0.0
    %1392 = vmatprep.subr.mxu0 0.0
    %1393 = vmatpush1.msra.mxu0 0.0
    %1394 = vmatprep.subr.mxu0 0.0
    %1395 = vmatpush1.msra.mxu0 0.0
    %1396 = vmatprep.subr.mxu0 0.0
    %1397 = vmatpush1.msra.mxu0 0.0
    %1398 = vmatprep.subr.mxu0 0.0
    %1399 = vmatpush1.msra.mxu0 0.0
    %1400 = vmatprep.subr.mxu0 0.0
    %1401 = vmatpush1.msra.mxu0 %v121
    %1402 = vmatprep.subr.mxu0 0.0
    %1403 = vmatpush1.msra.mxu0 %v120
    %1404 = vmatprep.subr.mxu0 0.0
    %1405 = vmatpush2.msra.mxu0 0.0
    %1406 = vmatprep.subr.mxu0 0.0
    %1407 = vmatpush2.msra.mxu0 0.0
    %1408 = vmatprep.subr.mxu0 0.0
    %1409 = vmatpush2.msra.mxu0 0.0
    %1410 = vmatprep.subr.mxu0 0.0
    %1411 = vmatpush2.msra.mxu0 0.0
    %1412 = vmatprep.subr.mxu0 0.0
    %1413 = vmatpush2.msra.mxu0 0.0
    %1414 = vmatprep.subr.mxu0 0.0
    %1415 = vmatpush2.msra.mxu0 0.0
    %1416 = vmatprep.subr.mxu0 0.0
    %1417 = vmatpush2.msra.mxu0 0.0
    %1418 = vmatprep.subr.mxu0 0.0
    %1419 = vmatpush2.msra.mxu0 0.0
    %1420 = vmatprep.subr.mxu0 0.0
    %1421 = vmatpush2.msra.mxu0 0.0
    %1422 = vmatprep.subr.mxu0 0.0
    %1423 = vmatpush2.msra.mxu0 0.0
    %1424 = vmatprep.subr.mxu0 0.0
    %1425 = vmatpush2.msra.mxu0 0.0
    %1426 = vmatprep.subr.mxu0 0.0
    %1427 = vmatpush2.msra.mxu0 0.0
    %1428 = vmatprep.subr.mxu0 0.0
    %1429 = vmatpush2.msra.mxu0 0.0
    %1430 = vmatprep.subr.mxu0 0.0
    %1431 = vmatpush2.msra.mxu0 0.0
    %1432 = vmatprep.subr.mxu0 0.0
    %1433 = vmatpush2.msra.mxu0 0.0
    %1434 = vmatprep.subr.mxu0 0.0
    %1435 = vmatpush2.msra.mxu0 0.0
    %1436 = vmatprep.mubr.f32.mxu0 0.0
    %1437 = vmatmul.mubr.f32.gmra.mxu0 %v1367
    %v1438 = vpop.f32.mrf.mxu0
    %v1439 = vadd.f32 0.0, %v1438
    %v1440 = vpop.f32.mrf.mxu0
    %1441 = vmatprep.mubr.f32.mxu0 0.0
    %1442 = vmatmul.mubr.f32.gmra.mxu0 %v1370
    %v1443 = vpop.f32.mrf.mxu0
    %v1444 = vadd.f32 0.0, %v1443
    %v1445 = vpop.f32.mrf.mxu0
    %1446 = vdwg.mxu0
    %v1448 = vsel %vm695, %v122, 0
    %v1451 = vsel %vm695, %v123, 0
    %1453 = vmatprep.subr.mxu0 0.0
    %1454 = vmatpush1.msra.mxu0 0.0
    %1455 = vmatprep.subr.mxu0 0.0
    %1456 = vmatpush1.msra.mxu0 0.0
    %1457 = vmatprep.subr.mxu0 0.0
    %1458 = vmatpush1.msra.mxu0 0.0
    %1459 = vmatprep.subr.mxu0 0.0
    %1460 = vmatpush1.msra.mxu0 0.0
    %1461 = vmatprep.subr.mxu0 0.0
    %1462 = vmatpush1.msra.mxu0 0.0
    %1463 = vmatprep.subr.mxu0 0.0
    %1464 = vmatpush1.msra.mxu0 0.0
    %1465 = vmatprep.subr.mxu0 0.0
    %1466 = vmatpush1.msra.mxu0 0.0
    %1467 = vmatprep.subr.mxu0 0.0
    %1468 = vmatpush1.msra.mxu0 0.0
    %1469 = vmatprep.subr.mxu0 0.0
    %1470 = vmatpush1.msra.mxu0 0.0
    %1471 = vmatprep.subr.mxu0 0.0
    %1472 = vmatpush1.msra.mxu0 0.0
    %1473 = vmatprep.subr.mxu0 0.0
    %1474 = vmatpush1.msra.mxu0 0.0
    %1475 = vmatprep.subr.mxu0 0.0
    %1476 = vmatpush1.msra.mxu0 0.0
    %1477 = vmatprep.subr.mxu0 0.0
    %1478 = vmatpush1.msra.mxu0 0.0
    %1479 = vmatprep.subr.mxu0 0.0
    %1480 = vmatpush1.msra.mxu0 0.0
    %1481 = vmatprep.subr.mxu0 0.0
    %1482 = vmatpush1.msra.mxu0 %v123
    %1483 = vmatprep.subr.mxu0 0.0
    %1484 = vmatpush1.msra.mxu0 %v122
    %1485 = vmatprep.subr.mxu0 0.0
    %1486 = vmatpush2.msra.mxu0 0.0
    %1487 = vmatprep.subr.mxu0 0.0
    %1488 = vmatpush2.msra.mxu0 0.0
    %1489 = vmatprep.subr.mxu0 0.0
    %1490 = vmatpush2.msra.mxu0 0.0
    %1491 = vmatprep.subr.mxu0 0.0
    %1492 = vmatpush2.msra.mxu0 0.0
    %1493 = vmatprep.subr.mxu0 0.0
    %1494 = vmatpush2.msra.mxu0 0.0
    %1495 = vmatprep.subr.mxu0 0.0
    %1496 = vmatpush2.msra.mxu0 0.0
    %1497 = vmatprep.subr.mxu0 0.0
    %1498 = vmatpush2.msra.mxu0 0.0
    %1499 = vmatprep.subr.mxu0 0.0
    %1500 = vmatpush2.msra.mxu0 0.0
    %1501 = vmatprep.subr.mxu0 0.0
    %1502 = vmatpush2.msra.mxu0 0.0
    %1503 = vmatprep.subr.mxu0 0.0
    %1504 = vmatpush2.msra.mxu0 0.0
    %1505 = vmatprep.subr.mxu0 0.0
    %1506 = vmatpush2.msra.mxu0 0.0
    %1507 = vmatprep.subr.mxu0 0.0
    %1508 = vmatpush2.msra.mxu0 0.0
    %1509 = vmatprep.subr.mxu0 0.0
    %1510 = vmatpush2.msra.mxu0 0.0
    %1511 = vmatprep.subr.mxu0 0.0
    %1512 = vmatpush2.msra.mxu0 0.0
    %1513 = vmatprep.subr.mxu0 0.0
    %1514 = vmatpush2.msra.mxu0 0.0
    %1515 = vmatprep.subr.mxu0 0.0
    %1516 = vmatpush2.msra.mxu0 0.0
    %1517 = vmatprep.mubr.f32.mxu0 0.0
    %1518 = vmatmul.mubr.f32.gmra.mxu0 %v1448
    %v1519 = vpop.f32.mrf.mxu0
    %v1520 = vadd.f32 0.0, %v1519
    %v1521 = vpop.f32.mrf.mxu0
    %1522 = vmatprep.mubr.f32.mxu0 0.0
    %1523 = vmatmul.mubr.f32.gmra.mxu0 %v1451
    %v1524 = vpop.f32.mrf.mxu0
    %v1525 = vadd.f32 0.0, %v1524
    %v1526 = vpop.f32.mrf.mxu0
    %1527 = vdwg.mxu0
    %v1528 = vadd.f32 %v1439, 1.0
    %v1529 = vadd.f32 %v1444, 1.0
    %v1530 = vadd.f32 %v1520, 1.0
    %v1531 = vadd.f32 %v1525, 1.0
    %v1532 = vsel %vm689, %v1528, %v1439
    %v1533 = vsel %vm690, %v1529, %v1444
    %v1534 = vsel %vm689, %v1530, %v1520
    %v1535 = vsel %vm690, %v1531, %v1525
    %v1536 = vsel %vm695, %v1532, 0.0
    %1537 = vadd.xlane.f32.xlu0 %v1536
    %v1538 = vpop.xlane.xlu0 %1537
    %v1539 = vsel %vm695, %v1533, 0.0
    %1540 = vadd.xlane.f32.xlu0 %v1539
    %v1541 = vpop.xlane.xlu0 %1540
    %v1542 = vsel %vm695, %v1534, 0.0
    %1543 = vadd.xlane.f32.xlu0 %v1542
    %v1544 = vpop.xlane.xlu0 %1543
    %v1545 = vsel %vm695, %v1535, 0.0
    %1546 = vadd.xlane.f32.xlu0 %v1545
    %v1547 = vpop.xlane.xlu0 %1546
    %v1548 = vmax.f32 %v1538, 1e-12
    %v1549 = vmax.f32 %v1541, 1e-12
    %v1550 = vmax.f32 %v1544, 1e-12
    %v1551 = vmax.f32 %v1547, 1e-12
    %v1552 = vadd.f32 %v1536, %v1539
    %v1553 = vrot.slane %v1552, 4
    %v1554 = vadd.f32 %v1552, %v1553
    %v1555 = vrot.slane %v1554, 2
    %v1556 = vadd.f32 %v1554, %v1555
    %v1557 = vrot.slane %v1556, 1
    %v1558 = vadd.f32 %v1556, %v1557
    %v1559 = vadd.f32 %v1542, %v1545
    %v1560 = vrot.slane %v1559, 4
    %v1561 = vadd.f32 %v1559, %v1560
    %v1562 = vrot.slane %v1561, 2
    %v1563 = vadd.f32 %v1561, %v1562
    %v1564 = vrot.slane %v1563, 1
    %v1565 = vadd.f32 %v1563, %v1564
    %v1566 = vmax.f32 %v1558, 1e-12
    %v1567 = vmax.f32 %v1565, 1e-12
    %v1568 = vrsqrt.pop %v1548
    %v1569 = vrsqrt.pop %v1549
    %v1570 = vrsqrt.pop %v1550
    %v1571 = vrsqrt.pop %v1551
    %v1572 = vrsqrt.pop %v1566
    %v1573 = vrsqrt.pop %v1567
    %v1574 = vmul.f32 %v1568, %v1572
    %v1575 = vmul.f32 %v1569, %v1572
    %v1576 = vmul.f32 %v1570, %v1573
    %v1577 = vmul.f32 %v1571, %v1573
    %v1578 = vmul.f32 %v1532, %v1574
    %v1579 = vmul.f32 %v1533, %v1575
    %v1580 = vmul.f32 %v1534, %v1576
    %v1581 = vmul.f32 %v1535, %v1577
    %1582 = vxpose.xlu0.b32.start [1/16] %v1578, 128
    %1583 = vxpose.xlu0.b32.cont [2/16] %v1579, 128
    %1584 = vxpose.xlu0.b32.cont [3/16] 0.0, 128
    %1585 = vxpose.xlu0.b32.cont [4/16] 0.0, 128
    %1586 = vxpose.xlu0.b32.cont [5/16] 0.0, 128
    %1587 = vxpose.xlu0.b32.cont [6/16] 0.0, 128
    %1588 = vxpose.xlu0.b32.cont [7/16] 0.0, 128
    %1589 = vxpose.xlu0.b32.cont [8/16] 0.0, 128
    %1590 = vxpose.xlu0.b32.cont [9/16] 0.0, 128
    %1591 = vxpose.xlu0.b32.cont [10/16] 0.0, 128
    %1592 = vxpose.xlu0.b32.cont [11/16] 0.0, 128
    %1593 = vxpose.xlu0.b32.cont [12/16] 0.0, 128
    %1594 = vxpose.xlu0.b32.cont [13/16] 0.0, 128
    %1595 = vxpose.xlu0.b32.cont [14/16] 0.0, 128
    %1596 = vxpose.xlu0.b32.cont [15/16] 0.0, 128
    %1597 = vxpose.xlu0.b32.end [16/16] 0.0, 128
    %v1598 = vpop.trf.xlu0
    %v1599 = vpop.trf.xlu0
    %v1600 = vpop.trf.xlu0
    %v1601 = vpop.trf.xlu0
    %v1602 = vpop.trf.xlu0
    %v1603 = vpop.trf.xlu0
    %v1604 = vpop.trf.xlu0
    %v1605 = vpop.trf.xlu0
    %v1606 = vpop.trf.xlu0
    %v1607 = vpop.trf.xlu0
    %v1608 = vpop.trf.xlu0
    %v1609 = vpop.trf.xlu0
    %v1610 = vpop.trf.xlu0
    %v1611 = vpop.trf.xlu0
    %v1612 = vpop.trf.xlu0
    %v1613 = vpop.trf.xlu0
    %1614 = vxpose.xlu0.b32.start [1/16] %v1580, 128
    %1615 = vxpose.xlu0.b32.cont [2/16] %v1581, 128
    %1616 = vxpose.xlu0.b32.cont [3/16] 0.0, 128
    %1617 = vxpose.xlu0.b32.cont [4/16] 0.0, 128
    %1618 = vxpose.xlu0.b32.cont [5/16] 0.0, 128
    %1619 = vxpose.xlu0.b32.cont [6/16] 0.0, 128
    %1620 = vxpose.xlu0.b32.cont [7/16] 0.0, 128
    %1621 = vxpose.xlu0.b32.cont [8/16] 0.0, 128
    %1622 = vxpose.xlu0.b32.cont [9/16] 0.0, 128
    %1623 = vxpose.xlu0.b32.cont [10/16] 0.0, 128
    %1624 = vxpose.xlu0.b32.cont [11/16] 0.0, 128
    %1625 = vxpose.xlu0.b32.cont [12/16] 0.0, 128
    %1626 = vxpose.xlu0.b32.cont [13/16] 0.0, 128
    %1627 = vxpose.xlu0.b32.cont [14/16] 0.0, 128
    %1628 = vxpose.xlu0.b32.cont [15/16] 0.0, 128
    %1629 = vxpose.xlu0.b32.end [16/16] 0.0, 128
    %v1630 = vpop.trf.xlu0
    %v1631 = vpop.trf.xlu0
    %v1632 = vpop.trf.xlu0
    %v1633 = vpop.trf.xlu0
    %v1634 = vpop.trf.xlu0
    %v1635 = vpop.trf.xlu0
    %v1636 = vpop.trf.xlu0
    %v1637 = vpop.trf.xlu0
    %v1638 = vpop.trf.xlu0
    %v1639 = vpop.trf.xlu0
    %v1640 = vpop.trf.xlu0
    %v1641 = vpop.trf.xlu0
    %v1642 = vpop.trf.xlu0
    %v1643 = vpop.trf.xlu0
    %v1644 = vpop.trf.xlu0
    %v1645 = vpop.trf.xlu0
    %v1647 = vsel %vm695, %v1578, 0
    %v1650 = vsel %vm695, %v1579, 0
    %1652 = vmatprep.subr.mxu0 0.0
    %1653 = vmatpush1.msra.mxu0 0.0
    %1654 = vmatprep.subr.mxu0 0.0
    %1655 = vmatpush1.msra.mxu0 0.0
    %1656 = vmatprep.subr.mxu0 0.0
    %1657 = vmatpush1.msra.mxu0 0.0
    %1658 = vmatprep.subr.mxu0 0.0
    %1659 = vmatpush1.msra.mxu0 0.0
    %1660 = vmatprep.subr.mxu0 0.0
    %1661 = vmatpush1.msra.mxu0 0.0
    %1662 = vmatprep.subr.mxu0 0.0
    %1663 = vmatpush1.msra.mxu0 0.0
    %1664 = vmatprep.subr.mxu0 0.0
    %1665 = vmatpush1.msra.mxu0 0.0
    %1666 = vmatprep.subr.mxu0 0.0
    %1667 = vmatpush1.msra.mxu0 0.0
    %1668 = vmatprep.subr.mxu0 0.0
    %1669 = vmatpush1.msra.mxu0 0.0
    %1670 = vmatprep.subr.mxu0 0.0
    %1671 = vmatpush1.msra.mxu0 0.0
    %1672 = vmatprep.subr.mxu0 0.0
    %1673 = vmatpush1.msra.mxu0 0.0
    %1674 = vmatprep.subr.mxu0 0.0
    %1675 = vmatpush1.msra.mxu0 0.0
    %1676 = vmatprep.subr.mxu0 0.0
    %1677 = vmatpush1.msra.mxu0 0.0
    %1678 = vmatprep.subr.mxu0 0.0
    %1679 = vmatpush1.msra.mxu0 0.0
    %1680 = vmatprep.subr.mxu0 0.0
    %1681 = vmatpush1.msra.mxu0 %v400
    %1682 = vmatprep.subr.mxu0 0.0
    %1683 = vmatpush1.msra.mxu0 %v394
    %1684 = vmatprep.subr.mxu0 0.0
    %1685 = vmatpush2.msra.mxu0 0.0
    %1686 = vmatprep.subr.mxu0 0.0
    %1687 = vmatpush2.msra.mxu0 0.0
    %1688 = vmatprep.subr.mxu0 0.0
    %1689 = vmatpush2.msra.mxu0 0.0
    %1690 = vmatprep.subr.mxu0 0.0
    %1691 = vmatpush2.msra.mxu0 0.0
    %1692 = vmatprep.subr.mxu0 0.0
    %1693 = vmatpush2.msra.mxu0 0.0
    %1694 = vmatprep.subr.mxu0 0.0
    %1695 = vmatpush2.msra.mxu0 0.0
    %1696 = vmatprep.subr.mxu0 0.0
    %1697 = vmatpush2.msra.mxu0 0.0
    %1698 = vmatprep.subr.mxu0 0.0
    %1699 = vmatpush2.msra.mxu0 0.0
    %1700 = vmatprep.subr.mxu0 0.0
    %1701 = vmatpush2.msra.mxu0 0.0
    %1702 = vmatprep.subr.mxu0 0.0
    %1703 = vmatpush2.msra.mxu0 0.0
    %1704 = vmatprep.subr.mxu0 0.0
    %1705 = vmatpush2.msra.mxu0 0.0
    %1706 = vmatprep.subr.mxu0 0.0
    %1707 = vmatpush2.msra.mxu0 0.0
    %1708 = vmatprep.subr.mxu0 0.0
    %1709 = vmatpush2.msra.mxu0 0.0
    %1710 = vmatprep.subr.mxu0 0.0
    %1711 = vmatpush2.msra.mxu0 0.0
    %1712 = vmatprep.subr.mxu0 0.0
    %1713 = vmatpush2.msra.mxu0 0.0
    %1714 = vmatprep.subr.mxu0 0.0
    %1715 = vmatpush2.msra.mxu0 0.0
    %1716 = vmatprep.mubr.f32.mxu0 0.0
    %1717 = vmatmul.mubr.f32.gmra.mxu0 %v1647
    %v1718 = vpop.f32.mrf.mxu0
    %v1719 = vadd.f32 0.0, %v1718
    %v1720 = vpop.f32.mrf.mxu0
    %1721 = vmatprep.mubr.f32.mxu0 0.0
    %1722 = vmatmul.mubr.f32.gmra.mxu0 %v1650
    %v1723 = vpop.f32.mrf.mxu0
    %v1724 = vadd.f32 0.0, %v1723
    %v1725 = vpop.f32.mrf.mxu0
    %1726 = vdwg.mxu0
    %v1728 = vsel %vm695, %v1580, 0
    %v1731 = vsel %vm695, %v1581, 0
    %1733 = vmatprep.subr.mxu0 0.0
    %1734 = vmatpush1.msra.mxu0 0.0
    %1735 = vmatprep.subr.mxu0 0.0
    %1736 = vmatpush1.msra.mxu0 0.0
    %1737 = vmatprep.subr.mxu0 0.0
    %1738 = vmatpush1.msra.mxu0 0.0
    %1739 = vmatprep.subr.mxu0 0.0
    %1740 = vmatpush1.msra.mxu0 0.0
    %1741 = vmatprep.subr.mxu0 0.0
    %1742 = vmatpush1.msra.mxu0 0.0
    %1743 = vmatprep.subr.mxu0 0.0
    %1744 = vmatpush1.msra.mxu0 0.0
    %1745 = vmatprep.subr.mxu0 0.0
    %1746 = vmatpush1.msra.mxu0 0.0
    %1747 = vmatprep.subr.mxu0 0.0
    %1748 = vmatpush1.msra.mxu0 0.0
    %1749 = vmatprep.subr.mxu0 0.0
    %1750 = vmatpush1.msra.mxu0 0.0
    %1751 = vmatprep.subr.mxu0 0.0
    %1752 = vmatpush1.msra.mxu0 0.0
    %1753 = vmatprep.subr.mxu0 0.0
    %1754 = vmatpush1.msra.mxu0 0.0
    %1755 = vmatprep.subr.mxu0 0.0
    %1756 = vmatpush1.msra.mxu0 0.0
    %1757 = vmatprep.subr.mxu0 0.0
    %1758 = vmatpush1.msra.mxu0 0.0
    %1759 = vmatprep.subr.mxu0 0.0
    %1760 = vmatpush1.msra.mxu0 0.0
    %1761 = vmatprep.subr.mxu0 0.0
    %1762 = vmatpush1.msra.mxu0 %v412
    %1763 = vmatprep.subr.mxu0 0.0
    %1764 = vmatpush1.msra.mxu0 %v406
    %1765 = vmatprep.subr.mxu0 0.0
    %1766 = vmatpush2.msra.mxu0 0.0
    %1767 = vmatprep.subr.mxu0 0.0
    %1768 = vmatpush2.msra.mxu0 0.0
    %1769 = vmatprep.subr.mxu0 0.0
    %1770 = vmatpush2.msra.mxu0 0.0
    %1771 = vmatprep.subr.mxu0 0.0
    %1772 = vmatpush2.msra.mxu0 0.0
    %1773 = vmatprep.subr.mxu0 0.0
    %1774 = vmatpush2.msra.mxu0 0.0
    %1775 = vmatprep.subr.mxu0 0.0
    %1776 = vmatpush2.msra.mxu0 0.0
    %1777 = vmatprep.subr.mxu0 0.0
    %1778 = vmatpush2.msra.mxu0 0.0
    %1779 = vmatprep.subr.mxu0 0.0
    %1780 = vmatpush2.msra.mxu0 0.0
    %1781 = vmatprep.subr.mxu0 0.0
    %1782 = vmatpush2.msra.mxu0 0.0
    %1783 = vmatprep.subr.mxu0 0.0
    %1784 = vmatpush2.msra.mxu0 0.0
    %1785 = vmatprep.subr.mxu0 0.0
    %1786 = vmatpush2.msra.mxu0 0.0
    %1787 = vmatprep.subr.mxu0 0.0
    %1788 = vmatpush2.msra.mxu0 0.0
    %1789 = vmatprep.subr.mxu0 0.0
    %1790 = vmatpush2.msra.mxu0 0.0
    %1791 = vmatprep.subr.mxu0 0.0
    %1792 = vmatpush2.msra.mxu0 0.0
    %1793 = vmatprep.subr.mxu0 0.0
    %1794 = vmatpush2.msra.mxu0 0.0
    %1795 = vmatprep.subr.mxu0 0.0
    %1796 = vmatpush2.msra.mxu0 0.0
    %1797 = vmatprep.mubr.f32.mxu0 0.0
    %1798 = vmatmul.mubr.f32.gmra.mxu0 %v1728
    %v1799 = vpop.f32.mrf.mxu0
    %v1800 = vadd.f32 0.0, %v1799
    %v1801 = vpop.f32.mrf.mxu0
    %1802 = vmatprep.mubr.f32.mxu0 0.0
    %1803 = vmatmul.mubr.f32.gmra.mxu0 %v1731
    %v1804 = vpop.f32.mrf.mxu0
    %v1805 = vadd.f32 0.0, %v1804
    %v1806 = vpop.f32.mrf.mxu0
    %1807 = vdwg.mxu0
    %v1809 = vsel %vm695, %v1598, 0
    %v1812 = vsel %vm695, %v1599, 0
    %1814 = vmatprep.subr.mxu0 0.0
    %1815 = vmatpush1.msra.mxu0 0.0
    %1816 = vmatprep.subr.mxu0 0.0
    %1817 = vmatpush1.msra.mxu0 0.0
    %1818 = vmatprep.subr.mxu0 0.0
    %1819 = vmatpush1.msra.mxu0 0.0
    %1820 = vmatprep.subr.mxu0 0.0
    %1821 = vmatpush1.msra.mxu0 0.0
    %1822 = vmatprep.subr.mxu0 0.0
    %1823 = vmatpush1.msra.mxu0 0.0
    %1824 = vmatprep.subr.mxu0 0.0
    %1825 = vmatpush1.msra.mxu0 0.0
    %1826 = vmatprep.subr.mxu0 0.0
    %1827 = vmatpush1.msra.mxu0 0.0
    %1828 = vmatprep.subr.mxu0 0.0
    %1829 = vmatpush1.msra.mxu0 0.0
    %1830 = vmatprep.subr.mxu0 0.0
    %1831 = vmatpush1.msra.mxu0 0.0
    %1832 = vmatprep.subr.mxu0 0.0
    %1833 = vmatpush1.msra.mxu0 0.0
    %1834 = vmatprep.subr.mxu0 0.0
    %1835 = vmatpush1.msra.mxu0 0.0
    %1836 = vmatprep.subr.mxu0 0.0
    %1837 = vmatpush1.msra.mxu0 0.0
    %1838 = vmatprep.subr.mxu0 0.0
    %1839 = vmatpush1.msra.mxu0 0.0
    %1840 = vmatprep.subr.mxu0 0.0
    %1841 = vmatpush1.msra.mxu0 0.0
    %1842 = vmatprep.subr.mxu0 0.0
    %1843 = vmatpush1.msra.mxu0 %v402
    %1844 = vmatprep.subr.mxu0 0.0
    %1845 = vmatpush1.msra.mxu0 %v396
    %1846 = vmatprep.subr.mxu0 0.0
    %1847 = vmatpush2.msra.mxu0 0.0
    %1848 = vmatprep.subr.mxu0 0.0
    %1849 = vmatpush2.msra.mxu0 0.0
    %1850 = vmatprep.subr.mxu0 0.0
    %1851 = vmatpush2.msra.mxu0 0.0
    %1852 = vmatprep.subr.mxu0 0.0
    %1853 = vmatpush2.msra.mxu0 0.0
    %1854 = vmatprep.subr.mxu0 0.0
    %1855 = vmatpush2.msra.mxu0 0.0
    %1856 = vmatprep.subr.mxu0 0.0
    %1857 = vmatpush2.msra.mxu0 0.0
    %1858 = vmatprep.subr.mxu0 0.0
    %1859 = vmatpush2.msra.mxu0 0.0
    %1860 = vmatprep.subr.mxu0 0.0
    %1861 = vmatpush2.msra.mxu0 0.0
    %1862 = vmatprep.subr.mxu0 0.0
    %1863 = vmatpush2.msra.mxu0 0.0
    %1864 = vmatprep.subr.mxu0 0.0
    %1865 = vmatpush2.msra.mxu0 0.0
    %1866 = vmatprep.subr.mxu0 0.0
    %1867 = vmatpush2.msra.mxu0 0.0
    %1868 = vmatprep.subr.mxu0 0.0
    %1869 = vmatpush2.msra.mxu0 0.0
    %1870 = vmatprep.subr.mxu0 0.0
    %1871 = vmatpush2.msra.mxu0 0.0
    %1872 = vmatprep.subr.mxu0 0.0
    %1873 = vmatpush2.msra.mxu0 0.0
    %1874 = vmatprep.subr.mxu0 0.0
    %1875 = vmatpush2.msra.mxu0 0.0
    %1876 = vmatprep.subr.mxu0 0.0
    %1877 = vmatpush2.msra.mxu0 0.0
    %1878 = vmatprep.mubr.f32.mxu0 0.0
    %1879 = vmatmul.mubr.f32.gmra.mxu0 %v1809
    %v1880 = vpop.f32.mrf.mxu0
    %v1881 = vadd.f32 0.0, %v1880
    %v1882 = vpop.f32.mrf.mxu0
    %1883 = vmatprep.mubr.f32.mxu0 0.0
    %1884 = vmatmul.mubr.f32.gmra.mxu0 %v1812
    %v1885 = vpop.f32.mrf.mxu0
    %v1886 = vadd.f32 0.0, %v1885
    %v1887 = vpop.f32.mrf.mxu0
    %1888 = vdwg.mxu0
    %v1890 = vsel %vm695, %v1630, 0
    %v1893 = vsel %vm695, %v1631, 0
    %1895 = vmatprep.subr.mxu0 0.0
    %1896 = vmatpush1.msra.mxu0 0.0
    %1897 = vmatprep.subr.mxu0 0.0
    %1898 = vmatpush1.msra.mxu0 0.0
    %1899 = vmatprep.subr.mxu0 0.0
    %1900 = vmatpush1.msra.mxu0 0.0
    %1901 = vmatprep.subr.mxu0 0.0
    %1902 = vmatpush1.msra.mxu0 0.0
    %1903 = vmatprep.subr.mxu0 0.0
    %1904 = vmatpush1.msra.mxu0 0.0
    %1905 = vmatprep.subr.mxu0 0.0
    %1906 = vmatpush1.msra.mxu0 0.0
    %1907 = vmatprep.subr.mxu0 0.0
    %1908 = vmatpush1.msra.mxu0 0.0
    %1909 = vmatprep.subr.mxu0 0.0
    %1910 = vmatpush1.msra.mxu0 0.0
    %1911 = vmatprep.subr.mxu0 0.0
    %1912 = vmatpush1.msra.mxu0 0.0
    %1913 = vmatprep.subr.mxu0 0.0
    %1914 = vmatpush1.msra.mxu0 0.0
    %1915 = vmatprep.subr.mxu0 0.0
    %1916 = vmatpush1.msra.mxu0 0.0
    %1917 = vmatprep.subr.mxu0 0.0
    %1918 = vmatpush1.msra.mxu0 0.0
    %1919 = vmatprep.subr.mxu0 0.0
    %1920 = vmatpush1.msra.mxu0 0.0
    %1921 = vmatprep.subr.mxu0 0.0
    %1922 = vmatpush1.msra.mxu0 0.0
    %1923 = vmatprep.subr.mxu0 0.0
    %1924 = vmatpush1.msra.mxu0 %v414
    %1925 = vmatprep.subr.mxu0 0.0
    %1926 = vmatpush1.msra.mxu0 %v408
    %1927 = vmatprep.subr.mxu0 0.0
    %1928 = vmatpush2.msra.mxu0 0.0
    %1929 = vmatprep.subr.mxu0 0.0
    %1930 = vmatpush2.msra.mxu0 0.0
    %1931 = vmatprep.subr.mxu0 0.0
    %1932 = vmatpush2.msra.mxu0 0.0
    %1933 = vmatprep.subr.mxu0 0.0
    %1934 = vmatpush2.msra.mxu0 0.0
    %1935 = vmatprep.subr.mxu0 0.0
    %1936 = vmatpush2.msra.mxu0 0.0
    %1937 = vmatprep.subr.mxu0 0.0
    %1938 = vmatpush2.msra.mxu0 0.0
    %1939 = vmatprep.subr.mxu0 0.0
    %1940 = vmatpush2.msra.mxu0 0.0
    %1941 = vmatprep.subr.mxu0 0.0
    %1942 = vmatpush2.msra.mxu0 0.0
    %1943 = vmatprep.subr.mxu0 0.0
    %1944 = vmatpush2.msra.mxu0 0.0
    %1945 = vmatprep.subr.mxu0 0.0
    %1946 = vmatpush2.msra.mxu0 0.0
    %1947 = vmatprep.subr.mxu0 0.0
    %1948 = vmatpush2.msra.mxu0 0.0
    %1949 = vmatprep.subr.mxu0 0.0
    %1950 = vmatpush2.msra.mxu0 0.0
    %1951 = vmatprep.subr.mxu0 0.0
    %1952 = vmatpush2.msra.mxu0 0.0
    %1953 = vmatprep.subr.mxu0 0.0
    %1954 = vmatpush2.msra.mxu0 0.0
    %1955 = vmatprep.subr.mxu0 0.0
    %1956 = vmatpush2.msra.mxu0 0.0
    %1957 = vmatprep.subr.mxu0 0.0
    %1958 = vmatpush2.msra.mxu0 0.0
    %1959 = vmatprep.mubr.f32.mxu0 0.0
    %1960 = vmatmul.mubr.f32.gmra.mxu0 %v1890
    %v1961 = vpop.f32.mrf.mxu0
    %v1962 = vadd.f32 0.0, %v1961
    %v1963 = vpop.f32.mrf.mxu0
    %1964 = vmatprep.mubr.f32.mxu0 0.0
    %1965 = vmatmul.mubr.f32.gmra.mxu0 %v1893
    %v1966 = vpop.f32.mrf.mxu0
    %v1967 = vadd.f32 0.0, %v1966
    %v1968 = vpop.f32.mrf.mxu0
    %1969 = vdwg.mxu0
    %s1970 = scalar_lea.vmem [#allocation10], 128
    %v1971 = vld [vmem:[%s1970] sm:$0xff]
    %v1972 = vld [vmem:[%s1970 + $0x8] sm:$0xff]
    %v1973 = vld [vmem:[%s1970 + $0x10] sm:$0xff]
    %v1974 = vld [vmem:[%s1970 + $0x18] sm:$0xff]
    %v1975 = vld [vmem:[%s1970 + $0x20] sm:$0xff]
    %v1976 = vld [vmem:[%s1970 + $0x28] sm:$0xff]
    %v1977 = vld [vmem:[%s1970 + $0x30] sm:$0xff]
    %v1978 = vld [vmem:[%s1970 + $0x38] sm:$0xff]
    %v1979 = vld [vmem:[%s1970 + $0x40] sm:$0xff]
    %v1980 = vld [vmem:[%s1970 + $0x48] sm:$0xff]
    %v1981 = vld [vmem:[%s1970 + $0x50] sm:$0xff]
    %v1982 = vld [vmem:[%s1970 + $0x58] sm:$0xff]
    %v1983 = vld [vmem:[%s1970 + $0x60] sm:$0xff]
    %v1984 = vld [vmem:[%s1970 + $0x68] sm:$0xff]
    %v1985 = vld [vmem:[%s1970 + $0x70] sm:$0xff]
    %v1986 = vld [vmem:[%s1970 + $0x78] sm:$0xff]
    %s1987 = scalar_lea.vmem [#allocation11], 128
    %v1988 = vld [vmem:[%s1987] sm:$0xff]
    %v1989 = vld [vmem:[%s1987 + $0x8] sm:$0xff]
    %v1990 = vld [vmem:[%s1987 + $0x10] sm:$0xff]
    %v1991 = vld [vmem:[%s1987 + $0x18] sm:$0xff]
    %v1992 = vld [vmem:[%s1987 + $0x20] sm:$0xff]
    %v1993 = vld [vmem:[%s1987 + $0x28] sm:$0xff]
    %v1994 = vld [vmem:[%s1987 + $0x30] sm:$0xff]
    %v1995 = vld [vmem:[%s1987 + $0x38] sm:$0xff]
    %v1996 = vld [vmem:[%s1987 + $0x40] sm:$0xff]
    %v1997 = vld [vmem:[%s1987 + $0x48] sm:$0xff]
    %v1998 = vld [vmem:[%s1987 + $0x50] sm:$0xff]
    %v1999 = vld [vmem:[%s1987 + $0x58] sm:$0xff]
    %v2000 = vld [vmem:[%s1987 + $0x60] sm:$0xff]
    %v2001 = vld [vmem:[%s1987 + $0x68] sm:$0xff]
    %v2002 = vld [vmem:[%s1987 + $0x70] sm:$0xff]
    %v2003 = vld [vmem:[%s1987 + $0x78] sm:$0xff]
    %2004 = vmatprep.subr.mxu0 0.0
    %2005 = vmatpush1.msra.mxu0 %v2003
    %2006 = vmatprep.subr.mxu0 0.0
    %2007 = vmatpush1.msra.mxu0 %v2002
    %2008 = vmatprep.subr.mxu0 0.0
    %2009 = vmatpush1.msra.mxu0 %v2001
    %2010 = vmatprep.subr.mxu0 0.0
    %2011 = vmatpush1.msra.mxu0 %v2000
    %2012 = vmatprep.subr.mxu0 0.0
    %2013 = vmatpush1.msra.mxu0 %v1999
    %2014 = vmatprep.subr.mxu0 0.0
    %2015 = vmatpush1.msra.mxu0 %v1998
    %2016 = vmatprep.subr.mxu0 0.0
    %2017 = vmatpush1.msra.mxu0 %v1997
    %2018 = vmatprep.subr.mxu0 0.0
    %2019 = vmatpush1.msra.mxu0 %v1996
    %2020 = vmatprep.subr.mxu0 0.0
    %2021 = vmatpush1.msra.mxu0 %v1995
    %2022 = vmatprep.subr.mxu0 0.0
    %2023 = vmatpush1.msra.mxu0 %v1994
    %2024 = vmatprep.subr.mxu0 0.0
    %2025 = vmatpush1.msra.mxu0 %v1993
    %2026 = vmatprep.subr.mxu0 0.0
    %2027 = vmatpush1.msra.mxu0 %v1992
    %2028 = vmatprep.subr.mxu0 0.0
    %2029 = vmatpush1.msra.mxu0 %v1991
    %2030 = vmatprep.subr.mxu0 0.0
    %2031 = vmatpush1.msra.mxu0 %v1990
    %2032 = vmatprep.subr.mxu0 0.0
    %2033 = vmatpush1.msra.mxu0 %v1989
    %2034 = vmatprep.subr.mxu0 0.0
    %2035 = vmatpush1.msra.mxu0 %v1988
    %2036 = vmatprep.subr.mxu0 0.0
    %2037 = vmatpush2.msra.mxu0 0.0
    %2038 = vmatprep.subr.mxu0 0.0
    %2039 = vmatpush2.msra.mxu0 0.0
    %2040 = vmatprep.subr.mxu0 0.0
    %2041 = vmatpush2.msra.mxu0 0.0
    %2042 = vmatprep.subr.mxu0 0.0
    %2043 = vmatpush2.msra.mxu0 0.0
    %2044 = vmatprep.subr.mxu0 0.0
    %2045 = vmatpush2.msra.mxu0 0.0
    %2046 = vmatprep.subr.mxu0 0.0
    %2047 = vmatpush2.msra.mxu0 0.0
    %2048 = vmatprep.subr.mxu0 0.0
    %2049 = vmatpush2.msra.mxu0 0.0
    %2050 = vmatprep.subr.mxu0 0.0
    %2051 = vmatpush2.msra.mxu0 0.0
    %2052 = vmatprep.subr.mxu0 0.0
    %2053 = vmatpush2.msra.mxu0 0.0
    %2054 = vmatprep.subr.mxu0 0.0
    %2055 = vmatpush2.msra.mxu0 0.0
    %2056 = vmatprep.subr.mxu0 0.0
    %2057 = vmatpush2.msra.mxu0 0.0
    %2058 = vmatprep.subr.mxu0 0.0
    %2059 = vmatpush2.msra.mxu0 0.0
    %2060 = vmatprep.subr.mxu0 0.0
    %2061 = vmatpush2.msra.mxu0 0.0
    %2062 = vmatprep.subr.mxu0 0.0
    %2063 = vmatpush2.msra.mxu0 0.0
    %2064 = vmatprep.subr.mxu0 0.0
    %2065 = vmatpush2.msra.mxu0 0.0
    %2066 = vmatprep.subr.mxu0 0.0
    %2067 = vmatpush2.msra.mxu0 0.0
    %2068 = vmatprep.mubr.f32.mxu0 0.0
    %2069 = vmatmul.mubr.f32.gmra.mxu0 %v1881
    %v2070 = vpop.f32.mrf.mxu0
    %v2071 = vadd.f32 0.0, %v2070
    %v2072 = vpop.f32.mrf.mxu0
    %2073 = vmatprep.mubr.f32.mxu0 0.0
    %2074 = vmatmul.mubr.f32.gmra.mxu0 %v1886
    %v2075 = vpop.f32.mrf.mxu0
    %v2076 = vadd.f32 0.0, %v2075
    %v2077 = vpop.f32.mrf.mxu0
    %2078 = vmatprep.mubr.f32.mxu0 0.0
    %2079 = vmatmul.mubr.f32.gmra.mxu0 %v1962
    %v2080 = vpop.f32.mrf.mxu0
    %v2081 = vadd.f32 0.0, %v2080
    %v2082 = vpop.f32.mrf.mxu0
    %2083 = vmatprep.mubr.f32.mxu0 0.0
    %2084 = vmatmul.mubr.f32.gmra.mxu0 %v1967
    %v2085 = vpop.f32.mrf.mxu0
    %v2086 = vadd.f32 0.0, %v2085
    %v2087 = vpop.f32.mrf.mxu0
    %2088 = vdwg.mxu0
    %2089 = vmatprep.subr.mxu0 0.0
    %2090 = vmatpush1.msra.mxu0 %v1986
    %2091 = vmatprep.subr.mxu0 0.0
    %2092 = vmatpush1.msra.mxu0 %v1985
    %2093 = vmatprep.subr.mxu0 0.0
    %2094 = vmatpush1.msra.mxu0 %v1984
    %2095 = vmatprep.subr.mxu0 0.0
    %2096 = vmatpush1.msra.mxu0 %v1983
    %2097 = vmatprep.subr.mxu0 0.0
    %2098 = vmatpush1.msra.mxu0 %v1982
    %2099 = vmatprep.subr.mxu0 0.0
    %2100 = vmatpush1.msra.mxu0 %v1981
    %2101 = vmatprep.subr.mxu0 0.0
    %2102 = vmatpush1.msra.mxu0 %v1980
    %2103 = vmatprep.subr.mxu0 0.0
    %2104 = vmatpush1.msra.mxu0 %v1979
    %2105 = vmatprep.subr.mxu0 0.0
    %2106 = vmatpush1.msra.mxu0 %v1978
    %2107 = vmatprep.subr.mxu0 0.0
    %2108 = vmatpush1.msra.mxu0 %v1977
    %2109 = vmatprep.subr.mxu0 0.0
    %2110 = vmatpush1.msra.mxu0 %v1976
    %2111 = vmatprep.subr.mxu0 0.0
    %2112 = vmatpush1.msra.mxu0 %v1975
    %2113 = vmatprep.subr.mxu0 0.0
    %2114 = vmatpush1.msra.mxu0 %v1974
    %2115 = vmatprep.subr.mxu0 0.0
    %2116 = vmatpush1.msra.mxu0 %v1973
    %2117 = vmatprep.subr.mxu0 0.0
    %2118 = vmatpush1.msra.mxu0 %v1972
    %2119 = vmatprep.subr.mxu0 0.0
    %2120 = vmatpush1.msra.mxu0 %v1971
    %2121 = vmatprep.subr.mxu0 0.0
    %2122 = vmatpush2.msra.mxu0 0.0
    %2123 = vmatprep.subr.mxu0 0.0
    %2124 = vmatpush2.msra.mxu0 0.0
    %2125 = vmatprep.subr.mxu0 0.0
    %2126 = vmatpush2.msra.mxu0 0.0
    %2127 = vmatprep.subr.mxu0 0.0
    %2128 = vmatpush2.msra.mxu0 0.0
    %2129 = vmatprep.subr.mxu0 0.0
    %2130 = vmatpush2.msra.mxu0 0.0
    %2131 = vmatprep.subr.mxu0 0.0
    %2132 = vmatpush2.msra.mxu0 0.0
    %2133 = vmatprep.subr.mxu0 0.0
    %2134 = vmatpush2.msra.mxu0 0.0
    %2135 = vmatprep.subr.mxu0 0.0
    %2136 = vmatpush2.msra.mxu0 0.0
    %2137 = vmatprep.subr.mxu0 0.0
    %2138 = vmatpush2.msra.mxu0 0.0
    %2139 = vmatprep.subr.mxu0 0.0
    %2140 = vmatpush2.msra.mxu0 0.0
    %2141 = vmatprep.subr.mxu0 0.0
    %2142 = vmatpush2.msra.mxu0 0.0
    %2143 = vmatprep.subr.mxu0 0.0
    %2144 = vmatpush2.msra.mxu0 0.0
    %2145 = vmatprep.subr.mxu0 0.0
    %2146 = vmatpush2.msra.mxu0 0.0
    %2147 = vmatprep.subr.mxu0 0.0
    %2148 = vmatpush2.msra.mxu0 0.0
    %2149 = vmatprep.subr.mxu0 0.0
    %2150 = vmatpush2.msra.mxu0 0.0
    %2151 = vmatprep.subr.mxu0 0.0
    %2152 = vmatpush2.msra.mxu0 0.0
    %2153 = vmatprep.mubr.f32.mxu0 0.0
    %2154 = vmatmul.mubr.f32.gmra.mxu0 %v1719
    %v2155 = vpop.f32.mrf.mxu0
    %v2156 = vadd.f32 %v2071, %v2155
    %v2157 = vpop.f32.mrf.mxu0
    %2158 = vmatprep.mubr.f32.mxu0 0.0
    %2159 = vmatmul.mubr.f32.gmra.mxu0 %v1724
    %v2160 = vpop.f32.mrf.mxu0
    %v2161 = vadd.f32 %v2076, %v2160
    %v2162 = vpop.f32.mrf.mxu0
    %2163 = vmatprep.mubr.f32.mxu0 0.0
    %2164 = vmatmul.mubr.f32.gmra.mxu0 %v1800
    %v2165 = vpop.f32.mrf.mxu0
    %v2166 = vadd.f32 %v2081, %v2165
    %v2167 = vpop.f32.mrf.mxu0
    %2168 = vmatprep.mubr.f32.mxu0 0.0
    %2169 = vmatmul.mubr.f32.gmra.mxu0 %v1805
    %v2170 = vpop.f32.mrf.mxu0
    %v2171 = vadd.f32 %v2086, %v2170
    %v2172 = vpop.f32.mrf.mxu0
    %2173 = vdwg.mxu0
    %s2174 = scalar_lea.vmem %s6, 1
    %v2175 = vld [vmem:[%s2174] sm:$0x1]
    %v2177 = vlaneseq
    %v2178 = vshrl.u32 %v2177, 7
    %v2179 = vsub.s32 0, %v2178
    %v2180 = vrot.slane %v2175, %v2179
    %v2182 = vadd.f32 %v2156, %v2180
    %v2183 = vadd.f32 %v2161, %v2180
    %v2184 = vadd.f32 %v2166, %v2180
    %v2185 = vadd.f32 %v2171, %v2180
    %v2186 = vmax.f32 %v2182, 0.0
    %v2187 = vmax.f32 %v2183, 0.0
    %v2188 = vmax.f32 %v2184, 0.0
    %v2189 = vmax.f32 %v2185, 0.0
    %s2190 = scalar_lea.vmem %s7, 1
    %v2191 = vld [vmem:[%s2190] sm:$0x1]
    %v2193 = vlaneseq
    %v2194 = vshrl.u32 %v2193, 7
    %v2195 = vsub.s32 0, %v2194
    %v2196 = vrot.slane %v2191, %v2195
    %v2198 = vmul.f32 %v2186, %v2196
    %v2199 = vmul.f32 %v2187, %v2196
    %v2200 = vmul.f32 %v2188, %v2196
    %v2201 = vmul.f32 %v2189, %v2196
    %2202 = vadd.xlane.f32.xlu0 %v2198
    %v2203 = vpop.xlane.xlu0 %2202
    %2204 = vadd.xlane.f32.xlu0 %v2199
    %v2205 = vpop.xlane.xlu0 %2204
    %2206 = vadd.xlane.f32.xlu0 %v2200
    %v2207 = vpop.xlane.xlu0 %2206
    %2208 = vadd.xlane.f32.xlu0 %v2201
    %v2209 = vpop.xlane.xlu0 %2208
    %v2210 = vmax.f32 %v1359, %v2203
    %v2211 = vmax.f32 %v1361, %v2205
    %v2212 = vmax.f32 %v1363, %v2207
    %v2213 = vmax.f32 %v1365, %v2209
    %v2214 = vsub.f32 %v1359, %v2210
    %v2215 = vsub.f32 %v1361, %v2211
    %v2216 = vsub.f32 %v1363, %v2212
    %v2217 = vsub.f32 %v1365, %v2213
    %v2218 = vmul.f32 %v2214, 1.442695
    %v2219 = vpow.pop %v2218
    %v2220 = vmul.f32 %v2215, 1.442695
    %v2221 = vpow.pop %v2220
    %v2222 = vmul.f32 %v2216, 1.442695
    %v2223 = vpow.pop %v2222
    %v2224 = vmul.f32 %v2217, 1.442695
    %v2225 = vpow.pop %v2224
    %v2226 = vsub.f32 %v2203, %v2210
    %v2227 = vsub.f32 %v2205, %v2211
    %v2228 = vsub.f32 %v2207, %v2212
    %v2229 = vsub.f32 %v2209, %v2213
    %v2230 = vmul.f32 %v2226, 1.442695
    %v2231 = vpow.pop %v2230
    %v2232 = vmul.f32 %v2227, 1.442695
    %v2233 = vpow.pop %v2232
    %v2234 = vmul.f32 %v2228, 1.442695
    %v2235 = vpow.pop %v2234
    %v2236 = vmul.f32 %v2229, 1.442695
    %v2237 = vpow.pop %v2236
    %v2238 = vadd.f32 %v2219, %v2231
    %v2239 = vadd.f32 %v2221, %v2233
    %v2240 = vadd.f32 %v2223, %v2235
    %v2241 = vadd.f32 %v2225, %v2237
    %v2242 = vmul.f32 %v1343, %v2219
    %v2243 = vmul.f32 %v1344, %v2221
    %v2244 = vmul.f32 %v1345, %v2223
    %v2245 = vmul.f32 %v1346, %v2225
    %v2246 = vmul.f32 %v2231, %v2186
    %v2247 = vmul.f32 %v2233, %v2187
    %v2248 = vmul.f32 %v2235, %v2188
    %v2249 = vmul.f32 %v2237, %v2189
    %v2250 = vadd.f32 %v2242, %v2246
    %v2251 = vadd.f32 %v2243, %v2247
    %v2252 = vadd.f32 %v2244, %v2248
    %v2253 = vadd.f32 %v2245, %v2249
    %v2255 = vsel %vm695, %v1439, 0
    %v2258 = vsel %vm695, %v1444, 0
    %2260 = vmatprep.subr.mxu0 0.0
    %2261 = vmatpush1.msra.mxu0 0.0
    %2262 = vmatprep.subr.mxu0 0.0
    %2263 = vmatpush1.msra.mxu0 0.0
    %2264 = vmatprep.subr.mxu0 0.0
    %2265 = vmatpush1.msra.mxu0 0.0
    %2266 = vmatprep.subr.mxu0 0.0
    %2267 = vmatpush1.msra.mxu0 0.0
    %2268 = vmatprep.subr.mxu0 0.0
    %2269 = vmatpush1.msra.mxu0 0.0
    %2270 = vmatprep.subr.mxu0 0.0
    %2271 = vmatpush1.msra.mxu0 0.0
    %2272 = vmatprep.subr.mxu0 0.0
    %2273 = vmatpush1.msra.mxu0 0.0
    %2274 = vmatprep.subr.mxu0 0.0
    %2275 = vmatpush1.msra.mxu0 0.0
    %2276 = vmatprep.subr.mxu0 0.0
    %2277 = vmatpush1.msra.mxu0 0.0
    %2278 = vmatprep.subr.mxu0 0.0
    %2279 = vmatpush1.msra.mxu0 0.0
    %2280 = vmatprep.subr.mxu0 0.0
    %2281 = vmatpush1.msra.mxu0 0.0
    %2282 = vmatprep.subr.mxu0 0.0
    %2283 = vmatpush1.msra.mxu0 0.0
    %2284 = vmatprep.subr.mxu0 0.0
    %2285 = vmatpush1.msra.mxu0 0.0
    %2286 = vmatprep.subr.mxu0 0.0
    %2287 = vmatpush1.msra.mxu0 0.0
    %2288 = vmatprep.subr.mxu0 0.0
    %2289 = vmatpush1.msra.mxu0 %v121
    %2290 = vmatprep.subr.mxu0 0.0
    %2291 = vmatpush1.msra.mxu0 %v120
    %2292 = vmatprep.subr.mxu0 0.0
    %2293 = vmatpush2.msra.mxu0 0.0
    %2294 = vmatprep.subr.mxu0 0.0
    %2295 = vmatpush2.msra.mxu0 0.0
    %2296 = vmatprep.subr.mxu0 0.0
    %2297 = vmatpush2.msra.mxu0 0.0
    %2298 = vmatprep.subr.mxu0 0.0
    %2299 = vmatpush2.msra.mxu0 0.0
    %2300 = vmatprep.subr.mxu0 0.0
    %2301 = vmatpush2.msra.mxu0 0.0
    %2302 = vmatprep.subr.mxu0 0.0
    %2303 = vmatpush2.msra.mxu0 0.0
    %2304 = vmatprep.subr.mxu0 0.0
    %2305 = vmatpush2.msra.mxu0 0.0
    %2306 = vmatprep.subr.mxu0 0.0
    %2307 = vmatpush2.msra.mxu0 0.0
    %2308 = vmatprep.subr.mxu0 0.0
    %2309 = vmatpush2.msra.mxu0 0.0
    %2310 = vmatprep.subr.mxu0 0.0
    %2311 = vmatpush2.msra.mxu0 0.0
    %2312 = vmatprep.subr.mxu0 0.0
    %2313 = vmatpush2.msra.mxu0 0.0
    %2314 = vmatprep.subr.mxu0 0.0
    %2315 = vmatpush2.msra.mxu0 0.0
    %2316 = vmatprep.subr.mxu0 0.0
    %2317 = vmatpush2.msra.mxu0 0.0
    %2318 = vmatprep.subr.mxu0 0.0
    %2319 = vmatpush2.msra.mxu0 0.0
    %2320 = vmatprep.subr.mxu0 0.0
    %2321 = vmatpush2.msra.mxu0 0.0
    %2322 = vmatprep.subr.mxu0 0.0
    %2323 = vmatpush2.msra.mxu0 0.0
    %2324 = vmatprep.mubr.f32.mxu0 0.0
    %2325 = vmatmul.mubr.f32.gmra.mxu0 %v2255
    %v2326 = vpop.f32.mrf.mxu0
    %v2327 = vadd.f32 0.0, %v2326
    %v2328 = vpop.f32.mrf.mxu0
    %2329 = vmatprep.mubr.f32.mxu0 0.0
    %2330 = vmatmul.mubr.f32.gmra.mxu0 %v2258
    %v2331 = vpop.f32.mrf.mxu0
    %v2332 = vadd.f32 0.0, %v2331
    %v2333 = vpop.f32.mrf.mxu0
    %2334 = vdwg.mxu0
    %v2336 = vsel %vm695, %v1520, 0
    %v2339 = vsel %vm695, %v1525, 0
    %2341 = vmatprep.subr.mxu0 0.0
    %2342 = vmatpush1.msra.mxu0 0.0
    %2343 = vmatprep.subr.mxu0 0.0
    %2344 = vmatpush1.msra.mxu0 0.0
    %2345 = vmatprep.subr.mxu0 0.0
    %2346 = vmatpush1.msra.mxu0 0.0
    %2347 = vmatprep.subr.mxu0 0.0
    %2348 = vmatpush1.msra.mxu0 0.0
    %2349 = vmatprep.subr.mxu0 0.0
    %2350 = vmatpush1.msra.mxu0 0.0
    %2351 = vmatprep.subr.mxu0 0.0
    %2352 = vmatpush1.msra.mxu0 0.0
    %2353 = vmatprep.subr.mxu0 0.0
    %2354 = vmatpush1.msra.mxu0 0.0
    %2355 = vmatprep.subr.mxu0 0.0
    %2356 = vmatpush1.msra.mxu0 0.0
    %2357 = vmatprep.subr.mxu0 0.0
    %2358 = vmatpush1.msra.mxu0 0.0
    %2359 = vmatprep.subr.mxu0 0.0
    %2360 = vmatpush1.msra.mxu0 0.0
    %2361 = vmatprep.subr.mxu0 0.0
    %2362 = vmatpush1.msra.mxu0 0.0
    %2363 = vmatprep.subr.mxu0 0.0
    %2364 = vmatpush1.msra.mxu0 0.0
    %2365 = vmatprep.subr.mxu0 0.0
    %2366 = vmatpush1.msra.mxu0 0.0
    %2367 = vmatprep.subr.mxu0 0.0
    %2368 = vmatpush1.msra.mxu0 0.0
    %2369 = vmatprep.subr.mxu0 0.0
    %2370 = vmatpush1.msra.mxu0 %v123
    %2371 = vmatprep.subr.mxu0 0.0
    %2372 = vmatpush1.msra.mxu0 %v122
    %2373 = vmatprep.subr.mxu0 0.0
    %2374 = vmatpush2.msra.mxu0 0.0
    %2375 = vmatprep.subr.mxu0 0.0
    %2376 = vmatpush2.msra.mxu0 0.0
    %2377 = vmatprep.subr.mxu0 0.0
    %2378 = vmatpush2.msra.mxu0 0.0
    %2379 = vmatprep.subr.mxu0 0.0
    %2380 = vmatpush2.msra.mxu0 0.0
    %2381 = vmatprep.subr.mxu0 0.0
    %2382 = vmatpush2.msra.mxu0 0.0
    %2383 = vmatprep.subr.mxu0 0.0
    %2384 = vmatpush2.msra.mxu0 0.0
    %2385 = vmatprep.subr.mxu0 0.0
    %2386 = vmatpush2.msra.mxu0 0.0
    %2387 = vmatprep.subr.mxu0 0.0
    %2388 = vmatpush2.msra.mxu0 0.0
    %2389 = vmatprep.subr.mxu0 0.0
    %2390 = vmatpush2.msra.mxu0 0.0
    %2391 = vmatprep.subr.mxu0 0.0
    %2392 = vmatpush2.msra.mxu0 0.0
    %2393 = vmatprep.subr.mxu0 0.0
    %2394 = vmatpush2.msra.mxu0 0.0
    %2395 = vmatprep.subr.mxu0 0.0
    %2396 = vmatpush2.msra.mxu0 0.0
    %2397 = vmatprep.subr.mxu0 0.0
    %2398 = vmatpush2.msra.mxu0 0.0
    %2399 = vmatprep.subr.mxu0 0.0
    %2400 = vmatpush2.msra.mxu0 0.0
    %2401 = vmatprep.subr.mxu0 0.0
    %2402 = vmatpush2.msra.mxu0 0.0
    %2403 = vmatprep.subr.mxu0 0.0
    %2404 = vmatpush2.msra.mxu0 0.0
    %2405 = vmatprep.mubr.f32.mxu0 0.0
    %2406 = vmatmul.mubr.f32.gmra.mxu0 %v2336
    %v2407 = vpop.f32.mrf.mxu0
    %v2408 = vadd.f32 0.0, %v2407
    %v2409 = vpop.f32.mrf.mxu0
    %2410 = vmatprep.mubr.f32.mxu0 0.0
    %2411 = vmatmul.mubr.f32.gmra.mxu0 %v2339
    %v2412 = vpop.f32.mrf.mxu0
    %v2413 = vadd.f32 0.0, %v2412
    %v2414 = vpop.f32.mrf.mxu0
    %2415 = vdwg.mxu0
    %v2416 = vadd.f32 %v2327, 1.0
    %v2417 = vadd.f32 %v2332, 1.0
    %v2418 = vadd.f32 %v2408, 1.0
    %v2419 = vadd.f32 %v2413, 1.0
    %v2420 = vsel %vm689, %v2416, %v2327
    %v2421 = vsel %vm690, %v2417, %v2332
    %v2422 = vsel %vm689, %v2418, %v2408
    %v2423 = vsel %vm690, %v2419, %v2413
    %v2424 = vsel %vm695, %v2420, 0.0
    %2425 = vadd.xlane.f32.xlu0 %v2424
    %v2426 = vpop.xlane.xlu0 %2425
    %v2427 = vsel %vm695, %v2421, 0.0
    %2428 = vadd.xlane.f32.xlu0 %v2427
    %v2429 = vpop.xlane.xlu0 %2428
    %v2430 = vsel %vm695, %v2422, 0.0
    %2431 = vadd.xlane.f32.xlu0 %v2430
    %v2432 = vpop.xlane.xlu0 %2431
    %v2433 = vsel %vm695, %v2423, 0.0
    %2434 = vadd.xlane.f32.xlu0 %v2433
    %v2435 = vpop.xlane.xlu0 %2434
    %v2436 = vmax.f32 %v2426, 1e-12
    %v2437 = vmax.f32 %v2429, 1e-12
    %v2438 = vmax.f32 %v2432, 1e-12
    %v2439 = vmax.f32 %v2435, 1e-12
    %v2440 = vadd.f32 %v2424, %v2427
    %v2441 = vrot.slane %v2440, 4
    %v2442 = vadd.f32 %v2440, %v2441
    %v2443 = vrot.slane %v2442, 2
    %v2444 = vadd.f32 %v2442, %v2443
    %v2445 = vrot.slane %v2444, 1
    %v2446 = vadd.f32 %v2444, %v2445
    %v2447 = vadd.f32 %v2430, %v2433
    %v2448 = vrot.slane %v2447, 4
    %v2449 = vadd.f32 %v2447, %v2448
    %v2450 = vrot.slane %v2449, 2
    %v2451 = vadd.f32 %v2449, %v2450
    %v2452 = vrot.slane %v2451, 1
    %v2453 = vadd.f32 %v2451, %v2452
    %v2454 = vmax.f32 %v2446, 1e-12
    %v2455 = vmax.f32 %v2453, 1e-12
    %v2456 = vrsqrt.pop %v2436
    %v2457 = vrsqrt.pop %v2437
    %v2458 = vrsqrt.pop %v2438
    %v2459 = vrsqrt.pop %v2439
    %v2460 = vrsqrt.pop %v2454
    %v2461 = vrsqrt.pop %v2455
    %v2462 = vmul.f32 %v2456, %v2460
    %v2463 = vmul.f32 %v2457, %v2460
    %v2464 = vmul.f32 %v2458, %v2461
    %v2465 = vmul.f32 %v2459, %v2461
    %v2466 = vmul.f32 %v2420, %v2462
    %v2467 = vmul.f32 %v2421, %v2463
    %v2468 = vmul.f32 %v2422, %v2464
    %v2469 = vmul.f32 %v2423, %v2465
    %2470 = vxpose.xlu0.b32.start [1/16] %v2466, 128
    %2471 = vxpose.xlu0.b32.cont [2/16] %v2467, 128
    %2472 = vxpose.xlu0.b32.cont [3/16] 0.0, 128
    %2473 = vxpose.xlu0.b32.cont [4/16] 0.0, 128
    %2474 = vxpose.xlu0.b32.cont [5/16] 0.0, 128
    %2475 = vxpose.xlu0.b32.cont [6/16] 0.0, 128
    %2476 = vxpose.xlu0.b32.cont [7/16] 0.0, 128
    %2477 = vxpose.xlu0.b32.cont [8/16] 0.0, 128
    %2478 = vxpose.xlu0.b32.cont [9/16] 0.0, 128
    %2479 = vxpose.xlu0.b32.cont [10/16] 0.0, 128
    %2480 = vxpose.xlu0.b32.cont [11/16] 0.0, 128
    %2481 = vxpose.xlu0.b32.cont [12/16] 0.0, 128
    %2482 = vxpose.xlu0.b32.cont [13/16] 0.0, 128
    %2483 = vxpose.xlu0.b32.cont [14/16] 0.0, 128
    %2484 = vxpose.xlu0.b32.cont [15/16] 0.0, 128
    %2485 = vxpose.xlu0.b32.end [16/16] 0.0, 128
    %v2486 = vpop.trf.xlu0
    %v2487 = vpop.trf.xlu0
    %v2488 = vpop.trf.xlu0
    %v2489 = vpop.trf.xlu0
    %v2490 = vpop.trf.xlu0
    %v2491 = vpop.trf.xlu0
    %v2492 = vpop.trf.xlu0
    %v2493 = vpop.trf.xlu0
    %v2494 = vpop.trf.xlu0
    %v2495 = vpop.trf.xlu0
    %v2496 = vpop.trf.xlu0
    %v2497 = vpop.trf.xlu0
    %v2498 = vpop.trf.xlu0
    %v2499 = vpop.trf.xlu0
    %v2500 = vpop.trf.xlu0
    %v2501 = vpop.trf.xlu0
    %2502 = vxpose.xlu0.b32.start [1/16] %v2468, 128
    %2503 = vxpose.xlu0.b32.cont [2/16] %v2469, 128
    %2504 = vxpose.xlu0.b32.cont [3/16] 0.0, 128
    %2505 = vxpose.xlu0.b32.cont [4/16] 0.0, 128
    %2506 = vxpose.xlu0.b32.cont [5/16] 0.0, 128
    %2507 = vxpose.xlu0.b32.cont [6/16] 0.0, 128
    %2508 = vxpose.xlu0.b32.cont [7/16] 0.0, 128
    %2509 = vxpose.xlu0.b32.cont [8/16] 0.0, 128
    %2510 = vxpose.xlu0.b32.cont [9/16] 0.0, 128
    %2511 = vxpose.xlu0.b32.cont [10/16] 0.0, 128
    %2512 = vxpose.xlu0.b32.cont [11/16] 0.0, 128
    %2513 = vxpose.xlu0.b32.cont [12/16] 0.0, 128
    %2514 = vxpose.xlu0.b32.cont [13/16] 0.0, 128
    %2515 = vxpose.xlu0.b32.cont [14/16] 0.0, 128
    %2516 = vxpose.xlu0.b32.cont [15/16] 0.0, 128
    %2517 = vxpose.xlu0.b32.end [16/16] 0.0, 128
    %v2518 = vpop.trf.xlu0
    %v2519 = vpop.trf.xlu0
    %v2520 = vpop.trf.xlu0
    %v2521 = vpop.trf.xlu0
    %v2522 = vpop.trf.xlu0
    %v2523 = vpop.trf.xlu0
    %v2524 = vpop.trf.xlu0
    %v2525 = vpop.trf.xlu0
    %v2526 = vpop.trf.xlu0
    %v2527 = vpop.trf.xlu0
    %v2528 = vpop.trf.xlu0
    %v2529 = vpop.trf.xlu0
    %v2530 = vpop.trf.xlu0
    %v2531 = vpop.trf.xlu0
    %v2532 = vpop.trf.xlu0
    %v2533 = vpop.trf.xlu0
    %v2535 = vsel %vm695, %v2466, 0
    %v2538 = vsel %vm695, %v2467, 0
    %2540 = vmatprep.subr.mxu0 0.0
    %2541 = vmatpush1.msra.mxu0 0.0
    %2542 = vmatprep.subr.mxu0 0.0
    %2543 = vmatpush1.msra.mxu0 0.0
    %2544 = vmatprep.subr.mxu0 0.0
    %2545 = vmatpush1.msra.mxu0 0.0
    %2546 = vmatprep.subr.mxu0 0.0
    %2547 = vmatpush1.msra.mxu0 0.0
    %2548 = vmatprep.subr.mxu0 0.0
    %2549 = vmatpush1.msra.mxu0 0.0
    %2550 = vmatprep.subr.mxu0 0.0
    %2551 = vmatpush1.msra.mxu0 0.0
    %2552 = vmatprep.subr.mxu0 0.0
    %2553 = vmatpush1.msra.mxu0 0.0
    %2554 = vmatprep.subr.mxu0 0.0
    %2555 = vmatpush1.msra.mxu0 0.0
    %2556 = vmatprep.subr.mxu0 0.0
    %2557 = vmatpush1.msra.mxu0 0.0
    %2558 = vmatprep.subr.mxu0 0.0
    %2559 = vmatpush1.msra.mxu0 0.0
    %2560 = vmatprep.subr.mxu0 0.0
    %2561 = vmatpush1.msra.mxu0 0.0
    %2562 = vmatprep.subr.mxu0 0.0
    %2563 = vmatpush1.msra.mxu0 0.0
    %2564 = vmatprep.subr.mxu0 0.0
    %2565 = vmatpush1.msra.mxu0 0.0
    %2566 = vmatprep.subr.mxu0 0.0
    %2567 = vmatpush1.msra.mxu0 0.0
    %2568 = vmatprep.subr.mxu0 0.0
    %2569 = vmatpush1.msra.mxu0 %v489
    %2570 = vmatprep.subr.mxu0 0.0
    %2571 = vmatpush1.msra.mxu0 %v483
    %2572 = vmatprep.subr.mxu0 0.0
    %2573 = vmatpush2.msra.mxu0 0.0
    %2574 = vmatprep.subr.mxu0 0.0
    %2575 = vmatpush2.msra.mxu0 0.0
    %2576 = vmatprep.subr.mxu0 0.0
    %2577 = vmatpush2.msra.mxu0 0.0
    %2578 = vmatprep.subr.mxu0 0.0
    %2579 = vmatpush2.msra.mxu0 0.0
    %2580 = vmatprep.subr.mxu0 0.0
    %2581 = vmatpush2.msra.mxu0 0.0
    %2582 = vmatprep.subr.mxu0 0.0
    %2583 = vmatpush2.msra.mxu0 0.0
    %2584 = vmatprep.subr.mxu0 0.0
    %2585 = vmatpush2.msra.mxu0 0.0
    %2586 = vmatprep.subr.mxu0 0.0
    %2587 = vmatpush2.msra.mxu0 0.0
    %2588 = vmatprep.subr.mxu0 0.0
    %2589 = vmatpush2.msra.mxu0 0.0
    %2590 = vmatprep.subr.mxu0 0.0
    %2591 = vmatpush2.msra.mxu0 0.0
    %2592 = vmatprep.subr.mxu0 0.0
    %2593 = vmatpush2.msra.mxu0 0.0
    %2594 = vmatprep.subr.mxu0 0.0
    %2595 = vmatpush2.msra.mxu0 0.0
    %2596 = vmatprep.subr.mxu0 0.0
    %2597 = vmatpush2.msra.mxu0 0.0
    %2598 = vmatprep.subr.mxu0 0.0
    %2599 = vmatpush2.msra.mxu0 0.0
    %2600 = vmatprep.subr.mxu0 0.0
    %2601 = vmatpush2.msra.mxu0 0.0
    %2602 = vmatprep.subr.mxu0 0.0
    %2603 = vmatpush2.msra.mxu0 0.0
    %2604 = vmatprep.mubr.f32.mxu0 0.0
    %2605 = vmatmul.mubr.f32.gmra.mxu0 %v2535
    %v2606 = vpop.f32.mrf.mxu0
    %v2607 = vadd.f32 0.0, %v2606
    %v2608 = vpop.f32.mrf.mxu0
    %2609 = vmatprep.mubr.f32.mxu0 0.0
    %2610 = vmatmul.mubr.f32.gmra.mxu0 %v2538
    %v2611 = vpop.f32.mrf.mxu0
    %v2612 = vadd.f32 0.0, %v2611
    %v2613 = vpop.f32.mrf.mxu0
    %2614 = vdwg.mxu0
    %v2616 = vsel %vm695, %v2468, 0
    %v2619 = vsel %vm695, %v2469, 0
    %2621 = vmatprep.subr.mxu0 0.0
    %2622 = vmatpush1.msra.mxu0 0.0
    %2623 = vmatprep.subr.mxu0 0.0
    %2624 = vmatpush1.msra.mxu0 0.0
    %2625 = vmatprep.subr.mxu0 0.0
    %2626 = vmatpush1.msra.mxu0 0.0
    %2627 = vmatprep.subr.mxu0 0.0
    %2628 = vmatpush1.msra.mxu0 0.0
    %2629 = vmatprep.subr.mxu0 0.0
    %2630 = vmatpush1.msra.mxu0 0.0
    %2631 = vmatprep.subr.mxu0 0.0
    %2632 = vmatpush1.msra.mxu0 0.0
    %2633 = vmatprep.subr.mxu0 0.0
    %2634 = vmatpush1.msra.mxu0 0.0
    %2635 = vmatprep.subr.mxu0 0.0
    %2636 = vmatpush1.msra.mxu0 0.0
    %2637 = vmatprep.subr.mxu0 0.0
    %2638 = vmatpush1.msra.mxu0 0.0
    %2639 = vmatprep.subr.mxu0 0.0
    %2640 = vmatpush1.msra.mxu0 0.0
    %2641 = vmatprep.subr.mxu0 0.0
    %2642 = vmatpush1.msra.mxu0 0.0
    %2643 = vmatprep.subr.mxu0 0.0
    %2644 = vmatpush1.msra.mxu0 0.0
    %2645 = vmatprep.subr.mxu0 0.0
    %2646 = vmatpush1.msra.mxu0 0.0
    %2647 = vmatprep.subr.mxu0 0.0
    %2648 = vmatpush1.msra.mxu0 0.0
    %2649 = vmatprep.subr.mxu0 0.0
    %2650 = vmatpush1.msra.mxu0 %v501
    %2651 = vmatprep.subr.mxu0 0.0
    %2652 = vmatpush1.msra.mxu0 %v495
    %2653 = vmatprep.subr.mxu0 0.0
    %2654 = vmatpush2.msra.mxu0 0.0
    %2655 = vmatprep.subr.mxu0 0.0
    %2656 = vmatpush2.msra.mxu0 0.0
    %2657 = vmatprep.subr.mxu0 0.0
    %2658 = vmatpush2.msra.mxu0 0.0
    %2659 = vmatprep.subr.mxu0 0.0
    %2660 = vmatpush2.msra.mxu0 0.0
    %2661 = vmatprep.subr.mxu0 0.0
    %2662 = vmatpush2.msra.mxu0 0.0
    %2663 = vmatprep.subr.mxu0 0.0
    %2664 = vmatpush2.msra.mxu0 0.0
    %2665 = vmatprep.subr.mxu0 0.0
    %2666 = vmatpush2.msra.mxu0 0.0
    %2667 = vmatprep.subr.mxu0 0.0
    %2668 = vmatpush2.msra.mxu0 0.0
    %2669 = vmatprep.subr.mxu0 0.0
    %2670 = vmatpush2.msra.mxu0 0.0
    %2671 = vmatprep.subr.mxu0 0.0
    %2672 = vmatpush2.msra.mxu0 0.0
    %2673 = vmatprep.subr.mxu0 0.0
    %2674 = vmatpush2.msra.mxu0 0.0
    %2675 = vmatprep.subr.mxu0 0.0
    %2676 = vmatpush2.msra.mxu0 0.0
    %2677 = vmatprep.subr.mxu0 0.0
    %2678 = vmatpush2.msra.mxu0 0.0
    %2679 = vmatprep.subr.mxu0 0.0
    %2680 = vmatpush2.msra.mxu0 0.0
    %2681 = vmatprep.subr.mxu0 0.0
    %2682 = vmatpush2.msra.mxu0 0.0
    %2683 = vmatprep.subr.mxu0 0.0
    %2684 = vmatpush2.msra.mxu0 0.0
    %2685 = vmatprep.mubr.f32.mxu0 0.0
    %2686 = vmatmul.mubr.f32.gmra.mxu0 %v2616
    %v2687 = vpop.f32.mrf.mxu0
    %v2688 = vadd.f32 0.0, %v2687
    %v2689 = vpop.f32.mrf.mxu0
    %2690 = vmatprep.mubr.f32.mxu0 0.0
    %2691 = vmatmul.mubr.f32.gmra.mxu0 %v2619
    %v2692 = vpop.f32.mrf.mxu0
    %v2693 = vadd.f32 0.0, %v2692
    %v2694 = vpop.f32.mrf.mxu0
    %2695 = vdwg.mxu0
    %v2697 = vsel %vm695, %v2486, 0
    %v2700 = vsel %vm695, %v2487, 0
    %2702 = vmatprep.subr.mxu0 0.0
    %2703 = vmatpush1.msra.mxu0 0.0
    %2704 = vmatprep.subr.mxu0 0.0
    %2705 = vmatpush1.msra.mxu0 0.0
    %2706 = vmatprep.subr.mxu0 0.0
    %2707 = vmatpush1.msra.mxu0 0.0
    %2708 = vmatprep.subr.mxu0 0.0
    %2709 = vmatpush1.msra.mxu0 0.0
    %2710 = vmatprep.subr.mxu0 0.0
    %2711 = vmatpush1.msra.mxu0 0.0
    %2712 = vmatprep.subr.mxu0 0.0
    %2713 = vmatpush1.msra.mxu0 0.0
    %2714 = vmatprep.subr.mxu0 0.0
    %2715 = vmatpush1.msra.mxu0 0.0
    %2716 = vmatprep.subr.mxu0 0.0
    %2717 = vmatpush1.msra.mxu0 0.0
    %2718 = vmatprep.subr.mxu0 0.0
    %2719 = vmatpush1.msra.mxu0 0.0
    %2720 = vmatprep.subr.mxu0 0.0
    %2721 = vmatpush1.msra.mxu0 0.0
    %2722 = vmatprep.subr.mxu0 0.0
    %2723 = vmatpush1.msra.mxu0 0.0
    %2724 = vmatprep.subr.mxu0 0.0
    %2725 = vmatpush1.msra.mxu0 0.0
    %2726 = vmatprep.subr.mxu0 0.0
    %2727 = vmatpush1.msra.mxu0 0.0
    %2728 = vmatprep.subr.mxu0 0.0
    %2729 = vmatpush1.msra.mxu0 0.0
    %2730 = vmatprep.subr.mxu0 0.0
    %2731 = vmatpush1.msra.mxu0 %v491
    %2732 = vmatprep.subr.mxu0 0.0
    %2733 = vmatpush1.msra.mxu0 %v485
    %2734 = vmatprep.subr.mxu0 0.0
    %2735 = vmatpush2.msra.mxu0 0.0
    %2736 = vmatprep.subr.mxu0 0.0
    %2737 = vmatpush2.msra.mxu0 0.0
    %2738 = vmatprep.subr.mxu0 0.0
    %2739 = vmatpush2.msra.mxu0 0.0
    %2740 = vmatprep.subr.mxu0 0.0
    %2741 = vmatpush2.msra.mxu0 0.0
    %2742 = vmatprep.subr.mxu0 0.0
    %2743 = vmatpush2.msra.mxu0 0.0
    %2744 = vmatprep.subr.mxu0 0.0
    %2745 = vmatpush2.msra.mxu0 0.0
    %2746 = vmatprep.subr.mxu0 0.0
    %2747 = vmatpush2.msra.mxu0 0.0
    %2748 = vmatprep.subr.mxu0 0.0
    %2749 = vmatpush2.msra.mxu0 0.0
    %2750 = vmatprep.subr.mxu0 0.0
    %2751 = vmatpush2.msra.mxu0 0.0
    %2752 = vmatprep.subr.mxu0 0.0
    %2753 = vmatpush2.msra.mxu0 0.0
    %2754 = vmatprep.subr.mxu0 0.0
    %2755 = vmatpush2.msra.mxu0 0.0
    %2756 = vmatprep.subr.mxu0 0.0
    %2757 = vmatpush2.msra.mxu0 0.0
    %2758 = vmatprep.subr.mxu0 0.0
    %2759 = vmatpush2.msra.mxu0 0.0
    %2760 = vmatprep.subr.mxu0 0.0
    %2761 = vmatpush2.msra.mxu0 0.0
    %2762 = vmatprep.subr.mxu0 0.0
    %2763 = vmatpush2.msra.mxu0 0.0
    %2764 = vmatprep.subr.mxu0 0.0
    %2765 = vmatpush2.msra.mxu0 0.0
    %2766 = vmatprep.mubr.f32.mxu0 0.0
    %2767 = vmatmul.mubr.f32.gmra.mxu0 %v2697
    %v2768 = vpop.f32.mrf.mxu0
    %v2769 = vadd.f32 0.0, %v2768
    %v2770 = vpop.f32.mrf.mxu0
    %2771 = vmatprep.mubr.f32.mxu0 0.0
    %2772 = vmatmul.mubr.f32.gmra.mxu0 %v2700
    %v2773 = vpop.f32.mrf.mxu0
    %v2774 = vadd.f32 0.0, %v2773
    %v2775 = vpop.f32.mrf.mxu0
    %2776 = vdwg.mxu0
    %v2778 = vsel %vm695, %v2518, 0
    %v2781 = vsel %vm695, %v2519, 0
    %2783 = vmatprep.subr.mxu0 0.0
    %2784 = vmatpush1.msra.mxu0 0.0
    %2785 = vmatprep.subr.mxu0 0.0
    %2786 = vmatpush1.msra.mxu0 0.0
    %2787 = vmatprep.subr.mxu0 0.0
    %2788 = vmatpush1.msra.mxu0 0.0
    %2789 = vmatprep.subr.mxu0 0.0
    %2790 = vmatpush1.msra.mxu0 0.0
    %2791 = vmatprep.subr.mxu0 0.0
    %2792 = vmatpush1.msra.mxu0 0.0
    %2793 = vmatprep.subr.mxu0 0.0
    %2794 = vmatpush1.msra.mxu0 0.0
    %2795 = vmatprep.subr.mxu0 0.0
    %2796 = vmatpush1.msra.mxu0 0.0
    %2797 = vmatprep.subr.mxu0 0.0
    %2798 = vmatpush1.msra.mxu0 0.0
    %2799 = vmatprep.subr.mxu0 0.0
    %2800 = vmatpush1.msra.mxu0 0.0
    %2801 = vmatprep.subr.mxu0 0.0
    %2802 = vmatpush1.msra.mxu0 0.0
    %2803 = vmatprep.subr.mxu0 0.0
    %2804 = vmatpush1.msra.mxu0 0.0
    %2805 = vmatprep.subr.mxu0 0.0
    %2806 = vmatpush1.msra.mxu0 0.0
    %2807 = vmatprep.subr.mxu0 0.0
    %2808 = vmatpush1.msra.mxu0 0.0
    %2809 = vmatprep.subr.mxu0 0.0
    %2810 = vmatpush1.msra.mxu0 0.0
    %2811 = vmatprep.subr.mxu0 0.0
    %2812 = vmatpush1.msra.mxu0 %v503
    %2813 = vmatprep.subr.mxu0 0.0
    %2814 = vmatpush1.msra.mxu0 %v497
    %2815 = vmatprep.subr.mxu0 0.0
    %2816 = vmatpush2.msra.mxu0 0.0
    %2817 = vmatprep.subr.mxu0 0.0
    %2818 = vmatpush2.msra.mxu0 0.0
    %2819 = vmatprep.subr.mxu0 0.0
    %2820 = vmatpush2.msra.mxu0 0.0
    %2821 = vmatprep.subr.mxu0 0.0
    %2822 = vmatpush2.msra.mxu0 0.0
    %2823 = vmatprep.subr.mxu0 0.0
    %2824 = vmatpush2.msra.mxu0 0.0
    %2825 = vmatprep.subr.mxu0 0.0
    %2826 = vmatpush2.msra.mxu0 0.0
    %2827 = vmatprep.subr.mxu0 0.0
    %2828 = vmatpush2.msra.mxu0 0.0
    %2829 = vmatprep.subr.mxu0 0.0
    %2830 = vmatpush2.msra.mxu0 0.0
    %2831 = vmatprep.subr.mxu0 0.0
    %2832 = vmatpush2.msra.mxu0 0.0
    %2833 = vmatprep.subr.mxu0 0.0
    %2834 = vmatpush2.msra.mxu0 0.0
    %2835 = vmatprep.subr.mxu0 0.0
    %2836 = vmatpush2.msra.mxu0 0.0
    %2837 = vmatprep.subr.mxu0 0.0
    %2838 = vmatpush2.msra.mxu0 0.0
    %2839 = vmatprep.subr.mxu0 0.0
    %2840 = vmatpush2.msra.mxu0 0.0
    %2841 = vmatprep.subr.mxu0 0.0
    %2842 = vmatpush2.msra.mxu0 0.0
    %2843 = vmatprep.subr.mxu0 0.0
    %2844 = vmatpush2.msra.mxu0 0.0
    %2845 = vmatprep.subr.mxu0 0.0
    %2846 = vmatpush2.msra.mxu0 0.0
    %2847 = vmatprep.mubr.f32.mxu0 0.0
    %2848 = vmatmul.mubr.f32.gmra.mxu0 %v2778
    %v2849 = vpop.f32.mrf.mxu0
    %v2850 = vadd.f32 0.0, %v2849
    %v2851 = vpop.f32.mrf.mxu0
    %2852 = vmatprep.mubr.f32.mxu0 0.0
    %2853 = vmatmul.mubr.f32.gmra.mxu0 %v2781
    %v2854 = vpop.f32.mrf.mxu0
    %v2855 = vadd.f32 0.0, %v2854
    %v2856 = vpop.f32.mrf.mxu0
    %2857 = vdwg.mxu0
    %s2858 = scalar_lea.vmem [#allocation10], 256
    %v2859 = vld [vmem:[%s2858] sm:$0xff]
    %v2860 = vld [vmem:[%s2858 + $0x8] sm:$0xff]
    %v2861 = vld [vmem:[%s2858 + $0x10] sm:$0xff]
    %v2862 = vld [vmem:[%s2858 + $0x18] sm:$0xff]
    %v2863 = vld [vmem:[%s2858 + $0x20] sm:$0xff]
    %v2864 = vld [vmem:[%s2858 + $0x28] sm:$0xff]
    %v2865 = vld [vmem:[%s2858 + $0x30] sm:$0xff]
    %v2866 = vld [vmem:[%s2858 + $0x38] sm:$0xff]
    %v2867 = vld [vmem:[%s2858 + $0x40] sm:$0xff]
    %v2868 = vld [vmem:[%s2858 + $0x48] sm:$0xff]
    %v2869 = vld [vmem:[%s2858 + $0x50] sm:$0xff]
    %v2870 = vld [vmem:[%s2858 + $0x58] sm:$0xff]
    %v2871 = vld [vmem:[%s2858 + $0x60] sm:$0xff]
    %v2872 = vld [vmem:[%s2858 + $0x68] sm:$0xff]
    %v2873 = vld [vmem:[%s2858 + $0x70] sm:$0xff]
    %v2874 = vld [vmem:[%s2858 + $0x78] sm:$0xff]
    %s2875 = scalar_lea.vmem [#allocation11], 256
    %v2876 = vld [vmem:[%s2875] sm:$0xff]
    %v2877 = vld [vmem:[%s2875 + $0x8] sm:$0xff]
    %v2878 = vld [vmem:[%s2875 + $0x10] sm:$0xff]
    %v2879 = vld [vmem:[%s2875 + $0x18] sm:$0xff]
    %v2880 = vld [vmem:[%s2875 + $0x20] sm:$0xff]
    %v2881 = vld [vmem:[%s2875 + $0x28] sm:$0xff]
    %v2882 = vld [vmem:[%s2875 + $0x30] sm:$0xff]
    %v2883 = vld [vmem:[%s2875 + $0x38] sm:$0xff]
    %v2884 = vld [vmem:[%s2875 + $0x40] sm:$0xff]
    %v2885 = vld [vmem:[%s2875 + $0x48] sm:$0xff]
    %v2886 = vld [vmem:[%s2875 + $0x50] sm:$0xff]
    %v2887 = vld [vmem:[%s2875 + $0x58] sm:$0xff]
    %v2888 = vld [vmem:[%s2875 + $0x60] sm:$0xff]
    %v2889 = vld [vmem:[%s2875 + $0x68] sm:$0xff]
    %v2890 = vld [vmem:[%s2875 + $0x70] sm:$0xff]
    %v2891 = vld [vmem:[%s2875 + $0x78] sm:$0xff]
    %2892 = vmatprep.subr.mxu0 0.0
    %2893 = vmatpush1.msra.mxu0 %v2891
    %2894 = vmatprep.subr.mxu0 0.0
    %2895 = vmatpush1.msra.mxu0 %v2890
    %2896 = vmatprep.subr.mxu0 0.0
    %2897 = vmatpush1.msra.mxu0 %v2889
    %2898 = vmatprep.subr.mxu0 0.0
    %2899 = vmatpush1.msra.mxu0 %v2888
    %2900 = vmatprep.subr.mxu0 0.0
    %2901 = vmatpush1.msra.mxu0 %v2887
    %2902 = vmatprep.subr.mxu0 0.0
    %2903 = vmatpush1.msra.mxu0 %v2886
    %2904 = vmatprep.subr.mxu0 0.0
    %2905 = vmatpush1.msra.mxu0 %v2885
    %2906 = vmatprep.subr.mxu0 0.0
    %2907 = vmatpush1.msra.mxu0 %v2884
    %2908 = vmatprep.subr.mxu0 0.0
    %2909 = vmatpush1.msra.mxu0 %v2883
    %2910 = vmatprep.subr.mxu0 0.0
    %2911 = vmatpush1.msra.mxu0 %v2882
    %2912 = vmatprep.subr.mxu0 0.0
    %2913 = vmatpush1.msra.mxu0 %v2881
    %2914 = vmatprep.subr.mxu0 0.0
    %2915 = vmatpush1.msra.mxu0 %v2880
    %2916 = vmatprep.subr.mxu0 0.0
    %2917 = vmatpush1.msra.mxu0 %v2879
    %2918 = vmatprep.subr.mxu0 0.0
    %2919 = vmatpush1.msra.mxu0 %v2878
    %2920 = vmatprep.subr.mxu0 0.0
    %2921 = vmatpush1.msra.mxu0 %v2877
    %2922 = vmatprep.subr.mxu0 0.0
    %2923 = vmatpush1.msra.mxu0 %v2876
    %2924 = vmatprep.subr.mxu0 0.0
    %2925 = vmatpush2.msra.mxu0 0.0
    %2926 = vmatprep.subr.mxu0 0.0
    %2927 = vmatpush2.msra.mxu0 0.0
    %2928 = vmatprep.subr.mxu0 0.0
    %2929 = vmatpush2.msra.mxu0 0.0
    %2930 = vmatprep.subr.mxu0 0.0
    %2931 = vmatpush2.msra.mxu0 0.0
    %2932 = vmatprep.subr.mxu0 0.0
    %2933 = vmatpush2.msra.mxu0 0.0
    %2934 = vmatprep.subr.mxu0 0.0
    %2935 = vmatpush2.msra.mxu0 0.0
    %2936 = vmatprep.subr.mxu0 0.0
    %2937 = vmatpush2.msra.mxu0 0.0
    %2938 = vmatprep.subr.mxu0 0.0
    %2939 = vmatpush2.msra.mxu0 0.0
    %2940 = vmatprep.subr.mxu0 0.0
    %2941 = vmatpush2.msra.mxu0 0.0
    %2942 = vmatprep.subr.mxu0 0.0
    %2943 = vmatpush2.msra.mxu0 0.0
    %2944 = vmatprep.subr.mxu0 0.0
    %2945 = vmatpush2.msra.mxu0 0.0
    %2946 = vmatprep.subr.mxu0 0.0
    %2947 = vmatpush2.msra.mxu0 0.0
    %2948 = vmatprep.subr.mxu0 0.0
    %2949 = vmatpush2.msra.mxu0 0.0
    %2950 = vmatprep.subr.mxu0 0.0
    %2951 = vmatpush2.msra.mxu0 0.0
    %2952 = vmatprep.subr.mxu0 0.0
    %2953 = vmatpush2.msra.mxu0 0.0
    %2954 = vmatprep.subr.mxu0 0.0
    %2955 = vmatpush2.msra.mxu0 0.0
    %2956 = vmatprep.mubr.f32.mxu0 0.0
    %2957 = vmatmul.mubr.f32.gmra.mxu0 %v2769
    %v2958 = vpop.f32.mrf.mxu0
    %v2959 = vadd.f32 0.0, %v2958
    %v2960 = vpop.f32.mrf.mxu0
    %2961 = vmatprep.mubr.f32.mxu0 0.0
    %2962 = vmatmul.mubr.f32.gmra.mxu0 %v2774
    %v2963 = vpop.f32.mrf.mxu0
    %v2964 = vadd.f32 0.0, %v2963
    %v2965 = vpop.f32.mrf.mxu0
    %2966 = vmatprep.mubr.f32.mxu0 0.0
    %2967 = vmatmul.mubr.f32.gmra.mxu0 %v2850
    %v2968 = vpop.f32.mrf.mxu0
    %v2969 = vadd.f32 0.0, %v2968
    %v2970 = vpop.f32.mrf.mxu0
    %2971 = vmatprep.mubr.f32.mxu0 0.0
    %2972 = vmatmul.mubr.f32.gmra.mxu0 %v2855
    %v2973 = vpop.f32.mrf.mxu0
    %v2974 = vadd.f32 0.0, %v2973
    %v2975 = vpop.f32.mrf.mxu0
    %2976 = vdwg.mxu0
    %2977 = vmatprep.subr.mxu0 0.0
    %2978 = vmatpush1.msra.mxu0 %v2874
    %2979 = vmatprep.subr.mxu0 0.0
    %2980 = vmatpush1.msra.mxu0 %v2873
    %2981 = vmatprep.subr.mxu0 0.0
    %2982 = vmatpush1.msra.mxu0 %v2872
    %2983 = vmatprep.subr.mxu0 0.0
    %2984 = vmatpush1.msra.mxu0 %v2871
    %2985 = vmatprep.subr.mxu0 0.0
    %2986 = vmatpush1.msra.mxu0 %v2870
    %2987 = vmatprep.subr.mxu0 0.0
    %2988 = vmatpush1.msra.mxu0 %v2869
    %2989 = vmatprep.subr.mxu0 0.0
    %2990 = vmatpush1.msra.mxu0 %v2868
    %2991 = vmatprep.subr.mxu0 0.0
    %2992 = vmatpush1.msra.mxu0 %v2867
    %2993 = vmatprep.subr.mxu0 0.0
    %2994 = vmatpush1.msra.mxu0 %v2866
    %2995 = vmatprep.subr.mxu0 0.0
    %2996 = vmatpush1.msra.mxu0 %v2865
    %2997 = vmatprep.subr.mxu0 0.0
    %2998 = vmatpush1.msra.mxu0 %v2864
    %2999 = vmatprep.subr.mxu0 0.0
    %3000 = vmatpush1.msra.mxu0 %v2863
    %3001 = vmatprep.subr.mxu0 0.0
    %3002 = vmatpush1.msra.mxu0 %v2862
    %3003 = vmatprep.subr.mxu0 0.0
    %3004 = vmatpush1.msra.mxu0 %v2861
    %3005 = vmatprep.subr.mxu0 0.0
    %3006 = vmatpush1.msra.mxu0 %v2860
    %3007 = vmatprep.subr.mxu0 0.0
    %3008 = vmatpush1.msra.mxu0 %v2859
    %3009 = vmatprep.subr.mxu0 0.0
    %3010 = vmatpush2.msra.mxu0 0.0
    %3011 = vmatprep.subr.mxu0 0.0
    %3012 = vmatpush2.msra.mxu0 0.0
    %3013 = vmatprep.subr.mxu0 0.0
    %3014 = vmatpush2.msra.mxu0 0.0
    %3015 = vmatprep.subr.mxu0 0.0
    %3016 = vmatpush2.msra.mxu0 0.0
    %3017 = vmatprep.subr.mxu0 0.0
    %3018 = vmatpush2.msra.mxu0 0.0
    %3019 = vmatprep.subr.mxu0 0.0
    %3020 = vmatpush2.msra.mxu0 0.0
    %3021 = vmatprep.subr.mxu0 0.0
    %3022 = vmatpush2.msra.mxu0 0.0
    %3023 = vmatprep.subr.mxu0 0.0
    %3024 = vmatpush2.msra.mxu0 0.0
    %3025 = vmatprep.subr.mxu0 0.0
    %3026 = vmatpush2.msra.mxu0 0.0
    %3027 = vmatprep.subr.mxu0 0.0
    %3028 = vmatpush2.msra.mxu0 0.0
    %3029 = vmatprep.subr.mxu0 0.0
    %3030 = vmatpush2.msra.mxu0 0.0
    %3031 = vmatprep.subr.mxu0 0.0
    %3032 = vmatpush2.msra.mxu0 0.0
    %3033 = vmatprep.subr.mxu0 0.0
    %3034 = vmatpush2.msra.mxu0 0.0
    %3035 = vmatprep.subr.mxu0 0.0
    %3036 = vmatpush2.msra.mxu0 0.0
    %3037 = vmatprep.subr.mxu0 0.0
    %3038 = vmatpush2.msra.mxu0 0.0
    %3039 = vmatprep.subr.mxu0 0.0
    %3040 = vmatpush2.msra.mxu0 0.0
    %3041 = vmatprep.mubr.f32.mxu0 0.0
    %3042 = vmatmul.mubr.f32.gmra.mxu0 %v2607
    %v3043 = vpop.f32.mrf.mxu0
    %v3044 = vadd.f32 %v2959, %v3043
    %v3045 = vpop.f32.mrf.mxu0
    %3046 = vmatprep.mubr.f32.mxu0 0.0
    %3047 = vmatmul.mubr.f32.gmra.mxu0 %v2612
    %v3048 = vpop.f32.mrf.mxu0
    %v3049 = vadd.f32 %v2964, %v3048
    %v3050 = vpop.f32.mrf.mxu0
    %3051 = vmatprep.mubr.f32.mxu0 0.0
    %3052 = vmatmul.mubr.f32.gmra.mxu0 %v2688
    %v3053 = vpop.f32.mrf.mxu0
    %v3054 = vadd.f32 %v2969, %v3053
    %v3055 = vpop.f32.mrf.mxu0
    %3056 = vmatprep.mubr.f32.mxu0 0.0
    %3057 = vmatmul.mubr.f32.gmra.mxu0 %v2693
    %v3058 = vpop.f32.mrf.mxu0
    %v3059 = vadd.f32 %v2974, %v3058
    %v3060 = vpop.f32.mrf.mxu0
    %3061 = vdwg.mxu0
    %s3062 = scalar_lea.vmem %s6, 2
    %v3063 = vld [vmem:[%s3062] sm:$0x1]
    %v3065 = vlaneseq
    %v3066 = vshrl.u32 %v3065, 7
    %v3067 = vsub.s32 0, %v3066
    %v3068 = vrot.slane %v3063, %v3067
    %v3070 = vadd.f32 %v3044, %v3068
    %v3071 = vadd.f32 %v3049, %v3068
    %v3072 = vadd.f32 %v3054, %v3068
    %v3073 = vadd.f32 %v3059, %v3068
    %v3074 = vmax.f32 %v3070, 0.0
    %v3075 = vmax.f32 %v3071, 0.0
    %v3076 = vmax.f32 %v3072, 0.0
    %v3077 = vmax.f32 %v3073, 0.0
    %s3078 = scalar_lea.vmem %s7, 2
    %v3079 = vld [vmem:[%s3078] sm:$0x1]
    %v3081 = vlaneseq
    %v3082 = vshrl.u32 %v3081, 7
    %v3083 = vsub.s32 0, %v3082
    %v3084 = vrot.slane %v3079, %v3083
    %v3086 = vmul.f32 %v3074, %v3084
    %v3087 = vmul.f32 %v3075, %v3084
    %v3088 = vmul.f32 %v3076, %v3084
    %v3089 = vmul.f32 %v3077, %v3084
    %3090 = vadd.xlane.f32.xlu0 %v3086
    %v3091 = vpop.xlane.xlu0 %3090
    %3092 = vadd.xlane.f32.xlu0 %v3087
    %v3093 = vpop.xlane.xlu0 %3092
    %3094 = vadd.xlane.f32.xlu0 %v3088
    %v3095 = vpop.xlane.xlu0 %3094
    %3096 = vadd.xlane.f32.xlu0 %v3089
    %v3097 = vpop.xlane.xlu0 %3096
    %v3098 = vmax.f32 %v2210, %v3091
    %v3099 = vmax.f32 %v2211, %v3093
    %v3100 = vmax.f32 %v2212, %v3095
    %v3101 = vmax.f32 %v2213, %v3097
    %v3102 = vsub.f32 %v2210, %v3098
    %v3103 = vsub.f32 %v2211, %v3099
    %v3104 = vsub.f32 %v2212, %v3100
    %v3105 = vsub.f32 %v2213, %v3101
    %v3106 = vmul.f32 %v3102, 1.442695
    %v3107 = vpow.pop %v3106
    %v3108 = vmul.f32 %v3103, 1.442695
    %v3109 = vpow.pop %v3108
    %v3110 = vmul.f32 %v3104, 1.442695
    %v3111 = vpow.pop %v3110
    %v3112 = vmul.f32 %v3105, 1.442695
    %v3113 = vpow.pop %v3112
    %v3114 = vsub.f32 %v3091, %v3098
    %v3115 = vsub.f32 %v3093, %v3099
    %v3116 = vsub.f32 %v3095, %v3100
    %v3117 = vsub.f32 %v3097, %v3101
    %v3118 = vmul.f32 %v3114, 1.442695
    %v3119 = vpow.pop %v3118
    %v3120 = vmul.f32 %v3115, 1.442695
    %v3121 = vpow.pop %v3120
    %v3122 = vmul.f32 %v3116, 1.442695
    %v3123 = vpow.pop %v3122
    %v3124 = vmul.f32 %v3117, 1.442695
    %v3125 = vpow.pop %v3124
    %v3126 = vmul.f32 %v2238, %v3107
    %v3127 = vmul.f32 %v2239, %v3109
    %v3128 = vmul.f32 %v2240, %v3111
    %v3129 = vmul.f32 %v2241, %v3113
    %v3130 = vadd.f32 %v3126, %v3119
    %v3131 = vadd.f32 %v3127, %v3121
    %v3132 = vadd.f32 %v3128, %v3123
    %v3133 = vadd.f32 %v3129, %v3125
    %v3134 = vmul.f32 %v2250, %v3107
    %v3135 = vmul.f32 %v2251, %v3109
    %v3136 = vmul.f32 %v2252, %v3111
    %v3137 = vmul.f32 %v2253, %v3113
    %v3138 = vmul.f32 %v3119, %v3074
    %v3139 = vmul.f32 %v3121, %v3075
    %v3140 = vmul.f32 %v3123, %v3076
    %v3141 = vmul.f32 %v3125, %v3077
    %v3142 = vadd.f32 %v3134, %v3138
    %v3143 = vadd.f32 %v3135, %v3139
    %v3144 = vadd.f32 %v3136, %v3140
    %v3145 = vadd.f32 %v3137, %v3141
    %v3147 = vsel %vm695, %v2327, 0
    %v3150 = vsel %vm695, %v2332, 0
    %3152 = vmatprep.subr.mxu0 0.0
    %3153 = vmatpush1.msra.mxu0 0.0
    %3154 = vmatprep.subr.mxu0 0.0
    %3155 = vmatpush1.msra.mxu0 0.0
    %3156 = vmatprep.subr.mxu0 0.0
    %3157 = vmatpush1.msra.mxu0 0.0
    %3158 = vmatprep.subr.mxu0 0.0
    %3159 = vmatpush1.msra.mxu0 0.0
    %3160 = vmatprep.subr.mxu0 0.0
    %3161 = vmatpush1.msra.mxu0 0.0
    %3162 = vmatprep.subr.mxu0 0.0
    %3163 = vmatpush1.msra.mxu0 0.0
    %3164 = vmatprep.subr.mxu0 0.0
    %3165 = vmatpush1.msra.mxu0 0.0
    %3166 = vmatprep.subr.mxu0 0.0
    %3167 = vmatpush1.msra.mxu0 0.0
    %3168 = vmatprep.subr.mxu0 0.0
    %3169 = vmatpush1.msra.mxu0 0.0
    %3170 = vmatprep.subr.mxu0 0.0
    %3171 = vmatpush1.msra.mxu0 0.0
    %3172 = vmatprep.subr.mxu0 0.0
    %3173 = vmatpush1.msra.mxu0 0.0
    %3174 = vmatprep.subr.mxu0 0.0
    %3175 = vmatpush1.msra.mxu0 0.0
    %3176 = vmatprep.subr.mxu0 0.0
    %3177 = vmatpush1.msra.mxu0 0.0
    %3178 = vmatprep.subr.mxu0 0.0
    %3179 = vmatpush1.msra.mxu0 0.0
    %3180 = vmatprep.subr.mxu0 0.0
    %3181 = vmatpush1.msra.mxu0 %v121
    %3182 = vmatprep.subr.mxu0 0.0
    %3183 = vmatpush1.msra.mxu0 %v120
    %3184 = vmatprep.subr.mxu0 0.0
    %3185 = vmatpush2.msra.mxu0 0.0
    %3186 = vmatprep.subr.mxu0 0.0
    %3187 = vmatpush2.msra.mxu0 0.0
    %3188 = vmatprep.subr.mxu0 0.0
    %3189 = vmatpush2.msra.mxu0 0.0
    %3190 = vmatprep.subr.mxu0 0.0
    %3191 = vmatpush2.msra.mxu0 0.0
    %3192 = vmatprep.subr.mxu0 0.0
    %3193 = vmatpush2.msra.mxu0 0.0
    %3194 = vmatprep.subr.mxu0 0.0
    %3195 = vmatpush2.msra.mxu0 0.0
    %3196 = vmatprep.subr.mxu0 0.0
    %3197 = vmatpush2.msra.mxu0 0.0
    %3198 = vmatprep.subr.mxu0 0.0
    %3199 = vmatpush2.msra.mxu0 0.0
    %3200 = vmatprep.subr.mxu0 0.0
    %3201 = vmatpush2.msra.mxu0 0.0
    %3202 = vmatprep.subr.mxu0 0.0
    %3203 = vmatpush2.msra.mxu0 0.0
    %3204 = vmatprep.subr.mxu0 0.0
    %3205 = vmatpush2.msra.mxu0 0.0
    %3206 = vmatprep.subr.mxu0 0.0
    %3207 = vmatpush2.msra.mxu0 0.0
    %3208 = vmatprep.subr.mxu0 0.0
    %3209 = vmatpush2.msra.mxu0 0.0
    %3210 = vmatprep.subr.mxu0 0.0
    %3211 = vmatpush2.msra.mxu0 0.0
    %3212 = vmatprep.subr.mxu0 0.0
    %3213 = vmatpush2.msra.mxu0 0.0
    %3214 = vmatprep.subr.mxu0 0.0
    %3215 = vmatpush2.msra.mxu0 0.0
    %3216 = vmatprep.mubr.f32.mxu0 0.0
    %3217 = vmatmul.mubr.f32.gmra.mxu0 %v3147
    %v3218 = vpop.f32.mrf.mxu0
    %v3219 = vadd.f32 0.0, %v3218
    %v3220 = vpop.f32.mrf.mxu0
    %3221 = vmatprep.mubr.f32.mxu0 0.0
    %3222 = vmatmul.mubr.f32.gmra.mxu0 %v3150
    %v3223 = vpop.f32.mrf.mxu0
    %v3224 = vadd.f32 0.0, %v3223
    %v3225 = vpop.f32.mrf.mxu0
    %3226 = vdwg.mxu0
    %v3228 = vsel %vm695, %v2408, 0
    %v3231 = vsel %vm695, %v2413, 0
    %3233 = vmatprep.subr.mxu0 0.0
    %3234 = vmatpush1.msra.mxu0 0.0
    %3235 = vmatprep.subr.mxu0 0.0
    %3236 = vmatpush1.msra.mxu0 0.0
    %3237 = vmatprep.subr.mxu0 0.0
    %3238 = vmatpush1.msra.mxu0 0.0
    %3239 = vmatprep.subr.mxu0 0.0
    %3240 = vmatpush1.msra.mxu0 0.0
    %3241 = vmatprep.subr.mxu0 0.0
    %3242 = vmatpush1.msra.mxu0 0.0
    %3243 = vmatprep.subr.mxu0 0.0
    %3244 = vmatpush1.msra.mxu0 0.0
    %3245 = vmatprep.subr.mxu0 0.0
    %3246 = vmatpush1.msra.mxu0 0.0
    %3247 = vmatprep.subr.mxu0 0.0
    %3248 = vmatpush1.msra.mxu0 0.0
    %3249 = vmatprep.subr.mxu0 0.0
    %3250 = vmatpush1.msra.mxu0 0.0
    %3251 = vmatprep.subr.mxu0 0.0
    %3252 = vmatpush1.msra.mxu0 0.0
    %3253 = vmatprep.subr.mxu0 0.0
    %3254 = vmatpush1.msra.mxu0 0.0
    %3255 = vmatprep.subr.mxu0 0.0
    %3256 = vmatpush1.msra.mxu0 0.0
    %3257 = vmatprep.subr.mxu0 0.0
    %3258 = vmatpush1.msra.mxu0 0.0
    %3259 = vmatprep.subr.mxu0 0.0
    %3260 = vmatpush1.msra.mxu0 0.0
    %3261 = vmatprep.subr.mxu0 0.0
    %3262 = vmatpush1.msra.mxu0 %v123
    %3263 = vmatprep.subr.mxu0 0.0
    %3264 = vmatpush1.msra.mxu0 %v122
    %3265 = vmatprep.subr.mxu0 0.0
    %3266 = vmatpush2.msra.mxu0 0.0
    %3267 = vmatprep.subr.mxu0 0.0
    %3268 = vmatpush2.msra.mxu0 0.0
    %3269 = vmatprep.subr.mxu0 0.0
    %3270 = vmatpush2.msra.mxu0 0.0
    %3271 = vmatprep.subr.mxu0 0.0
    %3272 = vmatpush2.msra.mxu0 0.0
    %3273 = vmatprep.subr.mxu0 0.0
    %3274 = vmatpush2.msra.mxu0 0.0
    %3275 = vmatprep.subr.mxu0 0.0
    %3276 = vmatpush2.msra.mxu0 0.0
    %3277 = vmatprep.subr.mxu0 0.0
    %3278 = vmatpush2.msra.mxu0 0.0
    %3279 = vmatprep.subr.mxu0 0.0
    %3280 = vmatpush2.msra.mxu0 0.0
    %3281 = vmatprep.subr.mxu0 0.0
    %3282 = vmatpush2.msra.mxu0 0.0
    %3283 = vmatprep.subr.mxu0 0.0
    %3284 = vmatpush2.msra.mxu0 0.0
    %3285 = vmatprep.subr.mxu0 0.0
    %3286 = vmatpush2.msra.mxu0 0.0
    %3287 = vmatprep.subr.mxu0 0.0
    %3288 = vmatpush2.msra.mxu0 0.0
    %3289 = vmatprep.subr.mxu0 0.0
    %3290 = vmatpush2.msra.mxu0 0.0
    %3291 = vmatprep.subr.mxu0 0.0
    %3292 = vmatpush2.msra.mxu0 0.0
    %3293 = vmatprep.subr.mxu0 0.0
    %3294 = vmatpush2.msra.mxu0 0.0
    %3295 = vmatprep.subr.mxu0 0.0
    %3296 = vmatpush2.msra.mxu0 0.0
    %3297 = vmatprep.mubr.f32.mxu0 0.0
    %3298 = vmatmul.mubr.f32.gmra.mxu0 %v3228
    %v3299 = vpop.f32.mrf.mxu0
    %v3300 = vadd.f32 0.0, %v3299
    %v3301 = vpop.f32.mrf.mxu0
    %3302 = vmatprep.mubr.f32.mxu0 0.0
    %3303 = vmatmul.mubr.f32.gmra.mxu0 %v3231
    %v3304 = vpop.f32.mrf.mxu0
    %v3305 = vadd.f32 0.0, %v3304
    %v3306 = vpop.f32.mrf.mxu0
    %3307 = vdwg.mxu0
    %v3308 = vadd.f32 %v3219, 1.0
    %v3309 = vadd.f32 %v3224, 1.0
    %v3310 = vadd.f32 %v3300, 1.0
    %v3311 = vadd.f32 %v3305, 1.0
    %v3312 = vsel %vm689, %v3308, %v3219
    %v3313 = vsel %vm690, %v3309, %v3224
    %v3314 = vsel %vm689, %v3310, %v3300
    %v3315 = vsel %vm690, %v3311, %v3305
    %v3316 = vsel %vm695, %v3312, 0.0
    %3317 = vadd.xlane.f32.xlu0 %v3316
    %v3318 = vpop.xlane.xlu0 %3317
    %v3319 = vsel %vm695, %v3313, 0.0
    %3320 = vadd.xlane.f32.xlu0 %v3319
    %v3321 = vpop.xlane.xlu0 %3320
    %v3322 = vsel %vm695, %v3314, 0.0
    %3323 = vadd.xlane.f32.xlu0 %v3322
    %v3324 = vpop.xlane.xlu0 %3323
    %v3325 = vsel %vm695, %v3315, 0.0
    %3326 = vadd.xlane.f32.xlu0 %v3325
    %v3327 = vpop.xlane.xlu0 %3326
    %v3328 = vmax.f32 %v3318, 1e-12
    %v3329 = vmax.f32 %v3321, 1e-12
    %v3330 = vmax.f32 %v3324, 1e-12
    %v3331 = vmax.f32 %v3327, 1e-12
    %v3332 = vadd.f32 %v3316, %v3319
    %v3333 = vrot.slane %v3332, 4
    %v3334 = vadd.f32 %v3332, %v3333
    %v3335 = vrot.slane %v3334, 2
    %v3336 = vadd.f32 %v3334, %v3335
    %v3337 = vrot.slane %v3336, 1
    %v3338 = vadd.f32 %v3336, %v3337
    %v3339 = vadd.f32 %v3322, %v3325
    %v3340 = vrot.slane %v3339, 4
    %v3341 = vadd.f32 %v3339, %v3340
    %v3342 = vrot.slane %v3341, 2
    %v3343 = vadd.f32 %v3341, %v3342
    %v3344 = vrot.slane %v3343, 1
    %v3345 = vadd.f32 %v3343, %v3344
    %v3346 = vmax.f32 %v3338, 1e-12
    %v3347 = vmax.f32 %v3345, 1e-12
    %v3348 = vrsqrt.pop %v3328
    %v3349 = vrsqrt.pop %v3329
    %v3350 = vrsqrt.pop %v3330
    %v3351 = vrsqrt.pop %v3331
    %v3352 = vrsqrt.pop %v3346
    %v3353 = vrsqrt.pop %v3347
    %v3354 = vmul.f32 %v3348, %v3352
    %v3355 = vmul.f32 %v3349, %v3352
    %v3356 = vmul.f32 %v3350, %v3353
    %v3357 = vmul.f32 %v3351, %v3353
    %v3358 = vmul.f32 %v3312, %v3354
    %v3359 = vmul.f32 %v3313, %v3355
    %v3360 = vmul.f32 %v3314, %v3356
    %v3361 = vmul.f32 %v3315, %v3357
    %3362 = vxpose.xlu0.b32.start [1/16] %v3358, 128
    %3363 = vxpose.xlu0.b32.cont [2/16] %v3359, 128
    %3364 = vxpose.xlu0.b32.cont [3/16] 0.0, 128
    %3365 = vxpose.xlu0.b32.cont [4/16] 0.0, 128
    %3366 = vxpose.xlu0.b32.cont [5/16] 0.0, 128
    %3367 = vxpose.xlu0.b32.cont [6/16] 0.0, 128
    %3368 = vxpose.xlu0.b32.cont [7/16] 0.0, 128
    %3369 = vxpose.xlu0.b32.cont [8/16] 0.0, 128
    %3370 = vxpose.xlu0.b32.cont [9/16] 0.0, 128
    %3371 = vxpose.xlu0.b32.cont [10/16] 0.0, 128
    %3372 = vxpose.xlu0.b32.cont [11/16] 0.0, 128
    %3373 = vxpose.xlu0.b32.cont [12/16] 0.0, 128
    %3374 = vxpose.xlu0.b32.cont [13/16] 0.0, 128
    %3375 = vxpose.xlu0.b32.cont [14/16] 0.0, 128
    %3376 = vxpose.xlu0.b32.cont [15/16] 0.0, 128
    %3377 = vxpose.xlu0.b32.end [16/16] 0.0, 128
    %v3378 = vpop.trf.xlu0
    %v3379 = vpop.trf.xlu0
    %v3380 = vpop.trf.xlu0
    %v3381 = vpop.trf.xlu0
    %v3382 = vpop.trf.xlu0
    %v3383 = vpop.trf.xlu0
    %v3384 = vpop.trf.xlu0
    %v3385 = vpop.trf.xlu0
    %v3386 = vpop.trf.xlu0
    %v3387 = vpop.trf.xlu0
    %v3388 = vpop.trf.xlu0
    %v3389 = vpop.trf.xlu0
    %v3390 = vpop.trf.xlu0
    %v3391 = vpop.trf.xlu0
    %v3392 = vpop.trf.xlu0
    %v3393 = vpop.trf.xlu0
    %3394 = vxpose.xlu0.b32.start [1/16] %v3360, 128
    %3395 = vxpose.xlu0.b32.cont [2/16] %v3361, 128
    %3396 = vxpose.xlu0.b32.cont [3/16] 0.0, 128
    %3397 = vxpose.xlu0.b32.cont [4/16] 0.0, 128
    %3398 = vxpose.xlu0.b32.cont [5/16] 0.0, 128
    %3399 = vxpose.xlu0.b32.cont [6/16] 0.0, 128
    %3400 = vxpose.xlu0.b32.cont [7/16] 0.0, 128
    %3401 = vxpose.xlu0.b32.cont [8/16] 0.0, 128
    %3402 = vxpose.xlu0.b32.cont [9/16] 0.0, 128
    %3403 = vxpose.xlu0.b32.cont [10/16] 0.0, 128
    %3404 = vxpose.xlu0.b32.cont [11/16] 0.0, 128
    %3405 = vxpose.xlu0.b32.cont [12/16] 0.0, 128
    %3406 = vxpose.xlu0.b32.cont [13/16] 0.0, 128
    %3407 = vxpose.xlu0.b32.cont [14/16] 0.0, 128
    %3408 = vxpose.xlu0.b32.cont [15/16] 0.0, 128
    %3409 = vxpose.xlu0.b32.end [16/16] 0.0, 128
    %v3410 = vpop.trf.xlu0
    %v3411 = vpop.trf.xlu0
    %v3412 = vpop.trf.xlu0
    %v3413 = vpop.trf.xlu0
    %v3414 = vpop.trf.xlu0
    %v3415 = vpop.trf.xlu0
    %v3416 = vpop.trf.xlu0
    %v3417 = vpop.trf.xlu0
    %v3418 = vpop.trf.xlu0
    %v3419 = vpop.trf.xlu0
    %v3420 = vpop.trf.xlu0
    %v3421 = vpop.trf.xlu0
    %v3422 = vpop.trf.xlu0
    %v3423 = vpop.trf.xlu0
    %v3424 = vpop.trf.xlu0
    %v3425 = vpop.trf.xlu0
    %v3427 = vsel %vm695, %v3358, 0
    %v3430 = vsel %vm695, %v3359, 0
    %3432 = vmatprep.subr.mxu0 0.0
    %3433 = vmatpush1.msra.mxu0 0.0
    %3434 = vmatprep.subr.mxu0 0.0
    %3435 = vmatpush1.msra.mxu0 0.0
    %3436 = vmatprep.subr.mxu0 0.0
    %3437 = vmatpush1.msra.mxu0 0.0
    %3438 = vmatprep.subr.mxu0 0.0
    %3439 = vmatpush1.msra.mxu0 0.0
    %3440 = vmatprep.subr.mxu0 0.0
    %3441 = vmatpush1.msra.mxu0 0.0
    %3442 = vmatprep.subr.mxu0 0.0
    %3443 = vmatpush1.msra.mxu0 0.0
    %3444 = vmatprep.subr.mxu0 0.0
    %3445 = vmatpush1.msra.mxu0 0.0
    %3446 = vmatprep.subr.mxu0 0.0
    %3447 = vmatpush1.msra.mxu0 0.0
    %3448 = vmatprep.subr.mxu0 0.0
    %3449 = vmatpush1.msra.mxu0 0.0
    %3450 = vmatprep.subr.mxu0 0.0
    %3451 = vmatpush1.msra.mxu0 0.0
    %3452 = vmatprep.subr.mxu0 0.0
    %3453 = vmatpush1.msra.mxu0 0.0
    %3454 = vmatprep.subr.mxu0 0.0
    %3455 = vmatpush1.msra.mxu0 0.0
    %3456 = vmatprep.subr.mxu0 0.0
    %3457 = vmatpush1.msra.mxu0 0.0
    %3458 = vmatprep.subr.mxu0 0.0
    %3459 = vmatpush1.msra.mxu0 0.0
    %3460 = vmatprep.subr.mxu0 0.0
    %3461 = vmatpush1.msra.mxu0 %v578
    %3462 = vmatprep.subr.mxu0 0.0
    %3463 = vmatpush1.msra.mxu0 %v572
    %3464 = vmatprep.subr.mxu0 0.0
    %3465 = vmatpush2.msra.mxu0 0.0
    %3466 = vmatprep.subr.mxu0 0.0
    %3467 = vmatpush2.msra.mxu0 0.0
    %3468 = vmatprep.subr.mxu0 0.0
    %3469 = vmatpush2.msra.mxu0 0.0
    %3470 = vmatprep.subr.mxu0 0.0
    %3471 = vmatpush2.msra.mxu0 0.0
    %3472 = vmatprep.subr.mxu0 0.0
    %3473 = vmatpush2.msra.mxu0 0.0
    %3474 = vmatprep.subr.mxu0 0.0
    %3475 = vmatpush2.msra.mxu0 0.0
    %3476 = vmatprep.subr.mxu0 0.0
    %3477 = vmatpush2.msra.mxu0 0.0
    %3478 = vmatprep.subr.mxu0 0.0
    %3479 = vmatpush2.msra.mxu0 0.0
    %3480 = vmatprep.subr.mxu0 0.0
    %3481 = vmatpush2.msra.mxu0 0.0
    %3482 = vmatprep.subr.mxu0 0.0
    %3483 = vmatpush2.msra.mxu0 0.0
    %3484 = vmatprep.subr.mxu0 0.0
    %3485 = vmatpush2.msra.mxu0 0.0
    %3486 = vmatprep.subr.mxu0 0.0
    %3487 = vmatpush2.msra.mxu0 0.0
    %3488 = vmatprep.subr.mxu0 0.0
    %3489 = vmatpush2.msra.mxu0 0.0
    %3490 = vmatprep.subr.mxu0 0.0
    %3491 = vmatpush2.msra.mxu0 0.0
    %3492 = vmatprep.subr.mxu0 0.0
    %3493 = vmatpush2.msra.mxu0 0.0
    %3494 = vmatprep.subr.mxu0 0.0
    %3495 = vmatpush2.msra.mxu0 0.0
    %3496 = vmatprep.mubr.f32.mxu0 0.0
    %3497 = vmatmul.mubr.f32.gmra.mxu0 %v3427
    %v3498 = vpop.f32.mrf.mxu0
    %v3499 = vadd.f32 0.0, %v3498
    %v3500 = vpop.f32.mrf.mxu0
    %3501 = vmatprep.mubr.f32.mxu0 0.0
    %3502 = vmatmul.mubr.f32.gmra.mxu0 %v3430
    %v3503 = vpop.f32.mrf.mxu0
    %v3504 = vadd.f32 0.0, %v3503
    %v3505 = vpop.f32.mrf.mxu0
    %3506 = vdwg.mxu0
    %v3508 = vsel %vm695, %v3360, 0
    %v3511 = vsel %vm695, %v3361, 0
    %3513 = vmatprep.subr.mxu0 0.0
    %3514 = vmatpush1.msra.mxu0 0.0
    %3515 = vmatprep.subr.mxu0 0.0
    %3516 = vmatpush1.msra.mxu0 0.0
    %3517 = vmatprep.subr.mxu0 0.0
    %3518 = vmatpush1.msra.mxu0 0.0
    %3519 = vmatprep.subr.mxu0 0.0
    %3520 = vmatpush1.msra.mxu0 0.0
    %3521 = vmatprep.subr.mxu0 0.0
    %3522 = vmatpush1.msra.mxu0 0.0
    %3523 = vmatprep.subr.mxu0 0.0
    %3524 = vmatpush1.msra.mxu0 0.0
    %3525 = vmatprep.subr.mxu0 0.0
    %3526 = vmatpush1.msra.mxu0 0.0
    %3527 = vmatprep.subr.mxu0 0.0
    %3528 = vmatpush1.msra.mxu0 0.0
    %3529 = vmatprep.subr.mxu0 0.0
    %3530 = vmatpush1.msra.mxu0 0.0
    %3531 = vmatprep.subr.mxu0 0.0
    %3532 = vmatpush1.msra.mxu0 0.0
    %3533 = vmatprep.subr.mxu0 0.0
    %3534 = vmatpush1.msra.mxu0 0.0
    %3535 = vmatprep.subr.mxu0 0.0
    %3536 = vmatpush1.msra.mxu0 0.0
    %3537 = vmatprep.subr.mxu0 0.0
    %3538 = vmatpush1.msra.mxu0 0.0
    %3539 = vmatprep.subr.mxu0 0.0
    %3540 = vmatpush1.msra.mxu0 0.0
    %3541 = vmatprep.subr.mxu0 0.0
    %3542 = vmatpush1.msra.mxu0 %v590
    %3543 = vmatprep.subr.mxu0 0.0
    %3544 = vmatpush1.msra.mxu0 %v584
    %3545 = vmatprep.subr.mxu0 0.0
    %3546 = vmatpush2.msra.mxu0 0.0
    %3547 = vmatprep.subr.mxu0 0.0
    %3548 = vmatpush2.msra.mxu0 0.0
    %3549 = vmatprep.subr.mxu0 0.0
    %3550 = vmatpush2.msra.mxu0 0.0
    %3551 = vmatprep.subr.mxu0 0.0
    %3552 = vmatpush2.msra.mxu0 0.0
    %3553 = vmatprep.subr.mxu0 0.0
    %3554 = vmatpush2.msra.mxu0 0.0
    %3555 = vmatprep.subr.mxu0 0.0
    %3556 = vmatpush2.msra.mxu0 0.0
    %3557 = vmatprep.subr.mxu0 0.0
    %3558 = vmatpush2.msra.mxu0 0.0
    %3559 = vmatprep.subr.mxu0 0.0
    %3560 = vmatpush2.msra.mxu0 0.0
    %3561 = vmatprep.subr.mxu0 0.0
    %3562 = vmatpush2.msra.mxu0 0.0
    %3563 = vmatprep.subr.mxu0 0.0
    %3564 = vmatpush2.msra.mxu0 0.0
    %3565 = vmatprep.subr.mxu0 0.0
    %3566 = vmatpush2.msra.mxu0 0.0
    %3567 = vmatprep.subr.mxu0 0.0
    %3568 = vmatpush2.msra.mxu0 0.0
    %3569 = vmatprep.subr.mxu0 0.0
    %3570 = vmatpush2.msra.mxu0 0.0
    %3571 = vmatprep.subr.mxu0 0.0
    %3572 = vmatpush2.msra.mxu0 0.0
    %3573 = vmatprep.subr.mxu0 0.0
    %3574 = vmatpush2.msra.mxu0 0.0
    %3575 = vmatprep.subr.mxu0 0.0
    %3576 = vmatpush2.msra.mxu0 0.0
    %3577 = vmatprep.mubr.f32.mxu0 0.0
    %3578 = vmatmul.mubr.f32.gmra.mxu0 %v3508
    %v3579 = vpop.f32.mrf.mxu0
    %v3580 = vadd.f32 0.0, %v3579
    %v3581 = vpop.f32.mrf.mxu0
    %3582 = vmatprep.mubr.f32.mxu0 0.0
    %3583 = vmatmul.mubr.f32.gmra.mxu0 %v3511
    %v3584 = vpop.f32.mrf.mxu0
    %v3585 = vadd.f32 0.0, %v3584
    %v3586 = vpop.f32.mrf.mxu0
    %3587 = vdwg.mxu0
    %v3589 = vsel %vm695, %v3378, 0
    %v3592 = vsel %vm695, %v3379, 0
    %3594 = vmatprep.subr.mxu0 0.0
    %3595 = vmatpush1.msra.mxu0 0.0
    %3596 = vmatprep.subr.mxu0 0.0
    %3597 = vmatpush1.msra.mxu0 0.0
    %3598 = vmatprep.subr.mxu0 0.0
    %3599 = vmatpush1.msra.mxu0 0.0
    %3600 = vmatprep.subr.mxu0 0.0
    %3601 = vmatpush1.msra.mxu0 0.0
    %3602 = vmatprep.subr.mxu0 0.0
    %3603 = vmatpush1.msra.mxu0 0.0
    %3604 = vmatprep.subr.mxu0 0.0
    %3605 = vmatpush1.msra.mxu0 0.0
    %3606 = vmatprep.subr.mxu0 0.0
    %3607 = vmatpush1.msra.mxu0 0.0
    %3608 = vmatprep.subr.mxu0 0.0
    %3609 = vmatpush1.msra.mxu0 0.0
    %3610 = vmatprep.subr.mxu0 0.0
    %3611 = vmatpush1.msra.mxu0 0.0
    %3612 = vmatprep.subr.mxu0 0.0
    %3613 = vmatpush1.msra.mxu0 0.0
    %3614 = vmatprep.subr.mxu0 0.0
    %3615 = vmatpush1.msra.mxu0 0.0
    %3616 = vmatprep.subr.mxu0 0.0
    %3617 = vmatpush1.msra.mxu0 0.0
    %3618 = vmatprep.subr.mxu0 0.0
    %3619 = vmatpush1.msra.mxu0 0.0
    %3620 = vmatprep.subr.mxu0 0.0
    %3621 = vmatpush1.msra.mxu0 0.0
    %3622 = vmatprep.subr.mxu0 0.0
    %3623 = vmatpush1.msra.mxu0 %v580
    %3624 = vmatprep.subr.mxu0 0.0
    %3625 = vmatpush1.msra.mxu0 %v574
    %3626 = vmatprep.subr.mxu0 0.0
    %3627 = vmatpush2.msra.mxu0 0.0
    %3628 = vmatprep.subr.mxu0 0.0
    %3629 = vmatpush2.msra.mxu0 0.0
    %3630 = vmatprep.subr.mxu0 0.0
    %3631 = vmatpush2.msra.mxu0 0.0
    %3632 = vmatprep.subr.mxu0 0.0
    %3633 = vmatpush2.msra.mxu0 0.0
    %3634 = vmatprep.subr.mxu0 0.0
    %3635 = vmatpush2.msra.mxu0 0.0
    %3636 = vmatprep.subr.mxu0 0.0
    %3637 = vmatpush2.msra.mxu0 0.0
    %3638 = vmatprep.subr.mxu0 0.0
    %3639 = vmatpush2.msra.mxu0 0.0
    %3640 = vmatprep.subr.mxu0 0.0
    %3641 = vmatpush2.msra.mxu0 0.0
    %3642 = vmatprep.subr.mxu0 0.0
    %3643 = vmatpush2.msra.mxu0 0.0
    %3644 = vmatprep.subr.mxu0 0.0
    %3645 = vmatpush2.msra.mxu0 0.0
    %3646 = vmatprep.subr.mxu0 0.0
    %3647 = vmatpush2.msra.mxu0 0.0
    %3648 = vmatprep.subr.mxu0 0.0
    %3649 = vmatpush2.msra.mxu0 0.0
    %3650 = vmatprep.subr.mxu0 0.0
    %3651 = vmatpush2.msra.mxu0 0.0
    %3652 = vmatprep.subr.mxu0 0.0
    %3653 = vmatpush2.msra.mxu0 0.0
    %3654 = vmatprep.subr.mxu0 0.0
    %3655 = vmatpush2.msra.mxu0 0.0
    %3656 = vmatprep.subr.mxu0 0.0
    %3657 = vmatpush2.msra.mxu0 0.0
    %3658 = vmatprep.mubr.f32.mxu0 0.0
    %3659 = vmatmul.mubr.f32.gmra.mxu0 %v3589
    %v3660 = vpop.f32.mrf.mxu0
    %v3661 = vadd.f32 0.0, %v3660
    %v3662 = vpop.f32.mrf.mxu0
    %3663 = vmatprep.mubr.f32.mxu0 0.0
    %3664 = vmatmul.mubr.f32.gmra.mxu0 %v3592
    %v3665 = vpop.f32.mrf.mxu0
    %v3666 = vadd.f32 0.0, %v3665
    %v3667 = vpop.f32.mrf.mxu0
    %3668 = vdwg.mxu0
    %v3670 = vsel %vm695, %v3410, 0
    %v3673 = vsel %vm695, %v3411, 0
    %3675 = vmatprep.subr.mxu0 0.0
    %3676 = vmatpush1.msra.mxu0 0.0
    %3677 = vmatprep.subr.mxu0 0.0
    %3678 = vmatpush1.msra.mxu0 0.0
    %3679 = vmatprep.subr.mxu0 0.0
    %3680 = vmatpush1.msra.mxu0 0.0
    %3681 = vmatprep.subr.mxu0 0.0
    %3682 = vmatpush1.msra.mxu0 0.0
    %3683 = vmatprep.subr.mxu0 0.0
    %3684 = vmatpush1.msra.mxu0 0.0
    %3685 = vmatprep.subr.mxu0 0.0
    %3686 = vmatpush1.msra.mxu0 0.0
    %3687 = vmatprep.subr.mxu0 0.0
    %3688 = vmatpush1.msra.mxu0 0.0
    %3689 = vmatprep.subr.mxu0 0.0
    %3690 = vmatpush1.msra.mxu0 0.0
    %3691 = vmatprep.subr.mxu0 0.0
    %3692 = vmatpush1.msra.mxu0 0.0
    %3693 = vmatprep.subr.mxu0 0.0
    %3694 = vmatpush1.msra.mxu0 0.0
    %3695 = vmatprep.subr.mxu0 0.0
    %3696 = vmatpush1.msra.mxu0 0.0
    %3697 = vmatprep.subr.mxu0 0.0
    %3698 = vmatpush1.msra.mxu0 0.0
    %3699 = vmatprep.subr.mxu0 0.0
    %3700 = vmatpush1.msra.mxu0 0.0
    %3701 = vmatprep.subr.mxu0 0.0
    %3702 = vmatpush1.msra.mxu0 0.0
    %3703 = vmatprep.subr.mxu0 0.0
    %3704 = vmatpush1.msra.mxu0 %v592
    %3705 = vmatprep.subr.mxu0 0.0
    %3706 = vmatpush1.msra.mxu0 %v586
    %3707 = vmatprep.subr.mxu0 0.0
    %3708 = vmatpush2.msra.mxu0 0.0
    %3709 = vmatprep.subr.mxu0 0.0
    %3710 = vmatpush2.msra.mxu0 0.0
    %3711 = vmatprep.subr.mxu0 0.0
    %3712 = vmatpush2.msra.mxu0 0.0
    %3713 = vmatprep.subr.mxu0 0.0
    %3714 = vmatpush2.msra.mxu0 0.0
    %3715 = vmatprep.subr.mxu0 0.0
    %3716 = vmatpush2.msra.mxu0 0.0
    %3717 = vmatprep.subr.mxu0 0.0
    %3718 = vmatpush2.msra.mxu0 0.0
    %3719 = vmatprep.subr.mxu0 0.0
    %3720 = vmatpush2.msra.mxu0 0.0
    %3721 = vmatprep.subr.mxu0 0.0
    %3722 = vmatpush2.msra.mxu0 0.0
    %3723 = vmatprep.subr.mxu0 0.0
    %3724 = vmatpush2.msra.mxu0 0.0
    %3725 = vmatprep.subr.mxu0 0.0
    %3726 = vmatpush2.msra.mxu0 0.0
    %3727 = vmatprep.subr.mxu0 0.0
    %3728 = vmatpush2.msra.mxu0 0.0
    %3729 = vmatprep.subr.mxu0 0.0
    %3730 = vmatpush2.msra.mxu0 0.0
    %3731 = vmatprep.subr.mxu0 0.0
    %3732 = vmatpush2.msra.mxu0 0.0
    %3733 = vmatprep.subr.mxu0 0.0
    %3734 = vmatpush2.msra.mxu0 0.0
    %3735 = vmatprep.subr.mxu0 0.0
    %3736 = vmatpush2.msra.mxu0 0.0
    %3737 = vmatprep.subr.mxu0 0.0
    %3738 = vmatpush2.msra.mxu0 0.0
    %3739 = vmatprep.mubr.f32.mxu0 0.0
    %3740 = vmatmul.mubr.f32.gmra.mxu0 %v3670
    %v3741 = vpop.f32.mrf.mxu0
    %v3742 = vadd.f32 0.0, %v3741
    %v3743 = vpop.f32.mrf.mxu0
    %3744 = vmatprep.mubr.f32.mxu0 0.0
    %3745 = vmatmul.mubr.f32.gmra.mxu0 %v3673
    %v3746 = vpop.f32.mrf.mxu0
    %v3747 = vadd.f32 0.0, %v3746
    %v3748 = vpop.f32.mrf.mxu0
    %3749 = vdwg.mxu0
    %s3750 = scalar_lea.vmem [#allocation10], 384
    %v3751 = vld [vmem:[%s3750] sm:$0xff]
    %v3752 = vld [vmem:[%s3750 + $0x8] sm:$0xff]
    %v3753 = vld [vmem:[%s3750 + $0x10] sm:$0xff]
    %v3754 = vld [vmem:[%s3750 + $0x18] sm:$0xff]
    %v3755 = vld [vmem:[%s3750 + $0x20] sm:$0xff]
    %v3756 = vld [vmem:[%s3750 + $0x28] sm:$0xff]
    %v3757 = vld [vmem:[%s3750 + $0x30] sm:$0xff]
    %v3758 = vld [vmem:[%s3750 + $0x38] sm:$0xff]
    %v3759 = vld [vmem:[%s3750 + $0x40] sm:$0xff]
    %v3760 = vld [vmem:[%s3750 + $0x48] sm:$0xff]
    %v3761 = vld [vmem:[%s3750 + $0x50] sm:$0xff]
    %v3762 = vld [vmem:[%s3750 + $0x58] sm:$0xff]
    %v3763 = vld [vmem:[%s3750 + $0x60] sm:$0xff]
    %v3764 = vld [vmem:[%s3750 + $0x68] sm:$0xff]
    %v3765 = vld [vmem:[%s3750 + $0x70] sm:$0xff]
    %v3766 = vld [vmem:[%s3750 + $0x78] sm:$0xff]
    %s3767 = scalar_lea.vmem [#allocation11], 384
    %v3768 = vld [vmem:[%s3767] sm:$0xff]
    %v3769 = vld [vmem:[%s3767 + $0x8] sm:$0xff]
    %v3770 = vld [vmem:[%s3767 + $0x10] sm:$0xff]
    %v3771 = vld [vmem:[%s3767 + $0x18] sm:$0xff]
    %v3772 = vld [vmem:[%s3767 + $0x20] sm:$0xff]
    %v3773 = vld [vmem:[%s3767 + $0x28] sm:$0xff]
    %v3774 = vld [vmem:[%s3767 + $0x30] sm:$0xff]
    %v3775 = vld [vmem:[%s3767 + $0x38] sm:$0xff]
    %v3776 = vld [vmem:[%s3767 + $0x40] sm:$0xff]
    %v3777 = vld [vmem:[%s3767 + $0x48] sm:$0xff]
    %v3778 = vld [vmem:[%s3767 + $0x50] sm:$0xff]
    %v3779 = vld [vmem:[%s3767 + $0x58] sm:$0xff]
    %v3780 = vld [vmem:[%s3767 + $0x60] sm:$0xff]
    %v3781 = vld [vmem:[%s3767 + $0x68] sm:$0xff]
    %v3782 = vld [vmem:[%s3767 + $0x70] sm:$0xff]
    %v3783 = vld [vmem:[%s3767 + $0x78] sm:$0xff]
    %3784 = vmatprep.subr.mxu0 0.0
    %3785 = vmatpush1.msra.mxu0 %v3783
    %3786 = vmatprep.subr.mxu0 0.0
    %3787 = vmatpush1.msra.mxu0 %v3782
    %3788 = vmatprep.subr.mxu0 0.0
    %3789 = vmatpush1.msra.mxu0 %v3781
    %3790 = vmatprep.subr.mxu0 0.0
    %3791 = vmatpush1.msra.mxu0 %v3780
    %3792 = vmatprep.subr.mxu0 0.0
    %3793 = vmatpush1.msra.mxu0 %v3779
    %3794 = vmatprep.subr.mxu0 0.0
    %3795 = vmatpush1.msra.mxu0 %v3778
    %3796 = vmatprep.subr.mxu0 0.0
    %3797 = vmatpush1.msra.mxu0 %v3777
    %3798 = vmatprep.subr.mxu0 0.0
    %3799 = vmatpush1.msra.mxu0 %v3776
    %3800 = vmatprep.subr.mxu0 0.0
    %3801 = vmatpush1.msra.mxu0 %v3775
    %3802 = vmatprep.subr.mxu0 0.0
    %3803 = vmatpush1.msra.mxu0 %v3774
    %3804 = vmatprep.subr.mxu0 0.0
    %3805 = vmatpush1.msra.mxu0 %v3773
    %3806 = vmatprep.subr.mxu0 0.0
    %3807 = vmatpush1.msra.mxu0 %v3772
    %3808 = vmatprep.subr.mxu0 0.0
    %3809 = vmatpush1.msra.mxu0 %v3771
    %3810 = vmatprep.subr.mxu0 0.0
    %3811 = vmatpush1.msra.mxu0 %v3770
    %3812 = vmatprep.subr.mxu0 0.0
    %3813 = vmatpush1.msra.mxu0 %v3769
    %3814 = vmatprep.subr.mxu0 0.0
    %3815 = vmatpush1.msra.mxu0 %v3768
    %3816 = vmatprep.subr.mxu0 0.0
    %3817 = vmatpush2.msra.mxu0 0.0
    %3818 = vmatprep.subr.mxu0 0.0
    %3819 = vmatpush2.msra.mxu0 0.0
    %3820 = vmatprep.subr.mxu0 0.0
    %3821 = vmatpush2.msra.mxu0 0.0
    %3822 = vmatprep.subr.mxu0 0.0
    %3823 = vmatpush2.msra.mxu0 0.0
    %3824 = vmatprep.subr.mxu0 0.0
    %3825 = vmatpush2.msra.mxu0 0.0
    %3826 = vmatprep.subr.mxu0 0.0
    %3827 = vmatpush2.msra.mxu0 0.0
    %3828 = vmatprep.subr.mxu0 0.0
    %3829 = vmatpush2.msra.mxu0 0.0
    %3830 = vmatprep.subr.mxu0 0.0
    %3831 = vmatpush2.msra.mxu0 0.0
    %3832 = vmatprep.subr.mxu0 0.0
    %3833 = vmatpush2.msra.mxu0 0.0
    %3834 = vmatprep.subr.mxu0 0.0
    %3835 = vmatpush2.msra.mxu0 0.0
    %3836 = vmatprep.subr.mxu0 0.0
    %3837 = vmatpush2.msra.mxu0 0.0
    %3838 = vmatprep.subr.mxu0 0.0
    %3839 = vmatpush2.msra.mxu0 0.0
    %3840 = vmatprep.subr.mxu0 0.0
    %3841 = vmatpush2.msra.mxu0 0.0
    %3842 = vmatprep.subr.mxu0 0.0
    %3843 = vmatpush2.msra.mxu0 0.0
    %3844 = vmatprep.subr.mxu0 0.0
    %3845 = vmatpush2.msra.mxu0 0.0
    %3846 = vmatprep.subr.mxu0 0.0
    %3847 = vmatpush2.msra.mxu0 0.0
    %3848 = vmatprep.mubr.f32.mxu0 0.0
    %3849 = vmatmul.mubr.f32.gmra.mxu0 %v3661
    %v3850 = vpop.f32.mrf.mxu0
    %v3851 = vadd.f32 0.0, %v3850
    %v3852 = vpop.f32.mrf.mxu0
    %3853 = vmatprep.mubr.f32.mxu0 0.0
    %3854 = vmatmul.mubr.f32.gmra.mxu0 %v3666
    %v3855 = vpop.f32.mrf.mxu0
    %v3856 = vadd.f32 0.0, %v3855
    %v3857 = vpop.f32.mrf.mxu0
    %3858 = vmatprep.mubr.f32.mxu0 0.0
    %3859 = vmatmul.mubr.f32.gmra.mxu0 %v3742
    %v3860 = vpop.f32.mrf.mxu0
    %v3861 = vadd.f32 0.0, %v3860
    %v3862 = vpop.f32.mrf.mxu0
    %3863 = vmatprep.mubr.f32.mxu0 0.0
    %3864 = vmatmul.mubr.f32.gmra.mxu0 %v3747
    %v3865 = vpop.f32.mrf.mxu0
    %v3866 = vadd.f32 0.0, %v3865
    %v3867 = vpop.f32.mrf.mxu0
    %3868 = vdwg.mxu0
    %3869 = vmatprep.subr.mxu0 0.0
    %3870 = vmatpush1.msra.mxu0 %v3766
    %3871 = vmatprep.subr.mxu0 0.0
    %3872 = vmatpush1.msra.mxu0 %v3765
    %3873 = vmatprep.subr.mxu0 0.0
    %3874 = vmatpush1.msra.mxu0 %v3764
    %3875 = vmatprep.subr.mxu0 0.0
    %3876 = vmatpush1.msra.mxu0 %v3763
    %3877 = vmatprep.subr.mxu0 0.0
    %3878 = vmatpush1.msra.mxu0 %v3762
    %3879 = vmatprep.subr.mxu0 0.0
    %3880 = vmatpush1.msra.mxu0 %v3761
    %3881 = vmatprep.subr.mxu0 0.0
    %3882 = vmatpush1.msra.mxu0 %v3760
    %3883 = vmatprep.subr.mxu0 0.0
    %3884 = vmatpush1.msra.mxu0 %v3759
    %3885 = vmatprep.subr.mxu0 0.0
    %3886 = vmatpush1.msra.mxu0 %v3758
    %3887 = vmatprep.subr.mxu0 0.0
    %3888 = vmatpush1.msra.mxu0 %v3757
    %3889 = vmatprep.subr.mxu0 0.0
    %3890 = vmatpush1.msra.mxu0 %v3756
    %3891 = vmatprep.subr.mxu0 0.0
    %3892 = vmatpush1.msra.mxu0 %v3755
    %3893 = vmatprep.subr.mxu0 0.0
    %3894 = vmatpush1.msra.mxu0 %v3754
    %3895 = vmatprep.subr.mxu0 0.0
    %3896 = vmatpush1.msra.mxu0 %v3753
    %3897 = vmatprep.subr.mxu0 0.0
    %3898 = vmatpush1.msra.mxu0 %v3752
    %3899 = vmatprep.subr.mxu0 0.0
    %3900 = vmatpush1.msra.mxu0 %v3751
    %3901 = vmatprep.subr.mxu0 0.0
    %3902 = vmatpush2.msra.mxu0 0.0
    %3903 = vmatprep.subr.mxu0 0.0
    %3904 = vmatpush2.msra.mxu0 0.0
    %3905 = vmatprep.subr.mxu0 0.0
    %3906 = vmatpush2.msra.mxu0 0.0
    %3907 = vmatprep.subr.mxu0 0.0
    %3908 = vmatpush2.msra.mxu0 0.0
    %3909 = vmatprep.subr.mxu0 0.0
    %3910 = vmatpush2.msra.mxu0 0.0
    %3911 = vmatprep.subr.mxu0 0.0
    %3912 = vmatpush2.msra.mxu0 0.0
    %3913 = vmatprep.subr.mxu0 0.0
    %3914 = vmatpush2.msra.mxu0 0.0
    %3915 = vmatprep.subr.mxu0 0.0
    %3916 = vmatpush2.msra.mxu0 0.0
    %3917 = vmatprep.subr.mxu0 0.0
    %3918 = vmatpush2.msra.mxu0 0.0
    %3919 = vmatprep.subr.mxu0 0.0
    %3920 = vmatpush2.msra.mxu0 0.0
    %3921 = vmatprep.subr.mxu0 0.0
    %3922 = vmatpush2.msra.mxu0 0.0
    %3923 = vmatprep.subr.mxu0 0.0
    %3924 = vmatpush2.msra.mxu0 0.0
    %3925 = vmatprep.subr.mxu0 0.0
    %3926 = vmatpush2.msra.mxu0 0.0
    %3927 = vmatprep.subr.mxu0 0.0
    %3928 = vmatpush2.msra.mxu0 0.0
    %3929 = vmatprep.subr.mxu0 0.0
    %3930 = vmatpush2.msra.mxu0 0.0
    %3931 = vmatprep.subr.mxu0 0.0
    %3932 = vmatpush2.msra.mxu0 0.0
    %3933 = vmatprep.mubr.f32.mxu0 0.0
    %3934 = vmatmul.mubr.f32.gmra.mxu0 %v3499
    %v3935 = vpop.f32.mrf.mxu0
    %v3936 = vadd.f32 %v3851, %v3935
    %v3937 = vpop.f32.mrf.mxu0
    %3938 = vmatprep.mubr.f32.mxu0 0.0
    %3939 = vmatmul.mubr.f32.gmra.mxu0 %v3504
    %v3940 = vpop.f32.mrf.mxu0
    %v3941 = vadd.f32 %v3856, %v3940
    %v3942 = vpop.f32.mrf.mxu0
    %3943 = vmatprep.mubr.f32.mxu0 0.0
    %3944 = vmatmul.mubr.f32.gmra.mxu0 %v3580
    %v3945 = vpop.f32.mrf.mxu0
    %v3946 = vadd.f32 %v3861, %v3945
    %v3947 = vpop.f32.mrf.mxu0
    %3948 = vmatprep.mubr.f32.mxu0 0.0
    %3949 = vmatmul.mubr.f32.gmra.mxu0 %v3585
    %v3950 = vpop.f32.mrf.mxu0
    %v3951 = vadd.f32 %v3866, %v3950
    %v3952 = vpop.f32.mrf.mxu0
    %3953 = vdwg.mxu0
    %s3954 = scalar_lea.vmem %s6, 3
    %v3955 = vld [vmem:[%s3954] sm:$0x1]
    %v3957 = vlaneseq
    %v3958 = vshrl.u32 %v3957, 7
    %v3959 = vsub.s32 0, %v3958
    %v3960 = vrot.slane %v3955, %v3959
    %v3962 = vadd.f32 %v3936, %v3960
    %v3963 = vadd.f32 %v3941, %v3960
    %v3964 = vadd.f32 %v3946, %v3960
    %v3965 = vadd.f32 %v3951, %v3960
    %v3966 = vmax.f32 %v3962, 0.0
    %v3967 = vmax.f32 %v3963, 0.0
    %v3968 = vmax.f32 %v3964, 0.0
    %v3969 = vmax.f32 %v3965, 0.0
    %s3970 = scalar_lea.vmem %s7, 3
    %v3971 = vld [vmem:[%s3970] sm:$0x1]
    %v3973 = vlaneseq
    %v3974 = vshrl.u32 %v3973, 7
    %v3975 = vsub.s32 0, %v3974
    %v3976 = vrot.slane %v3971, %v3975
    %v3978 = vmul.f32 %v3966, %v3976
    %v3979 = vmul.f32 %v3967, %v3976
    %v3980 = vmul.f32 %v3968, %v3976
    %v3981 = vmul.f32 %v3969, %v3976
    %3982 = vadd.xlane.f32.xlu0 %v3978
    %v3983 = vpop.xlane.xlu0 %3982
    %3984 = vadd.xlane.f32.xlu0 %v3979
    %v3985 = vpop.xlane.xlu0 %3984
    %3986 = vadd.xlane.f32.xlu0 %v3980
    %v3987 = vpop.xlane.xlu0 %3986
    %3988 = vadd.xlane.f32.xlu0 %v3981
    %v3989 = vpop.xlane.xlu0 %3988
    %v3990 = vmax.f32 %v3098, %v3983
    %v3991 = vmax.f32 %v3099, %v3985
    %v3992 = vmax.f32 %v3100, %v3987
    %v3993 = vmax.f32 %v3101, %v3989
    %v3994 = vsub.f32 %v3098, %v3990
    %v3995 = vsub.f32 %v3099, %v3991
    %v3996 = vsub.f32 %v3100, %v3992
    %v3997 = vsub.f32 %v3101, %v3993
    %v3998 = vmul.f32 %v3994, 1.442695
    %v3999 = vpow.pop %v3998
    %v4000 = vmul.f32 %v3995, 1.442695
    %v4001 = vpow.pop %v4000
    %v4002 = vmul.f32 %v3996, 1.442695
    %v4003 = vpow.pop %v4002
    %v4004 = vmul.f32 %v3997, 1.442695
    %v4005 = vpow.pop %v4004
    %v4006 = vsub.f32 %v3983, %v3990
    %v4007 = vsub.f32 %v3985, %v3991
    %v4008 = vsub.f32 %v3987, %v3992
    %v4009 = vsub.f32 %v3989, %v3993
    %v4010 = vmul.f32 %v4006, 1.442695
    %v4011 = vpow.pop %v4010
    %v4012 = vmul.f32 %v4007, 1.442695
    %v4013 = vpow.pop %v4012
    %v4014 = vmul.f32 %v4008, 1.442695
    %v4015 = vpow.pop %v4014
    %v4016 = vmul.f32 %v4009, 1.442695
    %v4017 = vpow.pop %v4016
    %v4018 = vmul.f32 %v3130, %v3999
    %v4019 = vmul.f32 %v3131, %v4001
    %v4020 = vmul.f32 %v3132, %v4003
    %v4021 = vmul.f32 %v3133, %v4005
    %v4022 = vadd.f32 %v4018, %v4011
    %v4023 = vadd.f32 %v4019, %v4013
    %v4024 = vadd.f32 %v4020, %v4015
    %v4025 = vadd.f32 %v4021, %v4017
    %v4026 = vmul.f32 %v3142, %v3999
    %v4027 = vmul.f32 %v3143, %v4001
    %v4028 = vmul.f32 %v3144, %v4003
    %v4029 = vmul.f32 %v3145, %v4005
    %v4030 = vmul.f32 %v4011, %v3966
    %v4031 = vmul.f32 %v4013, %v3967
    %v4032 = vmul.f32 %v4015, %v3968
    %v4033 = vmul.f32 %v4017, %v3969
    %v4034 = vadd.f32 %v4026, %v4030
    %v4035 = vadd.f32 %v4027, %v4031
    %v4036 = vadd.f32 %v4028, %v4032
    %v4037 = vadd.f32 %v4029, %v4033
    %v4039 = vsel %vm695, %v3219, 0
    %v4042 = vsel %vm695, %v3224, 0
    %4044 = vmatprep.subr.mxu0 0.0
    %4045 = vmatpush1.msra.mxu0 0.0
    %4046 = vmatprep.subr.mxu0 0.0
    %4047 = vmatpush1.msra.mxu0 0.0
    %4048 = vmatprep.subr.mxu0 0.0
    %4049 = vmatpush1.msra.mxu0 0.0
    %4050 = vmatprep.subr.mxu0 0.0
    %4051 = vmatpush1.msra.mxu0 0.0
    %4052 = vmatprep.subr.mxu0 0.0
    %4053 = vmatpush1.msra.mxu0 0.0
    %4054 = vmatprep.subr.mxu0 0.0
    %4055 = vmatpush1.msra.mxu0 0.0
    %4056 = vmatprep.subr.mxu0 0.0
    %4057 = vmatpush1.msra.mxu0 0.0
    %4058 = vmatprep.subr.mxu0 0.0
    %4059 = vmatpush1.msra.mxu0 0.0
    %4060 = vmatprep.subr.mxu0 0.0
    %4061 = vmatpush1.msra.mxu0 0.0
    %4062 = vmatprep.subr.mxu0 0.0
    %4063 = vmatpush1.msra.mxu0 0.0
    %4064 = vmatprep.subr.mxu0 0.0
    %4065 = vmatpush1.msra.mxu0 0.0
    %4066 = vmatprep.subr.mxu0 0.0
    %4067 = vmatpush1.msra.mxu0 0.0
    %4068 = vmatprep.subr.mxu0 0.0
    %4069 = vmatpush1.msra.mxu0 0.0
    %4070 = vmatprep.subr.mxu0 0.0
    %4071 = vmatpush1.msra.mxu0 0.0
    %4072 = vmatprep.subr.mxu0 0.0
    %4073 = vmatpush1.msra.mxu0 %v121
    %4074 = vmatprep.subr.mxu0 0.0
    %4075 = vmatpush1.msra.mxu0 %v120
    %4076 = vmatprep.subr.mxu0 0.0
    %4077 = vmatpush2.msra.mxu0 0.0
    %4078 = vmatprep.subr.mxu0 0.0
    %4079 = vmatpush2.msra.mxu0 0.0
    %4080 = vmatprep.subr.mxu0 0.0
    %4081 = vmatpush2.msra.mxu0 0.0
    %4082 = vmatprep.subr.mxu0 0.0
    %4083 = vmatpush2.msra.mxu0 0.0
    %4084 = vmatprep.subr.mxu0 0.0
    %4085 = vmatpush2.msra.mxu0 0.0
    %4086 = vmatprep.subr.mxu0 0.0
    %4087 = vmatpush2.msra.mxu0 0.0
    %4088 = vmatprep.subr.mxu0 0.0
    %4089 = vmatpush2.msra.mxu0 0.0
    %4090 = vmatprep.subr.mxu0 0.0
    %4091 = vmatpush2.msra.mxu0 0.0
    %4092 = vmatprep.subr.mxu0 0.0
    %4093 = vmatpush2.msra.mxu0 0.0
    %4094 = vmatprep.subr.mxu0 0.0
    %4095 = vmatpush2.msra.mxu0 0.0
    %4096 = vmatprep.subr.mxu0 0.0
    %4097 = vmatpush2.msra.mxu0 0.0
    %4098 = vmatprep.subr.mxu0 0.0
    %4099 = vmatpush2.msra.mxu0 0.0
    %4100 = vmatprep.subr.mxu0 0.0
    %4101 = vmatpush2.msra.mxu0 0.0
    %4102 = vmatprep.subr.mxu0 0.0
    %4103 = vmatpush2.msra.mxu0 0.0
    %4104 = vmatprep.subr.mxu0 0.0
    %4105 = vmatpush2.msra.mxu0 0.0
    %4106 = vmatprep.subr.mxu0 0.0
    %4107 = vmatpush2.msra.mxu0 0.0
    %4108 = vmatprep.mubr.f32.mxu0 0.0
    %4109 = vmatmul.mubr.f32.gmra.mxu0 %v4039
    %v4110 = vpop.f32.mrf.mxu0
    %v4111 = vadd.f32 0.0, %v4110
    %v4112 = vpop.f32.mrf.mxu0
    %4113 = vmatprep.mubr.f32.mxu0 0.0
    %4114 = vmatmul.mubr.f32.gmra.mxu0 %v4042
    %v4115 = vpop.f32.mrf.mxu0
    %v4116 = vadd.f32 0.0, %v4115
    %v4117 = vpop.f32.mrf.mxu0
    %4118 = vdwg.mxu0
    %v4120 = vsel %vm695, %v3300, 0
    %v4123 = vsel %vm695, %v3305, 0
    %4125 = vmatprep.subr.mxu0 0.0
    %4126 = vmatpush1.msra.mxu0 0.0
    %4127 = vmatprep.subr.mxu0 0.0
    %4128 = vmatpush1.msra.mxu0 0.0
    %4129 = vmatprep.subr.mxu0 0.0
    %4130 = vmatpush1.msra.mxu0 0.0
    %4131 = vmatprep.subr.mxu0 0.0
    %4132 = vmatpush1.msra.mxu0 0.0
    %4133 = vmatprep.subr.mxu0 0.0
    %4134 = vmatpush1.msra.mxu0 0.0
    %4135 = vmatprep.subr.mxu0 0.0
    %4136 = vmatpush1.msra.mxu0 0.0
    %4137 = vmatprep.subr.mxu0 0.0
    %4138 = vmatpush1.msra.mxu0 0.0
    %4139 = vmatprep.subr.mxu0 0.0
    %4140 = vmatpush1.msra.mxu0 0.0
    %4141 = vmatprep.subr.mxu0 0.0
    %4142 = vmatpush1.msra.mxu0 0.0
    %4143 = vmatprep.subr.mxu0 0.0
    %4144 = vmatpush1.msra.mxu0 0.0
    %4145 = vmatprep.subr.mxu0 0.0
    %4146 = vmatpush1.msra.mxu0 0.0
    %4147 = vmatprep.subr.mxu0 0.0
    %4148 = vmatpush1.msra.mxu0 0.0
    %4149 = vmatprep.subr.mxu0 0.0
    %4150 = vmatpush1.msra.mxu0 0.0
    %4151 = vmatprep.subr.mxu0 0.0
    %4152 = vmatpush1.msra.mxu0 0.0
    %4153 = vmatprep.subr.mxu0 0.0
    %4154 = vmatpush1.msra.mxu0 %v123
    %4155 = vmatprep.subr.mxu0 0.0
    %4156 = vmatpush1.msra.mxu0 %v122
    %4157 = vmatprep.subr.mxu0 0.0
    %4158 = vmatpush2.msra.mxu0 0.0
    %4159 = vmatprep.subr.mxu0 0.0
    %4160 = vmatpush2.msra.mxu0 0.0
    %4161 = vmatprep.subr.mxu0 0.0
    %4162 = vmatpush2.msra.mxu0 0.0
    %4163 = vmatprep.subr.mxu0 0.0
    %4164 = vmatpush2.msra.mxu0 0.0
    %4165 = vmatprep.subr.mxu0 0.0
    %4166 = vmatpush2.msra.mxu0 0.0
    %4167 = vmatprep.subr.mxu0 0.0
    %4168 = vmatpush2.msra.mxu0 0.0
    %4169 = vmatprep.subr.mxu0 0.0
    %4170 = vmatpush2.msra.mxu0 0.0
    %4171 = vmatprep.subr.mxu0 0.0
    %4172 = vmatpush2.msra.mxu0 0.0
    %4173 = vmatprep.subr.mxu0 0.0
    %4174 = vmatpush2.msra.mxu0 0.0
    %4175 = vmatprep.subr.mxu0 0.0
    %4176 = vmatpush2.msra.mxu0 0.0
    %4177 = vmatprep.subr.mxu0 0.0
    %4178 = vmatpush2.msra.mxu0 0.0
    %4179 = vmatprep.subr.mxu0 0.0
    %4180 = vmatpush2.msra.mxu0 0.0
    %4181 = vmatprep.subr.mxu0 0.0
    %4182 = vmatpush2.msra.mxu0 0.0
    %4183 = vmatprep.subr.mxu0 0.0
    %4184 = vmatpush2.msra.mxu0 0.0
    %4185 = vmatprep.subr.mxu0 0.0
    %4186 = vmatpush2.msra.mxu0 0.0
    %4187 = vmatprep.subr.mxu0 0.0
    %4188 = vmatpush2.msra.mxu0 0.0
    %4189 = vmatprep.mubr.f32.mxu0 0.0
    %4190 = vmatmul.mubr.f32.gmra.mxu0 %v4120
    %v4191 = vpop.f32.mrf.mxu0
    %v4192 = vadd.f32 0.0, %v4191
    %v4193 = vpop.f32.mrf.mxu0
    %4194 = vmatprep.mubr.f32.mxu0 0.0
    %4195 = vmatmul.mubr.f32.gmra.mxu0 %v4123
    %v4196 = vpop.f32.mrf.mxu0
    %v4197 = vadd.f32 0.0, %v4196
    %v4198 = vpop.f32.mrf.mxu0
    %4199 = vdwg.mxu0
    %v4200 = vadd.f32 %v4111, 1.0
    %v4201 = vadd.f32 %v4116, 1.0
    %v4202 = vadd.f32 %v4192, 1.0
    %v4203 = vadd.f32 %v4197, 1.0
    %v4204 = vsel %vm689, %v4200, %v4111
    %v4205 = vsel %vm690, %v4201, %v4116
    %v4206 = vsel %vm689, %v4202, %v4192
    %v4207 = vsel %vm690, %v4203, %v4197
    %v4208 = vsel %vm695, %v4204, 0.0
    %4209 = vadd.xlane.f32.xlu0 %v4208
    %v4210 = vpop.xlane.xlu0 %4209
    %v4211 = vsel %vm695, %v4205, 0.0
    %4212 = vadd.xlane.f32.xlu0 %v4211
    %v4213 = vpop.xlane.xlu0 %4212
    %v4214 = vsel %vm695, %v4206, 0.0
    %4215 = vadd.xlane.f32.xlu0 %v4214
    %v4216 = vpop.xlane.xlu0 %4215
    %v4217 = vsel %vm695, %v4207, 0.0
    %4218 = vadd.xlane.f32.xlu0 %v4217
    %v4219 = vpop.xlane.xlu0 %4218
    %v4220 = vmax.f32 %v4210, 1e-12
    %v4221 = vmax.f32 %v4213, 1e-12
    %v4222 = vmax.f32 %v4216, 1e-12
    %v4223 = vmax.f32 %v4219, 1e-12
    %v4224 = vadd.f32 %v4208, %v4211
    %v4225 = vrot.slane %v4224, 4
    %v4226 = vadd.f32 %v4224, %v4225
    %v4227 = vrot.slane %v4226, 2
    %v4228 = vadd.f32 %v4226, %v4227
    %v4229 = vrot.slane %v4228, 1
    %v4230 = vadd.f32 %v4228, %v4229
    %v4231 = vadd.f32 %v4214, %v4217
    %v4232 = vrot.slane %v4231, 4
    %v4233 = vadd.f32 %v4231, %v4232
    %v4234 = vrot.slane %v4233, 2
    %v4235 = vadd.f32 %v4233, %v4234
    %v4236 = vrot.slane %v4235, 1
    %v4237 = vadd.f32 %v4235, %v4236
    %v4238 = vmax.f32 %v4230, 1e-12
    %v4239 = vmax.f32 %v4237, 1e-12
    %v4240 = vrsqrt.pop %v4220
    %v4241 = vrsqrt.pop %v4221
    %v4242 = vrsqrt.pop %v4222
    %v4243 = vrsqrt.pop %v4223
    %v4244 = vrsqrt.pop %v4238
    %v4245 = vrsqrt.pop %v4239
    %v4246 = vmul.f32 %v4240, %v4244
    %v4247 = vmul.f32 %v4241, %v4244
    %v4248 = vmul.f32 %v4242, %v4245
    %v4249 = vmul.f32 %v4243, %v4245
    %v4250 = vmul.f32 %v4204, %v4246
    %v4251 = vmul.f32 %v4205, %v4247
    %v4252 = vmul.f32 %v4206, %v4248
    %v4253 = vmul.f32 %v4207, %v4249
    %4254 = vxpose.xlu0.b32.start [1/16] %v4250, 128
    %4255 = vxpose.xlu0.b32.cont [2/16] %v4251, 128
    %4256 = vxpose.xlu0.b32.cont [3/16] 0.0, 128
    %4257 = vxpose.xlu0.b32.cont [4/16] 0.0, 128
    %4258 = vxpose.xlu0.b32.cont [5/16] 0.0, 128
    %4259 = vxpose.xlu0.b32.cont [6/16] 0.0, 128
    %4260 = vxpose.xlu0.b32.cont [7/16] 0.0, 128
    %4261 = vxpose.xlu0.b32.cont [8/16] 0.0, 128
    %4262 = vxpose.xlu0.b32.cont [9/16] 0.0, 128
    %4263 = vxpose.xlu0.b32.cont [10/16] 0.0, 128
    %4264 = vxpose.xlu0.b32.cont [11/16] 0.0, 128
    %4265 = vxpose.xlu0.b32.cont [12/16] 0.0, 128
    %4266 = vxpose.xlu0.b32.cont [13/16] 0.0, 128
    %4267 = vxpose.xlu0.b32.cont [14/16] 0.0, 128
    %4268 = vxpose.xlu0.b32.cont [15/16] 0.0, 128
    %4269 = vxpose.xlu0.b32.end [16/16] 0.0, 128
    %v4270 = vpop.trf.xlu0
    %v4271 = vpop.trf.xlu0
    %v4272 = vpop.trf.xlu0
    %v4273 = vpop.trf.xlu0
    %v4274 = vpop.trf.xlu0
    %v4275 = vpop.trf.xlu0
    %v4276 = vpop.trf.xlu0
    %v4277 = vpop.trf.xlu0
    %v4278 = vpop.trf.xlu0
    %v4279 = vpop.trf.xlu0
    %v4280 = vpop.trf.xlu0
    %v4281 = vpop.trf.xlu0
    %v4282 = vpop.trf.xlu0
    %v4283 = vpop.trf.xlu0
    %v4284 = vpop.trf.xlu0
    %v4285 = vpop.trf.xlu0
    %4286 = vxpose.xlu0.b32.start [1/16] %v4252, 128
    %4287 = vxpose.xlu0.b32.cont [2/16] %v4253, 128
    %4288 = vxpose.xlu0.b32.cont [3/16] 0.0, 128
    %4289 = vxpose.xlu0.b32.cont [4/16] 0.0, 128
    %4290 = vxpose.xlu0.b32.cont [5/16] 0.0, 128
    %4291 = vxpose.xlu0.b32.cont [6/16] 0.0, 128
    %4292 = vxpose.xlu0.b32.cont [7/16] 0.0, 128
    %4293 = vxpose.xlu0.b32.cont [8/16] 0.0, 128
    %4294 = vxpose.xlu0.b32.cont [9/16] 0.0, 128
    %4295 = vxpose.xlu0.b32.cont [10/16] 0.0, 128
    %4296 = vxpose.xlu0.b32.cont [11/16] 0.0, 128
    %4297 = vxpose.xlu0.b32.cont [12/16] 0.0, 128
    %4298 = vxpose.xlu0.b32.cont [13/16] 0.0, 128
    %4299 = vxpose.xlu0.b32.cont [14/16] 0.0, 128
    %4300 = vxpose.xlu0.b32.cont [15/16] 0.0, 128
    %4301 = vxpose.xlu0.b32.end [16/16] 0.0, 128
    %v4302 = vpop.trf.xlu0
    %v4303 = vpop.trf.xlu0
    %v4304 = vpop.trf.xlu0
    %v4305 = vpop.trf.xlu0
    %v4306 = vpop.trf.xlu0
    %v4307 = vpop.trf.xlu0
    %v4308 = vpop.trf.xlu0
    %v4309 = vpop.trf.xlu0
    %v4310 = vpop.trf.xlu0
    %v4311 = vpop.trf.xlu0
    %v4312 = vpop.trf.xlu0
    %v4313 = vpop.trf.xlu0
    %v4314 = vpop.trf.xlu0
    %v4315 = vpop.trf.xlu0
    %v4316 = vpop.trf.xlu0
    %v4317 = vpop.trf.xlu0
    %v4319 = vsel %vm695, %v4250, 0
    %v4322 = vsel %vm695, %v4251, 0
    %4324 = vmatprep.subr.mxu0 0.0
    %4325 = vmatpush1.msra.mxu0 0.0
    %4326 = vmatprep.subr.mxu0 0.0
    %4327 = vmatpush1.msra.mxu0 0.0
    %4328 = vmatprep.subr.mxu0 0.0
    %4329 = vmatpush1.msra.mxu0 0.0
    %4330 = vmatprep.subr.mxu0 0.0
    %4331 = vmatpush1.msra.mxu0 0.0
    %4332 = vmatprep.subr.mxu0 0.0
    %4333 = vmatpush1.msra.mxu0 0.0
    %4334 = vmatprep.subr.mxu0 0.0
    %4335 = vmatpush1.msra.mxu0 0.0
    %4336 = vmatprep.subr.mxu0 0.0
    %4337 = vmatpush1.msra.mxu0 0.0
    %4338 = vmatprep.subr.mxu0 0.0
    %4339 = vmatpush1.msra.mxu0 0.0
    %4340 = vmatprep.subr.mxu0 0.0
    %4341 = vmatpush1.msra.mxu0 0.0
    %4342 = vmatprep.subr.mxu0 0.0
    %4343 = vmatpush1.msra.mxu0 0.0
    %4344 = vmatprep.subr.mxu0 0.0
    %4345 = vmatpush1.msra.mxu0 0.0
    %4346 = vmatprep.subr.mxu0 0.0
    %4347 = vmatpush1.msra.mxu0 0.0
    %4348 = vmatprep.subr.mxu0 0.0
    %4349 = vmatpush1.msra.mxu0 0.0
    %4350 = vmatprep.subr.mxu0 0.0
    %4351 = vmatpush1.msra.mxu0 0.0
    %4352 = vmatprep.subr.mxu0 0.0
    %4353 = vmatpush1.msra.mxu0 %v667
    %4354 = vmatprep.subr.mxu0 0.0
    %4355 = vmatpush1.msra.mxu0 %v661
    %4356 = vmatprep.subr.mxu0 0.0
    %4357 = vmatpush2.msra.mxu0 0.0
    %4358 = vmatprep.subr.mxu0 0.0
    %4359 = vmatpush2.msra.mxu0 0.0
    %4360 = vmatprep.subr.mxu0 0.0
    %4361 = vmatpush2.msra.mxu0 0.0
    %4362 = vmatprep.subr.mxu0 0.0
    %4363 = vmatpush2.msra.mxu0 0.0
    %4364 = vmatprep.subr.mxu0 0.0
    %4365 = vmatpush2.msra.mxu0 0.0
    %4366 = vmatprep.subr.mxu0 0.0
    %4367 = vmatpush2.msra.mxu0 0.0
    %4368 = vmatprep.subr.mxu0 0.0
    %4369 = vmatpush2.msra.mxu0 0.0
    %4370 = vmatprep.subr.mxu0 0.0
    %4371 = vmatpush2.msra.mxu0 0.0
    %4372 = vmatprep.subr.mxu0 0.0
    %4373 = vmatpush2.msra.mxu0 0.0
    %4374 = vmatprep.subr.mxu0 0.0
    %4375 = vmatpush2.msra.mxu0 0.0
    %4376 = vmatprep.subr.mxu0 0.0
    %4377 = vmatpush2.msra.mxu0 0.0
    %4378 = vmatprep.subr.mxu0 0.0
    %4379 = vmatpush2.msra.mxu0 0.0
    %4380 = vmatprep.subr.mxu0 0.0
    %4381 = vmatpush2.msra.mxu0 0.0
    %4382 = vmatprep.subr.mxu0 0.0
    %4383 = vmatpush2.msra.mxu0 0.0
    %4384 = vmatprep.subr.mxu0 0.0
    %4385 = vmatpush2.msra.mxu0 0.0
    %4386 = vmatprep.subr.mxu0 0.0
    %4387 = vmatpush2.msra.mxu0 0.0
    %4388 = vmatprep.mubr.f32.mxu0 0.0
    %4389 = vmatmul.mubr.f32.gmra.mxu0 %v4319
    %v4390 = vpop.f32.mrf.mxu0
    %v4391 = vadd.f32 0.0, %v4390
    %v4392 = vpop.f32.mrf.mxu0
    %4393 = vmatprep.mubr.f32.mxu0 0.0
    %4394 = vmatmul.mubr.f32.gmra.mxu0 %v4322
    %v4395 = vpop.f32.mrf.mxu0
    %v4396 = vadd.f32 0.0, %v4395
    %v4397 = vpop.f32.mrf.mxu0
    %4398 = vdwg.mxu0
    %v4400 = vsel %vm695, %v4252, 0
    %v4403 = vsel %vm695, %v4253, 0
    %4405 = vmatprep.subr.mxu0 0.0
    %4406 = vmatpush1.msra.mxu0 0.0
    %4407 = vmatprep.subr.mxu0 0.0
    %4408 = vmatpush1.msra.mxu0 0.0
    %4409 = vmatprep.subr.mxu0 0.0
    %4410 = vmatpush1.msra.mxu0 0.0
    %4411 = vmatprep.subr.mxu0 0.0
    %4412 = vmatpush1.msra.mxu0 0.0
    %4413 = vmatprep.subr.mxu0 0.0
    %4414 = vmatpush1.msra.mxu0 0.0
    %4415 = vmatprep.subr.mxu0 0.0
    %4416 = vmatpush1.msra.mxu0 0.0
    %4417 = vmatprep.subr.mxu0 0.0
    %4418 = vmatpush1.msra.mxu0 0.0
    %4419 = vmatprep.subr.mxu0 0.0
    %4420 = vmatpush1.msra.mxu0 0.0
    %4421 = vmatprep.subr.mxu0 0.0
    %4422 = vmatpush1.msra.mxu0 0.0
    %4423 = vmatprep.subr.mxu0 0.0
    %4424 = vmatpush1.msra.mxu0 0.0
    %4425 = vmatprep.subr.mxu0 0.0
    %4426 = vmatpush1.msra.mxu0 0.0
    %4427 = vmatprep.subr.mxu0 0.0
    %4428 = vmatpush1.msra.mxu0 0.0
    %4429 = vmatprep.subr.mxu0 0.0
    %4430 = vmatpush1.msra.mxu0 0.0
    %4431 = vmatprep.subr.mxu0 0.0
    %4432 = vmatpush1.msra.mxu0 0.0
    %4433 = vmatprep.subr.mxu0 0.0
    %4434 = vmatpush1.msra.mxu0 %v679
    %4435 = vmatprep.subr.mxu0 0.0
    %4436 = vmatpush1.msra.mxu0 %v673
    %4437 = vmatprep.subr.mxu0 0.0
    %4438 = vmatpush2.msra.mxu0 0.0
    %4439 = vmatprep.subr.mxu0 0.0
    %4440 = vmatpush2.msra.mxu0 0.0
    %4441 = vmatprep.subr.mxu0 0.0
    %4442 = vmatpush2.msra.mxu0 0.0
    %4443 = vmatprep.subr.mxu0 0.0
    %4444 = vmatpush2.msra.mxu0 0.0
    %4445 = vmatprep.subr.mxu0 0.0
    %4446 = vmatpush2.msra.mxu0 0.0
    %4447 = vmatprep.subr.mxu0 0.0
    %4448 = vmatpush2.msra.mxu0 0.0
    %4449 = vmatprep.subr.mxu0 0.0
    %4450 = vmatpush2.msra.mxu0 0.0
    %4451 = vmatprep.subr.mxu0 0.0
    %4452 = vmatpush2.msra.mxu0 0.0
    %4453 = vmatprep.subr.mxu0 0.0
    %4454 = vmatpush2.msra.mxu0 0.0
    %4455 = vmatprep.subr.mxu0 0.0
    %4456 = vmatpush2.msra.mxu0 0.0
    %4457 = vmatprep.subr.mxu0 0.0
    %4458 = vmatpush2.msra.mxu0 0.0
    %4459 = vmatprep.subr.mxu0 0.0
    %4460 = vmatpush2.msra.mxu0 0.0
    %4461 = vmatprep.subr.mxu0 0.0
    %4462 = vmatpush2.msra.mxu0 0.0
    %4463 = vmatprep.subr.mxu0 0.0
    %4464 = vmatpush2.msra.mxu0 0.0
    %4465 = vmatprep.subr.mxu0 0.0
    %4466 = vmatpush2.msra.mxu0 0.0
    %4467 = vmatprep.subr.mxu0 0.0
    %4468 = vmatpush2.msra.mxu0 0.0
    %4469 = vmatprep.mubr.f32.mxu0 0.0
    %4470 = vmatmul.mubr.f32.gmra.mxu0 %v4400
    %v4471 = vpop.f32.mrf.mxu0
    %v4472 = vadd.f32 0.0, %v4471
    %v4473 = vpop.f32.mrf.mxu0
    %4474 = vmatprep.mubr.f32.mxu0 0.0
    %4475 = vmatmul.mubr.f32.gmra.mxu0 %v4403
    %v4476 = vpop.f32.mrf.mxu0
    %v4477 = vadd.f32 0.0, %v4476
    %v4478 = vpop.f32.mrf.mxu0
    %4479 = vdwg.mxu0
    %v4481 = vsel %vm695, %v4270, 0
    %v4484 = vsel %vm695, %v4271, 0
    %4486 = vmatprep.subr.mxu0 0.0
    %4487 = vmatpush1.msra.mxu0 0.0
    %4488 = vmatprep.subr.mxu0 0.0
    %4489 = vmatpush1.msra.mxu0 0.0
    %4490 = vmatprep.subr.mxu0 0.0
    %4491 = vmatpush1.msra.mxu0 0.0
    %4492 = vmatprep.subr.mxu0 0.0
    %4493 = vmatpush1.msra.mxu0 0.0
    %4494 = vmatprep.subr.mxu0 0.0
    %4495 = vmatpush1.msra.mxu0 0.0
    %4496 = vmatprep.subr.mxu0 0.0
    %4497 = vmatpush1.msra.mxu0 0.0
    %4498 = vmatprep.subr.mxu0 0.0
    %4499 = vmatpush1.msra.mxu0 0.0
    %4500 = vmatprep.subr.mxu0 0.0
    %4501 = vmatpush1.msra.mxu0 0.0
    %4502 = vmatprep.subr.mxu0 0.0
    %4503 = vmatpush1.msra.mxu0 0.0
    %4504 = vmatprep.subr.mxu0 0.0
    %4505 = vmatpush1.msra.mxu0 0.0
    %4506 = vmatprep.subr.mxu0 0.0
    %4507 = vmatpush1.msra.mxu0 0.0
    %4508 = vmatprep.subr.mxu0 0.0
    %4509 = vmatpush1.msra.mxu0 0.0
    %4510 = vmatprep.subr.mxu0 0.0
    %4511 = vmatpush1.msra.mxu0 0.0
    %4512 = vmatprep.subr.mxu0 0.0
    %4513 = vmatpush1.msra.mxu0 0.0
    %4514 = vmatprep.subr.mxu0 0.0
    %4515 = vmatpush1.msra.mxu0 %v669
    %4516 = vmatprep.subr.mxu0 0.0
    %4517 = vmatpush1.msra.mxu0 %v663
    %4518 = vmatprep.subr.mxu0 0.0
    %4519 = vmatpush2.msra.mxu0 0.0
    %4520 = vmatprep.subr.mxu0 0.0
    %4521 = vmatpush2.msra.mxu0 0.0
    %4522 = vmatprep.subr.mxu0 0.0
    %4523 = vmatpush2.msra.mxu0 0.0
    %4524 = vmatprep.subr.mxu0 0.0
    %4525 = vmatpush2.msra.mxu0 0.0
    %4526 = vmatprep.subr.mxu0 0.0
    %4527 = vmatpush2.msra.mxu0 0.0
    %4528 = vmatprep.subr.mxu0 0.0
    %4529 = vmatpush2.msra.mxu0 0.0
    %4530 = vmatprep.subr.mxu0 0.0
    %4531 = vmatpush2.msra.mxu0 0.0
    %4532 = vmatprep.subr.mxu0 0.0
    %4533 = vmatpush2.msra.mxu0 0.0
    %4534 = vmatprep.subr.mxu0 0.0
    %4535 = vmatpush2.msra.mxu0 0.0
    %4536 = vmatprep.subr.mxu0 0.0
    %4537 = vmatpush2.msra.mxu0 0.0
    %4538 = vmatprep.subr.mxu0 0.0
    %4539 = vmatpush2.msra.mxu0 0.0
    %4540 = vmatprep.subr.mxu0 0.0
    %4541 = vmatpush2.msra.mxu0 0.0
    %4542 = vmatprep.subr.mxu0 0.0
    %4543 = vmatpush2.msra.mxu0 0.0
    %4544 = vmatprep.subr.mxu0 0.0
    %4545 = vmatpush2.msra.mxu0 0.0
    %4546 = vmatprep.subr.mxu0 0.0
    %4547 = vmatpush2.msra.mxu0 0.0
    %4548 = vmatprep.subr.mxu0 0.0
    %4549 = vmatpush2.msra.mxu0 0.0
    %4550 = vmatprep.mubr.f32.mxu0 0.0
    %4551 = vmatmul.mubr.f32.gmra.mxu0 %v4481
    %v4552 = vpop.f32.mrf.mxu0
    %v4553 = vadd.f32 0.0, %v4552
    %v4554 = vpop.f32.mrf.mxu0
    %4555 = vmatprep.mubr.f32.mxu0 0.0
    %4556 = vmatmul.mubr.f32.gmra.mxu0 %v4484
    %v4557 = vpop.f32.mrf.mxu0
    %v4558 = vadd.f32 0.0, %v4557
    %v4559 = vpop.f32.mrf.mxu0
    %4560 = vdwg.mxu0
    %v4562 = vsel %vm695, %v4302, 0
    %v4565 = vsel %vm695, %v4303, 0
    %4567 = vmatprep.subr.mxu0 0.0
    %4568 = vmatpush1.msra.mxu0 0.0
    %4569 = vmatprep.subr.mxu0 0.0
    %4570 = vmatpush1.msra.mxu0 0.0
    %4571 = vmatprep.subr.mxu0 0.0
    %4572 = vmatpush1.msra.mxu0 0.0
    %4573 = vmatprep.subr.mxu0 0.0
    %4574 = vmatpush1.msra.mxu0 0.0
    %4575 = vmatprep.subr.mxu0 0.0
    %4576 = vmatpush1.msra.mxu0 0.0
    %4577 = vmatprep.subr.mxu0 0.0
    %4578 = vmatpush1.msra.mxu0 0.0
    %4579 = vmatprep.subr.mxu0 0.0
    %4580 = vmatpush1.msra.mxu0 0.0
    %4581 = vmatprep.subr.mxu0 0.0
    %4582 = vmatpush1.msra.mxu0 0.0
    %4583 = vmatprep.subr.mxu0 0.0
    %4584 = vmatpush1.msra.mxu0 0.0
    %4585 = vmatprep.subr.mxu0 0.0
    %4586 = vmatpush1.msra.mxu0 0.0
    %4587 = vmatprep.subr.mxu0 0.0
    %4588 = vmatpush1.msra.mxu0 0.0
    %4589 = vmatprep.subr.mxu0 0.0
    %4590 = vmatpush1.msra.mxu0 0.0
    %4591 = vmatprep.subr.mxu0 0.0
    %4592 = vmatpush1.msra.mxu0 0.0
    %4593 = vmatprep.subr.mxu0 0.0
    %4594 = vmatpush1.msra.mxu0 0.0
    %4595 = vmatprep.subr.mxu0 0.0
    %4596 = vmatpush1.msra.mxu0 %v681
    %4597 = vmatprep.subr.mxu0 0.0
    %4598 = vmatpush1.msra.mxu0 %v675
    %4599 = vmatprep.subr.mxu0 0.0
    %4600 = vmatpush2.msra.mxu0 0.0
    %4601 = vmatprep.subr.mxu0 0.0
    %4602 = vmatpush2.msra.mxu0 0.0
    %4603 = vmatprep.subr.mxu0 0.0
    %4604 = vmatpush2.msra.mxu0 0.0
    %4605 = vmatprep.subr.mxu0 0.0
    %4606 = vmatpush2.msra.mxu0 0.0
    %4607 = vmatprep.subr.mxu0 0.0
    %4608 = vmatpush2.msra.mxu0 0.0
    %4609 = vmatprep.subr.mxu0 0.0
    %4610 = vmatpush2.msra.mxu0 0.0
    %4611 = vmatprep.subr.mxu0 0.0
    %4612 = vmatpush2.msra.mxu0 0.0
    %4613 = vmatprep.subr.mxu0 0.0
    %4614 = vmatpush2.msra.mxu0 0.0
    %4615 = vmatprep.subr.mxu0 0.0
    %4616 = vmatpush2.msra.mxu0 0.0
    %4617 = vmatprep.subr.mxu0 0.0
    %4618 = vmatpush2.msra.mxu0 0.0
    %4619 = vmatprep.subr.mxu0 0.0
    %4620 = vmatpush2.msra.mxu0 0.0
    %4621 = vmatprep.subr.mxu0 0.0
    %4622 = vmatpush2.msra.mxu0 0.0
    %4623 = vmatprep.subr.mxu0 0.0
    %4624 = vmatpush2.msra.mxu0 0.0
    %4625 = vmatprep.subr.mxu0 0.0
    %4626 = vmatpush2.msra.mxu0 0.0
    %4627 = vmatprep.subr.mxu0 0.0
    %4628 = vmatpush2.msra.mxu0 0.0
    %4629 = vmatprep.subr.mxu0 0.0
    %4630 = vmatpush2.msra.mxu0 0.0
    %4631 = vmatprep.mubr.f32.mxu0 0.0
    %4632 = vmatmul.mubr.f32.gmra.mxu0 %v4562
    %v4633 = vpop.f32.mrf.mxu0
    %v4634 = vadd.f32 0.0, %v4633
    %v4635 = vpop.f32.mrf.mxu0
    %4636 = vmatprep.mubr.f32.mxu0 0.0
    %4637 = vmatmul.mubr.f32.gmra.mxu0 %v4565
    %v4638 = vpop.f32.mrf.mxu0
    %v4639 = vadd.f32 0.0, %v4638
    %v4640 = vpop.f32.mrf.mxu0
    %4641 = vdwg.mxu0
    %s4642 = scalar_lea.vmem [#allocation10], 512
    %v4643 = vld [vmem:[%s4642] sm:$0xff]
    %v4644 = vld [vmem:[%s4642 + $0x8] sm:$0xff]
    %v4645 = vld [vmem:[%s4642 + $0x10] sm:$0xff]
    %v4646 = vld [vmem:[%s4642 + $0x18] sm:$0xff]
    %v4647 = vld [vmem:[%s4642 + $0x20] sm:$0xff]
    %v4648 = vld [vmem:[%s4642 + $0x28] sm:$0xff]
    %v4649 = vld [vmem:[%s4642 + $0x30] sm:$0xff]
    %v4650 = vld [vmem:[%s4642 + $0x38] sm:$0xff]
    %v4651 = vld [vmem:[%s4642 + $0x40] sm:$0xff]
    %v4652 = vld [vmem:[%s4642 + $0x48] sm:$0xff]
    %v4653 = vld [vmem:[%s4642 + $0x50] sm:$0xff]
    %v4654 = vld [vmem:[%s4642 + $0x58] sm:$0xff]
    %v4655 = vld [vmem:[%s4642 + $0x60] sm:$0xff]
    %v4656 = vld [vmem:[%s4642 + $0x68] sm:$0xff]
    %v4657 = vld [vmem:[%s4642 + $0x70] sm:$0xff]
    %v4658 = vld [vmem:[%s4642 + $0x78] sm:$0xff]
    %s4659 = scalar_lea.vmem [#allocation11], 512
    %v4660 = vld [vmem:[%s4659] sm:$0xff]
    %v4661 = vld [vmem:[%s4659 + $0x8] sm:$0xff]
    %v4662 = vld [vmem:[%s4659 + $0x10] sm:$0xff]
    %v4663 = vld [vmem:[%s4659 + $0x18] sm:$0xff]
    %v4664 = vld [vmem:[%s4659 + $0x20] sm:$0xff]
    %v4665 = vld [vmem:[%s4659 + $0x28] sm:$0xff]
    %v4666 = vld [vmem:[%s4659 + $0x30] sm:$0xff]
    %v4667 = vld [vmem:[%s4659 + $0x38] sm:$0xff]
    %v4668 = vld [vmem:[%s4659 + $0x40] sm:$0xff]
    %v4669 = vld [vmem:[%s4659 + $0x48] sm:$0xff]
    %v4670 = vld [vmem:[%s4659 + $0x50] sm:$0xff]
    %v4671 = vld [vmem:[%s4659 + $0x58] sm:$0xff]
    %v4672 = vld [vmem:[%s4659 + $0x60] sm:$0xff]
    %v4673 = vld [vmem:[%s4659 + $0x68] sm:$0xff]
    %v4674 = vld [vmem:[%s4659 + $0x70] sm:$0xff]
    %v4675 = vld [vmem:[%s4659 + $0x78] sm:$0xff]
    %4676 = vmatprep.subr.mxu0 0.0
    %4677 = vmatpush1.msra.mxu0 %v4675
    %4678 = vmatprep.subr.mxu0 0.0
    %4679 = vmatpush1.msra.mxu0 %v4674
    %4680 = vmatprep.subr.mxu0 0.0
    %4681 = vmatpush1.msra.mxu0 %v4673
    %4682 = vmatprep.subr.mxu0 0.0
    %4683 = vmatpush1.msra.mxu0 %v4672
    %4684 = vmatprep.subr.mxu0 0.0
    %4685 = vmatpush1.msra.mxu0 %v4671
    %4686 = vmatprep.subr.mxu0 0.0
    %4687 = vmatpush1.msra.mxu0 %v4670
    %4688 = vmatprep.subr.mxu0 0.0
    %4689 = vmatpush1.msra.mxu0 %v4669
    %4690 = vmatprep.subr.mxu0 0.0
    %4691 = vmatpush1.msra.mxu0 %v4668
    %4692 = vmatprep.subr.mxu0 0.0
    %4693 = vmatpush1.msra.mxu0 %v4667
    %4694 = vmatprep.subr.mxu0 0.0
    %4695 = vmatpush1.msra.mxu0 %v4666
    %4696 = vmatprep.subr.mxu0 0.0
    %4697 = vmatpush1.msra.mxu0 %v4665
    %4698 = vmatprep.subr.mxu0 0.0
    %4699 = vmatpush1.msra.mxu0 %v4664
    %4700 = vmatprep.subr.mxu0 0.0
    %4701 = vmatpush1.msra.mxu0 %v4663
    %4702 = vmatprep.subr.mxu0 0.0
    %4703 = vmatpush1.msra.mxu0 %v4662
    %4704 = vmatprep.subr.mxu0 0.0
    %4705 = vmatpush1.msra.mxu0 %v4661
    %4706 = vmatprep.subr.mxu0 0.0
    %4707 = vmatpush1.msra.mxu0 %v4660
    %4708 = vmatprep.subr.mxu0 0.0
    %4709 = vmatpush2.msra.mxu0 0.0
    %4710 = vmatprep.subr.mxu0 0.0
    %4711 = vmatpush2.msra.mxu0 0.0
    %4712 = vmatprep.subr.mxu0 0.0
    %4713 = vmatpush2.msra.mxu0 0.0
    %4714 = vmatprep.subr.mxu0 0.0
    %4715 = vmatpush2.msra.mxu0 0.0
    %4716 = vmatprep.subr.mxu0 0.0
    %4717 = vmatpush2.msra.mxu0 0.0
    %4718 = vmatprep.subr.mxu0 0.0
    %4719 = vmatpush2.msra.mxu0 0.0
    %4720 = vmatprep.subr.mxu0 0.0
    %4721 = vmatpush2.msra.mxu0 0.0
    %4722 = vmatprep.subr.mxu0 0.0
    %4723 = vmatpush2.msra.mxu0 0.0
    %4724 = vmatprep.subr.mxu0 0.0
    %4725 = vmatpush2.msra.mxu0 0.0
    %4726 = vmatprep.subr.mxu0 0.0
    %4727 = vmatpush2.msra.mxu0 0.0
    %4728 = vmatprep.subr.mxu0 0.0
    %4729 = vmatpush2.msra.mxu0 0.0
    %4730 = vmatprep.subr.mxu0 0.0
    %4731 = vmatpush2.msra.mxu0 0.0
    %4732 = vmatprep.subr.mxu0 0.0
    %4733 = vmatpush2.msra.mxu0 0.0
    %4734 = vmatprep.subr.mxu0 0.0
    %4735 = vmatpush2.msra.mxu0 0.0
    %4736 = vmatprep.subr.mxu0 0.0
    %4737 = vmatpush2.msra.mxu0 0.0
    %4738 = vmatprep.subr.mxu0 0.0
    %4739 = vmatpush2.msra.mxu0 0.0
    %4740 = vmatprep.mubr.f32.mxu0 0.0
    %4741 = vmatmul.mubr.f32.gmra.mxu0 %v4553
    %v4742 = vpop.f32.mrf.mxu0
    %v4743 = vadd.f32 0.0, %v4742
    %v4744 = vpop.f32.mrf.mxu0
    %4745 = vmatprep.mubr.f32.mxu0 0.0
    %4746 = vmatmul.mubr.f32.gmra.mxu0 %v4558
    %v4747 = vpop.f32.mrf.mxu0
    %v4748 = vadd.f32 0.0, %v4747
    %v4749 = vpop.f32.mrf.mxu0
    %4750 = vmatprep.mubr.f32.mxu0 0.0
    %4751 = vmatmul.mubr.f32.gmra.mxu0 %v4634
    %v4752 = vpop.f32.mrf.mxu0
    %v4753 = vadd.f32 0.0, %v4752
    %v4754 = vpop.f32.mrf.mxu0
    %4755 = vmatprep.mubr.f32.mxu0 0.0
    %4756 = vmatmul.mubr.f32.gmra.mxu0 %v4639
    %v4757 = vpop.f32.mrf.mxu0
    %v4758 = vadd.f32 0.0, %v4757
    %v4759 = vpop.f32.mrf.mxu0
    %4760 = vdwg.mxu0
    %4761 = vmatprep.subr.mxu0 0.0
    %4762 = vmatpush1.msra.mxu0 %v4658
    %4763 = vmatprep.subr.mxu0 0.0
    %4764 = vmatpush1.msra.mxu0 %v4657
    %4765 = vmatprep.subr.mxu0 0.0
    %4766 = vmatpush1.msra.mxu0 %v4656
    %4767 = vmatprep.subr.mxu0 0.0
    %4768 = vmatpush1.msra.mxu0 %v4655
    %4769 = vmatprep.subr.mxu0 0.0
    %4770 = vmatpush1.msra.mxu0 %v4654
    %4771 = vmatprep.subr.mxu0 0.0
    %4772 = vmatpush1.msra.mxu0 %v4653
    %4773 = vmatprep.subr.mxu0 0.0
    %4774 = vmatpush1.msra.mxu0 %v4652
    %4775 = vmatprep.subr.mxu0 0.0
    %4776 = vmatpush1.msra.mxu0 %v4651
    %4777 = vmatprep.subr.mxu0 0.0
    %4778 = vmatpush1.msra.mxu0 %v4650
    %4779 = vmatprep.subr.mxu0 0.0
    %4780 = vmatpush1.msra.mxu0 %v4649
    %4781 = vmatprep.subr.mxu0 0.0
    %4782 = vmatpush1.msra.mxu0 %v4648
    %4783 = vmatprep.subr.mxu0 0.0
    %4784 = vmatpush1.msra.mxu0 %v4647
    %4785 = vmatprep.subr.mxu0 0.0
    %4786 = vmatpush1.msra.mxu0 %v4646
    %4787 = vmatprep.subr.mxu0 0.0
    %4788 = vmatpush1.msra.mxu0 %v4645
    %4789 = vmatprep.subr.mxu0 0.0
    %4790 = vmatpush1.msra.mxu0 %v4644
    %4791 = vmatprep.subr.mxu0 0.0
    %4792 = vmatpush1.msra.mxu0 %v4643
    %4793 = vmatprep.subr.mxu0 0.0
    %4794 = vmatpush2.msra.mxu0 0.0
    %4795 = vmatprep.subr.mxu0 0.0
    %4796 = vmatpush2.msra.mxu0 0.0
    %4797 = vmatprep.subr.mxu0 0.0
    %4798 = vmatpush2.msra.mxu0 0.0
    %4799 = vmatprep.subr.mxu0 0.0
    %4800 = vmatpush2.msra.mxu0 0.0
    %4801 = vmatprep.subr.mxu0 0.0
    %4802 = vmatpush2.msra.mxu0 0.0
    %4803 = vmatprep.subr.mxu0 0.0
    %4804 = vmatpush2.msra.mxu0 0.0
    %4805 = vmatprep.subr.mxu0 0.0
    %4806 = vmatpush2.msra.mxu0 0.0
    %4807 = vmatprep.subr.mxu0 0.0
    %4808 = vmatpush2.msra.mxu0 0.0
    %4809 = vmatprep.subr.mxu0 0.0
    %4810 = vmatpush2.msra.mxu0 0.0
    %4811 = vmatprep.subr.mxu0 0.0
    %4812 = vmatpush2.msra.mxu0 0.0
    %4813 = vmatprep.subr.mxu0 0.0
    %4814 = vmatpush2.msra.mxu0 0.0
    %4815 = vmatprep.subr.mxu0 0.0
    %4816 = vmatpush2.msra.mxu0 0.0
    %4817 = vmatprep.subr.mxu0 0.0
    %4818 = vmatpush2.msra.mxu0 0.0
    %4819 = vmatprep.subr.mxu0 0.0
    %4820 = vmatpush2.msra.mxu0 0.0
    %4821 = vmatprep.subr.mxu0 0.0
    %4822 = vmatpush2.msra.mxu0 0.0
    %4823 = vmatprep.subr.mxu0 0.0
    %4824 = vmatpush2.msra.mxu0 0.0
    %4825 = vmatprep.mubr.f32.mxu0 0.0
    %4826 = vmatmul.mubr.f32.gmra.mxu0 %v4391
    %v4827 = vpop.f32.mrf.mxu0
    %v4828 = vadd.f32 %v4743, %v4827
    %v4829 = vpop.f32.mrf.mxu0
    %4830 = vmatprep.mubr.f32.mxu0 0.0
    %4831 = vmatmul.mubr.f32.gmra.mxu0 %v4396
    %v4832 = vpop.f32.mrf.mxu0
    %v4833 = vadd.f32 %v4748, %v4832
    %v4834 = vpop.f32.mrf.mxu0
    %4835 = vmatprep.mubr.f32.mxu0 0.0
    %4836 = vmatmul.mubr.f32.gmra.mxu0 %v4472
    %v4837 = vpop.f32.mrf.mxu0
    %v4838 = vadd.f32 %v4753, %v4837
    %v4839 = vpop.f32.mrf.mxu0
    %4840 = vmatprep.mubr.f32.mxu0 0.0
    %4841 = vmatmul.mubr.f32.gmra.mxu0 %v4477
    %v4842 = vpop.f32.mrf.mxu0
    %v4843 = vadd.f32 %v4758, %v4842
    %v4844 = vpop.f32.mrf.mxu0
    %4845 = vdwg.mxu0
    %s4846 = scalar_lea.vmem %s6, 4
    %v4847 = vld [vmem:[%s4846] sm:$0x1]
    %v4849 = vlaneseq
    %v4850 = vshrl.u32 %v4849, 7
    %v4851 = vsub.s32 0, %v4850
    %v4852 = vrot.slane %v4847, %v4851
    %v4854 = vadd.f32 %v4828, %v4852
    %v4855 = vadd.f32 %v4833, %v4852
    %v4856 = vadd.f32 %v4838, %v4852
    %v4857 = vadd.f32 %v4843, %v4852
    %v4858 = vmax.f32 %v4854, 0.0
    %v4859 = vmax.f32 %v4855, 0.0
    %v4860 = vmax.f32 %v4856, 0.0
    %v4861 = vmax.f32 %v4857, 0.0
    %s4862 = scalar_lea.vmem %s7, 4
    %v4863 = vld [vmem:[%s4862] sm:$0x1]
    %v4865 = vlaneseq
    %v4866 = vshrl.u32 %v4865, 7
    %v4867 = vsub.s32 0, %v4866
    %v4868 = vrot.slane %v4863, %v4867
    %v4870 = vmul.f32 %v4858, %v4868
    %v4871 = vmul.f32 %v4859, %v4868
    %v4872 = vmul.f32 %v4860, %v4868
    %v4873 = vmul.f32 %v4861, %v4868
    %4874 = vadd.xlane.f32.xlu0 %v4870
    %v4875 = vpop.xlane.xlu0 %4874
    %4876 = vadd.xlane.f32.xlu0 %v4871
    %v4877 = vpop.xlane.xlu0 %4876
    %4878 = vadd.xlane.f32.xlu0 %v4872
    %v4879 = vpop.xlane.xlu0 %4878
    %4880 = vadd.xlane.f32.xlu0 %v4873
    %v4881 = vpop.xlane.xlu0 %4880
    %v4882 = vmax.f32 %v3990, %v4875
    %v4883 = vmax.f32 %v3991, %v4877
    %v4884 = vmax.f32 %v3992, %v4879
    %v4885 = vmax.f32 %v3993, %v4881
    %v4886 = vsub.f32 %v3990, %v4882
    %v4887 = vsub.f32 %v3991, %v4883
    %v4888 = vsub.f32 %v3992, %v4884
    %v4889 = vsub.f32 %v3993, %v4885
    %v4890 = vmul.f32 %v4886, 1.442695
    %v4891 = vpow.pop %v4890
    %v4892 = vmul.f32 %v4887, 1.442695
    %v4893 = vpow.pop %v4892
    %v4894 = vmul.f32 %v4888, 1.442695
    %v4895 = vpow.pop %v4894
    %v4896 = vmul.f32 %v4889, 1.442695
    %v4897 = vpow.pop %v4896
    %v4898 = vsub.f32 %v4875, %v4882
    %v4899 = vsub.f32 %v4877, %v4883
    %v4900 = vsub.f32 %v4879, %v4884
    %v4901 = vsub.f32 %v4881, %v4885
    %v4902 = vmul.f32 %v4898, 1.442695
    %v4903 = vpow.pop %v4902
    %v4904 = vmul.f32 %v4899, 1.442695
    %v4905 = vpow.pop %v4904
    %v4906 = vmul.f32 %v4900, 1.442695
    %v4907 = vpow.pop %v4906
    %v4908 = vmul.f32 %v4901, 1.442695
    %v4909 = vpow.pop %v4908
    %v4910 = vmul.f32 %v4022, %v4891
    %v4911 = vmul.f32 %v4023, %v4893
    %v4912 = vmul.f32 %v4024, %v4895
    %v4913 = vmul.f32 %v4025, %v4897
    %v4914 = vadd.f32 %v4910, %v4903
    %v4915 = vadd.f32 %v4911, %v4905
    %v4916 = vadd.f32 %v4912, %v4907
    %v4917 = vadd.f32 %v4913, %v4909
    %v4918 = vmul.f32 %v4034, %v4891
    %v4919 = vmul.f32 %v4035, %v4893
    %v4920 = vmul.f32 %v4036, %v4895
    %v4921 = vmul.f32 %v4037, %v4897
    %v4922 = vmul.f32 %v4903, %v4858
    %v4923 = vmul.f32 %v4905, %v4859
    %v4924 = vmul.f32 %v4907, %v4860
    %v4925 = vmul.f32 %v4909, %v4861
    %v4926 = vadd.f32 %v4918, %v4922
    %v4927 = vadd.f32 %v4919, %v4923
    %v4928 = vadd.f32 %v4920, %v4924
    %v4929 = vadd.f32 %v4921, %v4925
    %v4930 = vrcp.pop %v4914
    %v4931 = vrcp.pop %v4915
    %v4932 = vrcp.pop %v4916
    %v4933 = vrcp.pop %v4917
    %v4934 = vmul.f32 %v4926, %v4930
    %v4935 = vmul.f32 %v4927, %v4931
    %v4936 = vmul.f32 %v4928, %v4932
    %v4937 = vmul.f32 %v4929, %v4933
    %4938 = vadd.xlane.f32.xlu0 %v4934
    %v4939 = vpop.xlane.xlu0 %4938
    %4940 = vadd.xlane.f32.xlu0 %v4935
    %v4941 = vpop.xlane.xlu0 %4940
    %4942 = vadd.xlane.f32.xlu0 %v4936
    %v4943 = vpop.xlane.xlu0 %4942
    %4944 = vadd.xlane.f32.xlu0 %v4937
    %v4945 = vpop.xlane.xlu0 %4944
    %v4946 = vmul.f32 %v4939, 0.03125
    %v4947 = vmul.f32 %v4941, 0.03125
    %v4948 = vmul.f32 %v4943, 0.03125
    %v4949 = vmul.f32 %v4945, 0.03125
    %vm4950 = vcmp.lt.s32.totalorder %v128, 32
    %v4951 = vsub.f32 %v4934, %v4946
    %v4952 = vsub.f32 %v4935, %v4947
    %v4953 = vsub.f32 %v4936, %v4948
    %v4954 = vsub.f32 %v4937, %v4949
    %v4955 = vsel %vm4950, 1, 0
    %vm4956 = vcmp.eq.s32.totalorder %v4955, 1
    %v4957 = vsel %vm4956, %v4951, 0.0
    %v4958 = vsel %vm4956, %v4952, 0.0
    %v4959 = vsel %vm4956, %v4953, 0.0
    %v4960 = vsel %vm4956, %v4954, 0.0
    %v4961 = vmul.f32 %v4957, %v4957
    %v4962 = vmul.f32 %v4958, %v4958
    %v4963 = vmul.f32 %v4959, %v4959
    %v4964 = vmul.f32 %v4960, %v4960
    %4965 = vadd.xlane.f32.xlu0 %v4961
    %v4966 = vpop.xlane.xlu0 %4965
    %4967 = vadd.xlane.f32.xlu0 %v4962
    %v4968 = vpop.xlane.xlu0 %4967
    %4969 = vadd.xlane.f32.xlu0 %v4963
    %v4970 = vpop.xlane.xlu0 %4969
    %4971 = vadd.xlane.f32.xlu0 %v4964
    %v4972 = vpop.xlane.xlu0 %4971
    %v4973 = vmul.f32 %v4966, 0.03125
    %v4974 = vmul.f32 %v4968, 0.03125
    %v4975 = vmul.f32 %v4970, 0.03125
    %v4976 = vmul.f32 %v4972, 0.03125
    %v4977 = vadd.f32 %v4973, 1e-05
    %v4978 = vadd.f32 %v4974, 1e-05
    %v4979 = vadd.f32 %v4975, 1e-05
    %v4980 = vadd.f32 %v4976, 1e-05
    %v4981 = vrsqrt.pop %v4977
    %v4982 = vrsqrt.pop %v4978
    %v4983 = vrsqrt.pop %v4979
    %v4984 = vrsqrt.pop %v4980
    %v4985 = vmul.f32 %v4951, %v4981
    %v4986 = vmul.f32 %v4952, %v4982
    %v4987 = vmul.f32 %v4953, %v4983
    %v4988 = vmul.f32 %v4954, %v4984
    %v4989 = vld [vmem:[%s8] sm:$0x1]
    %v4991 = vlaneseq
    %v4992 = vshrl.u32 %v4991, 7
    %v4993 = vsub.s32 0, %v4992
    %v4994 = vrot.slane %v4989, %v4993
    %v4996 = vmul.f32 %v4985, %v4994
    %v4997 = vmul.f32 %v4986, %v4994
    %v4998 = vmul.f32 %v4987, %v4994
    %v4999 = vmul.f32 %v4988, %v4994
    %v5000 = vld [vmem:[%s9] sm:$0x1]
    %v5002 = vlaneseq
    %v5003 = vshrl.u32 %v5002, 7
    %v5004 = vsub.s32 0, %v5003
    %v5005 = vrot.slane %v5000, %v5004
    %v5007 = vadd.f32 %v4996, %v5005
    %v5008 = vadd.f32 %v4997, %v5005
    %v5009 = vadd.f32 %v4998, %v5005
    %v5010 = vadd.f32 %v4999, %v5005
    %v5011 = vmax.f32 %v5007, 0.0
    %v5012 = vmax.f32 %v5008, 0.0
    %v5013 = vmax.f32 %v5009, 0.0
    %v5014 = vmax.f32 %v5010, 0.0
    %5015 = vst [vmem:[#allocation13] sm:$0xff] %v5011
    %5016 = vst [vmem:[#allocation13 + $0x8] sm:$0xff] %v5012
    %5017 = vst [vmem:[#allocation13 + $0x10] sm:$0xff] %v5013
    %5018 = vst [vmem:[#allocation13 + $0x18] sm:$0xff] %v5014
    // Predicated region
    $region66: #{tpu_custom_call.1} parent=1 // pred_check
      _
    $region67: #{tpu_custom_call.1} parent=1 // pred_check_branch
      %5020 = sbr.rel (0) target = $region69
    $region68: #{tpu_custom_call.1} parent=1 // pred_region
      %s5022 = ssub.s32 512, 512
      %5023 = vsyncadd [#allocation4], %s5022
      %s5024 = sshll.u32 [#allocation13], 4
      %s5025 = int_to_ptr.vmem [resolvable:$true] %s5024
      %5030 = dma.vmem_to_hbm [thread:$0]  %s5025, 512, %s10, [#allocation4], 128, 128, 8
    $region69: #{tpu_custom_call.1} parent=1 // pred_fallthru
      _
    // Predicated region
    $region70: #{tpu_custom_call.1} parent=1 // pred_check
      _
    $region71: #{tpu_custom_call.1} parent=1 // pred_check_branch
      %5032 = sbr.rel (0) target = $region73
    $region72: #{tpu_custom_call.1} parent=1 // pred_region
      %5033 = dma.done [#allocation4], 512
    $region73: #{tpu_custom_call.1} parent=1 // pred_fallthru
      _
    %5034 = vsyncpa [#allocation3], 1
    %5035 = vsyncpa [#allocation6], 1
    %5036 = vsyncpa [#allocation9], 1
    %5037 = vsyncpa [#allocation12], 1
    %5038 = vsyncpa [#allocation4], 1

</llo_original>
